<compile_context>
chip_gen: v6e
topology: v6e:2x2x1
jax: 0.10.0
libtpu: 0.0.40
codegen_flags: <defaults>
</compile_context>

<pallas_src>
import jax
import jax.numpy as jnp
from jax.experimental import pallas as pl
from jax.experimental.pallas import tpu as pltpu


def _cdiv(a, b):
    return (a + b - 1) // b


def _round_up(x, m):
    return _cdiv(x, m) * m


def _pick_tile(dim, max_tile, align):
    """Largest tile <= max_tile, multiple of `align`, with padding waste bounded
    by ~align per block (derive from round_up(dim, align) first, per review)."""
    if dim <= align:
        return dim                       # full (possibly sub-native) dim: no pad
    d0 = _round_up(dim, align)
    nblk = _cdiv(d0, max_tile)
    return _round_up(_cdiv(d0, nblk), align)


# ---------------------------------------------------------------------------
# Generic tiled matmul (+bias) kernel: used by ConvTranspose2d and as fallback
# ---------------------------------------------------------------------------

def _matmul_bias_kernel(x_ref, w_ref, b_ref, o_ref, acc_ref):
    """o = x @ w + b.  f32 accumulation in VMEM scratch, cast to o.dtype at the
    last K step (lets the output be bf16 while numerics stay f32)."""
    k = pl.program_id(2)

    @pl.when(k == 0)
    def _():
        acc_ref[...] = jnp.broadcast_to(b_ref[...], acc_ref.shape)

    acc_ref[...] += jnp.dot(x_ref[...], w_ref[...],
                            preferred_element_type=jnp.float32)

    @pl.when(k == pl.num_programs(2) - 1)
    def _():
        o_ref[...] = acc_ref[...].astype(o_ref.dtype)


def matmul_bias(x, w, b, *, out_dtype=jnp.bfloat16,
                max_tm=512, max_tn=512, max_tk=1024, min_parallel_tiles=2):
    """[M, K] @ [K, N] + b[N].  bf16 MXU operands, f32 accumulation."""
    M, K = x.shape
    Kw, N = w.shape
    assert K == Kw
    tm = _pick_tile(M, max_tm, 16)        # bf16 LHS packs 16 sublanes per vreg
    tk = _pick_tile(K, max_tk, 128)
    tn = _pick_tile(N, max_tn, 128)
    # v7x megacore: make sure both TensorCores get at least one (M, N) tile.
    while _cdiv(M, tm) * _cdiv(N, tn) < min_parallel_tiles and tm > 16:
        tm = max(16, _round_up(tm // 2, 16))
    Mp, Kp, Np = _round_up(M, tm), _round_up(K, tk), _round_up(N, tn)

    xb = x.astype(jnp.bfloat16)
    wb = w.astype(jnp.bfloat16)
    bf = b.astype(jnp.float32).reshape(1, N)
    if (Mp, Kp) != (M, K):
        xb = jnp.pad(xb, ((0, Mp - M), (0, Kp - K)))
    if (Kp, Np) != (K, N):
        wb = jnp.pad(wb, ((0, Kp - K), (0, Np - N)))
    if Np != N:
        bf = jnp.pad(bf, ((0, 0), (0, Np - N)))

    out = pl.pallas_call(
        _matmul_bias_kernel,
        out_shape=jax.ShapeDtypeStruct((Mp, Np), out_dtype),
        grid_spec=pltpu.PrefetchScalarGridSpec(
            num_scalar_prefetch=0,
            grid=(Mp // tm, Np // tn, Kp // tk),
            in_specs=[
                pl.BlockSpec((tm, tk), lambda i, j, k: (i, k)),
                pl.BlockSpec((tk, tn), lambda i, j, k: (k, j)),
                pl.BlockSpec((1, tn), lambda i, j, k: (0, j)),
            ],
            out_specs=pl.BlockSpec((tm, tn), lambda i, j, k: (i, j)),
            scratch_shapes=[pltpu.VMEM((tm, tn), jnp.float32)],
        ),
        compiler_params=pltpu.CompilerParams(
            dimension_semantics=("parallel", "parallel", "arbitrary")),
        cost_estimate=pl.CostEstimate(
            flops=2 * M * N * K, transcendentals=0,
            bytes_accessed=(M * K + K * N) * 2
                           + M * N * jnp.dtype(out_dtype).itemsize),
    )(xb, wb, bf)
    if (Mp, Np) != (M, N):
        out = out[:M, :N]
    return out


# ---------------------------------------------------------------------------
# Fused 3x3 conv kernel: implicit im2col + bias + bf16 output + BN partial stats
# ---------------------------------------------------------------------------

def _make_conv3x3_kernel(H, W):
    def kernel(x_ref, w_ref, b_ref, y_ref, sum_ref, sq_ref):
        # x_ref : (1, H+2, W+2, C)  bf16, spatially zero-padded sample
        # w_ref : (3, 3, C, tn)     bf16
        # b_ref : (1, tn)           f32
        # y_ref : (1, H*W, tn)      bf16 conv output
        # sum_ref, sq_ref : (1, 1, tn) f32 per-sample BN partial stats
        C = x_ref.shape[-1]
        tn = w_ref.shape[-1]
        x = x_ref[0]                      # (H+2, W+2, C), streamed once per step
        w = w_ref[...]                    # (3, 3, C, tn)
        acc = jnp.zeros((H * W, tn), jnp.float32)
        for kh in range(3):               # implicit im2col: taps sliced in VMEM
            for kw in range(3):
                win = x[kh:kh + H, kw:kw + W, :].reshape(H * W, C)
                acc = acc + jnp.dot(win, w[kh, kw],
                                    preferred_element_type=jnp.float32)
        acc = acc + b_ref[...]
        y_ref[0] = acc.astype(y_ref.dtype)
        # BN partial reductions ride on VPU/XLU slack under the MXU.
        sum_ref[0] = jnp.sum(acc, axis=0, keepdims=True)
        sq_ref[0] = jnp.sum(acc * acc, axis=0, keepdims=True)
    return kernel


def _fused_conv_fits(H, W, C, Cout, *, budget_bytes=12 << 20):
    """Conservative per-step VMEM estimate for the whole-sample fused kernel
    (safe under the v5e 16 MiB default scoped-VMEM limit)."""
    tn = Cout if Cout <= 256 else 256
    x_blk = (H + 2) * (W + 2) * C * 2
    w_blk = 9 * C * tn * 2
    y_blk = H * W * tn * 2
    acc = H * W * tn * 4
    win = H * W * C * 2
    return 2 * (x_blk + w_blk + y_blk) + acc + 3 * win < budget_bytes


def conv3x3_fused(x, w, b, *, max_tn=256):
    """3x3 / pad=1 conv with implicit im2col, bias, bf16 output and fused BN
    sum / sum-of-squares.  x: (N,H,W,C); w: (3,3,C,Cout)."""
    N, H, W, C = x.shape
    Cout = w.shape[-1]
    tn = Cout if Cout <= max_tn else _pick_tile(Cout, max_tn, 128)
    Cp = _round_up(Cout, tn)
    wb = w.astype(jnp.bfloat16)
    bf = b.astype(jnp.float32).reshape(1, Cout)
    if Cp != Cout:
        wb = jnp.pad(wb, ((0, 0), (0, 0), (0, 0), (0, Cp - Cout)))
        bf = jnp.pad(bf, ((0, 0), (0, Cp - Cout)))
    xp = jnp.pad(x.astype(jnp.bfloat16), ((0, 0), (1, 1), (1, 1), (0, 0)))

    y, s_n, sq_n = pl.pallas_call(
        _make_conv3x3_kernel(H, W),
        out_shape=(jax.ShapeDtypeStruct((N, H * W, Cp), jnp.bfloat16),
                   jax.ShapeDtypeStruct((N, 1, Cp), jnp.float32),
                   jax.ShapeDtypeStruct((N, 1, Cp), jnp.float32)),
        grid_spec=pltpu.PrefetchScalarGridSpec(
            num_scalar_prefetch=0,
            grid=(Cp // tn, N),
            in_specs=[
                pl.BlockSpec((1, H + 2, W + 2, C), lambda jc, n: (n, 0, 0, 0)),
                pl.BlockSpec((3, 3, C, tn), lambda jc, n: (0, 0, 0, jc)),
                pl.BlockSpec((1, tn), lambda jc, n: (0, jc)),
            ],
            out_specs=(pl.BlockSpec((1, H * W, tn), lambda jc, n: (n, 0, jc)),
                       pl.BlockSpec((1, 1, tn), lambda jc, n: (n, 0, jc)),
                       pl.BlockSpec((1, 1, tn), lambda jc, n: (n, 0, jc))),
        ),
        compiler_params=pltpu.CompilerParams(
            dimension_semantics=("parallel", "parallel")),
        cost_estimate=pl.CostEstimate(
            flops=2 * N * H * W * 9 * C * Cout, transcendentals=0,
            bytes_accessed=(N * (H + 2) * (W + 2) * C * 2 + 9 * C * Cout * 2
                            + N * H * W * Cout * 2 + 2 * N * Cout * 4)),
    )(xp, wb, bf)

    if Cp != Cout:
        y, s_n, sq_n = y[..., :Cout], s_n[..., :Cout], sq_n[..., :Cout]
    s = jnp.sum(s_n, axis=0).reshape(1, Cout)       # tiny XLA reduce over N
    sq = jnp.sum(sq_n, axis=0).reshape(1, Cout)
    return y.reshape(N * H * W, Cout), s, sq


# ---------------------------------------------------------------------------
# Fallback conv path (large images that don't fit the whole-sample kernel)
# ---------------------------------------------------------------------------

def _im2col3x3(x):
    N, H, W, C = x.shape
    xp = jnp.pad(x, ((0, 0), (1, 1), (1, 1), (0, 0)))
    cols = [xp[:, i:i + H, j:j + W, :] for i in range(3) for j in range(3)]
    return jnp.concatenate(cols, axis=-1).reshape(N * H * W, 9 * C)


def conv3x3_im2col(x, w, b):
    """Explicit im2col (9x LHS inflation) + tiled matmul; only used when a
    whole padded sample does not fit VMEM."""
    N, H, W, C = x.shape
    Cout = w.shape[-1]
    patches = _im2col3x3(x.astype(jnp.bfloat16))
    y = matmul_bias(patches, w.reshape(9 * C, Cout), b, out_dtype=jnp.bfloat16)
    yf = y.astype(jnp.float32)
    # TODO(synk): fuse these stats into the matmul epilogue (masked pad rows),
    # as the fused conv path already does.
    s = jnp.sum(yf, axis=0, keepdims=True)
    sq = jnp.sum(yf * yf, axis=0, keepdims=True)
    return y, s, sq


# ---------------------------------------------------------------------------
# BN normalize (pre-folded scale/shift) + ReLU
# ---------------------------------------------------------------------------

def _scale_shift_relu_kernel(y_ref, scale_ref, shift_ref, o_ref):
    o_ref[...] = jnp.maximum(
        y_ref[...].astype(jnp.float32) * scale_ref[...] + shift_ref[...],
        0.0).astype(o_ref.dtype)


def scale_shift_relu(y, scale, shift, *, out_dtype=jnp.bfloat16, max_tm=1024):
    """Fused BN normalize + affine + ReLU over [M, C] rows (bf16 in, bf16 out)."""
    # TODO(synk): fold this pass into the consumer conv's LHS load (needs the
    # conv's zero-padding border masked so pad pixels stay exactly zero).
    M, C = y.shape
    tm = _pick_tile(M, max_tm, 16)
    while _cdiv(M, tm) < 2 and tm > 16:            # >=2 tiles for v7x megacore
        tm = max(16, _round_up(tm // 2, 16))
    Mp = _round_up(M, tm)
    yp = y if Mp == M else jnp.pad(y, ((0, Mp - M), (0, 0)))
    out = pl.pallas_call(
        _scale_shift_relu_kernel,
        out_shape=jax.ShapeDtypeStruct((Mp, C), out_dtype),
        grid_spec=pltpu.PrefetchScalarGridSpec(
            num_scalar_prefetch=0,
            grid=(Mp // tm,),
            in_specs=[pl.BlockSpec((tm, C), lambda i: (i, 0)),
                      pl.BlockSpec((1, C), lambda i: (0, 0)),
                      pl.BlockSpec((1, C), lambda i: (0, 0))],
            out_specs=pl.BlockSpec((tm, C), lambda i: (i, 0)),
        ),
        compiler_params=pltpu.CompilerParams(
            dimension_semantics=("parallel",)),
    )(yp, scale.astype(jnp.float32), shift.astype(jnp.float32))
    return out if Mp == M else out[:M]


# ---------------------------------------------------------------------------
# Up / DoubleConv building blocks
# ---------------------------------------------------------------------------

def conv3x3_bn_relu(x, w, b, gamma, beta, *, eps=1e-5):
    """Conv2d(3x3, pad=1) + BatchNorm2d (training batch stats) + ReLU.
    x: (N, H, W, Cin) -> (N, H, W, Cout), bf16 activations."""
    N, H, W, C = x.shape
    Cout = w.shape[-1]
    M = N * H * W
    if _fused_conv_fits(H, W, C, Cout):
        y, s, sq = conv3x3_fused(x, w, b)
    else:
        y, s, sq = conv3x3_im2col(x, w, b)
    mean = s / M
    var = jnp.maximum(sq / M - mean * mean, 0.0)   # biased var, clamped >= 0
    inv = jax.lax.rsqrt(var + eps)
    scale = gamma.reshape(1, Cout) * inv
    shift = beta.reshape(1, Cout) - mean * scale
    out = scale_shift_relu(y, scale, shift)        # bf16, feeds the next conv
    return out.reshape(N, H, W, Cout)


def conv_transpose2x2(x, w, b):
    """ConvTranspose2d(Cin, Cout, 2, stride=2).  w: (Cin, 4*Cout) with columns
    ordered (kh, kw, cout); returns bf16 (N, 2H, 2W, Cout)."""
    N, H, W, Cin = x.shape
    Cout = w.shape[1] // 4
    y = matmul_bias(x.reshape(-1, Cin), w, jnp.tile(b, 4),
                    out_dtype=jnp.bfloat16)
    # TODO(synk): fold this 2x2 pixel-shuffle into the matmul's out_specs so the
    # up-sampled tensor is written directly at its (2h, 2w) destination.
    y = y.reshape(N, H, W, 2, 2, Cout).transpose(0, 1, 3, 2, 4, 5)
    return y.reshape(N, 2 * H, 2 * W, Cout)


def up_forward(params, x1_nchw, x2_nchw):
    """PyTorch Up.forward(x1, x2) = DoubleConv(cat([ConvT(x1), x2], dim=1))."""
    x1 = jnp.transpose(x1_nchw, (0, 2, 3, 1))        # NCHW -> NHWC
    x2 = jnp.transpose(x2_nchw, (0, 2, 3, 1))
    u = conv_transpose2x2(x1, params['up_w'], params['up_b'])      # bf16
    # TODO(synk): feed u and x2 as two accumulating LHS sources of the first
    # conv instead of materializing the concat (bf16 already halves its cost).
    x = jnp.concatenate([u, x2.astype(jnp.bfloat16)], axis=-1)
    p = params['dc']
    h = conv3x3_bn_relu(x, p['w1'], p['b1'], p['g1'], p['be1'])
    h = conv3x3_bn_relu(h, p['w2'], p['b2'], p['g2'], p['be2'])
    return jnp.transpose(h, (0, 3, 1, 2)).astype(jnp.float32)      # NCHW out


# ---------------------------------------------------------------------------
# Pure-JAX reference (same bf16 operand / intermediate precision)
# ---------------------------------------------------------------------------

def _conv3x3_ref(x_bf16, w, b):
    y = jax.lax.conv_general_dilated(
        x_bf16, w.astype(jnp.bfloat16), window_strides=(1, 1),
        padding=((1, 1), (1, 1)),
        dimension_numbers=('NHWC', 'HWIO', 'NHWC'),
        preferred_element_type=jnp.float32)
    return y + b.reshape(1, 1, 1, -1)


def _bn_relu_ref(y, gamma, beta, eps=1e-5):
    mean = jnp.mean(y, axis=(0, 1, 2), keepdims=True)
    var = jnp.maximum(jnp.mean(y * y, axis=(0, 1, 2), keepdims=True)
                      - mean * mean, 0.0)
    inv = jax.lax.rsqrt(var + eps)
    scale = gamma.reshape(1, 1, 1, -1) * inv
    shift = beta.reshape(1, 1, 1, -1) - mean * scale
    yb = y.astype(jnp.bfloat16).astype(jnp.float32)   # kernel stores y as bf16
    return jnp.maximum(yb * scale + shift, 0.0).astype(jnp.bfloat16)


def up_reference(params, x1_nchw, x2_nchw):
    x1 = jnp.transpose(x1_nchw, (0, 2, 3, 1))
    x2 = jnp.transpose(x2_nchw, (0, 2, 3, 1))
    N, H, W, Cin = x1.shape
    Cmid = params['up_w'].shape[1] // 4
    u = jnp.dot(x1.reshape(-1, Cin).astype(jnp.bfloat16),
                params['up_w'].astype(jnp.bfloat16),
                preferred_element_type=jnp.float32)
    u = (u + jnp.tile(params['up_b'], 4).reshape(1, -1)).astype(jnp.bfloat16)
    u = u.reshape(N, H, W, 2, 2, Cmid).transpose(0, 1, 3, 2, 4, 5)
    u = u.reshape(N, 2 * H, 2 * W, Cmid)
    x = jnp.concatenate([u, x2.astype(jnp.bfloat16)], axis=-1)
    p = params['dc']
    h1 = _bn_relu_ref(_conv3x3_ref(x, p['w1'], p['b1']), p['g1'], p['be1'])
    h2 = _bn_relu_ref(_conv3x3_ref(h1, p['w2'], p['b2']), p['g2'], p['be2'])
    return jnp.transpose(h2, (0, 3, 1, 2)).astype(jnp.float32)


# ---------------------------------------------------------------------------
# Deterministic parameter init (shapes follow the PyTorch Up module)
# ---------------------------------------------------------------------------

def init_up_params(key, in_ch, out_ch):
    ks = jax.random.split(key, 6)
    cmid = in_ch // 2
    return dict(
        up_w=jax.random.normal(ks[0], (in_ch, 4 * cmid), jnp.float32)
             / jnp.sqrt(4.0 * in_ch),
        up_b=jax.random.normal(ks[1], (cmid,), jnp.float32) * 0.01,
        dc=dict(
            w1=jax.random.normal(ks[2], (3, 3, in_ch, out_ch), jnp.float32)
               / jnp.sqrt(9.0 * in_ch),
            b1=jax.random.normal(ks[3], (out_ch,), jnp.float32) * 0.01,
            g1=jnp.ones((out_ch,), jnp.float32),
            be1=jnp.zeros((out_ch,), jnp.float32),
            w2=jax.random.normal(ks[4], (3, 3, out_ch, out_ch), jnp.float32)
               / jnp.sqrt(9.0 * out_ch),
            b2=jax.random.normal(ks[5], (out_ch,), jnp.float32) * 0.01,
            g2=jnp.ones((out_ch,), jnp.float32),
            be2=jnp.zeros((out_ch,), jnp.float32),
        ),
    )


# ---------------------------------------------------------------------------

if __name__ == "__main__":
    key = jax.random.PRNGKey(0)
    pkey, k1, k2 = jax.random.split(key, 3)
    IN_CH, OUT_CH = 64, 32
    params = init_up_params(pkey, IN_CH, OUT_CH)
    # x1: low-res / high-channel feature map; x2: skip connection at 2x spatial.
    x1 = jax.random.normal(k1, (2, IN_CH, 8, 8), jnp.float32)
    x2 = jax.random.normal(k2, (2, IN_CH // 2, 16, 16), jnp.float32)

    fwd = jax.jit(up_forward)
    out = jax.block_until_ready(fwd(params, x1, x2))

    assert out.shape == (2, OUT_CH, 16, 16), out.shape
    assert bool(jnp.all(jnp.isfinite(out)))

    ref = jax.block_until_ready(jax.jit(up_reference)(params, x1, x2))
    err = float(jnp.max(jnp.abs(out - ref)))
    assert err < 5e-2, f"max abs err vs reference: {err}"
    print("KERNEL_OK")
</pallas_src>

<mosaic_0001>
module attributes {stable_mosaic.version = 11 : i64} {
  func.func @_matmul_bias_kernel(%arg0: i32, %arg1: i32, %arg2: i32, %arg3: memref<64x64xbf16, #tpu.memory_space<vmem>>, %arg4: memref<64x128xbf16, #tpu.memory_space<vmem>>, %arg5: memref<1x128xf32, #tpu.memory_space<vmem>>, %arg6: memref<64x128xbf16, #tpu.memory_space<vmem>>, %arg7: memref<64x128xf32, #tpu.memory_space<vmem>>) attributes {dimension_semantics = [#tpu.dimension_semantics<parallel>, #tpu.dimension_semantics<parallel>, #tpu.dimension_semantics<arbitrary>], iteration_bounds = array<i64: 2, 1, 1>, scalar_prefetch = 0 : i64, scratch_operands = 1 : i64, tpu.core_type = #tpu.core_type<tc>, window_params = [{transform_indices = @transform_0, window_bounds = array<i64: 64, 64>}, {transform_indices = @transform_1, window_bounds = array<i64: 64, 128>}, {transform_indices = @transform_2, window_bounds = array<i64: 1, 128>}, {transform_indices = @transform_3, window_bounds = array<i64: 64, 128>}]} {
    %c0_i32 = arith.constant 0 : i32
    %0 = arith.cmpi eq, %arg2, %c0_i32 : i32
    %1 = arith.extui %0 : i1 to i32
    %c0_i32_0 = arith.constant 0 : i32
    %2 = arith.cmpi ne, %1, %c0_i32_0 : i32
    scf.if %2 {
      %c0_10 = arith.constant 0 : index
      %c0_11 = arith.constant 0 : index
      %12 = vector.load %arg5[%c0_10, %c0_11] : memref<1x128xf32, #tpu.memory_space<vmem>>, vector<1x128xf32>
      %13 = vector.shape_cast %12 : vector<1x128xf32> to vector<1x128xf32>
      %14 = vector.broadcast %13 : vector<1x128xf32> to vector<64x128xf32>
      %c0_12 = arith.constant 0 : index
      %c0_13 = arith.constant 0 : index
      %15 = vector.load %arg7[%c0_12, %c0_13] : memref<64x128xf32, #tpu.memory_space<vmem>>, vector<64x128xf32>
      tpu.vector_store %arg7[%c0_12, %c0_13], %14 {strides = array<i32>} : memref<64x128xf32, #tpu.memory_space<vmem>>, vector<64x128xf32>,
    } else {
    }
    %c0 = arith.constant 0 : index
    %c0_1 = arith.constant 0 : index
    %3 = vector.load %arg7[%c0, %c0_1] : memref<64x128xf32, #tpu.memory_space<vmem>>, vector<64x128xf32>
    %c0_2 = arith.constant 0 : index
    %c0_3 = arith.constant 0 : index
    %4 = vector.load %arg3[%c0_2, %c0_3] : memref<64x64xbf16, #tpu.memory_space<vmem>>, vector<64x64xbf16>
    %c0_4 = arith.constant 0 : index
    %c0_5 = arith.constant 0 : index
    %5 = vector.load %arg4[%c0_4, %c0_5] : memref<64x128xbf16, #tpu.memory_space<vmem>>, vector<64x128xbf16>
    %cst = arith.constant dense<0.000000e+00> : vector<64x128xf32>
    %6 = tpu.matmul %4, %5, %cst {dimension_numbers = #tpu.dot_dimension_numbers<[1], [0], [0], [1], [0, 0, 1, 1], [], []>} : vector<64x64xbf16>, vector<64x128xbf16>, vector<64x128xf32> -> vector<64x128xf32>
    %7 = arith.addf %3, %6 : vector<64x128xf32>
    %c0_6 = arith.constant 0 : index
    %c0_7 = arith.constant 0 : index
    %8 = vector.load %arg7[%c0_6, %c0_7] : memref<64x128xf32, #tpu.memory_space<vmem>>, vector<64x128xf32>
    tpu.vector_store %arg7[%c0_6, %c0_7], %7 {strides = array<i32>} : memref<64x128xf32, #tpu.memory_space<vmem>>, vector<64x128xf32>,
    %c0_i32_8 = arith.constant 0 : i32
    %9 = arith.cmpi eq, %arg2, %c0_i32_8 : i32
    %10 = arith.extui %9 : i1 to i32
    %c0_i32_9 = arith.constant 0 : i32
    %11 = arith.cmpi ne, %10, %c0_i32_9 : i32
    scf.if %11 {
      %c0_10 = arith.constant 0 : index
      %c0_11 = arith.constant 0 : index
      %12 = vector.load %arg7[%c0_10, %c0_11] : memref<64x128xf32, #tpu.memory_space<vmem>>, vector<64x128xf32>
      %13 = arith.truncf %12 : vector<64x128xf32> to vector<64x128xbf16>
      %c0_12 = arith.constant 0 : index
      %c0_13 = arith.constant 0 : index
      %14 = vector.load %arg6[%c0_12, %c0_13] : memref<64x128xbf16, #tpu.memory_space<vmem>>, vector<64x128xbf16>
      tpu.vector_store %arg6[%c0_12, %c0_13], %13 {strides = array<i32>} : memref<64x128xbf16, #tpu.memory_space<vmem>>, vector<64x128xbf16>,
    } else {
    }
    return
  }
  func.func @transform_0(%arg0: i32, %arg1: i32, %arg2: i32) -> (i32, i32) {
    %c0_i32 = arith.constant 0 : i32
    return %arg0, %arg2 : i32, i32
  }
  func.func @transform_1(%arg0: i32, %arg1: i32, %arg2: i32) -> (i32, i32) {
    %c0_i32 = arith.constant 0 : i32
    return %arg2, %arg1 : i32, i32
  }
  func.func @transform_2(%arg0: i32, %arg1: i32, %arg2: i32) -> (i32, i32) {
    %c0_i32 = arith.constant 0 : i32
    %c0_i32_0 = arith.constant 0 : i32
    return %c0_i32, %arg1 : i32, i32
  }
  func.func @transform_3(%arg0: i32, %arg1: i32, %arg2: i32) -> (i32, i32) {
    %c0_i32 = arith.constant 0 : i32
    return %arg0, %arg1 : i32, i32
  }
}

module attributes {stable_mosaic.version = 11 : i64} {
  func.func @kernel(%arg0: i32, %arg1: i32, %arg2: memref<1x18x18x64xbf16, #tpu.memory_space<vmem>>, %arg3: memref<3x3x64x32xbf16, #tpu.memory_space<vmem>>, %arg4: memref<1x32xf32, #tpu.memory_space<vmem>>, %arg5: memref<1x256x32xbf16, #tpu.memory_space<vmem>>, %arg6: memref<1x1x32xf32, #tpu.memory_space<vmem>>, %arg7: memref<1x1x32xf32, #tpu.memory_space<vmem>>) attributes {dimension_semantics = [#tpu.dimension_semantics<parallel>, #tpu.dimension_semantics<parallel>], iteration_bounds = array<i64: 1, 2>, scalar_prefetch = 0 : i64, scratch_operands = 0 : i64, tpu.core_type = #tpu.core_type<tc>, window_params = [{transform_indices = @transform_0, window_bounds = array<i64: 1, 18, 18, 64>}, {transform_indices = @transform_1, window_bounds = array<i64: 3, 3, 64, 32>}, {transform_indices = @transform_2, window_bounds = array<i64: 1, 32>}, {transform_indices = @transform_3, window_bounds = array<i64: 1, 256, 32>}, {transform_indices = @transform_4, window_bounds = array<i64: 1, 1, 32>}, {transform_indices = @transform_5, window_bounds = array<i64: 1, 1, 32>}]} {
    %c0 = arith.constant 0 : index
    %c0_0 = arith.constant 0 : index
    %c0_1 = arith.constant 0 : index
    %c0_2 = arith.constant 0 : index
    %0 = vector.load %arg2[%c0, %c0_0, %c0_1, %c0_2] : memref<1x18x18x64xbf16, #tpu.memory_space<vmem>>, vector<1x18x18x64xbf16>
    %1 = vector.shape_cast %0 : vector<1x18x18x64xbf16> to vector<18x18x64xbf16>
    %c0_3 = arith.constant 0 : index
    %c0_4 = arith.constant 0 : index
    %c0_5 = arith.constant 0 : index
    %c0_6 = arith.constant 0 : index
    %2 = vector.load %arg3[%c0_3, %c0_4, %c0_5, %c0_6] : memref<3x3x64x32xbf16, #tpu.memory_space<vmem>>, vector<3x3x64x32xbf16>
    %cst = arith.constant 0.000000e+00 : f32
    %3 = vector.broadcast %cst : f32 to vector<256x32xf32>
    %4 = vector.extract_strided_slice %1 {offsets = [0, 0, 0], sizes = [16, 16, 64], strides = [1, 1, 1]} : vector<18x18x64xbf16> to vector<16x16x64xbf16>
    %5 = vector.shape_cast %4 : vector<16x16x64xbf16> to vector<256x64xbf16>
    %6 = vector.extract_strided_slice %2 {offsets = [0, 0, 0, 0], sizes = [1, 1, 64, 32], strides = [1, 1, 1, 1]} : vector<3x3x64x32xbf16> to vector<1x1x64x32xbf16>
    %7 = vector.shape_cast %6 : vector<1x1x64x32xbf16> to vector<64x32xbf16>
    %cst_7 = arith.constant dense<0.000000e+00> : vector<256x32xf32>
    %8 = tpu.matmul %5, %7, %cst_7 {dimension_numbers = #tpu.dot_dimension_numbers<[1], [0], [0], [1], [0, 0, 1, 1], [], []>} : vector<256x64xbf16>, vector<64x32xbf16>, vector<256x32xf32> -> vector<256x32xf32>
    %9 = arith.addf %3, %8 : vector<256x32xf32>
    %10 = vector.extract_strided_slice %1 {offsets = [0, 1, 0], sizes = [16, 16, 64], strides = [1, 1, 1]} : vector<18x18x64xbf16> to vector<16x16x64xbf16>
    %11 = vector.shape_cast %10 : vector<16x16x64xbf16> to vector<256x64xbf16>
    %12 = vector.extract_strided_slice %2 {offsets = [0, 1, 0, 0], sizes = [1, 1, 64, 32], strides = [1, 1, 1, 1]} : vector<3x3x64x32xbf16> to vector<1x1x64x32xbf16>
    %13 = vector.shape_cast %12 : vector<1x1x64x32xbf16> to vector<64x32xbf16>
    %cst_8 = arith.constant dense<0.000000e+00> : vector<256x32xf32>
    %14 = tpu.matmul %11, %13, %cst_8 {dimension_numbers = #tpu.dot_dimension_numbers<[1], [0], [0], [1], [0, 0, 1, 1], [], []>} : vector<256x64xbf16>, vector<64x32xbf16>, vector<256x32xf32> -> vector<256x32xf32>
    %15 = arith.addf %9, %14 : vector<256x32xf32>
    %16 = vector.extract_strided_slice %1 {offsets = [0, 2, 0], sizes = [16, 16, 64], strides = [1, 1, 1]} : vector<18x18x64xbf16> to vector<16x16x64xbf16>
    %17 = vector.shape_cast %16 : vector<16x16x64xbf16> to vector<256x64xbf16>
    %18 = vector.extract_strided_slice %2 {offsets = [0, 2, 0, 0], sizes = [1, 1, 64, 32], strides = [1, 1, 1, 1]} : vector<3x3x64x32xbf16> to vector<1x1x64x32xbf16>
    %19 = vector.shape_cast %18 : vector<1x1x64x32xbf16> to vector<64x32xbf16>
    %cst_9 = arith.constant dense<0.000000e+00> : vector<256x32xf32>
    %20 = tpu.matmul %17, %19, %cst_9 {dimension_numbers = #tpu.dot_dimension_numbers<[1], [0], [0], [1], [0, 0, 1, 1], [], []>} : vector<256x64xbf16>, vector<64x32xbf16>, vector<256x32xf32> -> vector<256x32xf32>
    %21 = arith.addf %15, %20 : vector<256x32xf32>
    %22 = vector.extract_strided_slice %1 {offsets = [1, 0, 0], sizes = [16, 16, 64], strides = [1, 1, 1]} : vector<18x18x64xbf16> to vector<16x16x64xbf16>
    %23 = vector.shape_cast %22 : vector<16x16x64xbf16> to vector<256x64xbf16>
    %24 = vector.extract_strided_slice %2 {offsets = [1, 0, 0, 0], sizes = [1, 1, 64, 32], strides = [1, 1, 1, 1]} : vector<3x3x64x32xbf16> to vector<1x1x64x32xbf16>
    %25 = vector.shape_cast %24 : vector<1x1x64x32xbf16> to vector<64x32xbf16>
    %cst_10 = arith.constant dense<0.000000e+00> : vector<256x32xf32>
    %26 = tpu.matmul %23, %25, %cst_10 {dimension_numbers = #tpu.dot_dimension_numbers<[1], [0], [0], [1], [0, 0, 1, 1], [], []>} : vector<256x64xbf16>, vector<64x32xbf16>, vector<256x32xf32> -> vector<256x32xf32>
    %27 = arith.addf %21, %26 : vector<256x32xf32>
    %28 = vector.extract_strided_slice %1 {offsets = [1, 1, 0], sizes = [16, 16, 64], strides = [1, 1, 1]} : vector<18x18x64xbf16> to vector<16x16x64xbf16>
    %29 = vector.shape_cast %28 : vector<16x16x64xbf16> to vector<256x64xbf16>
    %30 = vector.extract_strided_slice %2 {offsets = [1, 1, 0, 0], sizes = [1, 1, 64, 32], strides = [1, 1, 1, 1]} : vector<3x3x64x32xbf16> to vector<1x1x64x32xbf16>
    %31 = vector.shape_cast %30 : vector<1x1x64x32xbf16> to vector<64x32xbf16>
    %cst_11 = arith.constant dense<0.000000e+00> : vector<256x32xf32>
    %32 = tpu.matmul %29, %31, %cst_11 {dimension_numbers = #tpu.dot_dimension_numbers<[1], [0], [0], [1], [0, 0, 1, 1], [], []>} : vector<256x64xbf16>, vector<64x32xbf16>, vector<256x32xf32> -> vector<256x32xf32>
    %33 = arith.addf %27, %32 : vector<256x32xf32>
    %34 = vector.extract_strided_slice %1 {offsets = [1, 2, 0], sizes = [16, 16, 64], strides = [1, 1, 1]} : vector<18x18x64xbf16> to vector<16x16x64xbf16>
    %35 = vector.shape_cast %34 : vector<16x16x64xbf16> to vector<256x64xbf16>
    %36 = vector.extract_strided_slice %2 {offsets = [1, 2, 0, 0], sizes = [1, 1, 64, 32], strides = [1, 1, 1, 1]} : vector<3x3x64x32xbf16> to vector<1x1x64x32xbf16>
    %37 = vector.shape_cast %36 : vector<1x1x64x32xbf16> to vector<64x32xbf16>
    %cst_12 = arith.constant dense<0.000000e+00> : vector<256x32xf32>
    %38 = tpu.matmul %35, %37, %cst_12 {dimension_numbers = #tpu.dot_dimension_numbers<[1], [0], [0], [1], [0, 0, 1, 1], [], []>} : vector<256x64xbf16>, vector<64x32xbf16>, vector<256x32xf32> -> vector<256x32xf32>
    %39 = arith.addf %33, %38 : vector<256x32xf32>
    %40 = vector.extract_strided_slice %1 {offsets = [2, 0, 0], sizes = [16, 16, 64], strides = [1, 1, 1]} : vector<18x18x64xbf16> to vector<16x16x64xbf16>
    %41 = vector.shape_cast %40 : vector<16x16x64xbf16> to vector<256x64xbf16>
    %42 = vector.extract_strided_slice %2 {offsets = [2, 0, 0, 0], sizes = [1, 1, 64, 32], strides = [1, 1, 1, 1]} : vector<3x3x64x32xbf16> to vector<1x1x64x32xbf16>
    %43 = vector.shape_cast %42 : vector<1x1x64x32xbf16> to vector<64x32xbf16>
    %cst_13 = arith.constant dense<0.000000e+00> : vector<256x32xf32>
    %44 = tpu.matmul %41, %43, %cst_13 {dimension_numbers = #tpu.dot_dimension_numbers<[1], [0], [0], [1], [0, 0, 1, 1], [], []>} : vector<256x64xbf16>, vector<64x32xbf16>, vector<256x32xf32> -> vector<256x32xf32>
    %45 = arith.addf %39, %44 : vector<256x32xf32>
    %46 = vector.extract_strided_slice %1 {offsets = [2, 1, 0], sizes = [16, 16, 64], strides = [1, 1, 1]} : vector<18x18x64xbf16> to vector<16x16x64xbf16>
    %47 = vector.shape_cast %46 : vector<16x16x64xbf16> to vector<256x64xbf16>
    %48 = vector.extract_strided_slice %2 {offsets = [2, 1, 0, 0], sizes = [1, 1, 64, 32], strides = [1, 1, 1, 1]} : vector<3x3x64x32xbf16> to vector<1x1x64x32xbf16>
    %49 = vector.shape_cast %48 : vector<1x1x64x32xbf16> to vector<64x32xbf16>
    %cst_14 = arith.constant dense<0.000000e+00> : vector<256x32xf32>
    %50 = tpu.matmul %47, %49, %cst_14 {dimension_numbers = #tpu.dot_dimension_numbers<[1], [0], [0], [1], [0, 0, 1, 1], [], []>} : vector<256x64xbf16>, vector<64x32xbf16>, vector<256x32xf32> -> vector<256x32xf32>
    %51 = arith.addf %45, %50 : vector<256x32xf32>
    %52 = vector.extract_strided_slice %1 {offsets = [2, 2, 0], sizes = [16, 16, 64], strides = [1, 1, 1]} : vector<18x18x64xbf16> to vector<16x16x64xbf16>
    %53 = vector.shape_cast %52 : vector<16x16x64xbf16> to vector<256x64xbf16>
    %54 = vector.extract_strided_slice %2 {offsets = [2, 2, 0, 0], sizes = [1, 1, 64, 32], strides = [1, 1, 1, 1]} : vector<3x3x64x32xbf16> to vector<1x1x64x32xbf16>
    %55 = vector.shape_cast %54 : vector<1x1x64x32xbf16> to vector<64x32xbf16>
    %cst_15 = arith.constant dense<0.000000e+00> : vector<256x32xf32>
    %56 = tpu.matmul %53, %55, %cst_15 {dimension_numbers = #tpu.dot_dimension_numbers<[1], [0], [0], [1], [0, 0, 1, 1], [], []>} : vector<256x64xbf16>, vector<64x32xbf16>, vector<256x32xf32> -> vector<256x32xf32>
    %57 = arith.addf %51, %56 : vector<256x32xf32>
    %c0_16 = arith.constant 0 : index
    %c0_17 = arith.constant 0 : index
    %58 = vector.load %arg4[%c0_16, %c0_17] : memref<1x32xf32, #tpu.memory_space<vmem>>, vector<1x32xf32>
    %59 = vector.broadcast %58 : vector<1x32xf32> to vector<256x32xf32>
    %60 = arith.addf %57, %59 : vector<256x32xf32>
    %61 = arith.truncf %60 : vector<256x32xf32> to vector<256x32xbf16>
    %c0_18 = arith.constant 0 : index
    %c0_19 = arith.constant 0 : index
    %c0_20 = arith.constant 0 : index
    %62 = vector.load %arg5[%c0_18, %c0_19, %c0_20] : memref<1x256x32xbf16, #tpu.memory_space<vmem>>, vector<1x256x32xbf16>
    %63 = vector.shape_cast %62 : vector<1x256x32xbf16> to vector<256x32xbf16>
    %64 = vector.shape_cast %61 : vector<256x32xbf16> to vector<1x256x32xbf16>
    tpu.vector_store %arg5[%c0_18, %c0_19, %c0_20], %64 {strides = array<i32>} : memref<1x256x32xbf16, #tpu.memory_space<vmem>>, vector<1x256x32xbf16>,
    %cst_21 = arith.constant dense<0.000000e+00> : vector<32xf32>
    %65 = vector.multi_reduction <add>, %60, %cst_21 [0] : vector<256x32xf32> to vector<32xf32>
    %66 = vector.shape_cast %65 : vector<32xf32> to vector<1x32xf32>
    %c0_22 = arith.constant 0 : index
    %c0_23 = arith.constant 0 : index
    %c0_24 = arith.constant 0 : index
    %67 = vector.load %arg6[%c0_22, %c0_23, %c0_24] : memref<1x1x32xf32, #tpu.memory_space<vmem>>, vector<1x1x32xf32>
    %68 = vector.shape_cast %67 : vector<1x1x32xf32> to vector<1x32xf32>
    %69 = vector.shape_cast %66 : vector<1x32xf32> to vector<1x1x32xf32>
    tpu.vector_store %arg6[%c0_22, %c0_23, %c0_24], %69 {strides = array<i32>} : memref<1x1x32xf32, #tpu.memory_space<vmem>>, vector<1x1x32xf32>,
    %70 = arith.mulf %60, %60 : vector<256x32xf32>
    %cst_25 = arith.constant dense<0.000000e+00> : vector<32xf32>
    %71 = vector.multi_reduction <add>, %70, %cst_25 [0] : vector<256x32xf32> to vector<32xf32>
    %72 = vector.shape_cast %71 : vector<32xf32> to vector<1x32xf32>
    %c0_26 = arith.constant 0 : index
    %c0_27 = arith.constant 0 : index
    %c0_28 = arith.constant 0 : index
    %73 = vector.load %arg7[%c0_26, %c0_27, %c0_28] : memref<1x1x32xf32, #tpu.memory_space<vmem>>, vector<1x1x32xf32>
    %74 = vector.shape_cast %73 : vector<1x1x32xf32> to vector<1x32xf32>
    %75 = vector.shape_cast %72 : vector<1x32xf32> to vector<1x1x32xf32>
    tpu.vector_store %arg7[%c0_26, %c0_27, %c0_28], %75 {strides = array<i32>} : memref<1x1x32xf32, #tpu.memory_space<vmem>>, vector<1x1x32xf32>,
    return
  }
  func.func @transform_0(%arg0: i32, %arg1: i32) -> (i32, i32, i32, i32) {
    %c0_i32 = arith.constant 0 : i32
    %c0_i32_0 = arith.constant 0 : i32
    %c0_i32_1 = arith.constant 0 : i32
    %c0_i32_2 = arith.constant 0 : i32
    return %arg1, %c0_i32, %c0_i32_0, %c0_i32_1 : i32, i32, i32, i32
  }
  func.func @transform_1(%arg0: i32, %arg1: i32) -> (i32, i32, i32, i32) {
    %c0_i32 = arith.constant 0 : i32
    %c0_i32_0 = arith.constant 0 : i32
    %c0_i32_1 = arith.constant 0 : i32
    %c0_i32_2 = arith.constant 0 : i32
    return %c0_i32, %c0_i32_0, %c0_i32_1, %arg0 : i32, i32, i32, i32
  }
  func.func @transform_2(%arg0: i32, %arg1: i32) -> (i32, i32) {
    %c0_i32 = arith.constant 0 : i32
    %c0_i32_0 = arith.constant 0 : i32
    return %c0_i32, %arg0 : i32, i32
  }
  func.func @transform_3(%arg0: i32, %arg1: i32) -> (i32, i32, i32) {
    %c0_i32 = arith.constant 0 : i32
    %c0_i32_0 = arith.constant 0 : i32
    return %arg1, %c0_i32, %arg0 : i32, i32, i32
  }
  func.func @transform_4(%arg0: i32, %arg1: i32) -> (i32, i32, i32) {
    %c0_i32 = arith.constant 0 : i32
    %c0_i32_0 = arith.constant 0 : i32
    return %arg1, %c0_i32, %arg0 : i32, i32, i32
  }
  func.func @transform_5(%arg0: i32, %arg1: i32) -> (i32, i32, i32) {
    %c0_i32 = arith.constant 0 : i32
    %c0_i32_0 = arith.constant 0 : i32
    return %arg1, %c0_i32, %arg0 : i32, i32, i32
  }
}

module attributes {stable_mosaic.version = 11 : i64} {
  func.func @_scale_shift_relu_kernel(%arg0: i32, %arg1: memref<256x32xbf16, #tpu.memory_space<vmem>>, %arg2: memref<1x32xf32, #tpu.memory_space<vmem>>, %arg3: memref<1x32xf32, #tpu.memory_space<vmem>>, %arg4: memref<256x32xbf16, #tpu.memory_space<vmem>>) attributes {dimension_semantics = [#tpu.dimension_semantics<parallel>], iteration_bounds = array<i64: 2>, scalar_prefetch = 0 : i64, scratch_operands = 0 : i64, tpu.core_type = #tpu.core_type<tc>, window_params = [{transform_indices = @transform_0, window_bounds = array<i64: 256, 32>}, {pipeline_mode = #tpu.pipeline_mode<synchronous>, transform_indices = @transform_1, window_bounds = array<i64: 1, 32>}, {pipeline_mode = #tpu.pipeline_mode<synchronous>, transform_indices = @transform_2, window_bounds = array<i64: 1, 32>}, {transform_indices = @transform_3, window_bounds = array<i64: 256, 32>}]} {
    %c0 = arith.constant 0 : index
    %c0_0 = arith.constant 0 : index
    %0 = vector.load %arg1[%c0, %c0_0] : memref<256x32xbf16, #tpu.memory_space<vmem>>, vector<256x32xbf16>
    %1 = arith.extf %0 : vector<256x32xbf16> to vector<256x32xf32>
    %c0_1 = arith.constant 0 : index
    %c0_2 = arith.constant 0 : index
    %2 = vector.load %arg2[%c0_1, %c0_2] : memref<1x32xf32, #tpu.memory_space<vmem>>, vector<1x32xf32>
    %3 = vector.broadcast %2 : vector<1x32xf32> to vector<256x32xf32>
    %4 = arith.mulf %1, %3 : vector<256x32xf32>
    %c0_3 = arith.constant 0 : index
    %c0_4 = arith.constant 0 : index
    %5 = vector.load %arg3[%c0_3, %c0_4] : memref<1x32xf32, #tpu.memory_space<vmem>>, vector<1x32xf32>
    %6 = vector.broadcast %5 : vector<1x32xf32> to vector<256x32xf32>
    %7 = arith.addf %4, %6 : vector<256x32xf32>
    %cst = arith.constant 0.000000e+00 : f32
    %8 = vector.broadcast %cst : f32 to vector<256x32xf32>
    %9 = arith.maximumf %7, %8 : vector<256x32xf32>
    %10 = arith.truncf %9 : vector<256x32xf32> to vector<256x32xbf16>
    %c0_5 = arith.constant 0 : index
    %c0_6 = arith.constant 0 : index
    %11 = vector.load %arg4[%c0_5, %c0_6] : memref<256x32xbf16, #tpu.memory_space<vmem>>, vector<256x32xbf16>
    tpu.vector_store %arg4[%c0_5, %c0_6], %10 {strides = array<i32>} : memref<256x32xbf16, #tpu.memory_space<vmem>>, vector<256x32xbf16>,
    return
  }
  func.func @transform_0(%arg0: i32) -> (i32, i32) {
    %c0_i32 = arith.constant 0 : i32
    %c0_i32_0 = arith.constant 0 : i32
    return %arg0, %c0_i32 : i32, i32
  }
  func.func @transform_1(%arg0: i32) -> (i32, i32) {
    %c0_i32 = arith.constant 0 : i32
    %c0_i32_0 = arith.constant 0 : i32
    %c0_i32_1 = arith.constant 0 : i32
    return %c0_i32, %c0_i32_0 : i32, i32
  }
  func.func @transform_2(%arg0: i32) -> (i32, i32) {
    %c0_i32 = arith.constant 0 : i32
    %c0_i32_0 = arith.constant 0 : i32
    %c0_i32_1 = arith.constant 0 : i32
    return %c0_i32, %c0_i32_0 : i32, i32
  }
  func.func @transform_3(%arg0: i32) -> (i32, i32) {
    %c0_i32 = arith.constant 0 : i32
    %c0_i32_0 = arith.constant 0 : i32
    return %arg0, %c0_i32 : i32, i32
  }
}

module attributes {stable_mosaic.version = 11 : i64} {
  func.func @kernel(%arg0: i32, %arg1: i32, %arg2: memref<1x18x18x32xbf16, #tpu.memory_space<vmem>>, %arg3: memref<3x3x32x32xbf16, #tpu.memory_space<vmem>>, %arg4: memref<1x32xf32, #tpu.memory_space<vmem>>, %arg5: memref<1x256x32xbf16, #tpu.memory_space<vmem>>, %arg6: memref<1x1x32xf32, #tpu.memory_space<vmem>>, %arg7: memref<1x1x32xf32, #tpu.memory_space<vmem>>) attributes {dimension_semantics = [#tpu.dimension_semantics<parallel>, #tpu.dimension_semantics<parallel>], iteration_bounds = array<i64: 1, 2>, scalar_prefetch = 0 : i64, scratch_operands = 0 : i64, tpu.core_type = #tpu.core_type<tc>, window_params = [{transform_indices = @transform_0, window_bounds = array<i64: 1, 18, 18, 32>}, {transform_indices = @transform_1, window_bounds = array<i64: 3, 3, 32, 32>}, {transform_indices = @transform_2, window_bounds = array<i64: 1, 32>}, {transform_indices = @transform_3, window_bounds = array<i64: 1, 256, 32>}, {transform_indices = @transform_4, window_bounds = array<i64: 1, 1, 32>}, {transform_indices = @transform_5, window_bounds = array<i64: 1, 1, 32>}]} {
    %c0 = arith.constant 0 : index
    %c0_0 = arith.constant 0 : index
    %c0_1 = arith.constant 0 : index
    %c0_2 = arith.constant 0 : index
    %0 = vector.load %arg2[%c0, %c0_0, %c0_1, %c0_2] : memref<1x18x18x32xbf16, #tpu.memory_space<vmem>>, vector<1x18x18x32xbf16>
    %1 = vector.shape_cast %0 : vector<1x18x18x32xbf16> to vector<18x18x32xbf16>
    %c0_3 = arith.constant 0 : index
    %c0_4 = arith.constant 0 : index
    %c0_5 = arith.constant 0 : index
    %c0_6 = arith.constant 0 : index
    %2 = vector.load %arg3[%c0_3, %c0_4, %c0_5, %c0_6] : memref<3x3x32x32xbf16, #tpu.memory_space<vmem>>, vector<3x3x32x32xbf16>
    %cst = arith.constant 0.000000e+00 : f32
    %3 = vector.broadcast %cst : f32 to vector<256x32xf32>
    %4 = vector.extract_strided_slice %1 {offsets = [0, 0, 0], sizes = [16, 16, 32], strides = [1, 1, 1]} : vector<18x18x32xbf16> to vector<16x16x32xbf16>
    %5 = vector.shape_cast %4 : vector<16x16x32xbf16> to vector<256x32xbf16>
    %6 = vector.extract_strided_slice %2 {offsets = [0, 0, 0, 0], sizes = [1, 1, 32, 32], strides = [1, 1, 1, 1]} : vector<3x3x32x32xbf16> to vector<1x1x32x32xbf16>
    %7 = vector.shape_cast %6 : vector<1x1x32x32xbf16> to vector<32x32xbf16>
    %cst_7 = arith.constant dense<0.000000e+00> : vector<256x32xf32>
    %8 = tpu.matmul %5, %7, %cst_7 {dimension_numbers = #tpu.dot_dimension_numbers<[1], [0], [0], [1], [0, 0, 1, 1], [], []>} : vector<256x32xbf16>, vector<32x32xbf16>, vector<256x32xf32> -> vector<256x32xf32>
    %9 = arith.addf %3, %8 : vector<256x32xf32>
    %10 = vector.extract_strided_slice %1 {offsets = [0, 1, 0], sizes = [16, 16, 32], strides = [1, 1, 1]} : vector<18x18x32xbf16> to vector<16x16x32xbf16>
    %11 = vector.shape_cast %10 : vector<16x16x32xbf16> to vector<256x32xbf16>
    %12 = vector.extract_strided_slice %2 {offsets = [0, 1, 0, 0], sizes = [1, 1, 32, 32], strides = [1, 1, 1, 1]} : vector<3x3x32x32xbf16> to vector<1x1x32x32xbf16>
    %13 = vector.shape_cast %12 : vector<1x1x32x32xbf16> to vector<32x32xbf16>
    %cst_8 = arith.constant dense<0.000000e+00> : vector<256x32xf32>
    %14 = tpu.matmul %11, %13, %cst_8 {dimension_numbers = #tpu.dot_dimension_numbers<[1], [0], [0], [1], [0, 0, 1, 1], [], []>} : vector<256x32xbf16>, vector<32x32xbf16>, vector<256x32xf32> -> vector<256x32xf32>
    %15 = arith.addf %9, %14 : vector<256x32xf32>
    %16 = vector.extract_strided_slice %1 {offsets = [0, 2, 0], sizes = [16, 16, 32], strides = [1, 1, 1]} : vector<18x18x32xbf16> to vector<16x16x32xbf16>
    %17 = vector.shape_cast %16 : vector<16x16x32xbf16> to vector<256x32xbf16>
    %18 = vector.extract_strided_slice %2 {offsets = [0, 2, 0, 0], sizes = [1, 1, 32, 32], strides = [1, 1, 1, 1]} : vector<3x3x32x32xbf16> to vector<1x1x32x32xbf16>
    %19 = vector.shape_cast %18 : vector<1x1x32x32xbf16> to vector<32x32xbf16>
    %cst_9 = arith.constant dense<0.000000e+00> : vector<256x32xf32>
    %20 = tpu.matmul %17, %19, %cst_9 {dimension_numbers = #tpu.dot_dimension_numbers<[1], [0], [0], [1], [0, 0, 1, 1], [], []>} : vector<256x32xbf16>, vector<32x32xbf16>, vector<256x32xf32> -> vector<256x32xf32>
    %21 = arith.addf %15, %20 : vector<256x32xf32>
    %22 = vector.extract_strided_slice %1 {offsets = [1, 0, 0], sizes = [16, 16, 32], strides = [1, 1, 1]} : vector<18x18x32xbf16> to vector<16x16x32xbf16>
    %23 = vector.shape_cast %22 : vector<16x16x32xbf16> to vector<256x32xbf16>
    %24 = vector.extract_strided_slice %2 {offsets = [1, 0, 0, 0], sizes = [1, 1, 32, 32], strides = [1, 1, 1, 1]} : vector<3x3x32x32xbf16> to vector<1x1x32x32xbf16>
    %25 = vector.shape_cast %24 : vector<1x1x32x32xbf16> to vector<32x32xbf16>
    %cst_10 = arith.constant dense<0.000000e+00> : vector<256x32xf32>
    %26 = tpu.matmul %23, %25, %cst_10 {dimension_numbers = #tpu.dot_dimension_numbers<[1], [0], [0], [1], [0, 0, 1, 1], [], []>} : vector<256x32xbf16>, vector<32x32xbf16>, vector<256x32xf32> -> vector<256x32xf32>
    %27 = arith.addf %21, %26 : vector<256x32xf32>
    %28 = vector.extract_strided_slice %1 {offsets = [1, 1, 0], sizes = [16, 16, 32], strides = [1, 1, 1]} : vector<18x18x32xbf16> to vector<16x16x32xbf16>
    %29 = vector.shape_cast %28 : vector<16x16x32xbf16> to vector<256x32xbf16>
    %30 = vector.extract_strided_slice %2 {offsets = [1, 1, 0, 0], sizes = [1, 1, 32, 32], strides = [1, 1, 1, 1]} : vector<3x3x32x32xbf16> to vector<1x1x32x32xbf16>
    %31 = vector.shape_cast %30 : vector<1x1x32x32xbf16> to vector<32x32xbf16>
    %cst_11 = arith.constant dense<0.000000e+00> : vector<256x32xf32>
    %32 = tpu.matmul %29, %31, %cst_11 {dimension_numbers = #tpu.dot_dimension_numbers<[1], [0], [0], [1], [0, 0, 1, 1], [], []>} : vector<256x32xbf16>, vector<32x32xbf16>, vector<256x32xf32> -> vector<256x32xf32>
    %33 = arith.addf %27, %32 : vector<256x32xf32>
    %34 = vector.extract_strided_slice %1 {offsets = [1, 2, 0], sizes = [16, 16, 32], strides = [1, 1, 1]} : vector<18x18x32xbf16> to vector<16x16x32xbf16>
    %35 = vector.shape_cast %34 : vector<16x16x32xbf16> to vector<256x32xbf16>
    %36 = vector.extract_strided_slice %2 {offsets = [1, 2, 0, 0], sizes = [1, 1, 32, 32], strides = [1, 1, 1, 1]} : vector<3x3x32x32xbf16> to vector<1x1x32x32xbf16>
    %37 = vector.shape_cast %36 : vector<1x1x32x32xbf16> to vector<32x32xbf16>
    %cst_12 = arith.constant dense<0.000000e+00> : vector<256x32xf32>
    %38 = tpu.matmul %35, %37, %cst_12 {dimension_numbers = #tpu.dot_dimension_numbers<[1], [0], [0], [1], [0, 0, 1, 1], [], []>} : vector<256x32xbf16>, vector<32x32xbf16>, vector<256x32xf32> -> vector<256x32xf32>
    %39 = arith.addf %33, %38 : vector<256x32xf32>
    %40 = vector.extract_strided_slice %1 {offsets = [2, 0, 0], sizes = [16, 16, 32], strides = [1, 1, 1]} : vector<18x18x32xbf16> to vector<16x16x32xbf16>
    %41 = vector.shape_cast %40 : vector<16x16x32xbf16> to vector<256x32xbf16>
    %42 = vector.extract_strided_slice %2 {offsets = [2, 0, 0, 0], sizes = [1, 1, 32, 32], strides = [1, 1, 1, 1]} : vector<3x3x32x32xbf16> to vector<1x1x32x32xbf16>
    %43 = vector.shape_cast %42 : vector<1x1x32x32xbf16> to vector<32x32xbf16>
    %cst_13 = arith.constant dense<0.000000e+00> : vector<256x32xf32>
    %44 = tpu.matmul %41, %43, %cst_13 {dimension_numbers = #tpu.dot_dimension_numbers<[1], [0], [0], [1], [0, 0, 1, 1], [], []>} : vector<256x32xbf16>, vector<32x32xbf16>, vector<256x32xf32> -> vector<256x32xf32>
    %45 = arith.addf %39, %44 : vector<256x32xf32>
    %46 = vector.extract_strided_slice %1 {offsets = [2, 1, 0], sizes = [16, 16, 32], strides = [1, 1, 1]} : vector<18x18x32xbf16> to vector<16x16x32xbf16>
    %47 = vector.shape_cast %46 : vector<16x16x32xbf16> to vector<256x32xbf16>
    %48 = vector.extract_strided_slice %2 {offsets = [2, 1, 0, 0], sizes = [1, 1, 32, 32], strides = [1, 1, 1, 1]} : vector<3x3x32x32xbf16> to vector<1x1x32x32xbf16>
    %49 = vector.shape_cast %48 : vector<1x1x32x32xbf16> to vector<32x32xbf16>
    %cst_14 = arith.constant dense<0.000000e+00> : vector<256x32xf32>
    %50 = tpu.matmul %47, %49, %cst_14 {dimension_numbers = #tpu.dot_dimension_numbers<[1], [0], [0], [1], [0, 0, 1, 1], [], []>} : vector<256x32xbf16>, vector<32x32xbf16>, vector<256x32xf32> -> vector<256x32xf32>
    %51 = arith.addf %45, %50 : vector<256x32xf32>
    %52 = vector.extract_strided_slice %1 {offsets = [2, 2, 0], sizes = [16, 16, 32], strides = [1, 1, 1]} : vector<18x18x32xbf16> to vector<16x16x32xbf16>
    %53 = vector.shape_cast %52 : vector<16x16x32xbf16> to vector<256x32xbf16>
    %54 = vector.extract_strided_slice %2 {offsets = [2, 2, 0, 0], sizes = [1, 1, 32, 32], strides = [1, 1, 1, 1]} : vector<3x3x32x32xbf16> to vector<1x1x32x32xbf16>
    %55 = vector.shape_cast %54 : vector<1x1x32x32xbf16> to vector<32x32xbf16>
    %cst_15 = arith.constant dense<0.000000e+00> : vector<256x32xf32>
    %56 = tpu.matmul %53, %55, %cst_15 {dimension_numbers = #tpu.dot_dimension_numbers<[1], [0], [0], [1], [0, 0, 1, 1], [], []>} : vector<256x32xbf16>, vector<32x32xbf16>, vector<256x32xf32> -> vector<256x32xf32>
    %57 = arith.addf %51, %56 : vector<256x32xf32>
    %c0_16 = arith.constant 0 : index
    %c0_17 = arith.constant 0 : index
    %58 = vector.load %arg4[%c0_16, %c0_17] : memref<1x32xf32, #tpu.memory_space<vmem>>, vector<1x32xf32>
    %59 = vector.broadcast %58 : vector<1x32xf32> to vector<256x32xf32>
    %60 = arith.addf %57, %59 : vector<256x32xf32>
    %61 = arith.truncf %60 : vector<256x32xf32> to vector<256x32xbf16>
    %c0_18 = arith.constant 0 : index
    %c0_19 = arith.constant 0 : index
    %c0_20 = arith.constant 0 : index
    %62 = vector.load %arg5[%c0_18, %c0_19, %c0_20] : memref<1x256x32xbf16, #tpu.memory_space<vmem>>, vector<1x256x32xbf16>
    %63 = vector.shape_cast %62 : vector<1x256x32xbf16> to vector<256x32xbf16>
    %64 = vector.shape_cast %61 : vector<256x32xbf16> to vector<1x256x32xbf16>
    tpu.vector_store %arg5[%c0_18, %c0_19, %c0_20], %64 {strides = array<i32>} : memref<1x256x32xbf16, #tpu.memory_space<vmem>>, vector<1x256x32xbf16>,
    %cst_21 = arith.constant dense<0.000000e+00> : vector<32xf32>
    %65 = vector.multi_reduction <add>, %60, %cst_21 [0] : vector<256x32xf32> to vector<32xf32>
    %66 = vector.shape_cast %65 : vector<32xf32> to vector<1x32xf32>
    %c0_22 = arith.constant 0 : index
    %c0_23 = arith.constant 0 : index
    %c0_24 = arith.constant 0 : index
    %67 = vector.load %arg6[%c0_22, %c0_23, %c0_24] : memref<1x1x32xf32, #tpu.memory_space<vmem>>, vector<1x1x32xf32>
    %68 = vector.shape_cast %67 : vector<1x1x32xf32> to vector<1x32xf32>
    %69 = vector.shape_cast %66 : vector<1x32xf32> to vector<1x1x32xf32>
    tpu.vector_store %arg6[%c0_22, %c0_23, %c0_24], %69 {strides = array<i32>} : memref<1x1x32xf32, #tpu.memory_space<vmem>>, vector<1x1x32xf32>,
    %70 = arith.mulf %60, %60 : vector<256x32xf32>
    %cst_25 = arith.constant dense<0.000000e+00> : vector<32xf32>
    %71 = vector.multi_reduction <add>, %70, %cst_25 [0] : vector<256x32xf32> to vector<32xf32>
    %72 = vector.shape_cast %71 : vector<32xf32> to vector<1x32xf32>
    %c0_26 = arith.constant 0 : index
    %c0_27 = arith.constant 0 : index
    %c0_28 = arith.constant 0 : index
    %73 = vector.load %arg7[%c0_26, %c0_27, %c0_28] : memref<1x1x32xf32, #tpu.memory_space<vmem>>, vector<1x1x32xf32>
    %74 = vector.shape_cast %73 : vector<1x1x32xf32> to vector<1x32xf32>
    %75 = vector.shape_cast %72 : vector<1x32xf32> to vector<1x1x32xf32>
    tpu.vector_store %arg7[%c0_26, %c0_27, %c0_28], %75 {strides = array<i32>} : memref<1x1x32xf32, #tpu.memory_space<vmem>>, vector<1x1x32xf32>,
    return
  }
  func.func @transform_0(%arg0: i32, %arg1: i32) -> (i32, i32, i32, i32) {
    %c0_i32 = arith.constant 0 : i32
    %c0_i32_0 = arith.constant 0 : i32
    %c0_i32_1 = arith.constant 0 : i32
    %c0_i32_2 = arith.constant 0 : i32
    return %arg1, %c0_i32, %c0_i32_0, %c0_i32_1 : i32, i32, i32, i32
  }
  func.func @transform_1(%arg0: i32, %arg1: i32) -> (i32, i32, i32, i32) {
    %c0_i32 = arith.constant 0 : i32
    %c0_i32_0 = arith.constant 0 : i32
    %c0_i32_1 = arith.constant 0 : i32
    %c0_i32_2 = arith.constant 0 : i32
    return %c0_i32, %c0_i32_0, %c0_i32_1, %arg0 : i32, i32, i32, i32
  }
  func.func @transform_2(%arg0: i32, %arg1: i32) -> (i32, i32) {
    %c0_i32 = arith.constant 0 : i32
    %c0_i32_0 = arith.constant 0 : i32
    return %c0_i32, %arg0 : i32, i32
  }
  func.func @transform_3(%arg0: i32, %arg1: i32) -> (i32, i32, i32) {
    %c0_i32 = arith.constant 0 : i32
    %c0_i32_0 = arith.constant 0 : i32
    return %arg1, %c0_i32, %arg0 : i32, i32, i32
  }
  func.func @transform_4(%arg0: i32, %arg1: i32) -> (i32, i32, i32) {
    %c0_i32 = arith.constant 0 : i32
    %c0_i32_0 = arith.constant 0 : i32
    return %arg1, %c0_i32, %arg0 : i32, i32, i32
  }
  func.func @transform_5(%arg0: i32, %arg1: i32) -> (i32, i32, i32) {
    %c0_i32 = arith.constant 0 : i32
    %c0_i32_0 = arith.constant 0 : i32
    return %arg1, %c0_i32, %arg0 : i32, i32, i32
  }
}

</mosaic_0001>

<llo_original>
// kernel: tile.9
$region0: #{tile.9}
  %s0 = inlined_call_operand.vmem [shape: f32[4,32], index: 0, kind: input, shape index: {}]
  %s1 = inlined_call_operand.vmem [shape: f32[1,128], index: 1, kind: output, shape index: {}]
  $region1: #{tile.9} parent=0
    #allocation0 [shape = 'u8[4096]{0}', space=vmem, size = 0x1000, scoped, tag = 'scoped mem for output reshape']
    #allocation1 [shape = 'u8[4096]{0}', space=vmem, size = 0x1000, scoped, tag = 'scoped mem for input reshape']
    %s3 = sshll.u32 1, 4
    %s4 = ssub.s32 %s3, 1
    %v5 = vld [vmem:[%s0] sm:%s4]
    %6 = vst [vmem:[#allocation1] sm:%s4] %v5
    %v7 = vld [vmem:[#allocation1] sm:$0x1]
    %vm8 = vcmask 261120
    %9 = vst.msk [vmem:[#allocation0] sm:$0x1] %vm8, %v7
    %s10 = scalar_lea.vmem [#allocation1], 3
    %v11 = vld [vmem:[%s10] sm:$0x1]
    %12 = vrot.lane.b32.xlu0 %v11, 96
    %v13 = vpop.permute.xlu0 %12
    %vm14 = vcmask 1048320
    %15 = vst.msk [vmem:[#allocation0] sm:$0x1] %vm14, %v13
    %s16 = scalar_lea.vmem [#allocation1], 2
    %v17 = vld [vmem:[%s16] sm:$0x1]
    %18 = vrot.lane.b32.xlu0 %v17, 64
    %v19 = vpop.permute.xlu0 %18
    %vm20 = vcmask 785920
    %21 = vst.msk [vmem:[#allocation0] sm:$0x1] %vm20, %v19
    %s22 = scalar_lea.vmem [#allocation1], 1
    %v23 = vld [vmem:[%s22] sm:$0x1]
    %24 = vrot.lane.b32.xlu0 %v23, 32
    %v25 = vpop.permute.xlu0 %24
    %vm26 = vcmask 523520
    %27 = vst.msk [vmem:[#allocation0] sm:$0x1] %vm26, %v25
    %s29 = sshll.u32 1, 1
    %s30 = ssub.s32 %s29, 1
    %v32 = vld [vmem:[#allocation0] sm:%s30]
    %s33 = sshll.u32 1, 1
    %s34 = ssub.s32 %s33, 1
    %35 = vst [vmem:[%s1] sm:%s34] %v32

// kernel: tile.8
$region0: #{tile.8}
  #allocation0 [shape = 's32[1]{0}', space=sflag, size = 0x4, scoped, tag = 'scoped memory for tile.8']
  %s0 = inlined_call_operand.vmem [shape: f32[32], index: 0, kind: input, shape index: {}]
  %s1 = inlined_call_operand.vmem [shape: f32[4,32], index: 1, kind: output, shape index: {}]
  // Predicated region
  $region2: #{tile.8} parent=0 // pred_check
    _
  $region3: #{tile.8} parent=0 // pred_check_branch
    %3 = sbr.rel (0) target = $region5
  $region4: #{tile.8} parent=0 // pred_region
    _
  $region5: #{tile.8} parent=0 // pred_fallthru
    _
  %v4 = vld [vmem:[%s0] ss:$0 sm:$0xff]
  %5 = vst [vmem:[%s1] sm:$0xf] %v4

// kernel: up_forward.5
$region0: #{up_forward.5}
  #allocation0 [shape = 'u32[]', space=smem, size = 0x4, offset = 0x4, fixed_abs, tag = 'smem constant byte address 0x4 - core index']
  #allocation1 [shape = 'u32[144,128]{1,0:T(1,128)}', space=vmem, size = 0x12000, scoped, tag = 'internal scratch']
  #allocation2 [shape = 'f32[64,128]{1,0:T(8,128)}', space=vmem, size = 0x8000, scoped, tag = 'scratch operand']
  %s0 = inlined_call_operand.vmem [shape: bf16[128,64], index: 0, kind: input, shape index: {}]
  %s1 = inlined_call_operand.vmem [shape: bf16[64,128], index: 1, kind: input, shape index: {}]
  %s2 = inlined_call_operand.vmem [shape: f32[1,128], index: 2, kind: input, shape index: {}]
  %s3 = inlined_call_operand.vmem [shape: bf16[128,128], index: 3, kind: output, shape index: {}]
  %s4 = sld [smem:[#allocation0]]
  $region53: #{up_forward.5} parent=0
    _
  %s6 = ssub.s32 1, %s4
  %s7 = scalar_select 0, %s6, %s4
  loop: start=0, step=1, limit=4
  $region2: #{up_forward.5} parent=0 // loop_pre_header
    _
  $region3: #{up_forward.5} parent=0 // loop_header
    %s9 = sphi 0, %s13
    %p10 = scmp.ge.s32.totalorder %s9, 4
    %s16 = sphi 0, %s35
    %s17 = sphi 0, %s31
    %s18 = sphi 0, %s27
    %s19 = sphi 0, %s16
    %s20 = sphi 0, %s17
    %s21 = sphi 0, %s18
    %s22 = sphi 0, %s19
    %s23 = sphi 0, %s20
    %s24 = sphi 0, %s21
    %s40 = sphi 0, %s42
    %s43 = sphi 0, %s40
    %s44 = sphi 0, %s43
    %s60 = sphi 0, %s44
    %s68 = sphi 0, %s70
    %s71 = sphi 0, %s68
    %s72 = sphi 0, %s71
    %s88 = sphi 0, %s72
    %s94 = sphi 0, %s96
    %s97 = sphi 0, %s94
    %s98 = sphi 0, %s97
    %s114 = sphi 0, %s98
    %s122 = sphi 0, %s124
    %s125 = sphi 0, %s122
    %s126 = sphi 0, %s125
    %s142 = sphi 0, %s126
  $region4: #{up_forward.5} parent=0 // loop_header_branch
    %12 = sbr.rel (%p10) target = $region8
  $region5: #{up_forward.5} parent=0 // loop_body
    %s14 = ssub.s32 %s9, 1
    %s15 = ssub.s32 %s9, 2
    %s25 = sadd.s32 1, %s18
    %p26 = scmp.ge.s32.totalorder %s25, 1
    %s27 = scalar_select %p26, 0, %s25
    %s28 = sadd.s32 1, %s17
    %s29 = scalar_select %p26, %s28, %s17
    %p30 = scmp.ge.s32.totalorder %s29, 1
    %s31 = scalar_select %p30, 0, %s29
    %s32 = sadd.s32 1, %s16
    %s33 = scalar_select %p30, %s32, %s16
    %p34 = scmp.ge.s32.totalorder %s33, 2
    %s35 = scalar_select %p34, 0, %s33
    %s36 = ssub.s32 %s16, %s35
    %s37 = ssub.s32 %s18, %s27
    %s38 = sor.u32 %s36, %s37
    %p39 = scmp.eq.s32.totalorder %s38, 0
    %s41 = sadd.s32 %s40, 1
    %s42 = scalar_select %p39, %s40, %s41
    %p45 = pneg %p39
    %p46 = scmp.eq.s32.totalorder %s9, 1
    %p47 = por %p45, %p46
    %p48 = scmp.ne.s32.totalorder %s40, %s43
    %p49 = scmp.eq.s32.totalorder %s9, 0
    %p50 = por %p48, %p49
    %p51 = scmp.ne.s32.totalorder %s40, %s43
    %p52 = scmp.eq.s32.totalorder %s14, 1
    %p53 = por %p51, %p52
    %p54 = scmp.ne.s32.totalorder %s43, %s44
    %p55 = scmp.eq.s32.totalorder %s14, 0
    %p56 = por %p54, %p55
    %p57 = scmp.ne.s32.totalorder %s43, %s44
    %p58 = scmp.eq.s32.totalorder %s15, 1
    %p59 = por %p57, %p58
    %p61 = scmp.ne.s32.totalorder %s44, %s60
    %p62 = scmp.eq.s32.totalorder %s15, 0
    %p63 = por %p61, %p62
    %s64 = ssub.s32 %s18, %s27
    %s65 = ssub.s32 %s17, %s31
    %s66 = sor.u32 %s64, %s65
    %p67 = scmp.eq.s32.totalorder %s66, 0
    %s69 = sadd.s32 %s68, 1
    %s70 = scalar_select %p67, %s68, %s69
    %p73 = pneg %p67
    %p74 = scmp.eq.s32.totalorder %s9, 1
    %p75 = por %p73, %p74
    %p76 = scmp.ne.s32.totalorder %s68, %s71
    %p77 = scmp.eq.s32.totalorder %s9, 0
    %p78 = por %p76, %p77
    %p79 = scmp.ne.s32.totalorder %s68, %s71
    %p80 = scmp.eq.s32.totalorder %s14, 1
    %p81 = por %p79, %p80
    %p82 = scmp.ne.s32.totalorder %s71, %s72
    %p83 = scmp.eq.s32.totalorder %s14, 0
    %p84 = por %p82, %p83
    %p85 = scmp.ne.s32.totalorder %s71, %s72
    %p86 = scmp.eq.s32.totalorder %s15, 1
    %p87 = por %p85, %p86
    %p89 = scmp.ne.s32.totalorder %s72, %s88
    %p90 = scmp.eq.s32.totalorder %s15, 0
    %p91 = por %p89, %p90
    %s92 = ssub.s32 %s17, %s31
    %p93 = scmp.eq.s32.totalorder %s92, 0
    %s95 = sadd.s32 %s94, 1
    %s96 = scalar_select %p93, %s94, %s95
    %p99 = pneg %p93
    %p100 = scmp.eq.s32.totalorder %s9, 1
    %p101 = por %p99, %p100
    %p102 = scmp.ne.s32.totalorder %s94, %s97
    %p103 = scmp.eq.s32.totalorder %s9, 0
    %p104 = por %p102, %p103
    %p105 = scmp.ne.s32.totalorder %s94, %s97
    %p106 = scmp.eq.s32.totalorder %s14, 1
    %p107 = por %p105, %p106
    %p108 = scmp.ne.s32.totalorder %s97, %s98
    %p109 = scmp.eq.s32.totalorder %s14, 0
    %p110 = por %p108, %p109
    %p111 = scmp.ne.s32.totalorder %s97, %s98
    %p112 = scmp.eq.s32.totalorder %s15, 1
    %p113 = por %p111, %p112
    %p115 = scmp.ne.s32.totalorder %s98, %s114
    %p116 = scmp.eq.s32.totalorder %s15, 0
    %p117 = por %p115, %p116
    %s118 = ssub.s32 %s16, %s35
    %s119 = ssub.s32 %s17, %s31
    %s120 = sor.u32 %s118, %s119
    %p121 = scmp.eq.s32.totalorder %s120, 0
    %s123 = sadd.s32 %s122, 1
    %s124 = scalar_select %p121, %s122, %s123
    %p127 = pneg %p121
    %p128 = scmp.eq.s32.totalorder %s9, 1
    %p129 = por %p127, %p128
    %p130 = scmp.ne.s32.totalorder %s122, %s125
    %p131 = scmp.eq.s32.totalorder %s9, 0
    %p132 = por %p130, %p131
    %p133 = scmp.ne.s32.totalorder %s122, %s125
    %p134 = scmp.eq.s32.totalorder %s14, 1
    %p135 = por %p133, %p134
    %p136 = scmp.ne.s32.totalorder %s125, %s126
    %p137 = scmp.eq.s32.totalorder %s14, 0
    %p138 = por %p136, %p137
    %p139 = scmp.ne.s32.totalorder %s125, %s126
    %p140 = scmp.eq.s32.totalorder %s15, 1
    %p141 = por %p139, %p140
    %p143 = scmp.ne.s32.totalorder %s126, %s142
    %p144 = scmp.eq.s32.totalorder %s15, 0
    %p145 = por %p143, %p144
    %p146 = scmp.le.s32.totalorder 1, %s9
    %p147 = scmp.lt.s32.totalorder %s9, 3
    %p148 = pnand %p146, %p147
    %p149 = pneg %p148
    // Predicated region
    $region9: #{up_forward.5} parent=5 // pred_check
      _
    $region10: #{up_forward.5} parent=5 // pred_check_branch
      %151 = sbr.rel (%p148) target = $region12
    $region11: #{up_forward.5} parent=5 // pred_region
      %s152 = ssub.s32 %s9, 1
      // Predicated region
      $region13: #{up_forward.5} parent=11 // pred_check
        %p153 = pneg %p84
      $region14: #{up_forward.5} parent=11 // pred_check_branch
        %155 = sbr.rel (%p153) target = $region16
      $region15: #{up_forward.5} parent=11 // pred_region
        %s156 = smul.u32 8, %s21
        %p157 = scmp.lt.s32.totalorder %s156, 7
        %s158 = scalar_select %p157, %s156, 7
        %p159 = scmp.lt.s32.totalorder %s20, 0
        %s160 = scalar_select %p159, %s20, 0
        %s161 = sadd.s32 %s160, %s158
        %s162 = smul.addr %s161, 4
        %s163 = scalar_lea.vmem %s1, %s162
        %s164 = smul.u32 8, %s21
      $region16: #{up_forward.5} parent=11 // pred_fallthru
        _
      // Predicated region
      $region17: #{up_forward.5} parent=11 // pred_check
        %p165 = pneg %p110
      $region18: #{up_forward.5} parent=11 // pred_check_branch
        %167 = sbr.rel (%p165) target = $region20
      $region19: #{up_forward.5} parent=11 // pred_region
        %p168 = scmp.lt.s32.totalorder %s20, 0
        %s169 = scalar_select %p168, %s20, 0
        %s170 = scalar_lea.vmem %s2, %s169
      $region20: #{up_forward.5} parent=11 // pred_fallthru
        _
    $region12: #{up_forward.5} parent=5 // pred_fallthru
      _
    %p171 = scmp.lt.s32.totalorder %s9, 2
    // Predicated region
    $region21: #{up_forward.5} parent=5 // pred_check
      %p172 = pneg %p171
    $region22: #{up_forward.5} parent=5 // pred_check_branch
      %174 = sbr.rel (%p172) target = $region24
    $region23: #{up_forward.5} parent=5 // pred_region
      // Predicated region
      $region25: #{up_forward.5} parent=23 // pred_check
        %p175 = pneg %p50
      $region26: #{up_forward.5} parent=23 // pred_check_branch
        %177 = sbr.rel (%p175) target = $region28
      $region27: #{up_forward.5} parent=23 // pred_region
        %s178 = smul.u32 8, %s16
        %p179 = scmp.lt.s32.totalorder %s178, 15
        %s180 = scalar_select %p179, %s178, 15
        %p181 = scmp.lt.s32.totalorder %s18, 0
        %s182 = scalar_select %p181, %s18, 0
        %s183 = sadd.s32 %s182, %s180
        %s184 = smul.addr %s183, 4
        %s185 = scalar_lea.vmem %s0, %s184
        %s186 = smul.u32 8, %s16
      $region28: #{up_forward.5} parent=23 // pred_fallthru
        _
    $region24: #{up_forward.5} parent=5 // pred_fallthru
      _
    %p187 = scmp.le.s32.totalorder 1, %s9
    %p188 = scmp.lt.s32.totalorder %s9, 3
    %p189 = pnand %p187, %p188
    %p190 = pneg %p189
    // Predicated region
    $region29: #{up_forward.5} parent=5 // pred_check
      _
    $region30: #{up_forward.5} parent=5 // pred_check_branch
      %192 = sbr.rel (%p189) target = $region32
    $region31: #{up_forward.5} parent=5 // pred_region
      %s193 = ssub.s32 %s9, 1
      %s194 = smul.u32 8, %s19
      %p195 = scmp.lt.s32.totalorder %s194, 15
      %s196 = scalar_select %p195, %s194, 15
      %p197 = scmp.lt.s32.totalorder %s21, 0
      %s198 = scalar_select %p197, %s21, 0
      %s199 = sadd.s32 %s198, %s196
      %s200 = smul.addr %s199, 4
      %s201 = scalar_lea.vmem %s0, %s200
      %p202 = pneg %p56
      %p203 = pneg %p53
      %s204 = smul.u32 8, %s21
      %p205 = scmp.lt.s32.totalorder %s204, 7
      %s206 = scalar_select %p205, %s204, 7
      %p207 = scmp.lt.s32.totalorder %s20, 0
      %s208 = scalar_select %p207, %s20, 0
      %s209 = sadd.s32 %s208, %s206
      %s210 = smul.addr %s209, 4
      %s211 = scalar_lea.vmem %s1, %s210
      %p212 = pneg %p84
      %p213 = pneg %p81
      %p214 = scmp.lt.s32.totalorder %s20, 0
      %s215 = scalar_select %p214, %s20, 0
      %s216 = scalar_lea.vmem %s2, %s215
      %p217 = pneg %p110
      %p218 = pneg %p107
      %p219 = pneg %p138
      %p220 = pneg %p135
      %s221 = smul.u32 8, %s19
      %p222 = scmp.lt.s32.totalorder %s221, 15
      %s223 = scalar_select %p222, %s221, 15
      %p224 = scmp.lt.s32.totalorder %s20, 0
      %s225 = scalar_select %p224, %s20, 0
      %s226 = sadd.s32 %s225, %s223
      %s227 = smul.addr %s226, 4
      %s228 = scalar_lea.vmem %s3, %s227
      %s229 = smul.u32 8, %s19
      %p230 = scmp.lt.s32.totalorder %s229, 15
      %s231 = scalar_select %p230, %s229, 15
      %p232 = scmp.lt.s32.totalorder %s21, 0
      %s233 = scalar_select %p232, %s21, 0
      %s234 = sadd.s32 %s233, %s231
      %s235 = smul.addr %s234, 4
      %s236 = scalar_lea.vmem %s0, %s235
      %s237 = smul.u32 8, %s19
      %s238 = smul.u32 8, %s21
      %p239 = scmp.lt.s32.totalorder %s238, 7
      %s240 = scalar_select %p239, %s238, 7
      %p241 = scmp.lt.s32.totalorder %s20, 0
      %s242 = scalar_select %p241, %s20, 0
      %s243 = sadd.s32 %s242, %s240
      %s244 = smul.addr %s243, 4
      %s245 = scalar_lea.vmem %s1, %s244
      %s246 = smul.u32 8, %s21
      %p247 = scmp.lt.s32.totalorder %s20, 0
      %s248 = scalar_select %p247, %s20, 0
      %s249 = scalar_lea.vmem %s2, %s248
      %s250 = smul.u32 8, %s19
      %p251 = scmp.lt.s32.totalorder %s250, 15
      %s252 = scalar_select %p251, %s250, 15
      %p253 = scmp.lt.s32.totalorder %s20, 0
      %s254 = scalar_select %p253, %s20, 0
      %s255 = sadd.s32 %s254, %s252
      %s256 = smul.addr %s255, 4
      %s257 = scalar_lea.vmem %s3, %s256
      %s258 = smul.u32 8, %s19
      %p260 = scmp.eq.s32.totalorder %s21, 0
      // Predicated region
      $region33: #{up_forward.5} parent=31 // pred_check
        %p261 = pneg %p260
      $region34: #{up_forward.5} parent=31 // pred_check_branch
        %263 = sbr.rel (%p261) target = $region36
      $region35: #{up_forward.5} parent=31 // pred_region
        %v264 = vld [vmem:[%s249] sm:$0x1]
        %v266 = vlaneseq
        %v267 = vshrl.u32 %v266, 7
        %v268 = vsub.s32 0, %v267
        %v269 = vrot.slane %v264, %v268
        %271 = vst [vmem:[#allocation2] sm:$0xff] %v269
        %272 = vst [vmem:[#allocation2 + $0x8] sm:$0xff] %v269
        %273 = vst [vmem:[#allocation2 + $0x10] sm:$0xff] %v269
        %274 = vst [vmem:[#allocation2 + $0x18] sm:$0xff] %v269
        %275 = vst [vmem:[#allocation2 + $0x20] sm:$0xff] %v269
        %276 = vst [vmem:[#allocation2 + $0x28] sm:$0xff] %v269
        %277 = vst [vmem:[#allocation2 + $0x30] sm:$0xff] %v269
        %278 = vst [vmem:[#allocation2 + $0x38] sm:$0xff] %v269
      $region36: #{up_forward.5} parent=31 // pred_fallthru
        _
      %v279 = vld [vmem:[#allocation2] sm:$0xff]
      %v280 = vld [vmem:[#allocation2 + $0x8] sm:$0xff]
      %v281 = vld [vmem:[#allocation2 + $0x10] sm:$0xff]
      %v282 = vld [vmem:[#allocation2 + $0x18] sm:$0xff]
      %v283 = vld [vmem:[#allocation2 + $0x20] sm:$0xff]
      %v284 = vld [vmem:[#allocation2 + $0x28] sm:$0xff]
      %v285 = vld [vmem:[#allocation2 + $0x30] sm:$0xff]
      %v286 = vld [vmem:[#allocation2 + $0x38] sm:$0xff]
      %v287 = vld [vmem:[%s236] sm:$0xf]
      %v288 = vld [vmem:[%s236 + $0x4] sm:$0xf]
      %v289 = vld [vmem:[%s236 + $0x8] sm:$0xf]
      %v290 = vld [vmem:[%s236 + $0xc] sm:$0xf]
      %v291 = vld [vmem:[%s236 + $0x10] sm:$0xf]
      %v292 = vld [vmem:[%s236 + $0x14] sm:$0xf]
      %v293 = vld [vmem:[%s236 + $0x18] sm:$0xf]
      %v294 = vld [vmem:[%s236 + $0x1c] sm:$0xf]
      %v295 = vld [vmem:[%s245] sm:$0xf]
      %v296 = vld [vmem:[%s245 + $0x4] sm:$0xf]
      %v297 = vld [vmem:[%s245 + $0x8] sm:$0xf]
      %v298 = vld [vmem:[%s245 + $0xc] sm:$0xf]
      %v299 = vld [vmem:[%s245 + $0x10] sm:$0xf]
      %v300 = vld [vmem:[%s245 + $0x14] sm:$0xf]
      %v301 = vld [vmem:[%s245 + $0x18] sm:$0xf]
      %v302 = vld [vmem:[%s245 + $0x1c] sm:$0xf]
      %v311 = vunpack.c.l.b16 %v287
      %v312 = vunpack.c.l.b16 %v288
      %v313 = vunpack.c.l.b16 %v289
      %v314 = vunpack.c.l.b16 %v290
      %v315 = vunpack.c.l.b16 %v291
      %v316 = vunpack.c.l.b16 %v292
      %v317 = vunpack.c.l.b16 %v293
      %v318 = vunpack.c.l.b16 %v294
      %v319 = vpack.c.b16 %v312, %v311
      %v320 = vpack.c.b16 %v314, %v313
      %v321 = vpack.c.b16 %v316, %v315
      %v322 = vpack.c.b16 %v318, %v317
      %v331 = vunpack.c.l.b16 %v295
      %v332 = vunpack.c.l.b16 %v296
      %v333 = vunpack.c.l.b16 %v297
      %v334 = vunpack.c.l.b16 %v298
      %v335 = vunpack.c.l.b16 %v299
      %v336 = vunpack.c.l.b16 %v300
      %v337 = vunpack.c.l.b16 %v301
      %v338 = vunpack.c.l.b16 %v302
      %v339 = vpack.c.b16 %v332, %v331
      %v340 = vpack.c.b16 %v334, %v333
      %v341 = vpack.c.b16 %v336, %v335
      %v342 = vpack.c.b16 %v338, %v337
      %vm347 = vcmask 523264
      %v349 = vsel %vm347, %v319, 0
      %v352 = vsel %vm347, %v320, 0
      %v355 = vsel %vm347, %v321, 0
      %v358 = vsel %vm347, %v322, 0
      %360 = vmatprep.subr.bf16.mxu0 0
      %361 = vmatpush1.bf16.msra.mxu0 0
      %362 = vmatprep.subr.bf16.mxu0 0
      %363 = vmatpush1.bf16.msra.mxu0 0
      %364 = vmatprep.subr.bf16.mxu0 0
      %365 = vmatpush1.bf16.msra.mxu0 0
      %366 = vmatprep.subr.bf16.mxu0 0
      %367 = vmatpush1.bf16.msra.mxu0 0
      %368 = vmatprep.subr.bf16.mxu0 0
      %369 = vmatpush1.bf16.msra.mxu0 %v342
      %370 = vmatprep.subr.bf16.mxu0 0
      %371 = vmatpush1.bf16.msra.mxu0 %v341
      %372 = vmatprep.subr.bf16.mxu0 0
      %373 = vmatpush1.bf16.msra.mxu0 %v340
      %374 = vmatprep.subr.bf16.mxu0 0
      %375 = vmatpush1.bf16.msra.mxu0 %v339
      %376 = vmatprep.subr.bf16.mxu0 0
      %377 = vmatpush2.bf16.msra.mxu0 0
      %378 = vmatprep.subr.bf16.mxu0 0
      %379 = vmatpush2.bf16.msra.mxu0 0
      %380 = vmatprep.subr.bf16.mxu0 0
      %381 = vmatpush2.bf16.msra.mxu0 0
      %382 = vmatprep.subr.bf16.mxu0 0
      %383 = vmatpush2.bf16.msra.mxu0 0
      %384 = vmatprep.subr.bf16.mxu0 0
      %385 = vmatpush2.bf16.msra.mxu0 0
      %386 = vmatprep.subr.bf16.mxu0 0
      %387 = vmatpush2.bf16.msra.mxu0 0
      %388 = vmatprep.subr.bf16.mxu0 0
      %389 = vmatpush2.bf16.msra.mxu0 0
      %390 = vmatprep.subr.bf16.mxu0 0
      %391 = vmatpush2.bf16.msra.mxu0 0
      %392 = vmatprep.mubr.bf16.mxu0 0
      %393 = vmatmul.mubr.bf16.gmra.mxu0 %v349
      %v394 = vpop.f32.mrf.mxu0
      %v395 = vadd.f32 0.0, %v394
      %v396 = vpop.f32.mrf.mxu0
      %v397 = vpop.f32.mrf.mxu0
      %v398 = vadd.f32 0.0, %v397
      %v399 = vpop.f32.mrf.mxu0
      %400 = vmatprep.mubr.bf16.mxu0 0
      %401 = vmatmul.mubr.bf16.gmra.mxu0 %v352
      %v402 = vpop.f32.mrf.mxu0
      %v403 = vadd.f32 0.0, %v402
      %v404 = vpop.f32.mrf.mxu0
      %v405 = vpop.f32.mrf.mxu0
      %v406 = vadd.f32 0.0, %v405
      %v407 = vpop.f32.mrf.mxu0
      %408 = vmatprep.mubr.bf16.mxu0 0
      %409 = vmatmul.mubr.bf16.gmra.mxu0 %v355
      %v410 = vpop.f32.mrf.mxu0
      %v411 = vadd.f32 0.0, %v410
      %v412 = vpop.f32.mrf.mxu0
      %v413 = vpop.f32.mrf.mxu0
      %v414 = vadd.f32 0.0, %v413
      %v415 = vpop.f32.mrf.mxu0
      %416 = vmatprep.mubr.bf16.mxu0 0
      %417 = vmatmul.mubr.bf16.gmra.mxu0 %v358
      %v418 = vpop.f32.mrf.mxu0
      %v419 = vadd.f32 0.0, %v418
      %v420 = vpop.f32.mrf.mxu0
      %v421 = vpop.f32.mrf.mxu0
      %v422 = vadd.f32 0.0, %v421
      %v423 = vpop.f32.mrf.mxu0
      %424 = vdwg.mxu0
      %v425 = vadd.f32 %v279, %v395
      %v426 = vadd.f32 %v280, %v398
      %v427 = vadd.f32 %v281, %v403
      %v428 = vadd.f32 %v282, %v406
      %v429 = vadd.f32 %v283, %v411
      %v430 = vadd.f32 %v284, %v414
      %v431 = vadd.f32 %v285, %v419
      %v432 = vadd.f32 %v286, %v422
      %433 = vst [vmem:[#allocation2] sm:$0xff] %v425
      %434 = vst [vmem:[#allocation2 + $0x8] sm:$0xff] %v426
      %435 = vst [vmem:[#allocation2 + $0x10] sm:$0xff] %v427
      %436 = vst [vmem:[#allocation2 + $0x18] sm:$0xff] %v428
      %437 = vst [vmem:[#allocation2 + $0x20] sm:$0xff] %v429
      %438 = vst [vmem:[#allocation2 + $0x28] sm:$0xff] %v430
      %439 = vst [vmem:[#allocation2 + $0x30] sm:$0xff] %v431
      %440 = vst [vmem:[#allocation2 + $0x38] sm:$0xff] %v432
      // Predicated region
      $region37: #{up_forward.5} parent=31 // pred_check
        %p441 = pneg %p260
      $region38: #{up_forward.5} parent=31 // pred_check_branch
        %443 = sbr.rel (%p441) target = $region40
      $region39: #{up_forward.5} parent=31 // pred_region
        %v444 = vld [vmem:[#allocation2] sm:$0xff]
        %v445 = vld [vmem:[#allocation2 + $0x8] sm:$0xff]
        %v446 = vld [vmem:[#allocation2 + $0x10] sm:$0xff]
        %v447 = vld [vmem:[#allocation2 + $0x18] sm:$0xff]
        %v448 = vld [vmem:[#allocation2 + $0x20] sm:$0xff]
        %v449 = vld [vmem:[#allocation2 + $0x28] sm:$0xff]
        %v450 = vld [vmem:[#allocation2 + $0x30] sm:$0xff]
        %v451 = vld [vmem:[#allocation2 + $0x38] sm:$0xff]
        %v452 = vpack.c.bf16 %v445, %v444
        %v453 = vpack.c.bf16 %v447, %v446
        %v454 = vpack.c.bf16 %v449, %v448
        %v455 = vpack.c.bf16 %v451, %v450
        %v460 = vunpack.c.l.b16 %v452
        %v461 = vunpack.c.h.b16 %v452
        %v462 = vunpack.c.l.b16 %v453
        %v463 = vunpack.c.h.b16 %v453
        %v464 = vunpack.c.l.b16 %v454
        %v465 = vunpack.c.h.b16 %v454
        %v466 = vunpack.c.l.b16 %v455
        %v467 = vunpack.c.h.b16 %v455
        %v468 = vpack.c.b16 %v460, %v460
        %v469 = vpack.c.b16 %v461, %v461
        %v470 = vpack.c.b16 %v462, %v462
        %v471 = vpack.c.b16 %v463, %v463
        %v472 = vpack.c.b16 %v464, %v464
        %v473 = vpack.c.b16 %v465, %v465
        %v474 = vpack.c.b16 %v466, %v466
        %v475 = vpack.c.b16 %v467, %v467
        %484 = vst [vmem:[%s257] sm:$0xf] %v468
        %485 = vst [vmem:[%s257 + $0x4] sm:$0xf] %v469
        %486 = vst [vmem:[%s257 + $0x8] sm:$0xf] %v470
        %487 = vst [vmem:[%s257 + $0xc] sm:$0xf] %v471
        %488 = vst [vmem:[%s257 + $0x10] sm:$0xf] %v472
        %489 = vst [vmem:[%s257 + $0x14] sm:$0xf] %v473
        %490 = vst [vmem:[%s257 + $0x18] sm:$0xf] %v474
        %491 = vst [vmem:[%s257 + $0x1c] sm:$0xf] %v475
      $region40: #{up_forward.5} parent=31 // pred_fallthru
        _
      %s492 = smul.u32 8, %s19
      %p493 = scmp.lt.s32.totalorder %s492, 15
      %s494 = scalar_select %p493, %s492, 15
      %p495 = scmp.lt.s32.totalorder %s20, 0
      %s496 = scalar_select %p495, %s20, 0
      %s497 = sadd.s32 %s496, %s494
      %s498 = smul.addr %s497, 4
      %s499 = scalar_lea.vmem %s3, %s498
      // Predicated region
      $region41: #{up_forward.5} parent=31 // pred_check
        %p500 = pneg %p135
      $region42: #{up_forward.5} parent=31 // pred_check_branch
        %502 = sbr.rel (%p500) target = $region44
      $region43: #{up_forward.5} parent=31 // pred_region
        %s503 = smul.u32 8, %s19
      $region44: #{up_forward.5} parent=31 // pred_fallthru
        _
    $region32: #{up_forward.5} parent=5 // pred_fallthru
      _
    %p504 = scmp.le.s32.totalorder 2, %s9
    // Predicated region
    $region45: #{up_forward.5} parent=5 // pred_check
      %p505 = pneg %p504
    $region46: #{up_forward.5} parent=5 // pred_check_branch
      %507 = sbr.rel (%p505) target = $region48
    $region47: #{up_forward.5} parent=5 // pred_region
      %s508 = ssub.s32 %s9, 2
      // Predicated region
      $region49: #{up_forward.5} parent=47 // pred_check
        %p509 = pneg %p141
      $region50: #{up_forward.5} parent=47 // pred_check_branch
        %511 = sbr.rel (%p509) target = $region52
      $region51: #{up_forward.5} parent=47 // pred_region
        %s512 = smul.u32 8, %s22
        %p513 = scmp.lt.s32.totalorder %s512, 15
        %s514 = scalar_select %p513, %s512, 15
        %p515 = scmp.lt.s32.totalorder %s23, 0
        %s516 = scalar_select %p515, %s23, 0
        %s517 = sadd.s32 %s516, %s514
        %s518 = smul.addr %s517, 4
        %s519 = scalar_lea.vmem %s3, %s518
      $region52: #{up_forward.5} parent=47 // pred_fallthru
        _
    $region48: #{up_forward.5} parent=5 // pred_fallthru
      _
  $region6: #{up_forward.5} parent=0 // loop_footer
    %s13 = sadd.s32 1, %s9
  $region7: #{up_forward.5} parent=0 // loop_footer_branch
    %8 = sbr.rel target = $region3
  $region8: #{up_forward.5} parent=0 // loop_exit
    _

// kernel: up_forward.7
$region0: #{up_forward.7}
  #allocation0 [shape = 'u32[]', space=smem, size = 0x4, offset = 0x4, fixed_abs, tag = 'smem constant byte address 0x4 - core index']
  #allocation1 [shape = 'u32[144,128]{1,0:T(1,128)}', space=vmem, size = 0x12000, scoped, tag = 'internal scratch']
  %s0 = inlined_call_operand.vmem [shape: bf16[512,32], index: 0, kind: input, shape index: {}]
  %s1 = inlined_call_operand.vmem [shape: f32[1,32], index: 1, kind: input, shape index: {}]
  %s2 = inlined_call_operand.vmem [shape: f32[1,32], index: 2, kind: input, shape index: {}]
  %s3 = inlined_call_operand.vmem [shape: bf16[512,32], index: 3, kind: output, shape index: {}]
  %s4 = sld [smem:[#allocation0]]
  $region45: #{up_forward.7} parent=0
    _
  %s6 = ssub.s32 1, %s4
  %s7 = scalar_select 0, %s6, %s4
  loop: start=0, step=1, limit=4
  $region2: #{up_forward.7} parent=0 // loop_pre_header
    _
  $region3: #{up_forward.7} parent=0 // loop_header
    %s9 = sphi 0, %s13
    %p10 = scmp.ge.s32.totalorder %s9, 4
    %s19 = sphi 0, %s21
    %s22 = sphi 0, %s19
    %s23 = sphi 0, %s22
    %s39 = sphi 0, %s23
    %s43 = sphi 0, %s43
    %s45 = sphi 0, %s43
    %s46 = sphi 0, %s45
    %s60 = sphi 0, %s46
    %s64 = sphi 0, %s64
    %s66 = sphi 0, %s64
    %s67 = sphi 0, %s66
    %s81 = sphi 0, %s67
    %s87 = sphi 0, %s89
    %s90 = sphi 0, %s87
    %s91 = sphi 0, %s90
    %s107 = sphi 0, %s91
  $region4: #{up_forward.7} parent=0 // loop_header_branch
    %12 = sbr.rel (%p10) target = $region8
  $region5: #{up_forward.7} parent=0 // loop_body
    %s14 = ssub.s32 %s9, 1
    %s15 = ssub.s32 %s9, 2
    %s16 = sadd.s32 %s9, 1
    %s17 = ssub.s32 %s9, %s16
    %p18 = scmp.eq.s32.totalorder %s17, 0
    %s20 = sadd.s32 %s19, 1
    %s21 = scalar_select %p18, %s19, %s20
    %p24 = pneg %p18
    %p25 = scmp.eq.s32.totalorder %s9, 1
    %p26 = por %p24, %p25
    %p27 = scmp.ne.s32.totalorder %s19, %s22
    %p28 = scmp.eq.s32.totalorder %s9, 0
    %p29 = por %p27, %p28
    %p30 = scmp.ne.s32.totalorder %s19, %s22
    %p31 = scmp.eq.s32.totalorder %s14, 1
    %p32 = por %p30, %p31
    %p33 = scmp.ne.s32.totalorder %s22, %s23
    %p34 = scmp.eq.s32.totalorder %s14, 0
    %p35 = por %p33, %p34
    %p36 = scmp.ne.s32.totalorder %s22, %s23
    %p37 = scmp.eq.s32.totalorder %s15, 1
    %p38 = por %p36, %p37
    %p40 = scmp.ne.s32.totalorder %s23, %s39
    %p41 = scmp.eq.s32.totalorder %s15, 0
    %p42 = por %p40, %p41
    %s44 = sadd.s32 %s43, 1
    %p47 = scmp.eq.s32.totalorder %s9, 1
    %p48 = scmp.ne.s32.totalorder %s43, %s45
    %p49 = scmp.eq.s32.totalorder %s9, 0
    %p50 = por %p48, %p49
    %p51 = scmp.ne.s32.totalorder %s43, %s45
    %p52 = scmp.eq.s32.totalorder %s14, 1
    %p53 = por %p51, %p52
    %p54 = scmp.ne.s32.totalorder %s45, %s46
    %p55 = scmp.eq.s32.totalorder %s14, 0
    %p56 = por %p54, %p55
    %p57 = scmp.ne.s32.totalorder %s45, %s46
    %p58 = scmp.eq.s32.totalorder %s15, 1
    %p59 = por %p57, %p58
    %p61 = scmp.ne.s32.totalorder %s46, %s60
    %p62 = scmp.eq.s32.totalorder %s15, 0
    %p63 = por %p61, %p62
    %s65 = sadd.s32 %s64, 1
    %p68 = scmp.eq.s32.totalorder %s9, 1
    %p69 = scmp.ne.s32.totalorder %s64, %s66
    %p70 = scmp.eq.s32.totalorder %s9, 0
    %p71 = por %p69, %p70
    %p72 = scmp.ne.s32.totalorder %s64, %s66
    %p73 = scmp.eq.s32.totalorder %s14, 1
    %p74 = por %p72, %p73
    %p75 = scmp.ne.s32.totalorder %s66, %s67
    %p76 = scmp.eq.s32.totalorder %s14, 0
    %p77 = por %p75, %p76
    %p78 = scmp.ne.s32.totalorder %s66, %s67
    %p79 = scmp.eq.s32.totalorder %s15, 1
    %p80 = por %p78, %p79
    %p82 = scmp.ne.s32.totalorder %s67, %s81
    %p83 = scmp.eq.s32.totalorder %s15, 0
    %p84 = por %p82, %p83
    %s85 = ssub.s32 %s9, %s16
    %p86 = scmp.eq.s32.totalorder %s85, 0
    %s88 = sadd.s32 %s87, 1
    %s89 = scalar_select %p86, %s87, %s88
    %p92 = pneg %p86
    %p93 = scmp.eq.s32.totalorder %s9, 1
    %p94 = por %p92, %p93
    %p95 = scmp.ne.s32.totalorder %s87, %s90
    %p96 = scmp.eq.s32.totalorder %s9, 0
    %p97 = por %p95, %p96
    %p98 = scmp.ne.s32.totalorder %s87, %s90
    %p99 = scmp.eq.s32.totalorder %s14, 1
    %p100 = por %p98, %p99
    %p101 = scmp.ne.s32.totalorder %s90, %s91
    %p102 = scmp.eq.s32.totalorder %s14, 0
    %p103 = por %p101, %p102
    %p104 = scmp.ne.s32.totalorder %s90, %s91
    %p105 = scmp.eq.s32.totalorder %s15, 1
    %p106 = por %p104, %p105
    %p108 = scmp.ne.s32.totalorder %s91, %s107
    %p109 = scmp.eq.s32.totalorder %s15, 0
    %p110 = por %p108, %p109
    %p111 = scmp.le.s32.totalorder 1, %s9
    %p112 = scmp.lt.s32.totalorder %s9, 3
    %p113 = pnand %p111, %p112
    %p114 = pneg %p113
    // Predicated region
    $region9: #{up_forward.7} parent=5 // pred_check
      _
    $region10: #{up_forward.7} parent=5 // pred_check_branch
      %116 = sbr.rel (%p113) target = $region12
    $region11: #{up_forward.7} parent=5 // pred_region
      %s117 = ssub.s32 %s9, 1
      // Predicated region
      $region13: #{up_forward.7} parent=11 // pred_check
        %p118 = pneg %p56
      $region14: #{up_forward.7} parent=11 // pred_check_branch
        %120 = sbr.rel (%p118) target = $region16
      $region15: #{up_forward.7} parent=11 // pred_region
        _
      $region16: #{up_forward.7} parent=11 // pred_fallthru
        _
      // Predicated region
      $region17: #{up_forward.7} parent=11 // pred_check
        %p121 = pneg %p77
      $region18: #{up_forward.7} parent=11 // pred_check_branch
        %123 = sbr.rel (%p121) target = $region20
      $region19: #{up_forward.7} parent=11 // pred_region
        _
      $region20: #{up_forward.7} parent=11 // pred_fallthru
        _
    $region12: #{up_forward.7} parent=5 // pred_fallthru
      _
    %p124 = scmp.lt.s32.totalorder %s9, 2
    // Predicated region
    $region21: #{up_forward.7} parent=5 // pred_check
      %p125 = pneg %p124
    $region22: #{up_forward.7} parent=5 // pred_check_branch
      %127 = sbr.rel (%p125) target = $region24
    $region23: #{up_forward.7} parent=5 // pred_region
      // Predicated region
      $region25: #{up_forward.7} parent=23 // pred_check
        %p128 = pneg %p29
      $region26: #{up_forward.7} parent=23 // pred_check_branch
        %130 = sbr.rel (%p128) target = $region28
      $region27: #{up_forward.7} parent=23 // pred_region
        %s131 = smul.u32 32, %s9
        %p132 = scmp.lt.s32.totalorder %s131, 63
        %s133 = scalar_select %p132, %s131, 63
        %s134 = smul.addr %s133, 4
        %s135 = scalar_lea.vmem %s0, %s134
        %s136 = smul.u32 32, %s9
      $region28: #{up_forward.7} parent=23 // pred_fallthru
        _
    $region24: #{up_forward.7} parent=5 // pred_fallthru
      _
    %p137 = scmp.le.s32.totalorder 1, %s9
    %p138 = scmp.lt.s32.totalorder %s9, 3
    %p139 = pnand %p137, %p138
    %p140 = pneg %p139
    // Predicated region
    $region29: #{up_forward.7} parent=5 // pred_check
      _
    $region30: #{up_forward.7} parent=5 // pred_check_branch
      %142 = sbr.rel (%p139) target = $region32
    $region31: #{up_forward.7} parent=5 // pred_region
      %s143 = ssub.s32 %s9, 1
      %s144 = smul.u32 32, %s14
      %p145 = scmp.lt.s32.totalorder %s144, 63
      %s146 = scalar_select %p145, %s144, 63
      %s147 = smul.addr %s146, 4
      %s148 = scalar_lea.vmem %s0, %s147
      %p149 = pneg %p35
      %p150 = pneg %p32
      %p151 = pneg %p56
      %p152 = pneg %p53
      %p153 = pneg %p77
      %p154 = pneg %p74
      %p155 = pneg %p103
      %p156 = pneg %p100
      %s157 = smul.u32 32, %s14
      %p158 = scmp.lt.s32.totalorder %s157, 63
      %s159 = scalar_select %p158, %s157, 63
      %s160 = smul.addr %s159, 4
      %s161 = scalar_lea.vmem %s3, %s160
      %s162 = smul.u32 32, %s14
      %p163 = scmp.lt.s32.totalorder %s162, 63
      %s164 = scalar_select %p163, %s162, 63
      %s165 = smul.addr %s164, 4
      %s166 = scalar_lea.vmem %s0, %s165
      %s167 = smul.u32 32, %s14
      %s168 = smul.u32 32, %s14
      %p169 = scmp.lt.s32.totalorder %s168, 63
      %s170 = scalar_select %p169, %s168, 63
      %s171 = smul.addr %s170, 4
      %s172 = scalar_lea.vmem %s3, %s171
      %s173 = smul.u32 32, %s14
      %v174 = vld [vmem:[%s166] sm:$0xf]
      %v175 = vld [vmem:[%s166 + $0x4] sm:$0xf]
      %v176 = vld [vmem:[%s166 + $0x8] sm:$0xf]
      %v177 = vld [vmem:[%s166 + $0xc] sm:$0xf]
      %v178 = vld [vmem:[%s166 + $0x10] sm:$0xf]
      %v179 = vld [vmem:[%s166 + $0x14] sm:$0xf]
      %v180 = vld [vmem:[%s166 + $0x18] sm:$0xf]
      %v181 = vld [vmem:[%s166 + $0x1c] sm:$0xf]
      %v182 = vld [vmem:[%s166 + $0x20] sm:$0xf]
      %v183 = vld [vmem:[%s166 + $0x24] sm:$0xf]
      %v184 = vld [vmem:[%s166 + $0x28] sm:$0xf]
      %v185 = vld [vmem:[%s166 + $0x2c] sm:$0xf]
      %v186 = vld [vmem:[%s166 + $0x30] sm:$0xf]
      %v187 = vld [vmem:[%s166 + $0x34] sm:$0xf]
      %v188 = vld [vmem:[%s166 + $0x38] sm:$0xf]
      %v189 = vld [vmem:[%s166 + $0x3c] sm:$0xf]
      %v190 = vld [vmem:[%s166 + $0x40] sm:$0xf]
      %v191 = vld [vmem:[%s166 + $0x44] sm:$0xf]
      %v192 = vld [vmem:[%s166 + $0x48] sm:$0xf]
      %v193 = vld [vmem:[%s166 + $0x4c] sm:$0xf]
      %v194 = vld [vmem:[%s166 + $0x50] sm:$0xf]
      %v195 = vld [vmem:[%s166 + $0x54] sm:$0xf]
      %v196 = vld [vmem:[%s166 + $0x58] sm:$0xf]
      %v197 = vld [vmem:[%s166 + $0x5c] sm:$0xf]
      %v198 = vld [vmem:[%s166 + $0x60] sm:$0xf]
      %v199 = vld [vmem:[%s166 + $0x64] sm:$0xf]
      %v200 = vld [vmem:[%s166 + $0x68] sm:$0xf]
      %v201 = vld [vmem:[%s166 + $0x6c] sm:$0xf]
      %v202 = vld [vmem:[%s166 + $0x70] sm:$0xf]
      %v203 = vld [vmem:[%s166 + $0x74] sm:$0xf]
      %v204 = vld [vmem:[%s166 + $0x78] sm:$0xf]
      %v205 = vld [vmem:[%s166 + $0x7c] sm:$0xf]
      %v206 = vunpack.c.l.bf16 %v174
      %v207 = vunpack.c.l.bf16 %v175
      %v208 = vunpack.c.l.bf16 %v176
      %v209 = vunpack.c.l.bf16 %v177
      %v210 = vunpack.c.l.bf16 %v178
      %v211 = vunpack.c.l.bf16 %v179
      %v212 = vunpack.c.l.bf16 %v180
      %v213 = vunpack.c.l.bf16 %v181
      %v214 = vunpack.c.l.bf16 %v182
      %v215 = vunpack.c.l.bf16 %v183
      %v216 = vunpack.c.l.bf16 %v184
      %v217 = vunpack.c.l.bf16 %v185
      %v218 = vunpack.c.l.bf16 %v186
      %v219 = vunpack.c.l.bf16 %v187
      %v220 = vunpack.c.l.bf16 %v188
      %v221 = vunpack.c.l.bf16 %v189
      %v222 = vunpack.c.l.bf16 %v190
      %v223 = vunpack.c.l.bf16 %v191
      %v224 = vunpack.c.l.bf16 %v192
      %v225 = vunpack.c.l.bf16 %v193
      %v226 = vunpack.c.l.bf16 %v194
      %v227 = vunpack.c.l.bf16 %v195
      %v228 = vunpack.c.l.bf16 %v196
      %v229 = vunpack.c.l.bf16 %v197
      %v230 = vunpack.c.l.bf16 %v198
      %v231 = vunpack.c.l.bf16 %v199
      %v232 = vunpack.c.l.bf16 %v200
      %v233 = vunpack.c.l.bf16 %v201
      %v234 = vunpack.c.l.bf16 %v202
      %v235 = vunpack.c.l.bf16 %v203
      %v236 = vunpack.c.l.bf16 %v204
      %v237 = vunpack.c.l.bf16 %v205
      %v238 = vld [vmem:[%s1] sm:$0x1]
      %v240 = vlaneseq
      %v241 = vshrl.u32 %v240, 7
      %v242 = vsub.s32 0, %v241
      %v243 = vrot.slane %v238, %v242
      %v245 = vmul.f32 %v206, %v243
      %v246 = vmul.f32 %v207, %v243
      %v247 = vmul.f32 %v208, %v243
      %v248 = vmul.f32 %v209, %v243
      %v249 = vmul.f32 %v210, %v243
      %v250 = vmul.f32 %v211, %v243
      %v251 = vmul.f32 %v212, %v243
      %v252 = vmul.f32 %v213, %v243
      %v253 = vmul.f32 %v214, %v243
      %v254 = vmul.f32 %v215, %v243
      %v255 = vmul.f32 %v216, %v243
      %v256 = vmul.f32 %v217, %v243
      %v257 = vmul.f32 %v218, %v243
      %v258 = vmul.f32 %v219, %v243
      %v259 = vmul.f32 %v220, %v243
      %v260 = vmul.f32 %v221, %v243
      %v261 = vmul.f32 %v222, %v243
      %v262 = vmul.f32 %v223, %v243
      %v263 = vmul.f32 %v224, %v243
      %v264 = vmul.f32 %v225, %v243
      %v265 = vmul.f32 %v226, %v243
      %v266 = vmul.f32 %v227, %v243
      %v267 = vmul.f32 %v228, %v243
      %v268 = vmul.f32 %v229, %v243
      %v269 = vmul.f32 %v230, %v243
      %v270 = vmul.f32 %v231, %v243
      %v271 = vmul.f32 %v232, %v243
      %v272 = vmul.f32 %v233, %v243
      %v273 = vmul.f32 %v234, %v243
      %v274 = vmul.f32 %v235, %v243
      %v275 = vmul.f32 %v236, %v243
      %v276 = vmul.f32 %v237, %v243
      %v277 = vld [vmem:[%s2] sm:$0x1]
      %v279 = vlaneseq
      %v280 = vshrl.u32 %v279, 7
      %v281 = vsub.s32 0, %v280
      %v282 = vrot.slane %v277, %v281
      %v284 = vadd.f32 %v245, %v282
      %v285 = vadd.f32 %v246, %v282
      %v286 = vadd.f32 %v247, %v282
      %v287 = vadd.f32 %v248, %v282
      %v288 = vadd.f32 %v249, %v282
      %v289 = vadd.f32 %v250, %v282
      %v290 = vadd.f32 %v251, %v282
      %v291 = vadd.f32 %v252, %v282
      %v292 = vadd.f32 %v253, %v282
      %v293 = vadd.f32 %v254, %v282
      %v294 = vadd.f32 %v255, %v282
      %v295 = vadd.f32 %v256, %v282
      %v296 = vadd.f32 %v257, %v282
      %v297 = vadd.f32 %v258, %v282
      %v298 = vadd.f32 %v259, %v282
      %v299 = vadd.f32 %v260, %v282
      %v300 = vadd.f32 %v261, %v282
      %v301 = vadd.f32 %v262, %v282
      %v302 = vadd.f32 %v263, %v282
      %v303 = vadd.f32 %v264, %v282
      %v304 = vadd.f32 %v265, %v282
      %v305 = vadd.f32 %v266, %v282
      %v306 = vadd.f32 %v267, %v282
      %v307 = vadd.f32 %v268, %v282
      %v308 = vadd.f32 %v269, %v282
      %v309 = vadd.f32 %v270, %v282
      %v310 = vadd.f32 %v271, %v282
      %v311 = vadd.f32 %v272, %v282
      %v312 = vadd.f32 %v273, %v282
      %v313 = vadd.f32 %v274, %v282
      %v314 = vadd.f32 %v275, %v282
      %v315 = vadd.f32 %v276, %v282
      %v316 = vmax.f32 %v284, 0.0
      %v317 = vmax.f32 %v285, 0.0
      %v318 = vmax.f32 %v286, 0.0
      %v319 = vmax.f32 %v287, 0.0
      %v320 = vmax.f32 %v288, 0.0
      %v321 = vmax.f32 %v289, 0.0
      %v322 = vmax.f32 %v290, 0.0
      %v323 = vmax.f32 %v291, 0.0
      %v324 = vmax.f32 %v292, 0.0
      %v325 = vmax.f32 %v293, 0.0
      %v326 = vmax.f32 %v294, 0.0
      %v327 = vmax.f32 %v295, 0.0
      %v328 = vmax.f32 %v296, 0.0
      %v329 = vmax.f32 %v297, 0.0
      %v330 = vmax.f32 %v298, 0.0
      %v331 = vmax.f32 %v299, 0.0
      %v332 = vmax.f32 %v300, 0.0
      %v333 = vmax.f32 %v301, 0.0
      %v334 = vmax.f32 %v302, 0.0
      %v335 = vmax.f32 %v303, 0.0
      %v336 = vmax.f32 %v304, 0.0
      %v337 = vmax.f32 %v305, 0.0
      %v338 = vmax.f32 %v306, 0.0
      %v339 = vmax.f32 %v307, 0.0
      %v340 = vmax.f32 %v308, 0.0
      %v341 = vmax.f32 %v309, 0.0
      %v342 = vmax.f32 %v310, 0.0
      %v343 = vmax.f32 %v311, 0.0
      %v344 = vmax.f32 %v312, 0.0
      %v345 = vmax.f32 %v313, 0.0
      %v346 = vmax.f32 %v314, 0.0
      %v347 = vmax.f32 %v315, 0.0
      %v348 = vpack.c.bf16 %v317, %v316
      %v349 = vpack.c.bf16 %v319, %v318
      %v350 = vpack.c.bf16 %v321, %v320
      %v351 = vpack.c.bf16 %v323, %v322
      %v352 = vpack.c.bf16 %v325, %v324
      %v353 = vpack.c.bf16 %v327, %v326
      %v354 = vpack.c.bf16 %v329, %v328
      %v355 = vpack.c.bf16 %v331, %v330
      %v356 = vpack.c.bf16 %v333, %v332
      %v357 = vpack.c.bf16 %v335, %v334
      %v358 = vpack.c.bf16 %v337, %v336
      %v359 = vpack.c.bf16 %v339, %v338
      %v360 = vpack.c.bf16 %v341, %v340
      %v361 = vpack.c.bf16 %v343, %v342
      %v362 = vpack.c.bf16 %v345, %v344
      %v363 = vpack.c.bf16 %v347, %v346
      %v380 = vunpack.c.l.b16 %v348
      %v381 = vunpack.c.h.b16 %v348
      %v382 = vunpack.c.l.b16 %v349
      %v383 = vunpack.c.h.b16 %v349
      %v384 = vunpack.c.l.b16 %v350
      %v385 = vunpack.c.h.b16 %v350
      %v386 = vunpack.c.l.b16 %v351
      %v387 = vunpack.c.h.b16 %v351
      %v388 = vunpack.c.l.b16 %v352
      %v389 = vunpack.c.h.b16 %v352
      %v390 = vunpack.c.l.b16 %v353
      %v391 = vunpack.c.h.b16 %v353
      %v392 = vunpack.c.l.b16 %v354
      %v393 = vunpack.c.h.b16 %v354
      %v394 = vunpack.c.l.b16 %v355
      %v395 = vunpack.c.h.b16 %v355
      %v396 = vunpack.c.l.b16 %v356
      %v397 = vunpack.c.h.b16 %v356
      %v398 = vunpack.c.l.b16 %v357
      %v399 = vunpack.c.h.b16 %v357
      %v400 = vunpack.c.l.b16 %v358
      %v401 = vunpack.c.h.b16 %v358
      %v402 = vunpack.c.l.b16 %v359
      %v403 = vunpack.c.h.b16 %v359
      %v404 = vunpack.c.l.b16 %v360
      %v405 = vunpack.c.h.b16 %v360
      %v406 = vunpack.c.l.b16 %v361
      %v407 = vunpack.c.h.b16 %v361
      %v408 = vunpack.c.l.b16 %v362
      %v409 = vunpack.c.h.b16 %v362
      %v410 = vunpack.c.l.b16 %v363
      %v411 = vunpack.c.h.b16 %v363
      %v412 = vpack.c.b16 %v380, %v380
      %v413 = vpack.c.b16 %v381, %v381
      %v414 = vpack.c.b16 %v382, %v382
      %v415 = vpack.c.b16 %v383, %v383
      %v416 = vpack.c.b16 %v384, %v384
      %v417 = vpack.c.b16 %v385, %v385
      %v418 = vpack.c.b16 %v386, %v386
      %v419 = vpack.c.b16 %v387, %v387
      %v420 = vpack.c.b16 %v388, %v388
      %v421 = vpack.c.b16 %v389, %v389
      %v422 = vpack.c.b16 %v390, %v390
      %v423 = vpack.c.b16 %v391, %v391
      %v424 = vpack.c.b16 %v392, %v392
      %v425 = vpack.c.b16 %v393, %v393
      %v426 = vpack.c.b16 %v394, %v394
      %v427 = vpack.c.b16 %v395, %v395
      %v428 = vpack.c.b16 %v396, %v396
      %v429 = vpack.c.b16 %v397, %v397
      %v430 = vpack.c.b16 %v398, %v398
      %v431 = vpack.c.b16 %v399, %v399
      %v432 = vpack.c.b16 %v400, %v400
      %v433 = vpack.c.b16 %v401, %v401
      %v434 = vpack.c.b16 %v402, %v402
      %v435 = vpack.c.b16 %v403, %v403
      %v436 = vpack.c.b16 %v404, %v404
      %v437 = vpack.c.b16 %v405, %v405
      %v438 = vpack.c.b16 %v406, %v406
      %v439 = vpack.c.b16 %v407, %v407
      %v440 = vpack.c.b16 %v408, %v408
      %v441 = vpack.c.b16 %v409, %v409
      %v442 = vpack.c.b16 %v410, %v410
      %v443 = vpack.c.b16 %v411, %v411
      %vm476 = vcmask 257024
      %477 = vst.msk [vmem:[%s172] sm:$0xf] %vm476, %v412
      %478 = vst.msk [vmem:[%s172 + $0x4] sm:$0xf] %vm476, %v413
      %479 = vst.msk [vmem:[%s172 + $0x8] sm:$0xf] %vm476, %v414
      %480 = vst.msk [vmem:[%s172 + $0xc] sm:$0xf] %vm476, %v415
      %481 = vst.msk [vmem:[%s172 + $0x10] sm:$0xf] %vm476, %v416
      %482 = vst.msk [vmem:[%s172 + $0x14] sm:$0xf] %vm476, %v417
      %483 = vst.msk [vmem:[%s172 + $0x18] sm:$0xf] %vm476, %v418
      %484 = vst.msk [vmem:[%s172 + $0x1c] sm:$0xf] %vm476, %v419
      %485 = vst.msk [vmem:[%s172 + $0x20] sm:$0xf] %vm476, %v420
      %486 = vst.msk [vmem:[%s172 + $0x24] sm:$0xf] %vm476, %v421
      %487 = vst.msk [vmem:[%s172 + $0x28] sm:$0xf] %vm476, %v422
      %488 = vst.msk [vmem:[%s172 + $0x2c] sm:$0xf] %vm476, %v423
      %489 = vst.msk [vmem:[%s172 + $0x30] sm:$0xf] %vm476, %v424
      %490 = vst.msk [vmem:[%s172 + $0x34] sm:$0xf] %vm476, %v425
      %491 = vst.msk [vmem:[%s172 + $0x38] sm:$0xf] %vm476, %v426
      %492 = vst.msk [vmem:[%s172 + $0x3c] sm:$0xf] %vm476, %v427
      %493 = vst.msk [vmem:[%s172 + $0x40] sm:$0xf] %vm476, %v428
      %494 = vst.msk [vmem:[%s172 + $0x44] sm:$0xf] %vm476, %v429
      %495 = vst.msk [vmem:[%s172 + $0x48] sm:$0xf] %vm476, %v430
      %496 = vst.msk [vmem:[%s172 + $0x4c] sm:$0xf] %vm476, %v431
      %497 = vst.msk [vmem:[%s172 + $0x50] sm:$0xf] %vm476, %v432
      %498 = vst.msk [vmem:[%s172 + $0x54] sm:$0xf] %vm476, %v433
      %499 = vst.msk [vmem:[%s172 + $0x58] sm:$0xf] %vm476, %v434
      %500 = vst.msk [vmem:[%s172 + $0x5c] sm:$0xf] %vm476, %v435
      %501 = vst.msk [vmem:[%s172 + $0x60] sm:$0xf] %vm476, %v436
      %502 = vst.msk [vmem:[%s172 + $0x64] sm:$0xf] %vm476, %v437
      %503 = vst.msk [vmem:[%s172 + $0x68] sm:$0xf] %vm476, %v438
      %504 = vst.msk [vmem:[%s172 + $0x6c] sm:$0xf] %vm476, %v439
      %505 = vst.msk [vmem:[%s172 + $0x70] sm:$0xf] %vm476, %v440
      %506 = vst.msk [vmem:[%s172 + $0x74] sm:$0xf] %vm476, %v441
      %507 = vst.msk [vmem:[%s172 + $0x78] sm:$0xf] %vm476, %v442
      %508 = vst.msk [vmem:[%s172 + $0x7c] sm:$0xf] %vm476, %v443
      %s509 = smul.u32 32, %s14
      %p510 = scmp.lt.s32.totalorder %s509, 63
      %s511 = scalar_select %p510, %s509, 63
      %s512 = smul.addr %s511, 4
      %s513 = scalar_lea.vmem %s3, %s512
      // Predicated region
      $region33: #{up_forward.7} parent=31 // pred_check
        %p514 = pneg %p100
      $region34: #{up_forward.7} parent=31 // pred_check_branch
        %516 = sbr.rel (%p514) target = $region36
      $region35: #{up_forward.7} parent=31 // pred_region
        %s517 = smul.u32 32, %s14
      $region36: #{up_forward.7} parent=31 // pred_fallthru
        _
    $region32: #{up_forward.7} parent=5 // pred_fallthru
      _
    %p518 = scmp.le.s32.totalorder 2, %s9
    // Predicated region
    $region37: #{up_forward.7} parent=5 // pred_check
      %p519 = pneg %p518
    $region38: #{up_forward.7} parent=5 // pred_check_branch
      %521 = sbr.rel (%p519) target = $region40
    $region39: #{up_forward.7} parent=5 // pred_region
      %s522 = ssub.s32 %s9, 2
      // Predicated region
      $region41: #{up_forward.7} parent=39 // pred_check
        %p523 = pneg %p106
      $region42: #{up_forward.7} parent=39 // pred_check_branch
        %525 = sbr.rel (%p523) target = $region44
      $region43: #{up_forward.7} parent=39 // pred_region
        %s526 = smul.u32 32, %s15
        %p527 = scmp.lt.s32.totalorder %s526, 63
        %s528 = scalar_select %p527, %s526, 63
        %s529 = smul.addr %s528, 4
        %s530 = scalar_lea.vmem %s3, %s529
      $region44: #{up_forward.7} parent=39 // pred_fallthru
        _
    $region40: #{up_forward.7} parent=5 // pred_fallthru
      _
  $region6: #{up_forward.7} parent=0 // loop_footer
    %s13 = sadd.s32 1, %s9
  $region7: #{up_forward.7} parent=0 // loop_footer_branch
    %8 = sbr.rel target = $region3
  $region8: #{up_forward.7} parent=0 // loop_exit
    _

// kernel: up_forward.6
$region0: #{up_forward.6}
  #allocation0 [shape = 'u32[]', space=smem, size = 0x4, offset = 0x4, fixed_abs, tag = 'smem constant byte address 0x4 - core index']
  #allocation1 [shape = 'u32[144,128]{1,0:T(1,128)}', space=vmem, size = 0x12000, scoped, tag = 'internal scratch']
  %s0 = inlined_call_operand.vmem [shape: bf16[2,18,18,64], index: 0, kind: input, shape index: {}]
  %s1 = inlined_call_operand.vmem [shape: bf16[3,3,64,32], index: 1, kind: input, shape index: {}]
  %s2 = inlined_call_operand.vmem [shape: f32[1,32], index: 2, kind: input, shape index: {}]
  %s3 = inlined_call_operand.vmem [shape: bf16[2,256,32], index: 3, kind: output, shape index: {0}]
  %s4 = inlined_call_operand.vmem [shape: f32[2,1,32], index: 4, kind: output, shape index: {1}]
  %s5 = inlined_call_operand.vmem [shape: f32[2,1,32], index: 5, kind: output, shape index: {2}]
  %6 = xla_tuple %s3, %s4, %s5
  %s7 = sld [smem:[#allocation0]]
  $region61: #{up_forward.6} parent=0
    _
  %s9 = ssub.s32 1, %s7
  %s10 = scalar_select 0, %s9, %s7
  loop: start=0, step=1, limit=4
  $region2: #{up_forward.6} parent=0 // loop_pre_header
    _
  $region3: #{up_forward.6} parent=0 // loop_header
    %s12 = sphi 0, %s16
    %p13 = scmp.ge.s32.totalorder %s12, 4
    %s19 = sphi 0, %s31
    %s20 = sphi 0, %s27
    %s21 = sphi 0, %s19
    %s22 = sphi 0, %s20
    %s23 = sphi 0, %s21
    %s24 = sphi 0, %s22
    %s34 = sphi 0, %s36
    %s37 = sphi 0, %s34
    %s38 = sphi 0, %s37
    %s54 = sphi 0, %s38
    %s60 = sphi 0, %s62
    %s63 = sphi 0, %s60
    %s64 = sphi 0, %s63
    %s80 = sphi 0, %s64
    %s86 = sphi 0, %s88
    %s89 = sphi 0, %s86
    %s90 = sphi 0, %s89
    %s106 = sphi 0, %s90
    %s114 = sphi 0, %s116
    %s117 = sphi 0, %s114
    %s118 = sphi 0, %s117
    %s134 = sphi 0, %s118
    %s142 = sphi 0, %s144
    %s145 = sphi 0, %s142
    %s146 = sphi 0, %s145
    %s162 = sphi 0, %s146
    %s170 = sphi 0, %s172
    %s173 = sphi 0, %s170
    %s174 = sphi 0, %s173
    %s190 = sphi 0, %s174
  $region4: #{up_forward.6} parent=0 // loop_header_branch
    %15 = sbr.rel (%p13) target = $region8
  $region5: #{up_forward.6} parent=0 // loop_body
    %s17 = ssub.s32 %s12, 1
    %s18 = ssub.s32 %s12, 2
    %s25 = sadd.s32 1, %s20
    %p26 = scmp.ge.s32.totalorder %s25, 2
    %s27 = scalar_select %p26, 0, %s25
    %s28 = sadd.s32 1, %s19
    %s29 = scalar_select %p26, %s28, %s19
    %p30 = scmp.ge.s32.totalorder %s29, 1
    %s31 = scalar_select %p30, 0, %s29
    %s32 = ssub.s32 %s20, %s27
    %p33 = scmp.eq.s32.totalorder %s32, 0
    %s35 = sadd.s32 %s34, 1
    %s36 = scalar_select %p33, %s34, %s35
    %p39 = pneg %p33
    %p40 = scmp.eq.s32.totalorder %s12, 1
    %p41 = por %p39, %p40
    %p42 = scmp.ne.s32.totalorder %s34, %s37
    %p43 = scmp.eq.s32.totalorder %s12, 0
    %p44 = por %p42, %p43
    %p45 = scmp.ne.s32.totalorder %s34, %s37
    %p46 = scmp.eq.s32.totalorder %s17, 1
    %p47 = por %p45, %p46
    %p48 = scmp.ne.s32.totalorder %s37, %s38
    %p49 = scmp.eq.s32.totalorder %s17, 0
    %p50 = por %p48, %p49
    %p51 = scmp.ne.s32.totalorder %s37, %s38
    %p52 = scmp.eq.s32.totalorder %s18, 1
    %p53 = por %p51, %p52
    %p55 = scmp.ne.s32.totalorder %s38, %s54
    %p56 = scmp.eq.s32.totalorder %s18, 0
    %p57 = por %p55, %p56
    %s58 = ssub.s32 %s19, %s31
    %p59 = scmp.eq.s32.totalorder %s58, 0
    %s61 = sadd.s32 %s60, 1
    %s62 = scalar_select %p59, %s60, %s61
    %p65 = pneg %p59
    %p66 = scmp.eq.s32.totalorder %s12, 1
    %p67 = por %p65, %p66
    %p68 = scmp.ne.s32.totalorder %s60, %s63
    %p69 = scmp.eq.s32.totalorder %s12, 0
    %p70 = por %p68, %p69
    %p71 = scmp.ne.s32.totalorder %s60, %s63
    %p72 = scmp.eq.s32.totalorder %s17, 1
    %p73 = por %p71, %p72
    %p74 = scmp.ne.s32.totalorder %s63, %s64
    %p75 = scmp.eq.s32.totalorder %s17, 0
    %p76 = por %p74, %p75
    %p77 = scmp.ne.s32.totalorder %s63, %s64
    %p78 = scmp.eq.s32.totalorder %s18, 1
    %p79 = por %p77, %p78
    %p81 = scmp.ne.s32.totalorder %s64, %s80
    %p82 = scmp.eq.s32.totalorder %s18, 0
    %p83 = por %p81, %p82
    %s84 = ssub.s32 %s19, %s31
    %p85 = scmp.eq.s32.totalorder %s84, 0
    %s87 = sadd.s32 %s86, 1
    %s88 = scalar_select %p85, %s86, %s87
    %p91 = pneg %p85
    %p92 = scmp.eq.s32.totalorder %s12, 1
    %p93 = por %p91, %p92
    %p94 = scmp.ne.s32.totalorder %s86, %s89
    %p95 = scmp.eq.s32.totalorder %s12, 0
    %p96 = por %p94, %p95
    %p97 = scmp.ne.s32.totalorder %s86, %s89
    %p98 = scmp.eq.s32.totalorder %s17, 1
    %p99 = por %p97, %p98
    %p100 = scmp.ne.s32.totalorder %s89, %s90
    %p101 = scmp.eq.s32.totalorder %s17, 0
    %p102 = por %p100, %p101
    %p103 = scmp.ne.s32.totalorder %s89, %s90
    %p104 = scmp.eq.s32.totalorder %s18, 1
    %p105 = por %p103, %p104
    %p107 = scmp.ne.s32.totalorder %s90, %s106
    %p108 = scmp.eq.s32.totalorder %s18, 0
    %p109 = por %p107, %p108
    %s110 = ssub.s32 %s20, %s27
    %s111 = ssub.s32 %s19, %s31
    %s112 = sor.u32 %s110, %s111
    %p113 = scmp.eq.s32.totalorder %s112, 0
    %s115 = sadd.s32 %s114, 1
    %s116 = scalar_select %p113, %s114, %s115
    %p119 = pneg %p113
    %p120 = scmp.eq.s32.totalorder %s12, 1
    %p121 = por %p119, %p120
    %p122 = scmp.ne.s32.totalorder %s114, %s117
    %p123 = scmp.eq.s32.totalorder %s12, 0
    %p124 = por %p122, %p123
    %p125 = scmp.ne.s32.totalorder %s114, %s117
    %p126 = scmp.eq.s32.totalorder %s17, 1
    %p127 = por %p125, %p126
    %p128 = scmp.ne.s32.totalorder %s117, %s118
    %p129 = scmp.eq.s32.totalorder %s17, 0
    %p130 = por %p128, %p129
    %p131 = scmp.ne.s32.totalorder %s117, %s118
    %p132 = scmp.eq.s32.totalorder %s18, 1
    %p133 = por %p131, %p132
    %p135 = scmp.ne.s32.totalorder %s118, %s134
    %p136 = scmp.eq.s32.totalorder %s18, 0
    %p137 = por %p135, %p136
    %s138 = ssub.s32 %s20, %s27
    %s139 = ssub.s32 %s19, %s31
    %s140 = sor.u32 %s138, %s139
    %p141 = scmp.eq.s32.totalorder %s140, 0
    %s143 = sadd.s32 %s142, 1
    %s144 = scalar_select %p141, %s142, %s143
    %p147 = pneg %p141
    %p148 = scmp.eq.s32.totalorder %s12, 1
    %p149 = por %p147, %p148
    %p150 = scmp.ne.s32.totalorder %s142, %s145
    %p151 = scmp.eq.s32.totalorder %s12, 0
    %p152 = por %p150, %p151
    %p153 = scmp.ne.s32.totalorder %s142, %s145
    %p154 = scmp.eq.s32.totalorder %s17, 1
    %p155 = por %p153, %p154
    %p156 = scmp.ne.s32.totalorder %s145, %s146
    %p157 = scmp.eq.s32.totalorder %s17, 0
    %p158 = por %p156, %p157
    %p159 = scmp.ne.s32.totalorder %s145, %s146
    %p160 = scmp.eq.s32.totalorder %s18, 1
    %p161 = por %p159, %p160
    %p163 = scmp.ne.s32.totalorder %s146, %s162
    %p164 = scmp.eq.s32.totalorder %s18, 0
    %p165 = por %p163, %p164
    %s166 = ssub.s32 %s20, %s27
    %s167 = ssub.s32 %s19, %s31
    %s168 = sor.u32 %s166, %s167
    %p169 = scmp.eq.s32.totalorder %s168, 0
    %s171 = sadd.s32 %s170, 1
    %s172 = scalar_select %p169, %s170, %s171
    %p175 = pneg %p169
    %p176 = scmp.eq.s32.totalorder %s12, 1
    %p177 = por %p175, %p176
    %p178 = scmp.ne.s32.totalorder %s170, %s173
    %p179 = scmp.eq.s32.totalorder %s12, 0
    %p180 = por %p178, %p179
    %p181 = scmp.ne.s32.totalorder %s170, %s173
    %p182 = scmp.eq.s32.totalorder %s17, 1
    %p183 = por %p181, %p182
    %p184 = scmp.ne.s32.totalorder %s173, %s174
    %p185 = scmp.eq.s32.totalorder %s17, 0
    %p186 = por %p184, %p185
    %p187 = scmp.ne.s32.totalorder %s173, %s174
    %p188 = scmp.eq.s32.totalorder %s18, 1
    %p189 = por %p187, %p188
    %p191 = scmp.ne.s32.totalorder %s174, %s190
    %p192 = scmp.eq.s32.totalorder %s18, 0
    %p193 = por %p191, %p192
    %p194 = scmp.le.s32.totalorder 1, %s12
    %p195 = scmp.lt.s32.totalorder %s12, 3
    %p196 = pnand %p194, %p195
    %p197 = pneg %p196
    // Predicated region
    $region9: #{up_forward.6} parent=5 // pred_check
      _
    $region10: #{up_forward.6} parent=5 // pred_check_branch
      %199 = sbr.rel (%p196) target = $region12
    $region11: #{up_forward.6} parent=5 // pred_region
      %s200 = ssub.s32 %s12, 1
      // Predicated region
      $region13: #{up_forward.6} parent=11 // pred_check
        %p201 = pneg %p76
      $region14: #{up_forward.6} parent=11 // pred_check_branch
        %203 = sbr.rel (%p201) target = $region16
      $region15: #{up_forward.6} parent=11 // pred_region
        %p204 = scmp.lt.s32.totalorder %s21, 0
        %s205 = scalar_select %p204, %s21, 0
        %s206 = smul.addr %s205, 4
        %s207 = scalar_lea.vmem %s1, %s206
      $region16: #{up_forward.6} parent=11 // pred_fallthru
        _
      // Predicated region
      $region17: #{up_forward.6} parent=11 // pred_check
        %p208 = pneg %p102
      $region18: #{up_forward.6} parent=11 // pred_check_branch
        %210 = sbr.rel (%p208) target = $region20
      $region19: #{up_forward.6} parent=11 // pred_region
        %p211 = scmp.lt.s32.totalorder %s21, 0
        %s212 = scalar_select %p211, %s21, 0
        %s213 = scalar_lea.vmem %s2, %s212
      $region20: #{up_forward.6} parent=11 // pred_fallthru
        _
    $region12: #{up_forward.6} parent=5 // pred_fallthru
      _
    %p214 = scmp.lt.s32.totalorder %s12, 2
    // Predicated region
    $region21: #{up_forward.6} parent=5 // pred_check
      %p215 = pneg %p214
    $region22: #{up_forward.6} parent=5 // pred_check_branch
      %217 = sbr.rel (%p215) target = $region24
    $region23: #{up_forward.6} parent=5 // pred_region
      // Predicated region
      $region25: #{up_forward.6} parent=23 // pred_check
        %p218 = pneg %p44
      $region26: #{up_forward.6} parent=23 // pred_check_branch
        %220 = sbr.rel (%p218) target = $region28
      $region27: #{up_forward.6} parent=23 // pred_region
        %p221 = scmp.lt.s32.totalorder %s20, 1
        %s222 = scalar_select %p221, %s20, 1
        %s223 = smul.addr %s222, 54
        %s224 = smul.addr %s223, 4
        %s225 = scalar_lea.vmem %s0, %s224
      $region28: #{up_forward.6} parent=23 // pred_fallthru
        _
    $region24: #{up_forward.6} parent=5 // pred_fallthru
      _
    %p226 = scmp.le.s32.totalorder 1, %s12
    %p227 = scmp.lt.s32.totalorder %s12, 3
    %p228 = pnand %p226, %p227
    %p229 = pneg %p228
    // Predicated region
    $region29: #{up_forward.6} parent=5 // pred_check
      _
    $region30: #{up_forward.6} parent=5 // pred_check_branch
      %231 = sbr.rel (%p228) target = $region32
    $region31: #{up_forward.6} parent=5 // pred_region
      %s232 = ssub.s32 %s12, 1
      %p233 = scmp.lt.s32.totalorder %s22, 1
      %s234 = scalar_select %p233, %s22, 1
      %s235 = smul.addr %s234, 54
      %s236 = smul.addr %s235, 4
      %s237 = scalar_lea.vmem %s0, %s236
      %p238 = pneg %p50
      %p239 = pneg %p47
      %p240 = scmp.lt.s32.totalorder %s21, 0
      %s241 = scalar_select %p240, %s21, 0
      %s242 = smul.addr %s241, 4
      %s243 = scalar_lea.vmem %s1, %s242
      %p244 = pneg %p76
      %p245 = pneg %p73
      %p246 = scmp.lt.s32.totalorder %s21, 0
      %s247 = scalar_select %p246, %s21, 0
      %s248 = scalar_lea.vmem %s2, %s247
      %p249 = pneg %p102
      %p250 = pneg %p99
      %p251 = pneg %p130
      %p252 = pneg %p127
      %p253 = scmp.lt.s32.totalorder %s22, 1
      %s254 = scalar_select %p253, %s22, 1
      %p255 = scmp.lt.s32.totalorder %s21, 0
      %s256 = scalar_select %p255, %s21, 0
      %s257 = smul.addr %s254, 32
      %s258 = sadd.s32 %s256, %s257
      %s259 = smul.addr %s258, 4
      %s260 = scalar_lea.vmem %s3, %s259
      %p261 = pneg %p158
      %p262 = pneg %p155
      %p263 = scmp.lt.s32.totalorder %s22, 1
      %s264 = scalar_select %p263, %s22, 1
      %p265 = scmp.lt.s32.totalorder %s21, 0
      %s266 = scalar_select %p265, %s21, 0
      %s267 = sadd.s32 %s266, %s264
      %s268 = scalar_lea.vmem %s4, %s267
      %p269 = pneg %p186
      %p270 = pneg %p183
      %p271 = scmp.lt.s32.totalorder %s22, 1
      %s272 = scalar_select %p271, %s22, 1
      %p273 = scmp.lt.s32.totalorder %s21, 0
      %s274 = scalar_select %p273, %s21, 0
      %s275 = sadd.s32 %s274, %s272
      %s276 = scalar_lea.vmem %s5, %s275
      %p277 = scmp.lt.s32.totalorder %s22, 1
      %s278 = scalar_select %p277, %s22, 1
      %s279 = smul.addr %s278, 54
      %s280 = smul.addr %s279, 4
      %s281 = scalar_lea.vmem %s0, %s280
      %p282 = scmp.lt.s32.totalorder %s21, 0
      %s283 = scalar_select %p282, %s21, 0
      %s284 = smul.addr %s283, 4
      %s285 = scalar_lea.vmem %s1, %s284
      %p286 = scmp.lt.s32.totalorder %s21, 0
      %s287 = scalar_select %p286, %s21, 0
      %s288 = scalar_lea.vmem %s2, %s287
      %p289 = scmp.lt.s32.totalorder %s22, 1
      %s290 = scalar_select %p289, %s22, 1
      %p291 = scmp.lt.s32.totalorder %s21, 0
      %s292 = scalar_select %p291, %s21, 0
      %s293 = smul.addr %s290, 32
      %s294 = sadd.s32 %s292, %s293
      %s295 = smul.addr %s294, 4
      %s296 = scalar_lea.vmem %s3, %s295
      %p297 = scmp.lt.s32.totalorder %s22, 1
      %s298 = scalar_select %p297, %s22, 1
      %p299 = scmp.lt.s32.totalorder %s21, 0
      %s300 = scalar_select %p299, %s21, 0
      %s301 = sadd.s32 %s300, %s298
      %s302 = scalar_lea.vmem %s4, %s301
      %p303 = scmp.lt.s32.totalorder %s22, 1
      %s304 = scalar_select %p303, %s22, 1
      %p305 = scmp.lt.s32.totalorder %s21, 0
      %s306 = scalar_select %p305, %s21, 0
      %s307 = sadd.s32 %s306, %s304
      %s308 = scalar_lea.vmem %s5, %s307
      %v310 = vld [vmem:[%s281] sm:$0xf]
      %v311 = vld [vmem:[%s281 + $0x4] sm:$0xf]
      %v312 = vld [vmem:[%s281 + $0x8] sm:$0x1]
      %v313 = vld [vmem:[%s281 + $0xc] sm:$0xf]
      %v314 = vld [vmem:[%s281 + $0x10] sm:$0xf]
      %v315 = vld [vmem:[%s281 + $0x14] sm:$0x1]
      %v316 = vld [vmem:[%s281 + $0x18] sm:$0xf]
      %v317 = vld [vmem:[%s281 + $0x1c] sm:$0xf]
      %v318 = vld [vmem:[%s281 + $0x20] sm:$0x1]
      %v319 = vld [vmem:[%s281 + $0x24] sm:$0xf]
      %v320 = vld [vmem:[%s281 + $0x28] sm:$0xf]
      %v321 = vld [vmem:[%s281 + $0x2c] sm:$0x1]
      %v322 = vld [vmem:[%s281 + $0x30] sm:$0xf]
      %v323 = vld [vmem:[%s281 + $0x34] sm:$0xf]
      %v324 = vld [vmem:[%s281 + $0x38] sm:$0x1]
      %v325 = vld [vmem:[%s281 + $0x3c] sm:$0xf]
      %v326 = vld [vmem:[%s281 + $0x40] sm:$0xf]
      %v327 = vld [vmem:[%s281 + $0x44] sm:$0x1]
      %v328 = vld [vmem:[%s281 + $0x48] sm:$0xf]
      %v329 = vld [vmem:[%s281 + $0x4c] sm:$0xf]
      %v330 = vld [vmem:[%s281 + $0x50] sm:$0x1]
      %v331 = vld [vmem:[%s281 + $0x54] sm:$0xf]
      %v332 = vld [vmem:[%s281 + $0x58] sm:$0xf]
      %v333 = vld [vmem:[%s281 + $0x5c] sm:$0x1]
      %v334 = vld [vmem:[%s281 + $0x60] sm:$0xf]
      %v335 = vld [vmem:[%s281 + $0x64] sm:$0xf]
      %v336 = vld [vmem:[%s281 + $0x68] sm:$0x1]
      %v337 = vld [vmem:[%s281 + $0x6c] sm:$0xf]
      %v338 = vld [vmem:[%s281 + $0x70] sm:$0xf]
      %v339 = vld [vmem:[%s281 + $0x74] sm:$0x1]
      %v340 = vld [vmem:[%s281 + $0x78] sm:$0xf]
      %v341 = vld [vmem:[%s281 + $0x7c] sm:$0xf]
      %v342 = vld [vmem:[%s281 + $0x80] sm:$0x1]
      %v343 = vld [vmem:[%s281 + $0x84] sm:$0xf]
      %v344 = vld [vmem:[%s281 + $0x88] sm:$0xf]
      %v345 = vld [vmem:[%s281 + $0x8c] sm:$0x1]
      %v346 = vld [vmem:[%s281 + $0x90] sm:$0xf]
      %v347 = vld [vmem:[%s281 + $0x94] sm:$0xf]
      %v348 = vld [vmem:[%s281 + $0x98] sm:$0x1]
      %v349 = vld [vmem:[%s281 + $0x9c] sm:$0xf]
      %v350 = vld [vmem:[%s281 + $0xa0] sm:$0xf]
      %v351 = vld [vmem:[%s281 + $0xa4] sm:$0x1]
      %v352 = vld [vmem:[%s281 + $0xa8] sm:$0xf]
      %v353 = vld [vmem:[%s281 + $0xac] sm:$0xf]
      %v354 = vld [vmem:[%s281 + $0xb0] sm:$0x1]
      %v355 = vld [vmem:[%s281 + $0xb4] sm:$0xf]
      %v356 = vld [vmem:[%s281 + $0xb8] sm:$0xf]
      %v357 = vld [vmem:[%s281 + $0xbc] sm:$0x1]
      %v358 = vld [vmem:[%s281 + $0xc0] sm:$0xf]
      %v359 = vld [vmem:[%s281 + $0xc4] sm:$0xf]
      %v360 = vld [vmem:[%s281 + $0xc8] sm:$0x1]
      %v361 = vld [vmem:[%s281 + $0xcc] sm:$0xf]
      %v362 = vld [vmem:[%s281 + $0xd0] sm:$0xf]
      %v363 = vld [vmem:[%s281 + $0xd4] sm:$0x1]
      %v364 = vld [vmem:[%s285] sm:$0xf]
      %v365 = vld [vmem:[%s285 + $0x4] sm:$0xf]
      %v366 = vld [vmem:[%s285 + $0x8] sm:$0xf]
      %v367 = vld [vmem:[%s285 + $0xc] sm:$0xf]
      %v368 = vld [vmem:[%s285 + $0x10] sm:$0xf]
      %v369 = vld [vmem:[%s285 + $0x14] sm:$0xf]
      %v370 = vld [vmem:[%s285 + $0x18] sm:$0xf]
      %v371 = vld [vmem:[%s285 + $0x1c] sm:$0xf]
      %v372 = vld [vmem:[%s285 + $0x20] sm:$0xf]
      %v373 = vld [vmem:[%s285 + $0x24] sm:$0xf]
      %v374 = vld [vmem:[%s285 + $0x28] sm:$0xf]
      %v375 = vld [vmem:[%s285 + $0x2c] sm:$0xf]
      %v376 = vld [vmem:[%s285 + $0x30] sm:$0xf]
      %v377 = vld [vmem:[%s285 + $0x34] sm:$0xf]
      %v378 = vld [vmem:[%s285 + $0x38] sm:$0xf]
      %v379 = vld [vmem:[%s285 + $0x3c] sm:$0xf]
      %v380 = vld [vmem:[%s285 + $0x40] sm:$0xf]
      %v381 = vld [vmem:[%s285 + $0x44] sm:$0xf]
      %v382 = vld [vmem:[%s285 + $0x48] sm:$0xf]
      %v383 = vld [vmem:[%s285 + $0x4c] sm:$0xf]
      %v384 = vld [vmem:[%s285 + $0x50] sm:$0xf]
      %v385 = vld [vmem:[%s285 + $0x54] sm:$0xf]
      %v386 = vld [vmem:[%s285 + $0x58] sm:$0xf]
      %v387 = vld [vmem:[%s285 + $0x5c] sm:$0xf]
      %v388 = vld [vmem:[%s285 + $0x60] sm:$0xf]
      %v389 = vld [vmem:[%s285 + $0x64] sm:$0xf]
      %v390 = vld [vmem:[%s285 + $0x68] sm:$0xf]
      %v391 = vld [vmem:[%s285 + $0x6c] sm:$0xf]
      %v392 = vld [vmem:[%s285 + $0x70] sm:$0xf]
      %v393 = vld [vmem:[%s285 + $0x74] sm:$0xf]
      %v394 = vld [vmem:[%s285 + $0x78] sm:$0xf]
      %v395 = vld [vmem:[%s285 + $0x7c] sm:$0xf]
      %v396 = vld [vmem:[%s285 + $0x80] sm:$0xf]
      %v397 = vld [vmem:[%s285 + $0x84] sm:$0xf]
      %v398 = vld [vmem:[%s285 + $0x88] sm:$0xf]
      %v399 = vld [vmem:[%s285 + $0x8c] sm:$0xf]
      %v400 = vld [vmem:[%s285 + $0x90] sm:$0xf]
      %v401 = vld [vmem:[%s285 + $0x94] sm:$0xf]
      %v402 = vld [vmem:[%s285 + $0x98] sm:$0xf]
      %v403 = vld [vmem:[%s285 + $0x9c] sm:$0xf]
      %v404 = vld [vmem:[%s285 + $0xa0] sm:$0xf]
      %v405 = vld [vmem:[%s285 + $0xa4] sm:$0xf]
      %v406 = vld [vmem:[%s285 + $0xa8] sm:$0xf]
      %v407 = vld [vmem:[%s285 + $0xac] sm:$0xf]
      %v408 = vld [vmem:[%s285 + $0xb0] sm:$0xf]
      %v409 = vld [vmem:[%s285 + $0xb4] sm:$0xf]
      %v410 = vld [vmem:[%s285 + $0xb8] sm:$0xf]
      %v411 = vld [vmem:[%s285 + $0xbc] sm:$0xf]
      %v412 = vld [vmem:[%s285 + $0xc0] sm:$0xf]
      %v413 = vld [vmem:[%s285 + $0xc4] sm:$0xf]
      %v414 = vld [vmem:[%s285 + $0xc8] sm:$0xf]
      %v415 = vld [vmem:[%s285 + $0xcc] sm:$0xf]
      %v416 = vld [vmem:[%s285 + $0xd0] sm:$0xf]
      %v417 = vld [vmem:[%s285 + $0xd4] sm:$0xf]
      %v418 = vld [vmem:[%s285 + $0xd8] sm:$0xf]
      %v419 = vld [vmem:[%s285 + $0xdc] sm:$0xf]
      %v420 = vld [vmem:[%s285 + $0xe0] sm:$0xf]
      %v421 = vld [vmem:[%s285 + $0xe4] sm:$0xf]
      %v422 = vld [vmem:[%s285 + $0xe8] sm:$0xf]
      %v423 = vld [vmem:[%s285 + $0xec] sm:$0xf]
      %v424 = vld [vmem:[%s285 + $0xf0] sm:$0xf]
      %v425 = vld [vmem:[%s285 + $0xf4] sm:$0xf]
      %v426 = vld [vmem:[%s285 + $0xf8] sm:$0xf]
      %v427 = vld [vmem:[%s285 + $0xfc] sm:$0xf]
      %v428 = vld [vmem:[%s285 + $0x100] sm:$0xf]
      %v429 = vld [vmem:[%s285 + $0x104] sm:$0xf]
      %v430 = vld [vmem:[%s285 + $0x108] sm:$0xf]
      %v431 = vld [vmem:[%s285 + $0x10c] sm:$0xf]
      %v432 = vld [vmem:[%s285 + $0x110] sm:$0xf]
      %v433 = vld [vmem:[%s285 + $0x114] sm:$0xf]
      %v434 = vld [vmem:[%s285 + $0x118] sm:$0xf]
      %v435 = vld [vmem:[%s285 + $0x11c] sm:$0xf]
      %vm436 = vsmask.f32 3328
      %vm437 = vsmask.f32 7440
      %vm438 = vmor %vm436, %vm437
      %v440 = vshrl.u32 %v310, 16
      %v442 = vrot.slane %v440, 4
      %v443 = vshll.u32 %v310, 16
      %v445 = vrot.slane %v443, 5
      %v446 = vor.u32 %v442, %v445
      %v447 = vrot.slane %v446, 4
      %v449 = vshll.u32 %v311, 16
      %v451 = vrot.slane %v449, 5
      %v452 = vsel %vm438, %v447, %v451
      %v453 = vshrl.u32 %v311, 16
      %v455 = vrot.slane %v453, 4
      %v456 = vor.u32 %v455, %v451
      %v457 = vrot.slane %v456, 4
      %v459 = vshll.u32 %v312, 16
      %v461 = vrot.slane %v459, 5
      %v462 = vsel %vm438, %v457, %v461
      %v464 = vshrl.u32 %v313, 16
      %v466 = vrot.slane %v464, 4
      %v467 = vshll.u32 %v313, 16
      %v469 = vrot.slane %v467, 5
      %v470 = vor.u32 %v466, %v469
      %v471 = vrot.slane %v470, 4
      %v473 = vshll.u32 %v314, 16
      %v475 = vrot.slane %v473, 5
      %v476 = vsel %vm438, %v471, %v475
      %v477 = vshrl.u32 %v314, 16
      %v479 = vrot.slane %v477, 4
      %v480 = vor.u32 %v479, %v475
      %v481 = vrot.slane %v480, 4
      %v483 = vshll.u32 %v315, 16
      %v485 = vrot.slane %v483, 5
      %v486 = vsel %vm438, %v481, %v485
      %v488 = vshrl.u32 %v316, 16
      %v490 = vrot.slane %v488, 4
      %v491 = vshll.u32 %v316, 16
      %v493 = vrot.slane %v491, 5
      %v494 = vor.u32 %v490, %v493
      %v495 = vrot.slane %v494, 4
      %v497 = vshll.u32 %v317, 16
      %v499 = vrot.slane %v497, 5
      %v500 = vsel %vm438, %v495, %v499
      %v501 = vshrl.u32 %v317, 16
      %v503 = vrot.slane %v501, 4
      %v504 = vor.u32 %v503, %v499
      %v505 = vrot.slane %v504, 4
      %v507 = vshll.u32 %v318, 16
      %v509 = vrot.slane %v507, 5
      %v510 = vsel %vm438, %v505, %v509
      %v512 = vshrl.u32 %v319, 16
      %v514 = vrot.slane %v512, 4
      %v515 = vshll.u32 %v319, 16
      %v517 = vrot.slane %v515, 5
      %v518 = vor.u32 %v514, %v517
      %v519 = vrot.slane %v518, 4
      %v521 = vshll.u32 %v320, 16
      %v523 = vrot.slane %v521, 5
      %v524 = vsel %vm438, %v519, %v523
      %v525 = vshrl.u32 %v320, 16
      %v527 = vrot.slane %v525, 4
      %v528 = vor.u32 %v527, %v523
      %v529 = vrot.slane %v528, 4
      %v531 = vshll.u32 %v321, 16
      %v533 = vrot.slane %v531, 5
      %v534 = vsel %vm438, %v529, %v533
      %v536 = vshrl.u32 %v322, 16
      %v538 = vrot.slane %v536, 4
      %v539 = vshll.u32 %v322, 16
      %v541 = vrot.slane %v539, 5
      %v542 = vor.u32 %v538, %v541
      %v543 = vrot.slane %v542, 4
      %v545 = vshll.u32 %v323, 16
      %v547 = vrot.slane %v545, 5
      %v548 = vsel %vm438, %v543, %v547
      %v549 = vshrl.u32 %v323, 16
      %v551 = vrot.slane %v549, 4
      %v552 = vor.u32 %v551, %v547
      %v553 = vrot.slane %v552, 4
      %v555 = vshll.u32 %v324, 16
      %v557 = vrot.slane %v555, 5
      %v558 = vsel %vm438, %v553, %v557
      %v560 = vshrl.u32 %v325, 16
      %v562 = vrot.slane %v560, 4
      %v563 = vshll.u32 %v325, 16
      %v565 = vrot.slane %v563, 5
      %v566 = vor.u32 %v562, %v565
      %v567 = vrot.slane %v566, 4
      %v569 = vshll.u32 %v326, 16
      %v571 = vrot.slane %v569, 5
      %v572 = vsel %vm438, %v567, %v571
      %v573 = vshrl.u32 %v326, 16
      %v575 = vrot.slane %v573, 4
      %v576 = vor.u32 %v575, %v571
      %v577 = vrot.slane %v576, 4
      %v579 = vshll.u32 %v327, 16
      %v581 = vrot.slane %v579, 5
      %v582 = vsel %vm438, %v577, %v581
      %v584 = vshrl.u32 %v328, 16
      %v586 = vrot.slane %v584, 4
      %v587 = vshll.u32 %v328, 16
      %v589 = vrot.slane %v587, 5
      %v590 = vor.u32 %v586, %v589
      %v591 = vrot.slane %v590, 4
      %v593 = vshll.u32 %v329, 16
      %v595 = vrot.slane %v593, 5
      %v596 = vsel %vm438, %v591, %v595
      %v597 = vshrl.u32 %v329, 16
      %v599 = vrot.slane %v597, 4
      %v600 = vor.u32 %v599, %v595
      %v601 = vrot.slane %v600, 4
      %v603 = vshll.u32 %v330, 16
      %v605 = vrot.slane %v603, 5
      %v606 = vsel %vm438, %v601, %v605
      %v608 = vshrl.u32 %v331, 16
      %v610 = vrot.slane %v608, 4
      %v611 = vshll.u32 %v331, 16
      %v613 = vrot.slane %v611, 5
      %v614 = vor.u32 %v610, %v613
      %v615 = vrot.slane %v614, 4
      %v617 = vshll.u32 %v332, 16
      %v619 = vrot.slane %v617, 5
      %v620 = vsel %vm438, %v615, %v619
      %v621 = vshrl.u32 %v332, 16
      %v623 = vrot.slane %v621, 4
      %v624 = vor.u32 %v623, %v619
      %v625 = vrot.slane %v624, 4
      %v627 = vshll.u32 %v333, 16
      %v629 = vrot.slane %v627, 5
      %v630 = vsel %vm438, %v625, %v629
      %v632 = vshrl.u32 %v334, 16
      %v634 = vrot.slane %v632, 4
      %v635 = vshll.u32 %v334, 16
      %v637 = vrot.slane %v635, 5
      %v638 = vor.u32 %v634, %v637
      %v639 = vrot.slane %v638, 4
      %v641 = vshll.u32 %v335, 16
      %v643 = vrot.slane %v641, 5
      %v644 = vsel %vm438, %v639, %v643
      %v645 = vshrl.u32 %v335, 16
      %v647 = vrot.slane %v645, 4
      %v648 = vor.u32 %v647, %v643
      %v649 = vrot.slane %v648, 4
      %v651 = vshll.u32 %v336, 16
      %v653 = vrot.slane %v651, 5
      %v654 = vsel %vm438, %v649, %v653
      %v656 = vshrl.u32 %v337, 16
      %v658 = vrot.slane %v656, 4
      %v659 = vshll.u32 %v337, 16
      %v661 = vrot.slane %v659, 5
      %v662 = vor.u32 %v658, %v661
      %v663 = vrot.slane %v662, 4
      %v665 = vshll.u32 %v338, 16
      %v667 = vrot.slane %v665, 5
      %v668 = vsel %vm438, %v663, %v667
      %v669 = vshrl.u32 %v338, 16
      %v671 = vrot.slane %v669, 4
      %v672 = vor.u32 %v671, %v667
      %v673 = vrot.slane %v672, 4
      %v675 = vshll.u32 %v339, 16
      %v677 = vrot.slane %v675, 5
      %v678 = vsel %vm438, %v673, %v677
      %v680 = vshrl.u32 %v340, 16
      %v682 = vrot.slane %v680, 4
      %v683 = vshll.u32 %v340, 16
      %v685 = vrot.slane %v683, 5
      %v686 = vor.u32 %v682, %v685
      %v687 = vrot.slane %v686, 4
      %v689 = vshll.u32 %v341, 16
      %v691 = vrot.slane %v689, 5
      %v692 = vsel %vm438, %v687, %v691
      %v693 = vshrl.u32 %v341, 16
      %v695 = vrot.slane %v693, 4
      %v696 = vor.u32 %v695, %v691
      %v697 = vrot.slane %v696, 4
      %v699 = vshll.u32 %v342, 16
      %v701 = vrot.slane %v699, 5
      %v702 = vsel %vm438, %v697, %v701
      %v704 = vshrl.u32 %v343, 16
      %v706 = vrot.slane %v704, 4
      %v707 = vshll.u32 %v343, 16
      %v709 = vrot.slane %v707, 5
      %v710 = vor.u32 %v706, %v709
      %v711 = vrot.slane %v710, 4
      %v713 = vshll.u32 %v344, 16
      %v715 = vrot.slane %v713, 5
      %v716 = vsel %vm438, %v711, %v715
      %v717 = vshrl.u32 %v344, 16
      %v719 = vrot.slane %v717, 4
      %v720 = vor.u32 %v719, %v715
      %v721 = vrot.slane %v720, 4
      %v723 = vshll.u32 %v345, 16
      %v725 = vrot.slane %v723, 5
      %v726 = vsel %vm438, %v721, %v725
      %v728 = vshrl.u32 %v346, 16
      %v730 = vrot.slane %v728, 4
      %v731 = vshll.u32 %v346, 16
      %v733 = vrot.slane %v731, 5
      %v734 = vor.u32 %v730, %v733
      %v735 = vrot.slane %v734, 4
      %v737 = vshll.u32 %v347, 16
      %v739 = vrot.slane %v737, 5
      %v740 = vsel %vm438, %v735, %v739
      %v741 = vshrl.u32 %v347, 16
      %v743 = vrot.slane %v741, 4
      %v744 = vor.u32 %v743, %v739
      %v745 = vrot.slane %v744, 4
      %v747 = vshll.u32 %v348, 16
      %v749 = vrot.slane %v747, 5
      %v750 = vsel %vm438, %v745, %v749
      %v752 = vshrl.u32 %v349, 16
      %v754 = vrot.slane %v752, 4
      %v755 = vshll.u32 %v349, 16
      %v757 = vrot.slane %v755, 5
      %v758 = vor.u32 %v754, %v757
      %v759 = vrot.slane %v758, 4
      %v761 = vshll.u32 %v350, 16
      %v763 = vrot.slane %v761, 5
      %v764 = vsel %vm438, %v759, %v763
      %v765 = vshrl.u32 %v350, 16
      %v767 = vrot.slane %v765, 4
      %v768 = vor.u32 %v767, %v763
      %v769 = vrot.slane %v768, 4
      %v771 = vshll.u32 %v351, 16
      %v773 = vrot.slane %v771, 5
      %v774 = vsel %vm438, %v769, %v773
      %v776 = vshrl.u32 %v352, 16
      %v778 = vrot.slane %v776, 4
      %v779 = vshll.u32 %v352, 16
      %v781 = vrot.slane %v779, 5
      %v782 = vor.u32 %v778, %v781
      %v783 = vrot.slane %v782, 4
      %v785 = vshll.u32 %v353, 16
      %v787 = vrot.slane %v785, 5
      %v788 = vsel %vm438, %v783, %v787
      %v789 = vshrl.u32 %v353, 16
      %v791 = vrot.slane %v789, 4
      %v792 = vor.u32 %v791, %v787
      %v793 = vrot.slane %v792, 4
      %v795 = vshll.u32 %v354, 16
      %v797 = vrot.slane %v795, 5
      %v798 = vsel %vm438, %v793, %v797
      %v800 = vshrl.u32 %v355, 16
      %v802 = vrot.slane %v800, 4
      %v803 = vshll.u32 %v355, 16
      %v805 = vrot.slane %v803, 5
      %v806 = vor.u32 %v802, %v805
      %v807 = vrot.slane %v806, 4
      %v809 = vshll.u32 %v356, 16
      %v811 = vrot.slane %v809, 5
      %v812 = vsel %vm438, %v807, %v811
      %v813 = vshrl.u32 %v356, 16
      %v815 = vrot.slane %v813, 4
      %v816 = vor.u32 %v815, %v811
      %v817 = vrot.slane %v816, 4
      %v819 = vshll.u32 %v357, 16
      %v821 = vrot.slane %v819, 5
      %v822 = vsel %vm438, %v817, %v821
      %v823 = vunpack.c.l.b16 %v452
      %v824 = vunpack.c.l.b16 %v462
      %v825 = vunpack.c.l.b16 %v476
      %v826 = vunpack.c.l.b16 %v486
      %v827 = vunpack.c.l.b16 %v500
      %v828 = vunpack.c.l.b16 %v510
      %v829 = vunpack.c.l.b16 %v524
      %v830 = vunpack.c.l.b16 %v534
      %v831 = vunpack.c.l.b16 %v548
      %v832 = vunpack.c.l.b16 %v558
      %v833 = vunpack.c.l.b16 %v572
      %v834 = vunpack.c.l.b16 %v582
      %v835 = vunpack.c.l.b16 %v596
      %v836 = vunpack.c.l.b16 %v606
      %v837 = vunpack.c.l.b16 %v620
      %v838 = vunpack.c.l.b16 %v630
      %v839 = vunpack.c.l.b16 %v644
      %v840 = vunpack.c.l.b16 %v654
      %v841 = vunpack.c.l.b16 %v668
      %v842 = vunpack.c.l.b16 %v678
      %v843 = vunpack.c.l.b16 %v692
      %v844 = vunpack.c.l.b16 %v702
      %v845 = vunpack.c.l.b16 %v716
      %v846 = vunpack.c.l.b16 %v726
      %v847 = vunpack.c.l.b16 %v740
      %v848 = vunpack.c.l.b16 %v750
      %v849 = vunpack.c.l.b16 %v764
      %v850 = vunpack.c.l.b16 %v774
      %v851 = vunpack.c.l.b16 %v788
      %v852 = vunpack.c.l.b16 %v798
      %v853 = vunpack.c.l.b16 %v812
      %v854 = vunpack.c.l.b16 %v822
      %v855 = vpack.c.b16 %v824, %v823
      %v856 = vpack.c.b16 %v826, %v825
      %v857 = vpack.c.b16 %v828, %v827
      %v858 = vpack.c.b16 %v830, %v829
      %v859 = vpack.c.b16 %v832, %v831
      %v860 = vpack.c.b16 %v834, %v833
      %v861 = vpack.c.b16 %v836, %v835
      %v862 = vpack.c.b16 %v838, %v837
      %v863 = vpack.c.b16 %v840, %v839
      %v864 = vpack.c.b16 %v842, %v841
      %v865 = vpack.c.b16 %v844, %v843
      %v866 = vpack.c.b16 %v846, %v845
      %v867 = vpack.c.b16 %v848, %v847
      %v868 = vpack.c.b16 %v850, %v849
      %v869 = vpack.c.b16 %v852, %v851
      %v870 = vpack.c.b16 %v854, %v853
      %v879 = vunpack.c.l.b16 %v372
      %v880 = vunpack.c.l.b16 %v373
      %v881 = vunpack.c.l.b16 %v374
      %v882 = vunpack.c.l.b16 %v375
      %v883 = vunpack.c.l.b16 %v376
      %v884 = vunpack.c.l.b16 %v377
      %v885 = vunpack.c.l.b16 %v378
      %v886 = vunpack.c.l.b16 %v379
      %v887 = vpack.c.b16 %v880, %v879
      %v888 = vpack.c.b16 %v882, %v881
      %v889 = vpack.c.b16 %v884, %v883
      %v890 = vpack.c.b16 %v886, %v885
      %vm895 = vcmask 523264
      %v897 = vsel %vm895, %v855, 0
      %v900 = vsel %vm895, %v856, 0
      %v903 = vsel %vm895, %v857, 0
      %v906 = vsel %vm895, %v858, 0
      %v909 = vsel %vm895, %v859, 0
      %v912 = vsel %vm895, %v860, 0
      %v915 = vsel %vm895, %v861, 0
      %v918 = vsel %vm895, %v862, 0
      %v921 = vsel %vm895, %v863, 0
      %v924 = vsel %vm895, %v864, 0
      %v927 = vsel %vm895, %v865, 0
      %v930 = vsel %vm895, %v866, 0
      %v933 = vsel %vm895, %v867, 0
      %v936 = vsel %vm895, %v868, 0
      %v939 = vsel %vm895, %v869, 0
      %v942 = vsel %vm895, %v870, 0
      %944 = vmatprep.subr.bf16.mxu0 0
      %945 = vmatpush1.bf16.msra.mxu0 0
      %946 = vmatprep.subr.bf16.mxu0 0
      %947 = vmatpush1.bf16.msra.mxu0 0
      %948 = vmatprep.subr.bf16.mxu0 0
      %949 = vmatpush1.bf16.msra.mxu0 0
      %950 = vmatprep.subr.bf16.mxu0 0
      %951 = vmatpush1.bf16.msra.mxu0 0
      %952 = vmatprep.subr.bf16.mxu0 0
      %953 = vmatpush1.bf16.msra.mxu0 %v890
      %954 = vmatprep.subr.bf16.mxu0 0
      %955 = vmatpush1.bf16.msra.mxu0 %v889
      %956 = vmatprep.subr.bf16.mxu0 0
      %957 = vmatpush1.bf16.msra.mxu0 %v888
      %958 = vmatprep.subr.bf16.mxu0 0
      %959 = vmatpush1.bf16.msra.mxu0 %v887
      %960 = vmatprep.subr.bf16.mxu0 0
      %961 = vmatpush2.bf16.msra.mxu0 0
      %962 = vmatprep.subr.bf16.mxu0 0
      %963 = vmatpush2.bf16.msra.mxu0 0
      %964 = vmatprep.subr.bf16.mxu0 0
      %965 = vmatpush2.bf16.msra.mxu0 0
      %966 = vmatprep.subr.bf16.mxu0 0
      %967 = vmatpush2.bf16.msra.mxu0 0
      %968 = vmatprep.subr.bf16.mxu0 0
      %969 = vmatpush2.bf16.msra.mxu0 0
      %970 = vmatprep.subr.bf16.mxu0 0
      %971 = vmatpush2.bf16.msra.mxu0 0
      %972 = vmatprep.subr.bf16.mxu0 0
      %973 = vmatpush2.bf16.msra.mxu0 0
      %974 = vmatprep.subr.bf16.mxu0 0
      %975 = vmatpush2.bf16.msra.mxu0 0
      %976 = vmatprep.mubr.bf16.mxu0 0
      %977 = vmatmul.mubr.bf16.gmra.mxu0 %v897
      %v978 = vpop.f32.mrf.mxu0
      %v979 = vadd.f32 0.0, %v978
      %v980 = vpop.f32.mrf.mxu0
      %v981 = vpop.f32.mrf.mxu0
      %v982 = vadd.f32 0.0, %v981
      %v983 = vpop.f32.mrf.mxu0
      %984 = vmatprep.mubr.bf16.mxu0 0
      %985 = vmatmul.mubr.bf16.gmra.mxu0 %v900
      %v986 = vpop.f32.mrf.mxu0
      %v987 = vadd.f32 0.0, %v986
      %v988 = vpop.f32.mrf.mxu0
      %v989 = vpop.f32.mrf.mxu0
      %v990 = vadd.f32 0.0, %v989
      %v991 = vpop.f32.mrf.mxu0
      %992 = vmatprep.mubr.bf16.mxu0 0
      %993 = vmatmul.mubr.bf16.gmra.mxu0 %v903
      %v994 = vpop.f32.mrf.mxu0
      %v995 = vadd.f32 0.0, %v994
      %v996 = vpop.f32.mrf.mxu0
      %v997 = vpop.f32.mrf.mxu0
      %v998 = vadd.f32 0.0, %v997
      %v999 = vpop.f32.mrf.mxu0
      %1000 = vmatprep.mubr.bf16.mxu0 0
      %1001 = vmatmul.mubr.bf16.gmra.mxu0 %v906
      %v1002 = vpop.f32.mrf.mxu0
      %v1003 = vadd.f32 0.0, %v1002
      %v1004 = vpop.f32.mrf.mxu0
      %v1005 = vpop.f32.mrf.mxu0
      %v1006 = vadd.f32 0.0, %v1005
      %v1007 = vpop.f32.mrf.mxu0
      %1008 = vmatprep.mubr.bf16.mxu0 0
      %1009 = vmatmul.mubr.bf16.gmra.mxu0 %v909
      %v1010 = vpop.f32.mrf.mxu0
      %v1011 = vadd.f32 0.0, %v1010
      %v1012 = vpop.f32.mrf.mxu0
      %v1013 = vpop.f32.mrf.mxu0
      %v1014 = vadd.f32 0.0, %v1013
      %v1015 = vpop.f32.mrf.mxu0
      %1016 = vmatprep.mubr.bf16.mxu0 0
      %1017 = vmatmul.mubr.bf16.gmra.mxu0 %v912
      %v1018 = vpop.f32.mrf.mxu0
      %v1019 = vadd.f32 0.0, %v1018
      %v1020 = vpop.f32.mrf.mxu0
      %v1021 = vpop.f32.mrf.mxu0
      %v1022 = vadd.f32 0.0, %v1021
      %v1023 = vpop.f32.mrf.mxu0
      %1024 = vmatprep.mubr.bf16.mxu0 0
      %1025 = vmatmul.mubr.bf16.gmra.mxu0 %v915
      %v1026 = vpop.f32.mrf.mxu0
      %v1027 = vadd.f32 0.0, %v1026
      %v1028 = vpop.f32.mrf.mxu0
      %v1029 = vpop.f32.mrf.mxu0
      %v1030 = vadd.f32 0.0, %v1029
      %v1031 = vpop.f32.mrf.mxu0
      %1032 = vmatprep.mubr.bf16.mxu0 0
      %1033 = vmatmul.mubr.bf16.gmra.mxu0 %v918
      %v1034 = vpop.f32.mrf.mxu0
      %v1035 = vadd.f32 0.0, %v1034
      %v1036 = vpop.f32.mrf.mxu0
      %v1037 = vpop.f32.mrf.mxu0
      %v1038 = vadd.f32 0.0, %v1037
      %v1039 = vpop.f32.mrf.mxu0
      %1040 = vmatprep.mubr.bf16.mxu0 0
      %1041 = vmatmul.mubr.bf16.gmra.mxu0 %v921
      %v1042 = vpop.f32.mrf.mxu0
      %v1043 = vadd.f32 0.0, %v1042
      %v1044 = vpop.f32.mrf.mxu0
      %v1045 = vpop.f32.mrf.mxu0
      %v1046 = vadd.f32 0.0, %v1045
      %v1047 = vpop.f32.mrf.mxu0
      %1048 = vmatprep.mubr.bf16.mxu0 0
      %1049 = vmatmul.mubr.bf16.gmra.mxu0 %v924
      %v1050 = vpop.f32.mrf.mxu0
      %v1051 = vadd.f32 0.0, %v1050
      %v1052 = vpop.f32.mrf.mxu0
      %v1053 = vpop.f32.mrf.mxu0
      %v1054 = vadd.f32 0.0, %v1053
      %v1055 = vpop.f32.mrf.mxu0
      %1056 = vmatprep.mubr.bf16.mxu0 0
      %1057 = vmatmul.mubr.bf16.gmra.mxu0 %v927
      %v1058 = vpop.f32.mrf.mxu0
      %v1059 = vadd.f32 0.0, %v1058
      %v1060 = vpop.f32.mrf.mxu0
      %v1061 = vpop.f32.mrf.mxu0
      %v1062 = vadd.f32 0.0, %v1061
      %v1063 = vpop.f32.mrf.mxu0
      %1064 = vmatprep.mubr.bf16.mxu0 0
      %1065 = vmatmul.mubr.bf16.gmra.mxu0 %v930
      %v1066 = vpop.f32.mrf.mxu0
      %v1067 = vadd.f32 0.0, %v1066
      %v1068 = vpop.f32.mrf.mxu0
      %v1069 = vpop.f32.mrf.mxu0
      %v1070 = vadd.f32 0.0, %v1069
      %v1071 = vpop.f32.mrf.mxu0
      %1072 = vmatprep.mubr.bf16.mxu0 0
      %1073 = vmatmul.mubr.bf16.gmra.mxu0 %v933
      %v1074 = vpop.f32.mrf.mxu0
      %v1075 = vadd.f32 0.0, %v1074
      %v1076 = vpop.f32.mrf.mxu0
      %v1077 = vpop.f32.mrf.mxu0
      %v1078 = vadd.f32 0.0, %v1077
      %v1079 = vpop.f32.mrf.mxu0
      %1080 = vmatprep.mubr.bf16.mxu0 0
      %1081 = vmatmul.mubr.bf16.gmra.mxu0 %v936
      %v1082 = vpop.f32.mrf.mxu0
      %v1083 = vadd.f32 0.0, %v1082
      %v1084 = vpop.f32.mrf.mxu0
      %v1085 = vpop.f32.mrf.mxu0
      %v1086 = vadd.f32 0.0, %v1085
      %v1087 = vpop.f32.mrf.mxu0
      %1088 = vmatprep.mubr.bf16.mxu0 0
      %1089 = vmatmul.mubr.bf16.gmra.mxu0 %v939
      %v1090 = vpop.f32.mrf.mxu0
      %v1091 = vadd.f32 0.0, %v1090
      %v1092 = vpop.f32.mrf.mxu0
      %v1093 = vpop.f32.mrf.mxu0
      %v1094 = vadd.f32 0.0, %v1093
      %v1095 = vpop.f32.mrf.mxu0
      %1096 = vmatprep.mubr.bf16.mxu0 0
      %1097 = vmatmul.mubr.bf16.gmra.mxu0 %v942
      %v1098 = vpop.f32.mrf.mxu0
      %v1099 = vadd.f32 0.0, %v1098
      %v1100 = vpop.f32.mrf.mxu0
      %v1101 = vpop.f32.mrf.mxu0
      %v1102 = vadd.f32 0.0, %v1101
      %v1103 = vpop.f32.mrf.mxu0
      %1104 = vdwg.mxu0
      %v1137 = vunpack.c.l.b16 %v310
      %v1138 = vunpack.c.l.b16 %v311
      %v1139 = vunpack.c.l.b16 %v313
      %v1140 = vunpack.c.l.b16 %v314
      %v1141 = vunpack.c.l.b16 %v316
      %v1142 = vunpack.c.l.b16 %v317
      %v1143 = vunpack.c.l.b16 %v319
      %v1144 = vunpack.c.l.b16 %v320
      %v1145 = vunpack.c.l.b16 %v322
      %v1146 = vunpack.c.l.b16 %v323
      %v1147 = vunpack.c.l.b16 %v325
      %v1148 = vunpack.c.l.b16 %v326
      %v1149 = vunpack.c.l.b16 %v328
      %v1150 = vunpack.c.l.b16 %v329
      %v1151 = vunpack.c.l.b16 %v331
      %v1152 = vunpack.c.l.b16 %v332
      %v1153 = vunpack.c.l.b16 %v334
      %v1154 = vunpack.c.l.b16 %v335
      %v1155 = vunpack.c.l.b16 %v337
      %v1156 = vunpack.c.l.b16 %v338
      %v1157 = vunpack.c.l.b16 %v340
      %v1158 = vunpack.c.l.b16 %v341
      %v1159 = vunpack.c.l.b16 %v343
      %v1160 = vunpack.c.l.b16 %v344
      %v1161 = vunpack.c.l.b16 %v346
      %v1162 = vunpack.c.l.b16 %v347
      %v1163 = vunpack.c.l.b16 %v349
      %v1164 = vunpack.c.l.b16 %v350
      %v1165 = vunpack.c.l.b16 %v352
      %v1166 = vunpack.c.l.b16 %v353
      %v1167 = vunpack.c.l.b16 %v355
      %v1168 = vunpack.c.l.b16 %v356
      %v1169 = vpack.c.b16 %v1138, %v1137
      %v1170 = vpack.c.b16 %v1140, %v1139
      %v1171 = vpack.c.b16 %v1142, %v1141
      %v1172 = vpack.c.b16 %v1144, %v1143
      %v1173 = vpack.c.b16 %v1146, %v1145
      %v1174 = vpack.c.b16 %v1148, %v1147
      %v1175 = vpack.c.b16 %v1150, %v1149
      %v1176 = vpack.c.b16 %v1152, %v1151
      %v1177 = vpack.c.b16 %v1154, %v1153
      %v1178 = vpack.c.b16 %v1156, %v1155
      %v1179 = vpack.c.b16 %v1158, %v1157
      %v1180 = vpack.c.b16 %v1160, %v1159
      %v1181 = vpack.c.b16 %v1162, %v1161
      %v1182 = vpack.c.b16 %v1164, %v1163
      %v1183 = vpack.c.b16 %v1166, %v1165
      %v1184 = vpack.c.b16 %v1168, %v1167
      %v1193 = vunpack.c.l.b16 %v364
      %v1194 = vunpack.c.l.b16 %v365
      %v1195 = vunpack.c.l.b16 %v366
      %v1196 = vunpack.c.l.b16 %v367
      %v1197 = vunpack.c.l.b16 %v368
      %v1198 = vunpack.c.l.b16 %v369
      %v1199 = vunpack.c.l.b16 %v370
      %v1200 = vunpack.c.l.b16 %v371
      %v1201 = vpack.c.b16 %v1194, %v1193
      %v1202 = vpack.c.b16 %v1196, %v1195
      %v1203 = vpack.c.b16 %v1198, %v1197
      %v1204 = vpack.c.b16 %v1200, %v1199
      %v1210 = vsel %vm895, %v1169, 0
      %v1213 = vsel %vm895, %v1170, 0
      %v1216 = vsel %vm895, %v1171, 0
      %v1219 = vsel %vm895, %v1172, 0
      %v1222 = vsel %vm895, %v1173, 0
      %v1225 = vsel %vm895, %v1174, 0
      %v1228 = vsel %vm895, %v1175, 0
      %v1231 = vsel %vm895, %v1176, 0
      %v1234 = vsel %vm895, %v1177, 0
      %v1237 = vsel %vm895, %v1178, 0
      %v1240 = vsel %vm895, %v1179, 0
      %v1243 = vsel %vm895, %v1180, 0
      %v1246 = vsel %vm895, %v1181, 0
      %v1249 = vsel %vm895, %v1182, 0
      %v1252 = vsel %vm895, %v1183, 0
      %v1255 = vsel %vm895, %v1184, 0
      %1257 = vmatprep.subr.bf16.mxu0 0
      %1258 = vmatpush1.bf16.msra.mxu0 0
      %1259 = vmatprep.subr.bf16.mxu0 0
      %1260 = vmatpush1.bf16.msra.mxu0 0
      %1261 = vmatprep.subr.bf16.mxu0 0
      %1262 = vmatpush1.bf16.msra.mxu0 0
      %1263 = vmatprep.subr.bf16.mxu0 0
      %1264 = vmatpush1.bf16.msra.mxu0 0
      %1265 = vmatprep.subr.bf16.mxu0 0
      %1266 = vmatpush1.bf16.msra.mxu0 %v1204
      %1267 = vmatprep.subr.bf16.mxu0 0
      %1268 = vmatpush1.bf16.msra.mxu0 %v1203
      %1269 = vmatprep.subr.bf16.mxu0 0
      %1270 = vmatpush1.bf16.msra.mxu0 %v1202
      %1271 = vmatprep.subr.bf16.mxu0 0
      %1272 = vmatpush1.bf16.msra.mxu0 %v1201
      %1273 = vmatprep.subr.bf16.mxu0 0
      %1274 = vmatpush2.bf16.msra.mxu0 0
      %1275 = vmatprep.subr.bf16.mxu0 0
      %1276 = vmatpush2.bf16.msra.mxu0 0
      %1277 = vmatprep.subr.bf16.mxu0 0
      %1278 = vmatpush2.bf16.msra.mxu0 0
      %1279 = vmatprep.subr.bf16.mxu0 0
      %1280 = vmatpush2.bf16.msra.mxu0 0
      %1281 = vmatprep.subr.bf16.mxu0 0
      %1282 = vmatpush2.bf16.msra.mxu0 0
      %1283 = vmatprep.subr.bf16.mxu0 0
      %1284 = vmatpush2.bf16.msra.mxu0 0
      %1285 = vmatprep.subr.bf16.mxu0 0
      %1286 = vmatpush2.bf16.msra.mxu0 0
      %1287 = vmatprep.subr.bf16.mxu0 0
      %1288 = vmatpush2.bf16.msra.mxu0 0
      %1289 = vmatprep.mubr.bf16.mxu0 0
      %1290 = vmatmul.mubr.bf16.gmra.mxu0 %v1210
      %v1291 = vpop.f32.mrf.mxu0
      %v1292 = vadd.f32 %v979, %v1291
      %v1293 = vpop.f32.mrf.mxu0
      %v1294 = vpop.f32.mrf.mxu0
      %v1295 = vadd.f32 %v982, %v1294
      %v1296 = vpop.f32.mrf.mxu0
      %1297 = vmatprep.mubr.bf16.mxu0 0
      %1298 = vmatmul.mubr.bf16.gmra.mxu0 %v1213
      %v1299 = vpop.f32.mrf.mxu0
      %v1300 = vadd.f32 %v987, %v1299
      %v1301 = vpop.f32.mrf.mxu0
      %v1302 = vpop.f32.mrf.mxu0
      %v1303 = vadd.f32 %v990, %v1302
      %v1304 = vpop.f32.mrf.mxu0
      %1305 = vmatprep.mubr.bf16.mxu0 0
      %1306 = vmatmul.mubr.bf16.gmra.mxu0 %v1216
      %v1307 = vpop.f32.mrf.mxu0
      %v1308 = vadd.f32 %v995, %v1307
      %v1309 = vpop.f32.mrf.mxu0
      %v1310 = vpop.f32.mrf.mxu0
      %v1311 = vadd.f32 %v998, %v1310
      %v1312 = vpop.f32.mrf.mxu0
      %1313 = vmatprep.mubr.bf16.mxu0 0
      %1314 = vmatmul.mubr.bf16.gmra.mxu0 %v1219
      %v1315 = vpop.f32.mrf.mxu0
      %v1316 = vadd.f32 %v1003, %v1315
      %v1317 = vpop.f32.mrf.mxu0
      %v1318 = vpop.f32.mrf.mxu0
      %v1319 = vadd.f32 %v1006, %v1318
      %v1320 = vpop.f32.mrf.mxu0
      %1321 = vmatprep.mubr.bf16.mxu0 0
      %1322 = vmatmul.mubr.bf16.gmra.mxu0 %v1222
      %v1323 = vpop.f32.mrf.mxu0
      %v1324 = vadd.f32 %v1011, %v1323
      %v1325 = vpop.f32.mrf.mxu0
      %v1326 = vpop.f32.mrf.mxu0
      %v1327 = vadd.f32 %v1014, %v1326
      %v1328 = vpop.f32.mrf.mxu0
      %1329 = vmatprep.mubr.bf16.mxu0 0
      %1330 = vmatmul.mubr.bf16.gmra.mxu0 %v1225
      %v1331 = vpop.f32.mrf.mxu0
      %v1332 = vadd.f32 %v1019, %v1331
      %v1333 = vpop.f32.mrf.mxu0
      %v1334 = vpop.f32.mrf.mxu0
      %v1335 = vadd.f32 %v1022, %v1334
      %v1336 = vpop.f32.mrf.mxu0
      %1337 = vmatprep.mubr.bf16.mxu0 0
      %1338 = vmatmul.mubr.bf16.gmra.mxu0 %v1228
      %v1339 = vpop.f32.mrf.mxu0
      %v1340 = vadd.f32 %v1027, %v1339
      %v1341 = vpop.f32.mrf.mxu0
      %v1342 = vpop.f32.mrf.mxu0
      %v1343 = vadd.f32 %v1030, %v1342
      %v1344 = vpop.f32.mrf.mxu0
      %1345 = vmatprep.mubr.bf16.mxu0 0
      %1346 = vmatmul.mubr.bf16.gmra.mxu0 %v1231
      %v1347 = vpop.f32.mrf.mxu0
      %v1348 = vadd.f32 %v1035, %v1347
      %v1349 = vpop.f32.mrf.mxu0
      %v1350 = vpop.f32.mrf.mxu0
      %v1351 = vadd.f32 %v1038, %v1350
      %v1352 = vpop.f32.mrf.mxu0
      %1353 = vmatprep.mubr.bf16.mxu0 0
      %1354 = vmatmul.mubr.bf16.gmra.mxu0 %v1234
      %v1355 = vpop.f32.mrf.mxu0
      %v1356 = vadd.f32 %v1043, %v1355
      %v1357 = vpop.f32.mrf.mxu0
      %v1358 = vpop.f32.mrf.mxu0
      %v1359 = vadd.f32 %v1046, %v1358
      %v1360 = vpop.f32.mrf.mxu0
      %1361 = vmatprep.mubr.bf16.mxu0 0
      %1362 = vmatmul.mubr.bf16.gmra.mxu0 %v1237
      %v1363 = vpop.f32.mrf.mxu0
      %v1364 = vadd.f32 %v1051, %v1363
      %v1365 = vpop.f32.mrf.mxu0
      %v1366 = vpop.f32.mrf.mxu0
      %v1367 = vadd.f32 %v1054, %v1366
      %v1368 = vpop.f32.mrf.mxu0
      %1369 = vmatprep.mubr.bf16.mxu0 0
      %1370 = vmatmul.mubr.bf16.gmra.mxu0 %v1240
      %v1371 = vpop.f32.mrf.mxu0
      %v1372 = vadd.f32 %v1059, %v1371
      %v1373 = vpop.f32.mrf.mxu0
      %v1374 = vpop.f32.mrf.mxu0
      %v1375 = vadd.f32 %v1062, %v1374
      %v1376 = vpop.f32.mrf.mxu0
      %1377 = vmatprep.mubr.bf16.mxu0 0
      %1378 = vmatmul.mubr.bf16.gmra.mxu0 %v1243
      %v1379 = vpop.f32.mrf.mxu0
      %v1380 = vadd.f32 %v1067, %v1379
      %v1381 = vpop.f32.mrf.mxu0
      %v1382 = vpop.f32.mrf.mxu0
      %v1383 = vadd.f32 %v1070, %v1382
      %v1384 = vpop.f32.mrf.mxu0
      %1385 = vmatprep.mubr.bf16.mxu0 0
      %1386 = vmatmul.mubr.bf16.gmra.mxu0 %v1246
      %v1387 = vpop.f32.mrf.mxu0
      %v1388 = vadd.f32 %v1075, %v1387
      %v1389 = vpop.f32.mrf.mxu0
      %v1390 = vpop.f32.mrf.mxu0
      %v1391 = vadd.f32 %v1078, %v1390
      %v1392 = vpop.f32.mrf.mxu0
      %1393 = vmatprep.mubr.bf16.mxu0 0
      %1394 = vmatmul.mubr.bf16.gmra.mxu0 %v1249
      %v1395 = vpop.f32.mrf.mxu0
      %v1396 = vadd.f32 %v1083, %v1395
      %v1397 = vpop.f32.mrf.mxu0
      %v1398 = vpop.f32.mrf.mxu0
      %v1399 = vadd.f32 %v1086, %v1398
      %v1400 = vpop.f32.mrf.mxu0
      %1401 = vmatprep.mubr.bf16.mxu0 0
      %1402 = vmatmul.mubr.bf16.gmra.mxu0 %v1252
      %v1403 = vpop.f32.mrf.mxu0
      %v1404 = vadd.f32 %v1091, %v1403
      %v1405 = vpop.f32.mrf.mxu0
      %v1406 = vpop.f32.mrf.mxu0
      %v1407 = vadd.f32 %v1094, %v1406
      %v1408 = vpop.f32.mrf.mxu0
      %1409 = vmatprep.mubr.bf16.mxu0 0
      %1410 = vmatmul.mubr.bf16.gmra.mxu0 %v1255
      %v1411 = vpop.f32.mrf.mxu0
      %v1412 = vadd.f32 %v1099, %v1411
      %v1413 = vpop.f32.mrf.mxu0
      %v1414 = vpop.f32.mrf.mxu0
      %v1415 = vadd.f32 %v1102, %v1414
      %v1416 = vpop.f32.mrf.mxu0
      %1417 = vdwg.mxu0
      %vm1434 = vcmask 1042432
      %vm1435 = vcmask 1046532
      %vm1436 = vmor %vm1434, %vm1435
      %v1437 = vrot.slane %v310, 5
      %v1438 = vrot.slane %v1437, 4
      %v1439 = vrot.slane %v311, 5
      %v1440 = vsel %vm1436, %v1438, %v1439
      %v1441 = vrot.slane %v1439, 4
      %v1442 = vrot.slane %v312, 5
      %v1443 = vsel %vm1436, %v1441, %v1442
      %v1444 = vrot.slane %v313, 5
      %v1445 = vrot.slane %v1444, 4
      %v1446 = vrot.slane %v314, 5
      %v1447 = vsel %vm1436, %v1445, %v1446
      %v1448 = vrot.slane %v1446, 4
      %v1449 = vrot.slane %v315, 5
      %v1450 = vsel %vm1436, %v1448, %v1449
      %v1451 = vrot.slane %v316, 5
      %v1452 = vrot.slane %v1451, 4
      %v1453 = vrot.slane %v317, 5
      %v1454 = vsel %vm1436, %v1452, %v1453
      %v1455 = vrot.slane %v1453, 4
      %v1456 = vrot.slane %v318, 5
      %v1457 = vsel %vm1436, %v1455, %v1456
      %v1458 = vrot.slane %v319, 5
      %v1459 = vrot.slane %v1458, 4
      %v1460 = vrot.slane %v320, 5
      %v1461 = vsel %vm1436, %v1459, %v1460
      %v1462 = vrot.slane %v1460, 4
      %v1463 = vrot.slane %v321, 5
      %v1464 = vsel %vm1436, %v1462, %v1463
      %v1465 = vrot.slane %v322, 5
      %v1466 = vrot.slane %v1465, 4
      %v1467 = vrot.slane %v323, 5
      %v1468 = vsel %vm1436, %v1466, %v1467
      %v1469 = vrot.slane %v1467, 4
      %v1470 = vrot.slane %v324, 5
      %v1471 = vsel %vm1436, %v1469, %v1470
      %v1472 = vrot.slane %v325, 5
      %v1473 = vrot.slane %v1472, 4
      %v1474 = vrot.slane %v326, 5
      %v1475 = vsel %vm1436, %v1473, %v1474
      %v1476 = vrot.slane %v1474, 4
      %v1477 = vrot.slane %v327, 5
      %v1478 = vsel %vm1436, %v1476, %v1477
      %v1479 = vrot.slane %v328, 5
      %v1480 = vrot.slane %v1479, 4
      %v1481 = vrot.slane %v329, 5
      %v1482 = vsel %vm1436, %v1480, %v1481
      %v1483 = vrot.slane %v1481, 4
      %v1484 = vrot.slane %v330, 5
      %v1485 = vsel %vm1436, %v1483, %v1484
      %v1486 = vrot.slane %v331, 5
      %v1487 = vrot.slane %v1486, 4
      %v1488 = vrot.slane %v332, 5
      %v1489 = vsel %vm1436, %v1487, %v1488
      %v1490 = vrot.slane %v1488, 4
      %v1491 = vrot.slane %v333, 5
      %v1492 = vsel %vm1436, %v1490, %v1491
      %v1493 = vrot.slane %v334, 5
      %v1494 = vrot.slane %v1493, 4
      %v1495 = vrot.slane %v335, 5
      %v1496 = vsel %vm1436, %v1494, %v1495
      %v1497 = vrot.slane %v1495, 4
      %v1498 = vrot.slane %v336, 5
      %v1499 = vsel %vm1436, %v1497, %v1498
      %v1500 = vrot.slane %v337, 5
      %v1501 = vrot.slane %v1500, 4
      %v1502 = vrot.slane %v338, 5
      %v1503 = vsel %vm1436, %v1501, %v1502
      %v1504 = vrot.slane %v1502, 4
      %v1505 = vrot.slane %v339, 5
      %v1506 = vsel %vm1436, %v1504, %v1505
      %v1507 = vrot.slane %v340, 5
      %v1508 = vrot.slane %v1507, 4
      %v1509 = vrot.slane %v341, 5
      %v1510 = vsel %vm1436, %v1508, %v1509
      %v1511 = vrot.slane %v1509, 4
      %v1512 = vrot.slane %v342, 5
      %v1513 = vsel %vm1436, %v1511, %v1512
      %v1514 = vrot.slane %v343, 5
      %v1515 = vrot.slane %v1514, 4
      %v1516 = vrot.slane %v344, 5
      %v1517 = vsel %vm1436, %v1515, %v1516
      %v1518 = vrot.slane %v1516, 4
      %v1519 = vrot.slane %v345, 5
      %v1520 = vsel %vm1436, %v1518, %v1519
      %v1521 = vrot.slane %v346, 5
      %v1522 = vrot.slane %v1521, 4
      %v1523 = vrot.slane %v347, 5
      %v1524 = vsel %vm1436, %v1522, %v1523
      %v1525 = vrot.slane %v1523, 4
      %v1526 = vrot.slane %v348, 5
      %v1527 = vsel %vm1436, %v1525, %v1526
      %v1528 = vrot.slane %v349, 5
      %v1529 = vrot.slane %v1528, 4
      %v1530 = vrot.slane %v350, 5
      %v1531 = vsel %vm1436, %v1529, %v1530
      %v1532 = vrot.slane %v1530, 4
      %v1533 = vrot.slane %v351, 5
      %v1534 = vsel %vm1436, %v1532, %v1533
      %v1535 = vrot.slane %v352, 5
      %v1536 = vrot.slane %v1535, 4
      %v1537 = vrot.slane %v353, 5
      %v1538 = vsel %vm1436, %v1536, %v1537
      %v1539 = vrot.slane %v1537, 4
      %v1540 = vrot.slane %v354, 5
      %v1541 = vsel %vm1436, %v1539, %v1540
      %v1542 = vrot.slane %v355, 5
      %v1543 = vrot.slane %v1542, 4
      %v1544 = vrot.slane %v356, 5
      %v1545 = vsel %vm1436, %v1543, %v1544
      %v1546 = vrot.slane %v1544, 4
      %v1547 = vrot.slane %v357, 5
      %v1548 = vsel %vm1436, %v1546, %v1547
      %v1549 = vunpack.c.l.b16 %v1440
      %v1550 = vunpack.c.l.b16 %v1443
      %v1551 = vunpack.c.l.b16 %v1447
      %v1552 = vunpack.c.l.b16 %v1450
      %v1553 = vunpack.c.l.b16 %v1454
      %v1554 = vunpack.c.l.b16 %v1457
      %v1555 = vunpack.c.l.b16 %v1461
      %v1556 = vunpack.c.l.b16 %v1464
      %v1557 = vunpack.c.l.b16 %v1468
      %v1558 = vunpack.c.l.b16 %v1471
      %v1559 = vunpack.c.l.b16 %v1475
      %v1560 = vunpack.c.l.b16 %v1478
      %v1561 = vunpack.c.l.b16 %v1482
      %v1562 = vunpack.c.l.b16 %v1485
      %v1563 = vunpack.c.l.b16 %v1489
      %v1564 = vunpack.c.l.b16 %v1492
      %v1565 = vunpack.c.l.b16 %v1496
      %v1566 = vunpack.c.l.b16 %v1499
      %v1567 = vunpack.c.l.b16 %v1503
      %v1568 = vunpack.c.l.b16 %v1506
      %v1569 = vunpack.c.l.b16 %v1510
      %v1570 = vunpack.c.l.b16 %v1513
      %v1571 = vunpack.c.l.b16 %v1517
      %v1572 = vunpack.c.l.b16 %v1520
      %v1573 = vunpack.c.l.b16 %v1524
      %v1574 = vunpack.c.l.b16 %v1527
      %v1575 = vunpack.c.l.b16 %v1531
      %v1576 = vunpack.c.l.b16 %v1534
      %v1577 = vunpack.c.l.b16 %v1538
      %v1578 = vunpack.c.l.b16 %v1541
      %v1579 = vunpack.c.l.b16 %v1545
      %v1580 = vunpack.c.l.b16 %v1548
      %v1581 = vpack.c.b16 %v1550, %v1549
      %v1582 = vpack.c.b16 %v1552, %v1551
      %v1583 = vpack.c.b16 %v1554, %v1553
      %v1584 = vpack.c.b16 %v1556, %v1555
      %v1585 = vpack.c.b16 %v1558, %v1557
      %v1586 = vpack.c.b16 %v1560, %v1559
      %v1587 = vpack.c.b16 %v1562, %v1561
      %v1588 = vpack.c.b16 %v1564, %v1563
      %v1589 = vpack.c.b16 %v1566, %v1565
      %v1590 = vpack.c.b16 %v1568, %v1567
      %v1591 = vpack.c.b16 %v1570, %v1569
      %v1592 = vpack.c.b16 %v1572, %v1571
      %v1593 = vpack.c.b16 %v1574, %v1573
      %v1594 = vpack.c.b16 %v1576, %v1575
      %v1595 = vpack.c.b16 %v1578, %v1577
      %v1596 = vpack.c.b16 %v1580, %v1579
      %v1605 = vunpack.c.l.b16 %v380
      %v1606 = vunpack.c.l.b16 %v381
      %v1607 = vunpack.c.l.b16 %v382
      %v1608 = vunpack.c.l.b16 %v383
      %v1609 = vunpack.c.l.b16 %v384
      %v1610 = vunpack.c.l.b16 %v385
      %v1611 = vunpack.c.l.b16 %v386
      %v1612 = vunpack.c.l.b16 %v387
      %v1613 = vpack.c.b16 %v1606, %v1605
      %v1614 = vpack.c.b16 %v1608, %v1607
      %v1615 = vpack.c.b16 %v1610, %v1609
      %v1616 = vpack.c.b16 %v1612, %v1611
      %v1622 = vsel %vm895, %v1581, 0
      %v1625 = vsel %vm895, %v1582, 0
      %v1628 = vsel %vm895, %v1583, 0
      %v1631 = vsel %vm895, %v1584, 0
      %v1634 = vsel %vm895, %v1585, 0
      %v1637 = vsel %vm895, %v1586, 0
      %v1640 = vsel %vm895, %v1587, 0
      %v1643 = vsel %vm895, %v1588, 0
      %v1646 = vsel %vm895, %v1589, 0
      %v1649 = vsel %vm895, %v1590, 0
      %v1652 = vsel %vm895, %v1591, 0
      %v1655 = vsel %vm895, %v1592, 0
      %v1658 = vsel %vm895, %v1593, 0
      %v1661 = vsel %vm895, %v1594, 0
      %v1664 = vsel %vm895, %v1595, 0
      %v1667 = vsel %vm895, %v1596, 0
      %1669 = vmatprep.subr.bf16.mxu0 0
      %1670 = vmatpush1.bf16.msra.mxu0 0
      %1671 = vmatprep.subr.bf16.mxu0 0
      %1672 = vmatpush1.bf16.msra.mxu0 0
      %1673 = vmatprep.subr.bf16.mxu0 0
      %1674 = vmatpush1.bf16.msra.mxu0 0
      %1675 = vmatprep.subr.bf16.mxu0 0
      %1676 = vmatpush1.bf16.msra.mxu0 0
      %1677 = vmatprep.subr.bf16.mxu0 0
      %1678 = vmatpush1.bf16.msra.mxu0 %v1616
      %1679 = vmatprep.subr.bf16.mxu0 0
      %1680 = vmatpush1.bf16.msra.mxu0 %v1615
      %1681 = vmatprep.subr.bf16.mxu0 0
      %1682 = vmatpush1.bf16.msra.mxu0 %v1614
      %1683 = vmatprep.subr.bf16.mxu0 0
      %1684 = vmatpush1.bf16.msra.mxu0 %v1613
      %1685 = vmatprep.subr.bf16.mxu0 0
      %1686 = vmatpush2.bf16.msra.mxu0 0
      %1687 = vmatprep.subr.bf16.mxu0 0
      %1688 = vmatpush2.bf16.msra.mxu0 0
      %1689 = vmatprep.subr.bf16.mxu0 0
      %1690 = vmatpush2.bf16.msra.mxu0 0
      %1691 = vmatprep.subr.bf16.mxu0 0
      %1692 = vmatpush2.bf16.msra.mxu0 0
      %1693 = vmatprep.subr.bf16.mxu0 0
      %1694 = vmatpush2.bf16.msra.mxu0 0
      %1695 = vmatprep.subr.bf16.mxu0 0
      %1696 = vmatpush2.bf16.msra.mxu0 0
      %1697 = vmatprep.subr.bf16.mxu0 0
      %1698 = vmatpush2.bf16.msra.mxu0 0
      %1699 = vmatprep.subr.bf16.mxu0 0
      %1700 = vmatpush2.bf16.msra.mxu0 0
      %1701 = vmatprep.mubr.bf16.mxu0 0
      %1702 = vmatmul.mubr.bf16.gmra.mxu0 %v1622
      %v1703 = vpop.f32.mrf.mxu0
      %v1704 = vadd.f32 0.0, %v1703
      %v1705 = vpop.f32.mrf.mxu0
      %v1706 = vpop.f32.mrf.mxu0
      %v1707 = vadd.f32 0.0, %v1706
      %v1708 = vpop.f32.mrf.mxu0
      %1709 = vmatprep.mubr.bf16.mxu0 0
      %1710 = vmatmul.mubr.bf16.gmra.mxu0 %v1625
      %v1711 = vpop.f32.mrf.mxu0
      %v1712 = vadd.f32 0.0, %v1711
      %v1713 = vpop.f32.mrf.mxu0
      %v1714 = vpop.f32.mrf.mxu0
      %v1715 = vadd.f32 0.0, %v1714
      %v1716 = vpop.f32.mrf.mxu0
      %1717 = vmatprep.mubr.bf16.mxu0 0
      %1718 = vmatmul.mubr.bf16.gmra.mxu0 %v1628
      %v1719 = vpop.f32.mrf.mxu0
      %v1720 = vadd.f32 0.0, %v1719
      %v1721 = vpop.f32.mrf.mxu0
      %v1722 = vpop.f32.mrf.mxu0
      %v1723 = vadd.f32 0.0, %v1722
      %v1724 = vpop.f32.mrf.mxu0
      %1725 = vmatprep.mubr.bf16.mxu0 0
      %1726 = vmatmul.mubr.bf16.gmra.mxu0 %v1631
      %v1727 = vpop.f32.mrf.mxu0
      %v1728 = vadd.f32 0.0, %v1727
      %v1729 = vpop.f32.mrf.mxu0
      %v1730 = vpop.f32.mrf.mxu0
      %v1731 = vadd.f32 0.0, %v1730
      %v1732 = vpop.f32.mrf.mxu0
      %1733 = vmatprep.mubr.bf16.mxu0 0
      %1734 = vmatmul.mubr.bf16.gmra.mxu0 %v1634
      %v1735 = vpop.f32.mrf.mxu0
      %v1736 = vadd.f32 0.0, %v1735
      %v1737 = vpop.f32.mrf.mxu0
      %v1738 = vpop.f32.mrf.mxu0
      %v1739 = vadd.f32 0.0, %v1738
      %v1740 = vpop.f32.mrf.mxu0
      %1741 = vmatprep.mubr.bf16.mxu0 0
      %1742 = vmatmul.mubr.bf16.gmra.mxu0 %v1637
      %v1743 = vpop.f32.mrf.mxu0
      %v1744 = vadd.f32 0.0, %v1743
      %v1745 = vpop.f32.mrf.mxu0
      %v1746 = vpop.f32.mrf.mxu0
      %v1747 = vadd.f32 0.0, %v1746
      %v1748 = vpop.f32.mrf.mxu0
      %1749 = vmatprep.mubr.bf16.mxu0 0
      %1750 = vmatmul.mubr.bf16.gmra.mxu0 %v1640
      %v1751 = vpop.f32.mrf.mxu0
      %v1752 = vadd.f32 0.0, %v1751
      %v1753 = vpop.f32.mrf.mxu0
      %v1754 = vpop.f32.mrf.mxu0
      %v1755 = vadd.f32 0.0, %v1754
      %v1756 = vpop.f32.mrf.mxu0
      %1757 = vmatprep.mubr.bf16.mxu0 0
      %1758 = vmatmul.mubr.bf16.gmra.mxu0 %v1643
      %v1759 = vpop.f32.mrf.mxu0
      %v1760 = vadd.f32 0.0, %v1759
      %v1761 = vpop.f32.mrf.mxu0
      %v1762 = vpop.f32.mrf.mxu0
      %v1763 = vadd.f32 0.0, %v1762
      %v1764 = vpop.f32.mrf.mxu0
      %1765 = vmatprep.mubr.bf16.mxu0 0
      %1766 = vmatmul.mubr.bf16.gmra.mxu0 %v1646
      %v1767 = vpop.f32.mrf.mxu0
      %v1768 = vadd.f32 0.0, %v1767
      %v1769 = vpop.f32.mrf.mxu0
      %v1770 = vpop.f32.mrf.mxu0
      %v1771 = vadd.f32 0.0, %v1770
      %v1772 = vpop.f32.mrf.mxu0
      %1773 = vmatprep.mubr.bf16.mxu0 0
      %1774 = vmatmul.mubr.bf16.gmra.mxu0 %v1649
      %v1775 = vpop.f32.mrf.mxu0
      %v1776 = vadd.f32 0.0, %v1775
      %v1777 = vpop.f32.mrf.mxu0
      %v1778 = vpop.f32.mrf.mxu0
      %v1779 = vadd.f32 0.0, %v1778
      %v1780 = vpop.f32.mrf.mxu0
      %1781 = vmatprep.mubr.bf16.mxu0 0
      %1782 = vmatmul.mubr.bf16.gmra.mxu0 %v1652
      %v1783 = vpop.f32.mrf.mxu0
      %v1784 = vadd.f32 0.0, %v1783
      %v1785 = vpop.f32.mrf.mxu0
      %v1786 = vpop.f32.mrf.mxu0
      %v1787 = vadd.f32 0.0, %v1786
      %v1788 = vpop.f32.mrf.mxu0
      %1789 = vmatprep.mubr.bf16.mxu0 0
      %1790 = vmatmul.mubr.bf16.gmra.mxu0 %v1655
      %v1791 = vpop.f32.mrf.mxu0
      %v1792 = vadd.f32 0.0, %v1791
      %v1793 = vpop.f32.mrf.mxu0
      %v1794 = vpop.f32.mrf.mxu0
      %v1795 = vadd.f32 0.0, %v1794
      %v1796 = vpop.f32.mrf.mxu0
      %1797 = vmatprep.mubr.bf16.mxu0 0
      %1798 = vmatmul.mubr.bf16.gmra.mxu0 %v1658
      %v1799 = vpop.f32.mrf.mxu0
      %v1800 = vadd.f32 0.0, %v1799
      %v1801 = vpop.f32.mrf.mxu0
      %v1802 = vpop.f32.mrf.mxu0
      %v1803 = vadd.f32 0.0, %v1802
      %v1804 = vpop.f32.mrf.mxu0
      %1805 = vmatprep.mubr.bf16.mxu0 0
      %1806 = vmatmul.mubr.bf16.gmra.mxu0 %v1661
      %v1807 = vpop.f32.mrf.mxu0
      %v1808 = vadd.f32 0.0, %v1807
      %v1809 = vpop.f32.mrf.mxu0
      %v1810 = vpop.f32.mrf.mxu0
      %v1811 = vadd.f32 0.0, %v1810
      %v1812 = vpop.f32.mrf.mxu0
      %1813 = vmatprep.mubr.bf16.mxu0 0
      %1814 = vmatmul.mubr.bf16.gmra.mxu0 %v1664
      %v1815 = vpop.f32.mrf.mxu0
      %v1816 = vadd.f32 0.0, %v1815
      %v1817 = vpop.f32.mrf.mxu0
      %v1818 = vpop.f32.mrf.mxu0
      %v1819 = vadd.f32 0.0, %v1818
      %v1820 = vpop.f32.mrf.mxu0
      %1821 = vmatprep.mubr.bf16.mxu0 0
      %1822 = vmatmul.mubr.bf16.gmra.mxu0 %v1667
      %v1823 = vpop.f32.mrf.mxu0
      %v1824 = vadd.f32 0.0, %v1823
      %v1825 = vpop.f32.mrf.mxu0
      %v1826 = vpop.f32.mrf.mxu0
      %v1827 = vadd.f32 0.0, %v1826
      %v1828 = vpop.f32.mrf.mxu0
      %1829 = vdwg.mxu0
      %v1830 = vadd.f32 %v1292, %v1704
      %v1831 = vadd.f32 %v1295, %v1707
      %v1832 = vadd.f32 %v1300, %v1712
      %v1833 = vadd.f32 %v1303, %v1715
      %v1834 = vadd.f32 %v1308, %v1720
      %v1835 = vadd.f32 %v1311, %v1723
      %v1836 = vadd.f32 %v1316, %v1728
      %v1837 = vadd.f32 %v1319, %v1731
      %v1838 = vadd.f32 %v1324, %v1736
      %v1839 = vadd.f32 %v1327, %v1739
      %v1840 = vadd.f32 %v1332, %v1744
      %v1841 = vadd.f32 %v1335, %v1747
      %v1842 = vadd.f32 %v1340, %v1752
      %v1843 = vadd.f32 %v1343, %v1755
      %v1844 = vadd.f32 %v1348, %v1760
      %v1845 = vadd.f32 %v1351, %v1763
      %v1846 = vadd.f32 %v1356, %v1768
      %v1847 = vadd.f32 %v1359, %v1771
      %v1848 = vadd.f32 %v1364, %v1776
      %v1849 = vadd.f32 %v1367, %v1779
      %v1850 = vadd.f32 %v1372, %v1784
      %v1851 = vadd.f32 %v1375, %v1787
      %v1852 = vadd.f32 %v1380, %v1792
      %v1853 = vadd.f32 %v1383, %v1795
      %v1854 = vadd.f32 %v1388, %v1800
      %v1855 = vadd.f32 %v1391, %v1803
      %v1856 = vadd.f32 %v1396, %v1808
      %v1857 = vadd.f32 %v1399, %v1811
      %v1858 = vadd.f32 %v1404, %v1816
      %v1859 = vadd.f32 %v1407, %v1819
      %v1860 = vadd.f32 %v1412, %v1824
      %v1861 = vadd.f32 %v1415, %v1827
      %v1864 = vunpack.c.l.b16 %v358
      %v1865 = vunpack.c.l.b16 %v359
      %v1866 = vpack.c.b16 %v1865, %v1864
      %v1875 = vunpack.c.l.b16 %v388
      %v1876 = vunpack.c.l.b16 %v389
      %v1877 = vunpack.c.l.b16 %v390
      %v1878 = vunpack.c.l.b16 %v391
      %v1879 = vunpack.c.l.b16 %v392
      %v1880 = vunpack.c.l.b16 %v393
      %v1881 = vunpack.c.l.b16 %v394
      %v1882 = vunpack.c.l.b16 %v395
      %v1883 = vpack.c.b16 %v1876, %v1875
      %v1884 = vpack.c.b16 %v1878, %v1877
      %v1885 = vpack.c.b16 %v1880, %v1879
      %v1886 = vpack.c.b16 %v1882, %v1881
      %v1892 = vsel %vm895, %v1866, 0
      %1894 = vmatprep.subr.bf16.mxu0 0
      %1895 = vmatpush1.bf16.msra.mxu0 0
      %1896 = vmatprep.subr.bf16.mxu0 0
      %1897 = vmatpush1.bf16.msra.mxu0 0
      %1898 = vmatprep.subr.bf16.mxu0 0
      %1899 = vmatpush1.bf16.msra.mxu0 0
      %1900 = vmatprep.subr.bf16.mxu0 0
      %1901 = vmatpush1.bf16.msra.mxu0 0
      %1902 = vmatprep.subr.bf16.mxu0 0
      %1903 = vmatpush1.bf16.msra.mxu0 %v1886
      %1904 = vmatprep.subr.bf16.mxu0 0
      %1905 = vmatpush1.bf16.msra.mxu0 %v1885
      %1906 = vmatprep.subr.bf16.mxu0 0
      %1907 = vmatpush1.bf16.msra.mxu0 %v1884
      %1908 = vmatprep.subr.bf16.mxu0 0
      %1909 = vmatpush1.bf16.msra.mxu0 %v1883
      %1910 = vmatprep.subr.bf16.mxu0 0
      %1911 = vmatpush2.bf16.msra.mxu0 0
      %1912 = vmatprep.subr.bf16.mxu0 0
      %1913 = vmatpush2.bf16.msra.mxu0 0
      %1914 = vmatprep.subr.bf16.mxu0 0
      %1915 = vmatpush2.bf16.msra.mxu0 0
      %1916 = vmatprep.subr.bf16.mxu0 0
      %1917 = vmatpush2.bf16.msra.mxu0 0
      %1918 = vmatprep.subr.bf16.mxu0 0
      %1919 = vmatpush2.bf16.msra.mxu0 0
      %1920 = vmatprep.subr.bf16.mxu0 0
      %1921 = vmatpush2.bf16.msra.mxu0 0
      %1922 = vmatprep.subr.bf16.mxu0 0
      %1923 = vmatpush2.bf16.msra.mxu0 0
      %1924 = vmatprep.subr.bf16.mxu0 0
      %1925 = vmatpush2.bf16.msra.mxu0 0
      %1926 = vmatprep.mubr.bf16.mxu0 0
      %1927 = vmatmul.mubr.bf16.gmra.mxu0 %v1213
      %v1928 = vpop.f32.mrf.mxu0
      %v1929 = vadd.f32 0.0, %v1928
      %v1930 = vpop.f32.mrf.mxu0
      %v1931 = vpop.f32.mrf.mxu0
      %v1932 = vadd.f32 0.0, %v1931
      %v1933 = vpop.f32.mrf.mxu0
      %1934 = vmatprep.mubr.bf16.mxu0 0
      %1935 = vmatmul.mubr.bf16.gmra.mxu0 %v1216
      %v1936 = vpop.f32.mrf.mxu0
      %v1937 = vadd.f32 0.0, %v1936
      %v1938 = vpop.f32.mrf.mxu0
      %v1939 = vpop.f32.mrf.mxu0
      %v1940 = vadd.f32 0.0, %v1939
      %v1941 = vpop.f32.mrf.mxu0
      %1942 = vmatprep.mubr.bf16.mxu0 0
      %1943 = vmatmul.mubr.bf16.gmra.mxu0 %v1219
      %v1944 = vpop.f32.mrf.mxu0
      %v1945 = vadd.f32 0.0, %v1944
      %v1946 = vpop.f32.mrf.mxu0
      %v1947 = vpop.f32.mrf.mxu0
      %v1948 = vadd.f32 0.0, %v1947
      %v1949 = vpop.f32.mrf.mxu0
      %1950 = vmatprep.mubr.bf16.mxu0 0
      %1951 = vmatmul.mubr.bf16.gmra.mxu0 %v1222
      %v1952 = vpop.f32.mrf.mxu0
      %v1953 = vadd.f32 0.0, %v1952
      %v1954 = vpop.f32.mrf.mxu0
      %v1955 = vpop.f32.mrf.mxu0
      %v1956 = vadd.f32 0.0, %v1955
      %v1957 = vpop.f32.mrf.mxu0
      %1958 = vmatprep.mubr.bf16.mxu0 0
      %1959 = vmatmul.mubr.bf16.gmra.mxu0 %v1225
      %v1960 = vpop.f32.mrf.mxu0
      %v1961 = vadd.f32 0.0, %v1960
      %v1962 = vpop.f32.mrf.mxu0
      %v1963 = vpop.f32.mrf.mxu0
      %v1964 = vadd.f32 0.0, %v1963
      %v1965 = vpop.f32.mrf.mxu0
      %1966 = vmatprep.mubr.bf16.mxu0 0
      %1967 = vmatmul.mubr.bf16.gmra.mxu0 %v1228
      %v1968 = vpop.f32.mrf.mxu0
      %v1969 = vadd.f32 0.0, %v1968
      %v1970 = vpop.f32.mrf.mxu0
      %v1971 = vpop.f32.mrf.mxu0
      %v1972 = vadd.f32 0.0, %v1971
      %v1973 = vpop.f32.mrf.mxu0
      %1974 = vmatprep.mubr.bf16.mxu0 0
      %1975 = vmatmul.mubr.bf16.gmra.mxu0 %v1231
      %v1976 = vpop.f32.mrf.mxu0
      %v1977 = vadd.f32 0.0, %v1976
      %v1978 = vpop.f32.mrf.mxu0
      %v1979 = vpop.f32.mrf.mxu0
      %v1980 = vadd.f32 0.0, %v1979
      %v1981 = vpop.f32.mrf.mxu0
      %1982 = vmatprep.mubr.bf16.mxu0 0
      %1983 = vmatmul.mubr.bf16.gmra.mxu0 %v1234
      %v1984 = vpop.f32.mrf.mxu0
      %v1985 = vadd.f32 0.0, %v1984
      %v1986 = vpop.f32.mrf.mxu0
      %v1987 = vpop.f32.mrf.mxu0
      %v1988 = vadd.f32 0.0, %v1987
      %v1989 = vpop.f32.mrf.mxu0
      %1990 = vmatprep.mubr.bf16.mxu0 0
      %1991 = vmatmul.mubr.bf16.gmra.mxu0 %v1237
      %v1992 = vpop.f32.mrf.mxu0
      %v1993 = vadd.f32 0.0, %v1992
      %v1994 = vpop.f32.mrf.mxu0
      %v1995 = vpop.f32.mrf.mxu0
      %v1996 = vadd.f32 0.0, %v1995
      %v1997 = vpop.f32.mrf.mxu0
      %1998 = vmatprep.mubr.bf16.mxu0 0
      %1999 = vmatmul.mubr.bf16.gmra.mxu0 %v1240
      %v2000 = vpop.f32.mrf.mxu0
      %v2001 = vadd.f32 0.0, %v2000
      %v2002 = vpop.f32.mrf.mxu0
      %v2003 = vpop.f32.mrf.mxu0
      %v2004 = vadd.f32 0.0, %v2003
      %v2005 = vpop.f32.mrf.mxu0
      %2006 = vmatprep.mubr.bf16.mxu0 0
      %2007 = vmatmul.mubr.bf16.gmra.mxu0 %v1243
      %v2008 = vpop.f32.mrf.mxu0
      %v2009 = vadd.f32 0.0, %v2008
      %v2010 = vpop.f32.mrf.mxu0
      %v2011 = vpop.f32.mrf.mxu0
      %v2012 = vadd.f32 0.0, %v2011
      %v2013 = vpop.f32.mrf.mxu0
      %2014 = vmatprep.mubr.bf16.mxu0 0
      %2015 = vmatmul.mubr.bf16.gmra.mxu0 %v1246
      %v2016 = vpop.f32.mrf.mxu0
      %v2017 = vadd.f32 0.0, %v2016
      %v2018 = vpop.f32.mrf.mxu0
      %v2019 = vpop.f32.mrf.mxu0
      %v2020 = vadd.f32 0.0, %v2019
      %v2021 = vpop.f32.mrf.mxu0
      %2022 = vmatprep.mubr.bf16.mxu0 0
      %2023 = vmatmul.mubr.bf16.gmra.mxu0 %v1249
      %v2024 = vpop.f32.mrf.mxu0
      %v2025 = vadd.f32 0.0, %v2024
      %v2026 = vpop.f32.mrf.mxu0
      %v2027 = vpop.f32.mrf.mxu0
      %v2028 = vadd.f32 0.0, %v2027
      %v2029 = vpop.f32.mrf.mxu0
      %2030 = vmatprep.mubr.bf16.mxu0 0
      %2031 = vmatmul.mubr.bf16.gmra.mxu0 %v1252
      %v2032 = vpop.f32.mrf.mxu0
      %v2033 = vadd.f32 0.0, %v2032
      %v2034 = vpop.f32.mrf.mxu0
      %v2035 = vpop.f32.mrf.mxu0
      %v2036 = vadd.f32 0.0, %v2035
      %v2037 = vpop.f32.mrf.mxu0
      %2038 = vmatprep.mubr.bf16.mxu0 0
      %2039 = vmatmul.mubr.bf16.gmra.mxu0 %v1255
      %v2040 = vpop.f32.mrf.mxu0
      %v2041 = vadd.f32 0.0, %v2040
      %v2042 = vpop.f32.mrf.mxu0
      %v2043 = vpop.f32.mrf.mxu0
      %v2044 = vadd.f32 0.0, %v2043
      %v2045 = vpop.f32.mrf.mxu0
      %2046 = vmatprep.mubr.bf16.mxu0 0
      %2047 = vmatmul.mubr.bf16.gmra.mxu0 %v1892
      %v2048 = vpop.f32.mrf.mxu0
      %v2049 = vadd.f32 0.0, %v2048
      %v2050 = vpop.f32.mrf.mxu0
      %v2051 = vpop.f32.mrf.mxu0
      %v2052 = vadd.f32 0.0, %v2051
      %v2053 = vpop.f32.mrf.mxu0
      %2054 = vdwg.mxu0
      %v2055 = vadd.f32 %v1830, %v1929
      %v2056 = vadd.f32 %v1831, %v1932
      %v2057 = vadd.f32 %v1832, %v1937
      %v2058 = vadd.f32 %v1833, %v1940
      %v2059 = vadd.f32 %v1834, %v1945
      %v2060 = vadd.f32 %v1835, %v1948
      %v2061 = vadd.f32 %v1836, %v1953
      %v2062 = vadd.f32 %v1837, %v1956
      %v2063 = vadd.f32 %v1838, %v1961
      %v2064 = vadd.f32 %v1839, %v1964
      %v2065 = vadd.f32 %v1840, %v1969
      %v2066 = vadd.f32 %v1841, %v1972
      %v2067 = vadd.f32 %v1842, %v1977
      %v2068 = vadd.f32 %v1843, %v1980
      %v2069 = vadd.f32 %v1844, %v1985
      %v2070 = vadd.f32 %v1845, %v1988
      %v2071 = vadd.f32 %v1846, %v1993
      %v2072 = vadd.f32 %v1847, %v1996
      %v2073 = vadd.f32 %v1848, %v2001
      %v2074 = vadd.f32 %v1849, %v2004
      %v2075 = vadd.f32 %v1850, %v2009
      %v2076 = vadd.f32 %v1851, %v2012
      %v2077 = vadd.f32 %v1852, %v2017
      %v2078 = vadd.f32 %v1853, %v2020
      %v2079 = vadd.f32 %v1854, %v2025
      %v2080 = vadd.f32 %v1855, %v2028
      %v2081 = vadd.f32 %v1856, %v2033
      %v2082 = vadd.f32 %v1857, %v2036
      %v2083 = vadd.f32 %v1858, %v2041
      %v2084 = vadd.f32 %v1859, %v2044
      %v2085 = vadd.f32 %v1860, %v2049
      %v2086 = vadd.f32 %v1861, %v2052
      %v2088 = vshrl.u32 %v358, 16
      %v2090 = vrot.slane %v2088, 4
      %v2091 = vshll.u32 %v358, 16
      %v2093 = vrot.slane %v2091, 5
      %v2094 = vor.u32 %v2090, %v2093
      %v2095 = vrot.slane %v2094, 4
      %v2097 = vshll.u32 %v359, 16
      %v2099 = vrot.slane %v2097, 5
      %v2100 = vsel %vm438, %v2095, %v2099
      %v2101 = vshrl.u32 %v359, 16
      %v2103 = vrot.slane %v2101, 4
      %v2104 = vor.u32 %v2103, %v2099
      %v2105 = vrot.slane %v2104, 4
      %v2107 = vshll.u32 %v360, 16
      %v2109 = vrot.slane %v2107, 5
      %v2110 = vsel %vm438, %v2105, %v2109
      %v2111 = vunpack.c.l.b16 %v2100
      %v2112 = vunpack.c.l.b16 %v2110
      %v2113 = vpack.c.b16 %v2112, %v2111
      %v2122 = vunpack.c.l.b16 %v396
      %v2123 = vunpack.c.l.b16 %v397
      %v2124 = vunpack.c.l.b16 %v398
      %v2125 = vunpack.c.l.b16 %v399
      %v2126 = vunpack.c.l.b16 %v400
      %v2127 = vunpack.c.l.b16 %v401
      %v2128 = vunpack.c.l.b16 %v402
      %v2129 = vunpack.c.l.b16 %v403
      %v2130 = vpack.c.b16 %v2123, %v2122
      %v2131 = vpack.c.b16 %v2125, %v2124
      %v2132 = vpack.c.b16 %v2127, %v2126
      %v2133 = vpack.c.b16 %v2129, %v2128
      %v2139 = vsel %vm895, %v2113, 0
      %2141 = vmatprep.subr.bf16.mxu0 0
      %2142 = vmatpush1.bf16.msra.mxu0 0
      %2143 = vmatprep.subr.bf16.mxu0 0
      %2144 = vmatpush1.bf16.msra.mxu0 0
      %2145 = vmatprep.subr.bf16.mxu0 0
      %2146 = vmatpush1.bf16.msra.mxu0 0
      %2147 = vmatprep.subr.bf16.mxu0 0
      %2148 = vmatpush1.bf16.msra.mxu0 0
      %2149 = vmatprep.subr.bf16.mxu0 0
      %2150 = vmatpush1.bf16.msra.mxu0 %v2133
      %2151 = vmatprep.subr.bf16.mxu0 0
      %2152 = vmatpush1.bf16.msra.mxu0 %v2132
      %2153 = vmatprep.subr.bf16.mxu0 0
      %2154 = vmatpush1.bf16.msra.mxu0 %v2131
      %2155 = vmatprep.subr.bf16.mxu0 0
      %2156 = vmatpush1.bf16.msra.mxu0 %v2130
      %2157 = vmatprep.subr.bf16.mxu0 0
      %2158 = vmatpush2.bf16.msra.mxu0 0
      %2159 = vmatprep.subr.bf16.mxu0 0
      %2160 = vmatpush2.bf16.msra.mxu0 0
      %2161 = vmatprep.subr.bf16.mxu0 0
      %2162 = vmatpush2.bf16.msra.mxu0 0
      %2163 = vmatprep.subr.bf16.mxu0 0
      %2164 = vmatpush2.bf16.msra.mxu0 0
      %2165 = vmatprep.subr.bf16.mxu0 0
      %2166 = vmatpush2.bf16.msra.mxu0 0
      %2167 = vmatprep.subr.bf16.mxu0 0
      %2168 = vmatpush2.bf16.msra.mxu0 0
      %2169 = vmatprep.subr.bf16.mxu0 0
      %2170 = vmatpush2.bf16.msra.mxu0 0
      %2171 = vmatprep.subr.bf16.mxu0 0
      %2172 = vmatpush2.bf16.msra.mxu0 0
      %2173 = vmatprep.mubr.bf16.mxu0 0
      %2174 = vmatmul.mubr.bf16.gmra.mxu0 %v900
      %v2175 = vpop.f32.mrf.mxu0
      %v2176 = vadd.f32 0.0, %v2175
      %v2177 = vpop.f32.mrf.mxu0
      %v2178 = vpop.f32.mrf.mxu0
      %v2179 = vadd.f32 0.0, %v2178
      %v2180 = vpop.f32.mrf.mxu0
      %2181 = vmatprep.mubr.bf16.mxu0 0
      %2182 = vmatmul.mubr.bf16.gmra.mxu0 %v903
      %v2183 = vpop.f32.mrf.mxu0
      %v2184 = vadd.f32 0.0, %v2183
      %v2185 = vpop.f32.mrf.mxu0
      %v2186 = vpop.f32.mrf.mxu0
      %v2187 = vadd.f32 0.0, %v2186
      %v2188 = vpop.f32.mrf.mxu0
      %2189 = vmatprep.mubr.bf16.mxu0 0
      %2190 = vmatmul.mubr.bf16.gmra.mxu0 %v906
      %v2191 = vpop.f32.mrf.mxu0
      %v2192 = vadd.f32 0.0, %v2191
      %v2193 = vpop.f32.mrf.mxu0
      %v2194 = vpop.f32.mrf.mxu0
      %v2195 = vadd.f32 0.0, %v2194
      %v2196 = vpop.f32.mrf.mxu0
      %2197 = vmatprep.mubr.bf16.mxu0 0
      %2198 = vmatmul.mubr.bf16.gmra.mxu0 %v909
      %v2199 = vpop.f32.mrf.mxu0
      %v2200 = vadd.f32 0.0, %v2199
      %v2201 = vpop.f32.mrf.mxu0
      %v2202 = vpop.f32.mrf.mxu0
      %v2203 = vadd.f32 0.0, %v2202
      %v2204 = vpop.f32.mrf.mxu0
      %2205 = vmatprep.mubr.bf16.mxu0 0
      %2206 = vmatmul.mubr.bf16.gmra.mxu0 %v912
      %v2207 = vpop.f32.mrf.mxu0
      %v2208 = vadd.f32 0.0, %v2207
      %v2209 = vpop.f32.mrf.mxu0
      %v2210 = vpop.f32.mrf.mxu0
      %v2211 = vadd.f32 0.0, %v2210
      %v2212 = vpop.f32.mrf.mxu0
      %2213 = vmatprep.mubr.bf16.mxu0 0
      %2214 = vmatmul.mubr.bf16.gmra.mxu0 %v915
      %v2215 = vpop.f32.mrf.mxu0
      %v2216 = vadd.f32 0.0, %v2215
      %v2217 = vpop.f32.mrf.mxu0
      %v2218 = vpop.f32.mrf.mxu0
      %v2219 = vadd.f32 0.0, %v2218
      %v2220 = vpop.f32.mrf.mxu0
      %2221 = vmatprep.mubr.bf16.mxu0 0
      %2222 = vmatmul.mubr.bf16.gmra.mxu0 %v918
      %v2223 = vpop.f32.mrf.mxu0
      %v2224 = vadd.f32 0.0, %v2223
      %v2225 = vpop.f32.mrf.mxu0
      %v2226 = vpop.f32.mrf.mxu0
      %v2227 = vadd.f32 0.0, %v2226
      %v2228 = vpop.f32.mrf.mxu0
      %2229 = vmatprep.mubr.bf16.mxu0 0
      %2230 = vmatmul.mubr.bf16.gmra.mxu0 %v921
      %v2231 = vpop.f32.mrf.mxu0
      %v2232 = vadd.f32 0.0, %v2231
      %v2233 = vpop.f32.mrf.mxu0
      %v2234 = vpop.f32.mrf.mxu0
      %v2235 = vadd.f32 0.0, %v2234
      %v2236 = vpop.f32.mrf.mxu0
      %2237 = vmatprep.mubr.bf16.mxu0 0
      %2238 = vmatmul.mubr.bf16.gmra.mxu0 %v924
      %v2239 = vpop.f32.mrf.mxu0
      %v2240 = vadd.f32 0.0, %v2239
      %v2241 = vpop.f32.mrf.mxu0
      %v2242 = vpop.f32.mrf.mxu0
      %v2243 = vadd.f32 0.0, %v2242
      %v2244 = vpop.f32.mrf.mxu0
      %2245 = vmatprep.mubr.bf16.mxu0 0
      %2246 = vmatmul.mubr.bf16.gmra.mxu0 %v927
      %v2247 = vpop.f32.mrf.mxu0
      %v2248 = vadd.f32 0.0, %v2247
      %v2249 = vpop.f32.mrf.mxu0
      %v2250 = vpop.f32.mrf.mxu0
      %v2251 = vadd.f32 0.0, %v2250
      %v2252 = vpop.f32.mrf.mxu0
      %2253 = vmatprep.mubr.bf16.mxu0 0
      %2254 = vmatmul.mubr.bf16.gmra.mxu0 %v930
      %v2255 = vpop.f32.mrf.mxu0
      %v2256 = vadd.f32 0.0, %v2255
      %v2257 = vpop.f32.mrf.mxu0
      %v2258 = vpop.f32.mrf.mxu0
      %v2259 = vadd.f32 0.0, %v2258
      %v2260 = vpop.f32.mrf.mxu0
      %2261 = vmatprep.mubr.bf16.mxu0 0
      %2262 = vmatmul.mubr.bf16.gmra.mxu0 %v933
      %v2263 = vpop.f32.mrf.mxu0
      %v2264 = vadd.f32 0.0, %v2263
      %v2265 = vpop.f32.mrf.mxu0
      %v2266 = vpop.f32.mrf.mxu0
      %v2267 = vadd.f32 0.0, %v2266
      %v2268 = vpop.f32.mrf.mxu0
      %2269 = vmatprep.mubr.bf16.mxu0 0
      %2270 = vmatmul.mubr.bf16.gmra.mxu0 %v936
      %v2271 = vpop.f32.mrf.mxu0
      %v2272 = vadd.f32 0.0, %v2271
      %v2273 = vpop.f32.mrf.mxu0
      %v2274 = vpop.f32.mrf.mxu0
      %v2275 = vadd.f32 0.0, %v2274
      %v2276 = vpop.f32.mrf.mxu0
      %2277 = vmatprep.mubr.bf16.mxu0 0
      %2278 = vmatmul.mubr.bf16.gmra.mxu0 %v939
      %v2279 = vpop.f32.mrf.mxu0
      %v2280 = vadd.f32 0.0, %v2279
      %v2281 = vpop.f32.mrf.mxu0
      %v2282 = vpop.f32.mrf.mxu0
      %v2283 = vadd.f32 0.0, %v2282
      %v2284 = vpop.f32.mrf.mxu0
      %2285 = vmatprep.mubr.bf16.mxu0 0
      %2286 = vmatmul.mubr.bf16.gmra.mxu0 %v942
      %v2287 = vpop.f32.mrf.mxu0
      %v2288 = vadd.f32 0.0, %v2287
      %v2289 = vpop.f32.mrf.mxu0
      %v2290 = vpop.f32.mrf.mxu0
      %v2291 = vadd.f32 0.0, %v2290
      %v2292 = vpop.f32.mrf.mxu0
      %2293 = vmatprep.mubr.bf16.mxu0 0
      %2294 = vmatmul.mubr.bf16.gmra.mxu0 %v2139
      %v2295 = vpop.f32.mrf.mxu0
      %v2296 = vadd.f32 0.0, %v2295
      %v2297 = vpop.f32.mrf.mxu0
      %v2298 = vpop.f32.mrf.mxu0
      %v2299 = vadd.f32 0.0, %v2298
      %v2300 = vpop.f32.mrf.mxu0
      %2301 = vdwg.mxu0
      %v2302 = vadd.f32 %v2055, %v2176
      %v2303 = vadd.f32 %v2056, %v2179
      %v2304 = vadd.f32 %v2057, %v2184
      %v2305 = vadd.f32 %v2058, %v2187
      %v2306 = vadd.f32 %v2059, %v2192
      %v2307 = vadd.f32 %v2060, %v2195
      %v2308 = vadd.f32 %v2061, %v2200
      %v2309 = vadd.f32 %v2062, %v2203
      %v2310 = vadd.f32 %v2063, %v2208
      %v2311 = vadd.f32 %v2064, %v2211
      %v2312 = vadd.f32 %v2065, %v2216
      %v2313 = vadd.f32 %v2066, %v2219
      %v2314 = vadd.f32 %v2067, %v2224
      %v2315 = vadd.f32 %v2068, %v2227
      %v2316 = vadd.f32 %v2069, %v2232
      %v2317 = vadd.f32 %v2070, %v2235
      %v2318 = vadd.f32 %v2071, %v2240
      %v2319 = vadd.f32 %v2072, %v2243
      %v2320 = vadd.f32 %v2073, %v2248
      %v2321 = vadd.f32 %v2074, %v2251
      %v2322 = vadd.f32 %v2075, %v2256
      %v2323 = vadd.f32 %v2076, %v2259
      %v2324 = vadd.f32 %v2077, %v2264
      %v2325 = vadd.f32 %v2078, %v2267
      %v2326 = vadd.f32 %v2079, %v2272
      %v2327 = vadd.f32 %v2080, %v2275
      %v2328 = vadd.f32 %v2081, %v2280
      %v2329 = vadd.f32 %v2082, %v2283
      %v2330 = vadd.f32 %v2083, %v2288
      %v2331 = vadd.f32 %v2084, %v2291
      %v2332 = vadd.f32 %v2085, %v2296
      %v2333 = vadd.f32 %v2086, %v2299
      %v2335 = vrot.slane %v358, 5
      %v2336 = vrot.slane %v2335, 4
      %v2337 = vrot.slane %v359, 5
      %v2338 = vsel %vm1436, %v2336, %v2337
      %v2339 = vrot.slane %v2337, 4
      %v2340 = vrot.slane %v360, 5
      %v2341 = vsel %vm1436, %v2339, %v2340
      %v2342 = vunpack.c.l.b16 %v2338
      %v2343 = vunpack.c.l.b16 %v2341
      %v2344 = vpack.c.b16 %v2343, %v2342
      %v2353 = vunpack.c.l.b16 %v404
      %v2354 = vunpack.c.l.b16 %v405
      %v2355 = vunpack.c.l.b16 %v406
      %v2356 = vunpack.c.l.b16 %v407
      %v2357 = vunpack.c.l.b16 %v408
      %v2358 = vunpack.c.l.b16 %v409
      %v2359 = vunpack.c.l.b16 %v410
      %v2360 = vunpack.c.l.b16 %v411
      %v2361 = vpack.c.b16 %v2354, %v2353
      %v2362 = vpack.c.b16 %v2356, %v2355
      %v2363 = vpack.c.b16 %v2358, %v2357
      %v2364 = vpack.c.b16 %v2360, %v2359
      %v2370 = vsel %vm895, %v2344, 0
      %2372 = vmatprep.subr.bf16.mxu0 0
      %2373 = vmatpush1.bf16.msra.mxu0 0
      %2374 = vmatprep.subr.bf16.mxu0 0
      %2375 = vmatpush1.bf16.msra.mxu0 0
      %2376 = vmatprep.subr.bf16.mxu0 0
      %2377 = vmatpush1.bf16.msra.mxu0 0
      %2378 = vmatprep.subr.bf16.mxu0 0
      %2379 = vmatpush1.bf16.msra.mxu0 0
      %2380 = vmatprep.subr.bf16.mxu0 0
      %2381 = vmatpush1.bf16.msra.mxu0 %v2364
      %2382 = vmatprep.subr.bf16.mxu0 0
      %2383 = vmatpush1.bf16.msra.mxu0 %v2363
      %2384 = vmatprep.subr.bf16.mxu0 0
      %2385 = vmatpush1.bf16.msra.mxu0 %v2362
      %2386 = vmatprep.subr.bf16.mxu0 0
      %2387 = vmatpush1.bf16.msra.mxu0 %v2361
      %2388 = vmatprep.subr.bf16.mxu0 0
      %2389 = vmatpush2.bf16.msra.mxu0 0
      %2390 = vmatprep.subr.bf16.mxu0 0
      %2391 = vmatpush2.bf16.msra.mxu0 0
      %2392 = vmatprep.subr.bf16.mxu0 0
      %2393 = vmatpush2.bf16.msra.mxu0 0
      %2394 = vmatprep.subr.bf16.mxu0 0
      %2395 = vmatpush2.bf16.msra.mxu0 0
      %2396 = vmatprep.subr.bf16.mxu0 0
      %2397 = vmatpush2.bf16.msra.mxu0 0
      %2398 = vmatprep.subr.bf16.mxu0 0
      %2399 = vmatpush2.bf16.msra.mxu0 0
      %2400 = vmatprep.subr.bf16.mxu0 0
      %2401 = vmatpush2.bf16.msra.mxu0 0
      %2402 = vmatprep.subr.bf16.mxu0 0
      %2403 = vmatpush2.bf16.msra.mxu0 0
      %2404 = vmatprep.mubr.bf16.mxu0 0
      %2405 = vmatmul.mubr.bf16.gmra.mxu0 %v1625
      %v2406 = vpop.f32.mrf.mxu0
      %v2407 = vadd.f32 0.0, %v2406
      %v2408 = vpop.f32.mrf.mxu0
      %v2409 = vpop.f32.mrf.mxu0
      %v2410 = vadd.f32 0.0, %v2409
      %v2411 = vpop.f32.mrf.mxu0
      %2412 = vmatprep.mubr.bf16.mxu0 0
      %2413 = vmatmul.mubr.bf16.gmra.mxu0 %v1628
      %v2414 = vpop.f32.mrf.mxu0
      %v2415 = vadd.f32 0.0, %v2414
      %v2416 = vpop.f32.mrf.mxu0
      %v2417 = vpop.f32.mrf.mxu0
      %v2418 = vadd.f32 0.0, %v2417
      %v2419 = vpop.f32.mrf.mxu0
      %2420 = vmatprep.mubr.bf16.mxu0 0
      %2421 = vmatmul.mubr.bf16.gmra.mxu0 %v1631
      %v2422 = vpop.f32.mrf.mxu0
      %v2423 = vadd.f32 0.0, %v2422
      %v2424 = vpop.f32.mrf.mxu0
      %v2425 = vpop.f32.mrf.mxu0
      %v2426 = vadd.f32 0.0, %v2425
      %v2427 = vpop.f32.mrf.mxu0
      %2428 = vmatprep.mubr.bf16.mxu0 0
      %2429 = vmatmul.mubr.bf16.gmra.mxu0 %v1634
      %v2430 = vpop.f32.mrf.mxu0
      %v2431 = vadd.f32 0.0, %v2430
      %v2432 = vpop.f32.mrf.mxu0
      %v2433 = vpop.f32.mrf.mxu0
      %v2434 = vadd.f32 0.0, %v2433
      %v2435 = vpop.f32.mrf.mxu0
      %2436 = vmatprep.mubr.bf16.mxu0 0
      %2437 = vmatmul.mubr.bf16.gmra.mxu0 %v1637
      %v2438 = vpop.f32.mrf.mxu0
      %v2439 = vadd.f32 0.0, %v2438
      %v2440 = vpop.f32.mrf.mxu0
      %v2441 = vpop.f32.mrf.mxu0
      %v2442 = vadd.f32 0.0, %v2441
      %v2443 = vpop.f32.mrf.mxu0
      %2444 = vmatprep.mubr.bf16.mxu0 0
      %2445 = vmatmul.mubr.bf16.gmra.mxu0 %v1640
      %v2446 = vpop.f32.mrf.mxu0
      %v2447 = vadd.f32 0.0, %v2446
      %v2448 = vpop.f32.mrf.mxu0
      %v2449 = vpop.f32.mrf.mxu0
      %v2450 = vadd.f32 0.0, %v2449
      %v2451 = vpop.f32.mrf.mxu0
      %2452 = vmatprep.mubr.bf16.mxu0 0
      %2453 = vmatmul.mubr.bf16.gmra.mxu0 %v1643
      %v2454 = vpop.f32.mrf.mxu0
      %v2455 = vadd.f32 0.0, %v2454
      %v2456 = vpop.f32.mrf.mxu0
      %v2457 = vpop.f32.mrf.mxu0
      %v2458 = vadd.f32 0.0, %v2457
      %v2459 = vpop.f32.mrf.mxu0
      %2460 = vmatprep.mubr.bf16.mxu0 0
      %2461 = vmatmul.mubr.bf16.gmra.mxu0 %v1646
      %v2462 = vpop.f32.mrf.mxu0
      %v2463 = vadd.f32 0.0, %v2462
      %v2464 = vpop.f32.mrf.mxu0
      %v2465 = vpop.f32.mrf.mxu0
      %v2466 = vadd.f32 0.0, %v2465
      %v2467 = vpop.f32.mrf.mxu0
      %2468 = vmatprep.mubr.bf16.mxu0 0
      %2469 = vmatmul.mubr.bf16.gmra.mxu0 %v1649
      %v2470 = vpop.f32.mrf.mxu0
      %v2471 = vadd.f32 0.0, %v2470
      %v2472 = vpop.f32.mrf.mxu0
      %v2473 = vpop.f32.mrf.mxu0
      %v2474 = vadd.f32 0.0, %v2473
      %v2475 = vpop.f32.mrf.mxu0
      %2476 = vmatprep.mubr.bf16.mxu0 0
      %2477 = vmatmul.mubr.bf16.gmra.mxu0 %v1652
      %v2478 = vpop.f32.mrf.mxu0
      %v2479 = vadd.f32 0.0, %v2478
      %v2480 = vpop.f32.mrf.mxu0
      %v2481 = vpop.f32.mrf.mxu0
      %v2482 = vadd.f32 0.0, %v2481
      %v2483 = vpop.f32.mrf.mxu0
      %2484 = vmatprep.mubr.bf16.mxu0 0
      %2485 = vmatmul.mubr.bf16.gmra.mxu0 %v1655
      %v2486 = vpop.f32.mrf.mxu0
      %v2487 = vadd.f32 0.0, %v2486
      %v2488 = vpop.f32.mrf.mxu0
      %v2489 = vpop.f32.mrf.mxu0
      %v2490 = vadd.f32 0.0, %v2489
      %v2491 = vpop.f32.mrf.mxu0
      %2492 = vmatprep.mubr.bf16.mxu0 0
      %2493 = vmatmul.mubr.bf16.gmra.mxu0 %v1658
      %v2494 = vpop.f32.mrf.mxu0
      %v2495 = vadd.f32 0.0, %v2494
      %v2496 = vpop.f32.mrf.mxu0
      %v2497 = vpop.f32.mrf.mxu0
      %v2498 = vadd.f32 0.0, %v2497
      %v2499 = vpop.f32.mrf.mxu0
      %2500 = vmatprep.mubr.bf16.mxu0 0
      %2501 = vmatmul.mubr.bf16.gmra.mxu0 %v1661
      %v2502 = vpop.f32.mrf.mxu0
      %v2503 = vadd.f32 0.0, %v2502
      %v2504 = vpop.f32.mrf.mxu0
      %v2505 = vpop.f32.mrf.mxu0
      %v2506 = vadd.f32 0.0, %v2505
      %v2507 = vpop.f32.mrf.mxu0
      %2508 = vmatprep.mubr.bf16.mxu0 0
      %2509 = vmatmul.mubr.bf16.gmra.mxu0 %v1664
      %v2510 = vpop.f32.mrf.mxu0
      %v2511 = vadd.f32 0.0, %v2510
      %v2512 = vpop.f32.mrf.mxu0
      %v2513 = vpop.f32.mrf.mxu0
      %v2514 = vadd.f32 0.0, %v2513
      %v2515 = vpop.f32.mrf.mxu0
      %2516 = vmatprep.mubr.bf16.mxu0 0
      %2517 = vmatmul.mubr.bf16.gmra.mxu0 %v1667
      %v2518 = vpop.f32.mrf.mxu0
      %v2519 = vadd.f32 0.0, %v2518
      %v2520 = vpop.f32.mrf.mxu0
      %v2521 = vpop.f32.mrf.mxu0
      %v2522 = vadd.f32 0.0, %v2521
      %v2523 = vpop.f32.mrf.mxu0
      %2524 = vmatprep.mubr.bf16.mxu0 0
      %2525 = vmatmul.mubr.bf16.gmra.mxu0 %v2370
      %v2526 = vpop.f32.mrf.mxu0
      %v2527 = vadd.f32 0.0, %v2526
      %v2528 = vpop.f32.mrf.mxu0
      %v2529 = vpop.f32.mrf.mxu0
      %v2530 = vadd.f32 0.0, %v2529
      %v2531 = vpop.f32.mrf.mxu0
      %2532 = vdwg.mxu0
      %v2533 = vadd.f32 %v2302, %v2407
      %v2534 = vadd.f32 %v2303, %v2410
      %v2535 = vadd.f32 %v2304, %v2415
      %v2536 = vadd.f32 %v2305, %v2418
      %v2537 = vadd.f32 %v2306, %v2423
      %v2538 = vadd.f32 %v2307, %v2426
      %v2539 = vadd.f32 %v2308, %v2431
      %v2540 = vadd.f32 %v2309, %v2434
      %v2541 = vadd.f32 %v2310, %v2439
      %v2542 = vadd.f32 %v2311, %v2442
      %v2543 = vadd.f32 %v2312, %v2447
      %v2544 = vadd.f32 %v2313, %v2450
      %v2545 = vadd.f32 %v2314, %v2455
      %v2546 = vadd.f32 %v2315, %v2458
      %v2547 = vadd.f32 %v2316, %v2463
      %v2548 = vadd.f32 %v2317, %v2466
      %v2549 = vadd.f32 %v2318, %v2471
      %v2550 = vadd.f32 %v2319, %v2474
      %v2551 = vadd.f32 %v2320, %v2479
      %v2552 = vadd.f32 %v2321, %v2482
      %v2553 = vadd.f32 %v2322, %v2487
      %v2554 = vadd.f32 %v2323, %v2490
      %v2555 = vadd.f32 %v2324, %v2495
      %v2556 = vadd.f32 %v2325, %v2498
      %v2557 = vadd.f32 %v2326, %v2503
      %v2558 = vadd.f32 %v2327, %v2506
      %v2559 = vadd.f32 %v2328, %v2511
      %v2560 = vadd.f32 %v2329, %v2514
      %v2561 = vadd.f32 %v2330, %v2519
      %v2562 = vadd.f32 %v2331, %v2522
      %v2563 = vadd.f32 %v2332, %v2527
      %v2564 = vadd.f32 %v2333, %v2530
      %v2567 = vunpack.c.l.b16 %v361
      %v2568 = vunpack.c.l.b16 %v362
      %v2569 = vpack.c.b16 %v2568, %v2567
      %v2578 = vunpack.c.l.b16 %v412
      %v2579 = vunpack.c.l.b16 %v413
      %v2580 = vunpack.c.l.b16 %v414
      %v2581 = vunpack.c.l.b16 %v415
      %v2582 = vunpack.c.l.b16 %v416
      %v2583 = vunpack.c.l.b16 %v417
      %v2584 = vunpack.c.l.b16 %v418
      %v2585 = vunpack.c.l.b16 %v419
      %v2586 = vpack.c.b16 %v2579, %v2578
      %v2587 = vpack.c.b16 %v2581, %v2580
      %v2588 = vpack.c.b16 %v2583, %v2582
      %v2589 = vpack.c.b16 %v2585, %v2584
      %v2595 = vsel %vm895, %v2569, 0
      %2597 = vmatprep.subr.bf16.mxu0 0
      %2598 = vmatpush1.bf16.msra.mxu0 0
      %2599 = vmatprep.subr.bf16.mxu0 0
      %2600 = vmatpush1.bf16.msra.mxu0 0
      %2601 = vmatprep.subr.bf16.mxu0 0
      %2602 = vmatpush1.bf16.msra.mxu0 0
      %2603 = vmatprep.subr.bf16.mxu0 0
      %2604 = vmatpush1.bf16.msra.mxu0 0
      %2605 = vmatprep.subr.bf16.mxu0 0
      %2606 = vmatpush1.bf16.msra.mxu0 %v2589
      %2607 = vmatprep.subr.bf16.mxu0 0
      %2608 = vmatpush1.bf16.msra.mxu0 %v2588
      %2609 = vmatprep.subr.bf16.mxu0 0
      %2610 = vmatpush1.bf16.msra.mxu0 %v2587
      %2611 = vmatprep.subr.bf16.mxu0 0
      %2612 = vmatpush1.bf16.msra.mxu0 %v2586
      %2613 = vmatprep.subr.bf16.mxu0 0
      %2614 = vmatpush2.bf16.msra.mxu0 0
      %2615 = vmatprep.subr.bf16.mxu0 0
      %2616 = vmatpush2.bf16.msra.mxu0 0
      %2617 = vmatprep.subr.bf16.mxu0 0
      %2618 = vmatpush2.bf16.msra.mxu0 0
      %2619 = vmatprep.subr.bf16.mxu0 0
      %2620 = vmatpush2.bf16.msra.mxu0 0
      %2621 = vmatprep.subr.bf16.mxu0 0
      %2622 = vmatpush2.bf16.msra.mxu0 0
      %2623 = vmatprep.subr.bf16.mxu0 0
      %2624 = vmatpush2.bf16.msra.mxu0 0
      %2625 = vmatprep.subr.bf16.mxu0 0
      %2626 = vmatpush2.bf16.msra.mxu0 0
      %2627 = vmatprep.subr.bf16.mxu0 0
      %2628 = vmatpush2.bf16.msra.mxu0 0
      %2629 = vmatprep.mubr.bf16.mxu0 0
      %2630 = vmatmul.mubr.bf16.gmra.mxu0 %v1216
      %v2631 = vpop.f32.mrf.mxu0
      %v2632 = vadd.f32 0.0, %v2631
      %v2633 = vpop.f32.mrf.mxu0
      %v2634 = vpop.f32.mrf.mxu0
      %v2635 = vadd.f32 0.0, %v2634
      %v2636 = vpop.f32.mrf.mxu0
      %2637 = vmatprep.mubr.bf16.mxu0 0
      %2638 = vmatmul.mubr.bf16.gmra.mxu0 %v1219
      %v2639 = vpop.f32.mrf.mxu0
      %v2640 = vadd.f32 0.0, %v2639
      %v2641 = vpop.f32.mrf.mxu0
      %v2642 = vpop.f32.mrf.mxu0
      %v2643 = vadd.f32 0.0, %v2642
      %v2644 = vpop.f32.mrf.mxu0
      %2645 = vmatprep.mubr.bf16.mxu0 0
      %2646 = vmatmul.mubr.bf16.gmra.mxu0 %v1222
      %v2647 = vpop.f32.mrf.mxu0
      %v2648 = vadd.f32 0.0, %v2647
      %v2649 = vpop.f32.mrf.mxu0
      %v2650 = vpop.f32.mrf.mxu0
      %v2651 = vadd.f32 0.0, %v2650
      %v2652 = vpop.f32.mrf.mxu0
      %2653 = vmatprep.mubr.bf16.mxu0 0
      %2654 = vmatmul.mubr.bf16.gmra.mxu0 %v1225
      %v2655 = vpop.f32.mrf.mxu0
      %v2656 = vadd.f32 0.0, %v2655
      %v2657 = vpop.f32.mrf.mxu0
      %v2658 = vpop.f32.mrf.mxu0
      %v2659 = vadd.f32 0.0, %v2658
      %v2660 = vpop.f32.mrf.mxu0
      %2661 = vmatprep.mubr.bf16.mxu0 0
      %2662 = vmatmul.mubr.bf16.gmra.mxu0 %v1228
      %v2663 = vpop.f32.mrf.mxu0
      %v2664 = vadd.f32 0.0, %v2663
      %v2665 = vpop.f32.mrf.mxu0
      %v2666 = vpop.f32.mrf.mxu0
      %v2667 = vadd.f32 0.0, %v2666
      %v2668 = vpop.f32.mrf.mxu0
      %2669 = vmatprep.mubr.bf16.mxu0 0
      %2670 = vmatmul.mubr.bf16.gmra.mxu0 %v1231
      %v2671 = vpop.f32.mrf.mxu0
      %v2672 = vadd.f32 0.0, %v2671
      %v2673 = vpop.f32.mrf.mxu0
      %v2674 = vpop.f32.mrf.mxu0
      %v2675 = vadd.f32 0.0, %v2674
      %v2676 = vpop.f32.mrf.mxu0
      %2677 = vmatprep.mubr.bf16.mxu0 0
      %2678 = vmatmul.mubr.bf16.gmra.mxu0 %v1234
      %v2679 = vpop.f32.mrf.mxu0
      %v2680 = vadd.f32 0.0, %v2679
      %v2681 = vpop.f32.mrf.mxu0
      %v2682 = vpop.f32.mrf.mxu0
      %v2683 = vadd.f32 0.0, %v2682
      %v2684 = vpop.f32.mrf.mxu0
      %2685 = vmatprep.mubr.bf16.mxu0 0
      %2686 = vmatmul.mubr.bf16.gmra.mxu0 %v1237
      %v2687 = vpop.f32.mrf.mxu0
      %v2688 = vadd.f32 0.0, %v2687
      %v2689 = vpop.f32.mrf.mxu0
      %v2690 = vpop.f32.mrf.mxu0
      %v2691 = vadd.f32 0.0, %v2690
      %v2692 = vpop.f32.mrf.mxu0
      %2693 = vmatprep.mubr.bf16.mxu0 0
      %2694 = vmatmul.mubr.bf16.gmra.mxu0 %v1240
      %v2695 = vpop.f32.mrf.mxu0
      %v2696 = vadd.f32 0.0, %v2695
      %v2697 = vpop.f32.mrf.mxu0
      %v2698 = vpop.f32.mrf.mxu0
      %v2699 = vadd.f32 0.0, %v2698
      %v2700 = vpop.f32.mrf.mxu0
      %2701 = vmatprep.mubr.bf16.mxu0 0
      %2702 = vmatmul.mubr.bf16.gmra.mxu0 %v1243
      %v2703 = vpop.f32.mrf.mxu0
      %v2704 = vadd.f32 0.0, %v2703
      %v2705 = vpop.f32.mrf.mxu0
      %v2706 = vpop.f32.mrf.mxu0
      %v2707 = vadd.f32 0.0, %v2706
      %v2708 = vpop.f32.mrf.mxu0
      %2709 = vmatprep.mubr.bf16.mxu0 0
      %2710 = vmatmul.mubr.bf16.gmra.mxu0 %v1246
      %v2711 = vpop.f32.mrf.mxu0
      %v2712 = vadd.f32 0.0, %v2711
      %v2713 = vpop.f32.mrf.mxu0
      %v2714 = vpop.f32.mrf.mxu0
      %v2715 = vadd.f32 0.0, %v2714
      %v2716 = vpop.f32.mrf.mxu0
      %2717 = vmatprep.mubr.bf16.mxu0 0
      %2718 = vmatmul.mubr.bf16.gmra.mxu0 %v1249
      %v2719 = vpop.f32.mrf.mxu0
      %v2720 = vadd.f32 0.0, %v2719
      %v2721 = vpop.f32.mrf.mxu0
      %v2722 = vpop.f32.mrf.mxu0
      %v2723 = vadd.f32 0.0, %v2722
      %v2724 = vpop.f32.mrf.mxu0
      %2725 = vmatprep.mubr.bf16.mxu0 0
      %2726 = vmatmul.mubr.bf16.gmra.mxu0 %v1252
      %v2727 = vpop.f32.mrf.mxu0
      %v2728 = vadd.f32 0.0, %v2727
      %v2729 = vpop.f32.mrf.mxu0
      %v2730 = vpop.f32.mrf.mxu0
      %v2731 = vadd.f32 0.0, %v2730
      %v2732 = vpop.f32.mrf.mxu0
      %2733 = vmatprep.mubr.bf16.mxu0 0
      %2734 = vmatmul.mubr.bf16.gmra.mxu0 %v1255
      %v2735 = vpop.f32.mrf.mxu0
      %v2736 = vadd.f32 0.0, %v2735
      %v2737 = vpop.f32.mrf.mxu0
      %v2738 = vpop.f32.mrf.mxu0
      %v2739 = vadd.f32 0.0, %v2738
      %v2740 = vpop.f32.mrf.mxu0
      %2741 = vmatprep.mubr.bf16.mxu0 0
      %2742 = vmatmul.mubr.bf16.gmra.mxu0 %v1892
      %v2743 = vpop.f32.mrf.mxu0
      %v2744 = vadd.f32 0.0, %v2743
      %v2745 = vpop.f32.mrf.mxu0
      %v2746 = vpop.f32.mrf.mxu0
      %v2747 = vadd.f32 0.0, %v2746
      %v2748 = vpop.f32.mrf.mxu0
      %2749 = vmatprep.mubr.bf16.mxu0 0
      %2750 = vmatmul.mubr.bf16.gmra.mxu0 %v2595
      %v2751 = vpop.f32.mrf.mxu0
      %v2752 = vadd.f32 0.0, %v2751
      %v2753 = vpop.f32.mrf.mxu0
      %v2754 = vpop.f32.mrf.mxu0
      %v2755 = vadd.f32 0.0, %v2754
      %v2756 = vpop.f32.mrf.mxu0
      %2757 = vdwg.mxu0
      %v2758 = vadd.f32 %v2533, %v2632
      %v2759 = vadd.f32 %v2534, %v2635
      %v2760 = vadd.f32 %v2535, %v2640
      %v2761 = vadd.f32 %v2536, %v2643
      %v2762 = vadd.f32 %v2537, %v2648
      %v2763 = vadd.f32 %v2538, %v2651
      %v2764 = vadd.f32 %v2539, %v2656
      %v2765 = vadd.f32 %v2540, %v2659
      %v2766 = vadd.f32 %v2541, %v2664
      %v2767 = vadd.f32 %v2542, %v2667
      %v2768 = vadd.f32 %v2543, %v2672
      %v2769 = vadd.f32 %v2544, %v2675
      %v2770 = vadd.f32 %v2545, %v2680
      %v2771 = vadd.f32 %v2546, %v2683
      %v2772 = vadd.f32 %v2547, %v2688
      %v2773 = vadd.f32 %v2548, %v2691
      %v2774 = vadd.f32 %v2549, %v2696
      %v2775 = vadd.f32 %v2550, %v2699
      %v2776 = vadd.f32 %v2551, %v2704
      %v2777 = vadd.f32 %v2552, %v2707
      %v2778 = vadd.f32 %v2553, %v2712
      %v2779 = vadd.f32 %v2554, %v2715
      %v2780 = vadd.f32 %v2555, %v2720
      %v2781 = vadd.f32 %v2556, %v2723
      %v2782 = vadd.f32 %v2557, %v2728
      %v2783 = vadd.f32 %v2558, %v2731
      %v2784 = vadd.f32 %v2559, %v2736
      %v2785 = vadd.f32 %v2560, %v2739
      %v2786 = vadd.f32 %v2561, %v2744
      %v2787 = vadd.f32 %v2562, %v2747
      %v2788 = vadd.f32 %v2563, %v2752
      %v2789 = vadd.f32 %v2564, %v2755
      %v2791 = vshrl.u32 %v361, 16
      %v2793 = vrot.slane %v2791, 4
      %v2794 = vshll.u32 %v361, 16
      %v2796 = vrot.slane %v2794, 5
      %v2797 = vor.u32 %v2793, %v2796
      %v2798 = vrot.slane %v2797, 4
      %v2800 = vshll.u32 %v362, 16
      %v2802 = vrot.slane %v2800, 5
      %v2803 = vsel %vm438, %v2798, %v2802
      %v2804 = vshrl.u32 %v362, 16
      %v2806 = vrot.slane %v2804, 4
      %v2807 = vor.u32 %v2806, %v2802
      %v2808 = vrot.slane %v2807, 4
      %v2810 = vshll.u32 %v363, 16
      %v2812 = vrot.slane %v2810, 5
      %v2813 = vsel %vm438, %v2808, %v2812
      %v2814 = vunpack.c.l.b16 %v2803
      %v2815 = vunpack.c.l.b16 %v2813
      %v2816 = vpack.c.b16 %v2815, %v2814
      %v2825 = vunpack.c.l.b16 %v420
      %v2826 = vunpack.c.l.b16 %v421
      %v2827 = vunpack.c.l.b16 %v422
      %v2828 = vunpack.c.l.b16 %v423
      %v2829 = vunpack.c.l.b16 %v424
      %v2830 = vunpack.c.l.b16 %v425
      %v2831 = vunpack.c.l.b16 %v426
      %v2832 = vunpack.c.l.b16 %v427
      %v2833 = vpack.c.b16 %v2826, %v2825
      %v2834 = vpack.c.b16 %v2828, %v2827
      %v2835 = vpack.c.b16 %v2830, %v2829
      %v2836 = vpack.c.b16 %v2832, %v2831
      %v2842 = vsel %vm895, %v2816, 0
      %2844 = vmatprep.subr.bf16.mxu0 0
      %2845 = vmatpush1.bf16.msra.mxu0 0
      %2846 = vmatprep.subr.bf16.mxu0 0
      %2847 = vmatpush1.bf16.msra.mxu0 0
      %2848 = vmatprep.subr.bf16.mxu0 0
      %2849 = vmatpush1.bf16.msra.mxu0 0
      %2850 = vmatprep.subr.bf16.mxu0 0
      %2851 = vmatpush1.bf16.msra.mxu0 0
      %2852 = vmatprep.subr.bf16.mxu0 0
      %2853 = vmatpush1.bf16.msra.mxu0 %v2836
      %2854 = vmatprep.subr.bf16.mxu0 0
      %2855 = vmatpush1.bf16.msra.mxu0 %v2835
      %2856 = vmatprep.subr.bf16.mxu0 0
      %2857 = vmatpush1.bf16.msra.mxu0 %v2834
      %2858 = vmatprep.subr.bf16.mxu0 0
      %2859 = vmatpush1.bf16.msra.mxu0 %v2833
      %2860 = vmatprep.subr.bf16.mxu0 0
      %2861 = vmatpush2.bf16.msra.mxu0 0
      %2862 = vmatprep.subr.bf16.mxu0 0
      %2863 = vmatpush2.bf16.msra.mxu0 0
      %2864 = vmatprep.subr.bf16.mxu0 0
      %2865 = vmatpush2.bf16.msra.mxu0 0
      %2866 = vmatprep.subr.bf16.mxu0 0
      %2867 = vmatpush2.bf16.msra.mxu0 0
      %2868 = vmatprep.subr.bf16.mxu0 0
      %2869 = vmatpush2.bf16.msra.mxu0 0
      %2870 = vmatprep.subr.bf16.mxu0 0
      %2871 = vmatpush2.bf16.msra.mxu0 0
      %2872 = vmatprep.subr.bf16.mxu0 0
      %2873 = vmatpush2.bf16.msra.mxu0 0
      %2874 = vmatprep.subr.bf16.mxu0 0
      %2875 = vmatpush2.bf16.msra.mxu0 0
      %2876 = vmatprep.mubr.bf16.mxu0 0
      %2877 = vmatmul.mubr.bf16.gmra.mxu0 %v903
      %v2878 = vpop.f32.mrf.mxu0
      %v2879 = vadd.f32 0.0, %v2878
      %v2880 = vpop.f32.mrf.mxu0
      %v2881 = vpop.f32.mrf.mxu0
      %v2882 = vadd.f32 0.0, %v2881
      %v2883 = vpop.f32.mrf.mxu0
      %2884 = vmatprep.mubr.bf16.mxu0 0
      %2885 = vmatmul.mubr.bf16.gmra.mxu0 %v906
      %v2886 = vpop.f32.mrf.mxu0
      %v2887 = vadd.f32 0.0, %v2886
      %v2888 = vpop.f32.mrf.mxu0
      %v2889 = vpop.f32.mrf.mxu0
      %v2890 = vadd.f32 0.0, %v2889
      %v2891 = vpop.f32.mrf.mxu0
      %2892 = vmatprep.mubr.bf16.mxu0 0
      %2893 = vmatmul.mubr.bf16.gmra.mxu0 %v909
      %v2894 = vpop.f32.mrf.mxu0
      %v2895 = vadd.f32 0.0, %v2894
      %v2896 = vpop.f32.mrf.mxu0
      %v2897 = vpop.f32.mrf.mxu0
      %v2898 = vadd.f32 0.0, %v2897
      %v2899 = vpop.f32.mrf.mxu0
      %2900 = vmatprep.mubr.bf16.mxu0 0
      %2901 = vmatmul.mubr.bf16.gmra.mxu0 %v912
      %v2902 = vpop.f32.mrf.mxu0
      %v2903 = vadd.f32 0.0, %v2902
      %v2904 = vpop.f32.mrf.mxu0
      %v2905 = vpop.f32.mrf.mxu0
      %v2906 = vadd.f32 0.0, %v2905
      %v2907 = vpop.f32.mrf.mxu0
      %2908 = vmatprep.mubr.bf16.mxu0 0
      %2909 = vmatmul.mubr.bf16.gmra.mxu0 %v915
      %v2910 = vpop.f32.mrf.mxu0
      %v2911 = vadd.f32 0.0, %v2910
      %v2912 = vpop.f32.mrf.mxu0
      %v2913 = vpop.f32.mrf.mxu0
      %v2914 = vadd.f32 0.0, %v2913
      %v2915 = vpop.f32.mrf.mxu0
      %2916 = vmatprep.mubr.bf16.mxu0 0
      %2917 = vmatmul.mubr.bf16.gmra.mxu0 %v918
      %v2918 = vpop.f32.mrf.mxu0
      %v2919 = vadd.f32 0.0, %v2918
      %v2920 = vpop.f32.mrf.mxu0
      %v2921 = vpop.f32.mrf.mxu0
      %v2922 = vadd.f32 0.0, %v2921
      %v2923 = vpop.f32.mrf.mxu0
      %2924 = vmatprep.mubr.bf16.mxu0 0
      %2925 = vmatmul.mubr.bf16.gmra.mxu0 %v921
      %v2926 = vpop.f32.mrf.mxu0
      %v2927 = vadd.f32 0.0, %v2926
      %v2928 = vpop.f32.mrf.mxu0
      %v2929 = vpop.f32.mrf.mxu0
      %v2930 = vadd.f32 0.0, %v2929
      %v2931 = vpop.f32.mrf.mxu0
      %2932 = vmatprep.mubr.bf16.mxu0 0
      %2933 = vmatmul.mubr.bf16.gmra.mxu0 %v924
      %v2934 = vpop.f32.mrf.mxu0
      %v2935 = vadd.f32 0.0, %v2934
      %v2936 = vpop.f32.mrf.mxu0
      %v2937 = vpop.f32.mrf.mxu0
      %v2938 = vadd.f32 0.0, %v2937
      %v2939 = vpop.f32.mrf.mxu0
      %2940 = vmatprep.mubr.bf16.mxu0 0
      %2941 = vmatmul.mubr.bf16.gmra.mxu0 %v927
      %v2942 = vpop.f32.mrf.mxu0
      %v2943 = vadd.f32 0.0, %v2942
      %v2944 = vpop.f32.mrf.mxu0
      %v2945 = vpop.f32.mrf.mxu0
      %v2946 = vadd.f32 0.0, %v2945
      %v2947 = vpop.f32.mrf.mxu0
      %2948 = vmatprep.mubr.bf16.mxu0 0
      %2949 = vmatmul.mubr.bf16.gmra.mxu0 %v930
      %v2950 = vpop.f32.mrf.mxu0
      %v2951 = vadd.f32 0.0, %v2950
      %v2952 = vpop.f32.mrf.mxu0
      %v2953 = vpop.f32.mrf.mxu0
      %v2954 = vadd.f32 0.0, %v2953
      %v2955 = vpop.f32.mrf.mxu0
      %2956 = vmatprep.mubr.bf16.mxu0 0
      %2957 = vmatmul.mubr.bf16.gmra.mxu0 %v933
      %v2958 = vpop.f32.mrf.mxu0
      %v2959 = vadd.f32 0.0, %v2958
      %v2960 = vpop.f32.mrf.mxu0
      %v2961 = vpop.f32.mrf.mxu0
      %v2962 = vadd.f32 0.0, %v2961
      %v2963 = vpop.f32.mrf.mxu0
      %2964 = vmatprep.mubr.bf16.mxu0 0
      %2965 = vmatmul.mubr.bf16.gmra.mxu0 %v936
      %v2966 = vpop.f32.mrf.mxu0
      %v2967 = vadd.f32 0.0, %v2966
      %v2968 = vpop.f32.mrf.mxu0
      %v2969 = vpop.f32.mrf.mxu0
      %v2970 = vadd.f32 0.0, %v2969
      %v2971 = vpop.f32.mrf.mxu0
      %2972 = vmatprep.mubr.bf16.mxu0 0
      %2973 = vmatmul.mubr.bf16.gmra.mxu0 %v939
      %v2974 = vpop.f32.mrf.mxu0
      %v2975 = vadd.f32 0.0, %v2974
      %v2976 = vpop.f32.mrf.mxu0
      %v2977 = vpop.f32.mrf.mxu0
      %v2978 = vadd.f32 0.0, %v2977
      %v2979 = vpop.f32.mrf.mxu0
      %2980 = vmatprep.mubr.bf16.mxu0 0
      %2981 = vmatmul.mubr.bf16.gmra.mxu0 %v942
      %v2982 = vpop.f32.mrf.mxu0
      %v2983 = vadd.f32 0.0, %v2982
      %v2984 = vpop.f32.mrf.mxu0
      %v2985 = vpop.f32.mrf.mxu0
      %v2986 = vadd.f32 0.0, %v2985
      %v2987 = vpop.f32.mrf.mxu0
      %2988 = vmatprep.mubr.bf16.mxu0 0
      %2989 = vmatmul.mubr.bf16.gmra.mxu0 %v2139
      %v2990 = vpop.f32.mrf.mxu0
      %v2991 = vadd.f32 0.0, %v2990
      %v2992 = vpop.f32.mrf.mxu0
      %v2993 = vpop.f32.mrf.mxu0
      %v2994 = vadd.f32 0.0, %v2993
      %v2995 = vpop.f32.mrf.mxu0
      %2996 = vmatprep.mubr.bf16.mxu0 0
      %2997 = vmatmul.mubr.bf16.gmra.mxu0 %v2842
      %v2998 = vpop.f32.mrf.mxu0
      %v2999 = vadd.f32 0.0, %v2998
      %v3000 = vpop.f32.mrf.mxu0
      %v3001 = vpop.f32.mrf.mxu0
      %v3002 = vadd.f32 0.0, %v3001
      %v3003 = vpop.f32.mrf.mxu0
      %3004 = vdwg.mxu0
      %v3005 = vadd.f32 %v2758, %v2879
      %v3006 = vadd.f32 %v2759, %v2882
      %v3007 = vadd.f32 %v2760, %v2887
      %v3008 = vadd.f32 %v2761, %v2890
      %v3009 = vadd.f32 %v2762, %v2895
      %v3010 = vadd.f32 %v2763, %v2898
      %v3011 = vadd.f32 %v2764, %v2903
      %v3012 = vadd.f32 %v2765, %v2906
      %v3013 = vadd.f32 %v2766, %v2911
      %v3014 = vadd.f32 %v2767, %v2914
      %v3015 = vadd.f32 %v2768, %v2919
      %v3016 = vadd.f32 %v2769, %v2922
      %v3017 = vadd.f32 %v2770, %v2927
      %v3018 = vadd.f32 %v2771, %v2930
      %v3019 = vadd.f32 %v2772, %v2935
      %v3020 = vadd.f32 %v2773, %v2938
      %v3021 = vadd.f32 %v2774, %v2943
      %v3022 = vadd.f32 %v2775, %v2946
      %v3023 = vadd.f32 %v2776, %v2951
      %v3024 = vadd.f32 %v2777, %v2954
      %v3025 = vadd.f32 %v2778, %v2959
      %v3026 = vadd.f32 %v2779, %v2962
      %v3027 = vadd.f32 %v2780, %v2967
      %v3028 = vadd.f32 %v2781, %v2970
      %v3029 = vadd.f32 %v2782, %v2975
      %v3030 = vadd.f32 %v2783, %v2978
      %v3031 = vadd.f32 %v2784, %v2983
      %v3032 = vadd.f32 %v2785, %v2986
      %v3033 = vadd.f32 %v2786, %v2991
      %v3034 = vadd.f32 %v2787, %v2994
      %v3035 = vadd.f32 %v2788, %v2999
      %v3036 = vadd.f32 %v2789, %v3002
      %v3038 = vrot.slane %v361, 5
      %v3039 = vrot.slane %v3038, 4
      %v3040 = vrot.slane %v362, 5
      %v3041 = vsel %vm1436, %v3039, %v3040
      %v3042 = vrot.slane %v3040, 4
      %v3043 = vrot.slane %v363, 5
      %v3044 = vsel %vm1436, %v3042, %v3043
      %v3045 = vunpack.c.l.b16 %v3041
      %v3046 = vunpack.c.l.b16 %v3044
      %v3047 = vpack.c.b16 %v3046, %v3045
      %v3056 = vunpack.c.l.b16 %v428
      %v3057 = vunpack.c.l.b16 %v429
      %v3058 = vunpack.c.l.b16 %v430
      %v3059 = vunpack.c.l.b16 %v431
      %v3060 = vunpack.c.l.b16 %v432
      %v3061 = vunpack.c.l.b16 %v433
      %v3062 = vunpack.c.l.b16 %v434
      %v3063 = vunpack.c.l.b16 %v435
      %v3064 = vpack.c.b16 %v3057, %v3056
      %v3065 = vpack.c.b16 %v3059, %v3058
      %v3066 = vpack.c.b16 %v3061, %v3060
      %v3067 = vpack.c.b16 %v3063, %v3062
      %v3073 = vsel %vm895, %v3047, 0
      %3075 = vmatprep.subr.bf16.mxu0 0
      %3076 = vmatpush1.bf16.msra.mxu0 0
      %3077 = vmatprep.subr.bf16.mxu0 0
      %3078 = vmatpush1.bf16.msra.mxu0 0
      %3079 = vmatprep.subr.bf16.mxu0 0
      %3080 = vmatpush1.bf16.msra.mxu0 0
      %3081 = vmatprep.subr.bf16.mxu0 0
      %3082 = vmatpush1.bf16.msra.mxu0 0
      %3083 = vmatprep.subr.bf16.mxu0 0
      %3084 = vmatpush1.bf16.msra.mxu0 %v3067
      %3085 = vmatprep.subr.bf16.mxu0 0
      %3086 = vmatpush1.bf16.msra.mxu0 %v3066
      %3087 = vmatprep.subr.bf16.mxu0 0
      %3088 = vmatpush1.bf16.msra.mxu0 %v3065
      %3089 = vmatprep.subr.bf16.mxu0 0
      %3090 = vmatpush1.bf16.msra.mxu0 %v3064
      %3091 = vmatprep.subr.bf16.mxu0 0
      %3092 = vmatpush2.bf16.msra.mxu0 0
      %3093 = vmatprep.subr.bf16.mxu0 0
      %3094 = vmatpush2.bf16.msra.mxu0 0
      %3095 = vmatprep.subr.bf16.mxu0 0
      %3096 = vmatpush2.bf16.msra.mxu0 0
      %3097 = vmatprep.subr.bf16.mxu0 0
      %3098 = vmatpush2.bf16.msra.mxu0 0
      %3099 = vmatprep.subr.bf16.mxu0 0
      %3100 = vmatpush2.bf16.msra.mxu0 0
      %3101 = vmatprep.subr.bf16.mxu0 0
      %3102 = vmatpush2.bf16.msra.mxu0 0
      %3103 = vmatprep.subr.bf16.mxu0 0
      %3104 = vmatpush2.bf16.msra.mxu0 0
      %3105 = vmatprep.subr.bf16.mxu0 0
      %3106 = vmatpush2.bf16.msra.mxu0 0
      %3107 = vmatprep.mubr.bf16.mxu0 0
      %3108 = vmatmul.mubr.bf16.gmra.mxu0 %v1628
      %v3109 = vpop.f32.mrf.mxu0
      %v3110 = vadd.f32 0.0, %v3109
      %v3111 = vpop.f32.mrf.mxu0
      %v3112 = vpop.f32.mrf.mxu0
      %v3113 = vadd.f32 0.0, %v3112
      %v3114 = vpop.f32.mrf.mxu0
      %3115 = vmatprep.mubr.bf16.mxu0 0
      %3116 = vmatmul.mubr.bf16.gmra.mxu0 %v1631
      %v3117 = vpop.f32.mrf.mxu0
      %v3118 = vadd.f32 0.0, %v3117
      %v3119 = vpop.f32.mrf.mxu0
      %v3120 = vpop.f32.mrf.mxu0
      %v3121 = vadd.f32 0.0, %v3120
      %v3122 = vpop.f32.mrf.mxu0
      %3123 = vmatprep.mubr.bf16.mxu0 0
      %3124 = vmatmul.mubr.bf16.gmra.mxu0 %v1634
      %v3125 = vpop.f32.mrf.mxu0
      %v3126 = vadd.f32 0.0, %v3125
      %v3127 = vpop.f32.mrf.mxu0
      %v3128 = vpop.f32.mrf.mxu0
      %v3129 = vadd.f32 0.0, %v3128
      %v3130 = vpop.f32.mrf.mxu0
      %3131 = vmatprep.mubr.bf16.mxu0 0
      %3132 = vmatmul.mubr.bf16.gmra.mxu0 %v1637
      %v3133 = vpop.f32.mrf.mxu0
      %v3134 = vadd.f32 0.0, %v3133
      %v3135 = vpop.f32.mrf.mxu0
      %v3136 = vpop.f32.mrf.mxu0
      %v3137 = vadd.f32 0.0, %v3136
      %v3138 = vpop.f32.mrf.mxu0
      %3139 = vmatprep.mubr.bf16.mxu0 0
      %3140 = vmatmul.mubr.bf16.gmra.mxu0 %v1640
      %v3141 = vpop.f32.mrf.mxu0
      %v3142 = vadd.f32 0.0, %v3141
      %v3143 = vpop.f32.mrf.mxu0
      %v3144 = vpop.f32.mrf.mxu0
      %v3145 = vadd.f32 0.0, %v3144
      %v3146 = vpop.f32.mrf.mxu0
      %3147 = vmatprep.mubr.bf16.mxu0 0
      %3148 = vmatmul.mubr.bf16.gmra.mxu0 %v1643
      %v3149 = vpop.f32.mrf.mxu0
      %v3150 = vadd.f32 0.0, %v3149
      %v3151 = vpop.f32.mrf.mxu0
      %v3152 = vpop.f32.mrf.mxu0
      %v3153 = vadd.f32 0.0, %v3152
      %v3154 = vpop.f32.mrf.mxu0
      %3155 = vmatprep.mubr.bf16.mxu0 0
      %3156 = vmatmul.mubr.bf16.gmra.mxu0 %v1646
      %v3157 = vpop.f32.mrf.mxu0
      %v3158 = vadd.f32 0.0, %v3157
      %v3159 = vpop.f32.mrf.mxu0
      %v3160 = vpop.f32.mrf.mxu0
      %v3161 = vadd.f32 0.0, %v3160
      %v3162 = vpop.f32.mrf.mxu0
      %3163 = vmatprep.mubr.bf16.mxu0 0
      %3164 = vmatmul.mubr.bf16.gmra.mxu0 %v1649
      %v3165 = vpop.f32.mrf.mxu0
      %v3166 = vadd.f32 0.0, %v3165
      %v3167 = vpop.f32.mrf.mxu0
      %v3168 = vpop.f32.mrf.mxu0
      %v3169 = vadd.f32 0.0, %v3168
      %v3170 = vpop.f32.mrf.mxu0
      %3171 = vmatprep.mubr.bf16.mxu0 0
      %3172 = vmatmul.mubr.bf16.gmra.mxu0 %v1652
      %v3173 = vpop.f32.mrf.mxu0
      %v3174 = vadd.f32 0.0, %v3173
      %v3175 = vpop.f32.mrf.mxu0
      %v3176 = vpop.f32.mrf.mxu0
      %v3177 = vadd.f32 0.0, %v3176
      %v3178 = vpop.f32.mrf.mxu0
      %3179 = vmatprep.mubr.bf16.mxu0 0
      %3180 = vmatmul.mubr.bf16.gmra.mxu0 %v1655
      %v3181 = vpop.f32.mrf.mxu0
      %v3182 = vadd.f32 0.0, %v3181
      %v3183 = vpop.f32.mrf.mxu0
      %v3184 = vpop.f32.mrf.mxu0
      %v3185 = vadd.f32 0.0, %v3184
      %v3186 = vpop.f32.mrf.mxu0
      %3187 = vmatprep.mubr.bf16.mxu0 0
      %3188 = vmatmul.mubr.bf16.gmra.mxu0 %v1658
      %v3189 = vpop.f32.mrf.mxu0
      %v3190 = vadd.f32 0.0, %v3189
      %v3191 = vpop.f32.mrf.mxu0
      %v3192 = vpop.f32.mrf.mxu0
      %v3193 = vadd.f32 0.0, %v3192
      %v3194 = vpop.f32.mrf.mxu0
      %3195 = vmatprep.mubr.bf16.mxu0 0
      %3196 = vmatmul.mubr.bf16.gmra.mxu0 %v1661
      %v3197 = vpop.f32.mrf.mxu0
      %v3198 = vadd.f32 0.0, %v3197
      %v3199 = vpop.f32.mrf.mxu0
      %v3200 = vpop.f32.mrf.mxu0
      %v3201 = vadd.f32 0.0, %v3200
      %v3202 = vpop.f32.mrf.mxu0
      %3203 = vmatprep.mubr.bf16.mxu0 0
      %3204 = vmatmul.mubr.bf16.gmra.mxu0 %v1664
      %v3205 = vpop.f32.mrf.mxu0
      %v3206 = vadd.f32 0.0, %v3205
      %v3207 = vpop.f32.mrf.mxu0
      %v3208 = vpop.f32.mrf.mxu0
      %v3209 = vadd.f32 0.0, %v3208
      %v3210 = vpop.f32.mrf.mxu0
      %3211 = vmatprep.mubr.bf16.mxu0 0
      %3212 = vmatmul.mubr.bf16.gmra.mxu0 %v1667
      %v3213 = vpop.f32.mrf.mxu0
      %v3214 = vadd.f32 0.0, %v3213
      %v3215 = vpop.f32.mrf.mxu0
      %v3216 = vpop.f32.mrf.mxu0
      %v3217 = vadd.f32 0.0, %v3216
      %v3218 = vpop.f32.mrf.mxu0
      %3219 = vmatprep.mubr.bf16.mxu0 0
      %3220 = vmatmul.mubr.bf16.gmra.mxu0 %v2370
      %v3221 = vpop.f32.mrf.mxu0
      %v3222 = vadd.f32 0.0, %v3221
      %v3223 = vpop.f32.mrf.mxu0
      %v3224 = vpop.f32.mrf.mxu0
      %v3225 = vadd.f32 0.0, %v3224
      %v3226 = vpop.f32.mrf.mxu0
      %3227 = vmatprep.mubr.bf16.mxu0 0
      %3228 = vmatmul.mubr.bf16.gmra.mxu0 %v3073
      %v3229 = vpop.f32.mrf.mxu0
      %v3230 = vadd.f32 0.0, %v3229
      %v3231 = vpop.f32.mrf.mxu0
      %v3232 = vpop.f32.mrf.mxu0
      %v3233 = vadd.f32 0.0, %v3232
      %v3234 = vpop.f32.mrf.mxu0
      %3235 = vdwg.mxu0
      %v3236 = vadd.f32 %v3005, %v3110
      %v3237 = vadd.f32 %v3006, %v3113
      %v3238 = vadd.f32 %v3007, %v3118
      %v3239 = vadd.f32 %v3008, %v3121
      %v3240 = vadd.f32 %v3009, %v3126
      %v3241 = vadd.f32 %v3010, %v3129
      %v3242 = vadd.f32 %v3011, %v3134
      %v3243 = vadd.f32 %v3012, %v3137
      %v3244 = vadd.f32 %v3013, %v3142
      %v3245 = vadd.f32 %v3014, %v3145
      %v3246 = vadd.f32 %v3015, %v3150
      %v3247 = vadd.f32 %v3016, %v3153
      %v3248 = vadd.f32 %v3017, %v3158
      %v3249 = vadd.f32 %v3018, %v3161
      %v3250 = vadd.f32 %v3019, %v3166
      %v3251 = vadd.f32 %v3020, %v3169
      %v3252 = vadd.f32 %v3021, %v3174
      %v3253 = vadd.f32 %v3022, %v3177
      %v3254 = vadd.f32 %v3023, %v3182
      %v3255 = vadd.f32 %v3024, %v3185
      %v3256 = vadd.f32 %v3025, %v3190
      %v3257 = vadd.f32 %v3026, %v3193
      %v3258 = vadd.f32 %v3027, %v3198
      %v3259 = vadd.f32 %v3028, %v3201
      %v3260 = vadd.f32 %v3029, %v3206
      %v3261 = vadd.f32 %v3030, %v3209
      %v3262 = vadd.f32 %v3031, %v3214
      %v3263 = vadd.f32 %v3032, %v3217
      %v3264 = vadd.f32 %v3033, %v3222
      %v3265 = vadd.f32 %v3034, %v3225
      %v3266 = vadd.f32 %v3035, %v3230
      %v3267 = vadd.f32 %v3036, %v3233
      %v3268 = vld [vmem:[%s288] sm:$0x1]
      %v3270 = vlaneseq
      %v3271 = vshrl.u32 %v3270, 7
      %v3272 = vsub.s32 0, %v3271
      %v3273 = vrot.slane %v3268, %v3272
      %v3275 = vadd.f32 %v3236, %v3273
      %v3276 = vadd.f32 %v3237, %v3273
      %v3277 = vadd.f32 %v3238, %v3273
      %v3278 = vadd.f32 %v3239, %v3273
      %v3279 = vadd.f32 %v3240, %v3273
      %v3280 = vadd.f32 %v3241, %v3273
      %v3281 = vadd.f32 %v3242, %v3273
      %v3282 = vadd.f32 %v3243, %v3273
      %v3283 = vadd.f32 %v3244, %v3273
      %v3284 = vadd.f32 %v3245, %v3273
      %v3285 = vadd.f32 %v3246, %v3273
      %v3286 = vadd.f32 %v3247, %v3273
      %v3287 = vadd.f32 %v3248, %v3273
      %v3288 = vadd.f32 %v3249, %v3273
      %v3289 = vadd.f32 %v3250, %v3273
      %v3290 = vadd.f32 %v3251, %v3273
      %v3291 = vadd.f32 %v3252, %v3273
      %v3292 = vadd.f32 %v3253, %v3273
      %v3293 = vadd.f32 %v3254, %v3273
      %v3294 = vadd.f32 %v3255, %v3273
      %v3295 = vadd.f32 %v3256, %v3273
      %v3296 = vadd.f32 %v3257, %v3273
      %v3297 = vadd.f32 %v3258, %v3273
      %v3298 = vadd.f32 %v3259, %v3273
      %v3299 = vadd.f32 %v3260, %v3273
      %v3300 = vadd.f32 %v3261, %v3273
      %v3301 = vadd.f32 %v3262, %v3273
      %v3302 = vadd.f32 %v3263, %v3273
      %v3303 = vadd.f32 %v3264, %v3273
      %v3304 = vadd.f32 %v3265, %v3273
      %v3305 = vadd.f32 %v3266, %v3273
      %v3306 = vadd.f32 %v3267, %v3273
      %v3307 = vpack.c.bf16 %v3276, %v3275
      %v3308 = vpack.c.bf16 %v3278, %v3277
      %v3309 = vpack.c.bf16 %v3280, %v3279
      %v3310 = vpack.c.bf16 %v3282, %v3281
      %v3311 = vpack.c.bf16 %v3284, %v3283
      %v3312 = vpack.c.bf16 %v3286, %v3285
      %v3313 = vpack.c.bf16 %v3288, %v3287
      %v3314 = vpack.c.bf16 %v3290, %v3289
      %v3315 = vpack.c.bf16 %v3292, %v3291
      %v3316 = vpack.c.bf16 %v3294, %v3293
      %v3317 = vpack.c.bf16 %v3296, %v3295
      %v3318 = vpack.c.bf16 %v3298, %v3297
      %v3319 = vpack.c.bf16 %v3300, %v3299
      %v3320 = vpack.c.bf16 %v3302, %v3301
      %v3321 = vpack.c.bf16 %v3304, %v3303
      %v3322 = vpack.c.bf16 %v3306, %v3305
      %v3339 = vunpack.c.l.b16 %v3307
      %v3340 = vunpack.c.h.b16 %v3307
      %v3341 = vunpack.c.l.b16 %v3308
      %v3342 = vunpack.c.h.b16 %v3308
      %v3343 = vunpack.c.l.b16 %v3309
      %v3344 = vunpack.c.h.b16 %v3309
      %v3345 = vunpack.c.l.b16 %v3310
      %v3346 = vunpack.c.h.b16 %v3310
      %v3347 = vunpack.c.l.b16 %v3311
      %v3348 = vunpack.c.h.b16 %v3311
      %v3349 = vunpack.c.l.b16 %v3312
      %v3350 = vunpack.c.h.b16 %v3312
      %v3351 = vunpack.c.l.b16 %v3313
      %v3352 = vunpack.c.h.b16 %v3313
      %v3353 = vunpack.c.l.b16 %v3314
      %v3354 = vunpack.c.h.b16 %v3314
      %v3355 = vunpack.c.l.b16 %v3315
      %v3356 = vunpack.c.h.b16 %v3315
      %v3357 = vunpack.c.l.b16 %v3316
      %v3358 = vunpack.c.h.b16 %v3316
      %v3359 = vunpack.c.l.b16 %v3317
      %v3360 = vunpack.c.h.b16 %v3317
      %v3361 = vunpack.c.l.b16 %v3318
      %v3362 = vunpack.c.h.b16 %v3318
      %v3363 = vunpack.c.l.b16 %v3319
      %v3364 = vunpack.c.h.b16 %v3319
      %v3365 = vunpack.c.l.b16 %v3320
      %v3366 = vunpack.c.h.b16 %v3320
      %v3367 = vunpack.c.l.b16 %v3321
      %v3368 = vunpack.c.h.b16 %v3321
      %v3369 = vunpack.c.l.b16 %v3322
      %v3370 = vunpack.c.h.b16 %v3322
      %v3371 = vpack.c.b16 %v3339, %v3339
      %v3372 = vpack.c.b16 %v3340, %v3340
      %v3373 = vpack.c.b16 %v3341, %v3341
      %v3374 = vpack.c.b16 %v3342, %v3342
      %v3375 = vpack.c.b16 %v3343, %v3343
      %v3376 = vpack.c.b16 %v3344, %v3344
      %v3377 = vpack.c.b16 %v3345, %v3345
      %v3378 = vpack.c.b16 %v3346, %v3346
      %v3379 = vpack.c.b16 %v3347, %v3347
      %v3380 = vpack.c.b16 %v3348, %v3348
      %v3381 = vpack.c.b16 %v3349, %v3349
      %v3382 = vpack.c.b16 %v3350, %v3350
      %v3383 = vpack.c.b16 %v3351, %v3351
      %v3384 = vpack.c.b16 %v3352, %v3352
      %v3385 = vpack.c.b16 %v3353, %v3353
      %v3386 = vpack.c.b16 %v3354, %v3354
      %v3387 = vpack.c.b16 %v3355, %v3355
      %v3388 = vpack.c.b16 %v3356, %v3356
      %v3389 = vpack.c.b16 %v3357, %v3357
      %v3390 = vpack.c.b16 %v3358, %v3358
      %v3391 = vpack.c.b16 %v3359, %v3359
      %v3392 = vpack.c.b16 %v3360, %v3360
      %v3393 = vpack.c.b16 %v3361, %v3361
      %v3394 = vpack.c.b16 %v3362, %v3362
      %v3395 = vpack.c.b16 %v3363, %v3363
      %v3396 = vpack.c.b16 %v3364, %v3364
      %v3397 = vpack.c.b16 %v3365, %v3365
      %v3398 = vpack.c.b16 %v3366, %v3366
      %v3399 = vpack.c.b16 %v3367, %v3367
      %v3400 = vpack.c.b16 %v3368, %v3368
      %v3401 = vpack.c.b16 %v3369, %v3369
      %v3402 = vpack.c.b16 %v3370, %v3370
      %vm3435 = vcmask 257024
      %3436 = vst.msk [vmem:[%s296] sm:$0xf] %vm3435, %v3371
      %3437 = vst.msk [vmem:[%s296 + $0x4] sm:$0xf] %vm3435, %v3372
      %3438 = vst.msk [vmem:[%s296 + $0x8] sm:$0xf] %vm3435, %v3373
      %3439 = vst.msk [vmem:[%s296 + $0xc] sm:$0xf] %vm3435, %v3374
      %3440 = vst.msk [vmem:[%s296 + $0x10] sm:$0xf] %vm3435, %v3375
      %3441 = vst.msk [vmem:[%s296 + $0x14] sm:$0xf] %vm3435, %v3376
      %3442 = vst.msk [vmem:[%s296 + $0x18] sm:$0xf] %vm3435, %v3377
      %3443 = vst.msk [vmem:[%s296 + $0x1c] sm:$0xf] %vm3435, %v3378
      %3444 = vst.msk [vmem:[%s296 + $0x20] sm:$0xf] %vm3435, %v3379
      %3445 = vst.msk [vmem:[%s296 + $0x24] sm:$0xf] %vm3435, %v3380
      %3446 = vst.msk [vmem:[%s296 + $0x28] sm:$0xf] %vm3435, %v3381
      %3447 = vst.msk [vmem:[%s296 + $0x2c] sm:$0xf] %vm3435, %v3382
      %3448 = vst.msk [vmem:[%s296 + $0x30] sm:$0xf] %vm3435, %v3383
      %3449 = vst.msk [vmem:[%s296 + $0x34] sm:$0xf] %vm3435, %v3384
      %3450 = vst.msk [vmem:[%s296 + $0x38] sm:$0xf] %vm3435, %v3385
      %3451 = vst.msk [vmem:[%s296 + $0x3c] sm:$0xf] %vm3435, %v3386
      %3452 = vst.msk [vmem:[%s296 + $0x40] sm:$0xf] %vm3435, %v3387
      %3453 = vst.msk [vmem:[%s296 + $0x44] sm:$0xf] %vm3435, %v3388
      %3454 = vst.msk [vmem:[%s296 + $0x48] sm:$0xf] %vm3435, %v3389
      %3455 = vst.msk [vmem:[%s296 + $0x4c] sm:$0xf] %vm3435, %v3390
      %3456 = vst.msk [vmem:[%s296 + $0x50] sm:$0xf] %vm3435, %v3391
      %3457 = vst.msk [vmem:[%s296 + $0x54] sm:$0xf] %vm3435, %v3392
      %3458 = vst.msk [vmem:[%s296 + $0x58] sm:$0xf] %vm3435, %v3393
      %3459 = vst.msk [vmem:[%s296 + $0x5c] sm:$0xf] %vm3435, %v3394
      %3460 = vst.msk [vmem:[%s296 + $0x60] sm:$0xf] %vm3435, %v3395
      %3461 = vst.msk [vmem:[%s296 + $0x64] sm:$0xf] %vm3435, %v3396
      %3462 = vst.msk [vmem:[%s296 + $0x68] sm:$0xf] %vm3435, %v3397
      %3463 = vst.msk [vmem:[%s296 + $0x6c] sm:$0xf] %vm3435, %v3398
      %3464 = vst.msk [vmem:[%s296 + $0x70] sm:$0xf] %vm3435, %v3399
      %3465 = vst.msk [vmem:[%s296 + $0x74] sm:$0xf] %vm3435, %v3400
      %3466 = vst.msk [vmem:[%s296 + $0x78] sm:$0xf] %vm3435, %v3401
      %3467 = vst.msk [vmem:[%s296 + $0x7c] sm:$0xf] %vm3435, %v3402
      %vm3468 = vcmask 261120
      %v3469 = vsel %vm3468, %v3275, 0.0
      %v3470 = vsel %vm3468, %v3276, 0.0
      %v3471 = vadd.f32 %v3469, %v3470
      %v3472 = vsel %vm3468, %v3277, 0.0
      %v3473 = vadd.f32 %v3471, %v3472
      %v3474 = vsel %vm3468, %v3278, 0.0
      %v3475 = vadd.f32 %v3473, %v3474
      %v3476 = vsel %vm3468, %v3279, 0.0
      %v3477 = vadd.f32 %v3475, %v3476
      %v3478 = vsel %vm3468, %v3280, 0.0
      %v3479 = vadd.f32 %v3477, %v3478
      %v3480 = vsel %vm3468, %v3281, 0.0
      %v3481 = vadd.f32 %v3479, %v3480
      %v3482 = vsel %vm3468, %v3282, 0.0
      %v3483 = vadd.f32 %v3481, %v3482
      %v3484 = vsel %vm3468, %v3283, 0.0
      %v3485 = vadd.f32 %v3483, %v3484
      %v3486 = vsel %vm3468, %v3284, 0.0
      %v3487 = vadd.f32 %v3485, %v3486
      %v3488 = vsel %vm3468, %v3285, 0.0
      %v3489 = vadd.f32 %v3487, %v3488
      %v3490 = vsel %vm3468, %v3286, 0.0
      %v3491 = vadd.f32 %v3489, %v3490
      %v3492 = vsel %vm3468, %v3287, 0.0
      %v3493 = vadd.f32 %v3491, %v3492
      %v3494 = vsel %vm3468, %v3288, 0.0
      %v3495 = vadd.f32 %v3493, %v3494
      %v3496 = vsel %vm3468, %v3289, 0.0
      %v3497 = vadd.f32 %v3495, %v3496
      %v3498 = vsel %vm3468, %v3290, 0.0
      %v3499 = vadd.f32 %v3497, %v3498
      %v3500 = vsel %vm3468, %v3291, 0.0
      %v3501 = vadd.f32 %v3499, %v3500
      %v3502 = vsel %vm3468, %v3292, 0.0
      %v3503 = vadd.f32 %v3501, %v3502
      %v3504 = vsel %vm3468, %v3293, 0.0
      %v3505 = vadd.f32 %v3503, %v3504
      %v3506 = vsel %vm3468, %v3294, 0.0
      %v3507 = vadd.f32 %v3505, %v3506
      %v3508 = vsel %vm3468, %v3295, 0.0
      %v3509 = vadd.f32 %v3507, %v3508
      %v3510 = vsel %vm3468, %v3296, 0.0
      %v3511 = vadd.f32 %v3509, %v3510
      %v3512 = vsel %vm3468, %v3297, 0.0
      %v3513 = vadd.f32 %v3511, %v3512
      %v3514 = vsel %vm3468, %v3298, 0.0
      %v3515 = vadd.f32 %v3513, %v3514
      %v3516 = vsel %vm3468, %v3299, 0.0
      %v3517 = vadd.f32 %v3515, %v3516
      %v3518 = vsel %vm3468, %v3300, 0.0
      %v3519 = vadd.f32 %v3517, %v3518
      %v3520 = vsel %vm3468, %v3301, 0.0
      %v3521 = vadd.f32 %v3519, %v3520
      %v3522 = vsel %vm3468, %v3302, 0.0
      %v3523 = vadd.f32 %v3521, %v3522
      %v3524 = vsel %vm3468, %v3303, 0.0
      %v3525 = vadd.f32 %v3523, %v3524
      %v3526 = vsel %vm3468, %v3304, 0.0
      %v3527 = vadd.f32 %v3525, %v3526
      %v3528 = vsel %vm3468, %v3305, 0.0
      %v3529 = vadd.f32 %v3527, %v3528
      %v3530 = vsel %vm3468, %v3306, 0.0
      %v3531 = vadd.f32 %v3529, %v3530
      %v3532 = vrot.slane %v3531, 4
      %v3533 = vadd.f32 %v3531, %v3532
      %v3534 = vrot.slane %v3533, 2
      %v3535 = vadd.f32 %v3533, %v3534
      %v3536 = vrot.slane %v3535, 1
      %v3537 = vadd.f32 %v3535, %v3536
      %vm3538 = vcmask 253952
      %3539 = vst.msk [vmem:[%s302] sm:$0x1] %vm3538, %v3537
      %v3540 = vmul.f32 %v3275, %v3275
      %v3541 = vmul.f32 %v3276, %v3276
      %v3542 = vmul.f32 %v3277, %v3277
      %v3543 = vmul.f32 %v3278, %v3278
      %v3544 = vmul.f32 %v3279, %v3279
      %v3545 = vmul.f32 %v3280, %v3280
      %v3546 = vmul.f32 %v3281, %v3281
      %v3547 = vmul.f32 %v3282, %v3282
      %v3548 = vmul.f32 %v3283, %v3283
      %v3549 = vmul.f32 %v3284, %v3284
      %v3550 = vmul.f32 %v3285, %v3285
      %v3551 = vmul.f32 %v3286, %v3286
      %v3552 = vmul.f32 %v3287, %v3287
      %v3553 = vmul.f32 %v3288, %v3288
      %v3554 = vmul.f32 %v3289, %v3289
      %v3555 = vmul.f32 %v3290, %v3290
      %v3556 = vmul.f32 %v3291, %v3291
      %v3557 = vmul.f32 %v3292, %v3292
      %v3558 = vmul.f32 %v3293, %v3293
      %v3559 = vmul.f32 %v3294, %v3294
      %v3560 = vmul.f32 %v3295, %v3295
      %v3561 = vmul.f32 %v3296, %v3296
      %v3562 = vmul.f32 %v3297, %v3297
      %v3563 = vmul.f32 %v3298, %v3298
      %v3564 = vmul.f32 %v3299, %v3299
      %v3565 = vmul.f32 %v3300, %v3300
      %v3566 = vmul.f32 %v3301, %v3301
      %v3567 = vmul.f32 %v3302, %v3302
      %v3568 = vmul.f32 %v3303, %v3303
      %v3569 = vmul.f32 %v3304, %v3304
      %v3570 = vmul.f32 %v3305, %v3305
      %v3571 = vmul.f32 %v3306, %v3306
      %v3572 = vsel %vm3468, %v3540, 0.0
      %v3573 = vsel %vm3468, %v3541, 0.0
      %v3574 = vadd.f32 %v3572, %v3573
      %v3575 = vsel %vm3468, %v3542, 0.0
      %v3576 = vadd.f32 %v3574, %v3575
      %v3577 = vsel %vm3468, %v3543, 0.0
      %v3578 = vadd.f32 %v3576, %v3577
      %v3579 = vsel %vm3468, %v3544, 0.0
      %v3580 = vadd.f32 %v3578, %v3579
      %v3581 = vsel %vm3468, %v3545, 0.0
      %v3582 = vadd.f32 %v3580, %v3581
      %v3583 = vsel %vm3468, %v3546, 0.0
      %v3584 = vadd.f32 %v3582, %v3583
      %v3585 = vsel %vm3468, %v3547, 0.0
      %v3586 = vadd.f32 %v3584, %v3585
      %v3587 = vsel %vm3468, %v3548, 0.0
      %v3588 = vadd.f32 %v3586, %v3587
      %v3589 = vsel %vm3468, %v3549, 0.0
      %v3590 = vadd.f32 %v3588, %v3589
      %v3591 = vsel %vm3468, %v3550, 0.0
      %v3592 = vadd.f32 %v3590, %v3591
      %v3593 = vsel %vm3468, %v3551, 0.0
      %v3594 = vadd.f32 %v3592, %v3593
      %v3595 = vsel %vm3468, %v3552, 0.0
      %v3596 = vadd.f32 %v3594, %v3595
      %v3597 = vsel %vm3468, %v3553, 0.0
      %v3598 = vadd.f32 %v3596, %v3597
      %v3599 = vsel %vm3468, %v3554, 0.0
      %v3600 = vadd.f32 %v3598, %v3599
      %v3601 = vsel %vm3468, %v3555, 0.0
      %v3602 = vadd.f32 %v3600, %v3601
      %v3603 = vsel %vm3468, %v3556, 0.0
      %v3604 = vadd.f32 %v3602, %v3603
      %v3605 = vsel %vm3468, %v3557, 0.0
      %v3606 = vadd.f32 %v3604, %v3605
      %v3607 = vsel %vm3468, %v3558, 0.0
      %v3608 = vadd.f32 %v3606, %v3607
      %v3609 = vsel %vm3468, %v3559, 0.0
      %v3610 = vadd.f32 %v3608, %v3609
      %v3611 = vsel %vm3468, %v3560, 0.0
      %v3612 = vadd.f32 %v3610, %v3611
      %v3613 = vsel %vm3468, %v3561, 0.0
      %v3614 = vadd.f32 %v3612, %v3613
      %v3615 = vsel %vm3468, %v3562, 0.0
      %v3616 = vadd.f32 %v3614, %v3615
      %v3617 = vsel %vm3468, %v3563, 0.0
      %v3618 = vadd.f32 %v3616, %v3617
      %v3619 = vsel %vm3468, %v3564, 0.0
      %v3620 = vadd.f32 %v3618, %v3619
      %v3621 = vsel %vm3468, %v3565, 0.0
      %v3622 = vadd.f32 %v3620, %v3621
      %v3623 = vsel %vm3468, %v3566, 0.0
      %v3624 = vadd.f32 %v3622, %v3623
      %v3625 = vsel %vm3468, %v3567, 0.0
      %v3626 = vadd.f32 %v3624, %v3625
      %v3627 = vsel %vm3468, %v3568, 0.0
      %v3628 = vadd.f32 %v3626, %v3627
      %v3629 = vsel %vm3468, %v3569, 0.0
      %v3630 = vadd.f32 %v3628, %v3629
      %v3631 = vsel %vm3468, %v3570, 0.0
      %v3632 = vadd.f32 %v3630, %v3631
      %v3633 = vsel %vm3468, %v3571, 0.0
      %v3634 = vadd.f32 %v3632, %v3633
      %v3635 = vrot.slane %v3634, 4
      %v3636 = vadd.f32 %v3634, %v3635
      %v3637 = vrot.slane %v3636, 2
      %v3638 = vadd.f32 %v3636, %v3637
      %v3639 = vrot.slane %v3638, 1
      %v3640 = vadd.f32 %v3638, %v3639
      %3641 = vst.msk [vmem:[%s308] sm:$0x1] %vm3538, %v3640
      %p3642 = scmp.lt.s32.totalorder %s22, 1
      %s3643 = scalar_select %p3642, %s22, 1
      %p3644 = scmp.lt.s32.totalorder %s21, 0
      %s3645 = scalar_select %p3644, %s21, 0
      %s3646 = smul.addr %s3643, 32
      %s3647 = sadd.s32 %s3645, %s3646
      %s3648 = smul.addr %s3647, 4
      %s3649 = scalar_lea.vmem %s3, %s3648
      %p3650 = scmp.lt.s32.totalorder %s22, 1
      %s3651 = scalar_select %p3650, %s22, 1
      %p3652 = scmp.lt.s32.totalorder %s21, 0
      %s3653 = scalar_select %p3652, %s21, 0
      %s3654 = sadd.s32 %s3653, %s3651
      %s3655 = scalar_lea.vmem %s4, %s3654
      %p3656 = scmp.lt.s32.totalorder %s22, 1
      %s3657 = scalar_select %p3656, %s22, 1
      %p3658 = scmp.lt.s32.totalorder %s21, 0
      %s3659 = scalar_select %p3658, %s21, 0
      %s3660 = sadd.s32 %s3659, %s3657
      %s3661 = scalar_lea.vmem %s5, %s3660
      // Predicated region
      $region33: #{up_forward.6} parent=31 // pred_check
        %p3662 = pneg %p127
      $region34: #{up_forward.6} parent=31 // pred_check_branch
        %3664 = sbr.rel (%p3662) target = $region36
      $region35: #{up_forward.6} parent=31 // pred_region
        _
      $region36: #{up_forward.6} parent=31 // pred_fallthru
        _
      // Predicated region
      $region37: #{up_forward.6} parent=31 // pred_check
        %p3665 = pneg %p155
      $region38: #{up_forward.6} parent=31 // pred_check_branch
        %3667 = sbr.rel (%p3665) target = $region40
      $region39: #{up_forward.6} parent=31 // pred_region
        _
      $region40: #{up_forward.6} parent=31 // pred_fallthru
        _
      // Predicated region
      $region41: #{up_forward.6} parent=31 // pred_check
        %p3668 = pneg %p183
      $region42: #{up_forward.6} parent=31 // pred_check_branch
        %3670 = sbr.rel (%p3668) target = $region44
      $region43: #{up_forward.6} parent=31 // pred_region
        _
      $region44: #{up_forward.6} parent=31 // pred_fallthru
        _
    $region32: #{up_forward.6} parent=5 // pred_fallthru
      _
    %p3671 = scmp.le.s32.totalorder 2, %s12
    // Predicated region
    $region45: #{up_forward.6} parent=5 // pred_check
      %p3672 = pneg %p3671
    $region46: #{up_forward.6} parent=5 // pred_check_branch
      %3674 = sbr.rel (%p3672) target = $region48
    $region47: #{up_forward.6} parent=5 // pred_region
      %s3675 = ssub.s32 %s12, 2
      // Predicated region
      $region49: #{up_forward.6} parent=47 // pred_check
        %p3676 = pneg %p133
      $region50: #{up_forward.6} parent=47 // pred_check_branch
        %3678 = sbr.rel (%p3676) target = $region52
      $region51: #{up_forward.6} parent=47 // pred_region
        %p3679 = scmp.lt.s32.totalorder %s24, 1
        %s3680 = scalar_select %p3679, %s24, 1
        %p3681 = scmp.lt.s32.totalorder %s23, 0
        %s3682 = scalar_select %p3681, %s23, 0
        %s3683 = smul.addr %s3680, 32
        %s3684 = sadd.s32 %s3682, %s3683
        %s3685 = smul.addr %s3684, 4
        %s3686 = scalar_lea.vmem %s3, %s3685
      $region52: #{up_forward.6} parent=47 // pred_fallthru
        _
      // Predicated region
      $region53: #{up_forward.6} parent=47 // pred_check
        %p3687 = pneg %p161
      $region54: #{up_forward.6} parent=47 // pred_check_branch
        %3689 = sbr.rel (%p3687) target = $region56
      $region55: #{up_forward.6} parent=47 // pred_region
        %p3690 = scmp.lt.s32.totalorder %s24, 1
        %s3691 = scalar_select %p3690, %s24, 1
        %p3692 = scmp.lt.s32.totalorder %s23, 0
        %s3693 = scalar_select %p3692, %s23, 0
        %s3694 = sadd.s32 %s3693, %s3691
        %s3695 = scalar_lea.vmem %s4, %s3694
      $region56: #{up_forward.6} parent=47 // pred_fallthru
        _
      // Predicated region
      $region57: #{up_forward.6} parent=47 // pred_check
        %p3696 = pneg %p189
      $region58: #{up_forward.6} parent=47 // pred_check_branch
        %3698 = sbr.rel (%p3696) target = $region60
      $region59: #{up_forward.6} parent=47 // pred_region
        %p3699 = scmp.lt.s32.totalorder %s24, 1
        %s3700 = scalar_select %p3699, %s24, 1
        %p3701 = scmp.lt.s32.totalorder %s23, 0
        %s3702 = scalar_select %p3701, %s23, 0
        %s3703 = sadd.s32 %s3702, %s3700
        %s3704 = scalar_lea.vmem %s5, %s3703
      $region60: #{up_forward.6} parent=47 // pred_fallthru
        _
    $region48: #{up_forward.6} parent=5 // pred_fallthru
      _
  $region6: #{up_forward.6} parent=0 // loop_footer
    %s16 = sadd.s32 1, %s12
  $region7: #{up_forward.6} parent=0 // loop_footer_branch
    %11 = sbr.rel target = $region3
  $region8: #{up_forward.6} parent=0 // loop_exit
    _

// kernel: up_forward.8
$region0: #{up_forward.8}
  #allocation0 [shape = 'u32[]', space=smem, size = 0x4, offset = 0x4, fixed_abs, tag = 'smem constant byte address 0x4 - core index']
  #allocation1 [shape = 'u32[144,128]{1,0:T(1,128)}', space=vmem, size = 0x12000, scoped, tag = 'internal scratch']
  %s0 = inlined_call_operand.vmem [shape: bf16[2,18,18,32], index: 0, kind: input, shape index: {}]
  %s1 = inlined_call_operand.vmem [shape: bf16[3,3,32,32], index: 1, kind: input, shape index: {}]
  %s2 = inlined_call_operand.vmem [shape: f32[1,32], index: 2, kind: input, shape index: {}]
  %s3 = inlined_call_operand.vmem [shape: bf16[2,256,32], index: 3, kind: output, shape index: {0}]
  %s4 = inlined_call_operand.vmem [shape: f32[2,1,32], index: 4, kind: output, shape index: {1}]
  %s5 = inlined_call_operand.vmem [shape: f32[2,1,32], index: 5, kind: output, shape index: {2}]
  %6 = xla_tuple %s3, %s4, %s5
  %s7 = sld [smem:[#allocation0]]
  $region61: #{up_forward.8} parent=0
    _
  %s9 = ssub.s32 1, %s7
  %s10 = scalar_select 0, %s9, %s7
  loop: start=0, step=1, limit=4
  $region2: #{up_forward.8} parent=0 // loop_pre_header
    _
  $region3: #{up_forward.8} parent=0 // loop_header
    %s12 = sphi 0, %s16
    %p13 = scmp.ge.s32.totalorder %s12, 4
    %s19 = sphi 0, %s31
    %s20 = sphi 0, %s27
    %s21 = sphi 0, %s19
    %s22 = sphi 0, %s20
    %s23 = sphi 0, %s21
    %s24 = sphi 0, %s22
    %s34 = sphi 0, %s36
    %s37 = sphi 0, %s34
    %s38 = sphi 0, %s37
    %s54 = sphi 0, %s38
    %s60 = sphi 0, %s62
    %s63 = sphi 0, %s60
    %s64 = sphi 0, %s63
    %s80 = sphi 0, %s64
    %s86 = sphi 0, %s88
    %s89 = sphi 0, %s86
    %s90 = sphi 0, %s89
    %s106 = sphi 0, %s90
    %s114 = sphi 0, %s116
    %s117 = sphi 0, %s114
    %s118 = sphi 0, %s117
    %s134 = sphi 0, %s118
    %s142 = sphi 0, %s144
    %s145 = sphi 0, %s142
    %s146 = sphi 0, %s145
    %s162 = sphi 0, %s146
    %s170 = sphi 0, %s172
    %s173 = sphi 0, %s170
    %s174 = sphi 0, %s173
    %s190 = sphi 0, %s174
  $region4: #{up_forward.8} parent=0 // loop_header_branch
    %15 = sbr.rel (%p13) target = $region8
  $region5: #{up_forward.8} parent=0 // loop_body
    %s17 = ssub.s32 %s12, 1
    %s18 = ssub.s32 %s12, 2
    %s25 = sadd.s32 1, %s20
    %p26 = scmp.ge.s32.totalorder %s25, 2
    %s27 = scalar_select %p26, 0, %s25
    %s28 = sadd.s32 1, %s19
    %s29 = scalar_select %p26, %s28, %s19
    %p30 = scmp.ge.s32.totalorder %s29, 1
    %s31 = scalar_select %p30, 0, %s29
    %s32 = ssub.s32 %s20, %s27
    %p33 = scmp.eq.s32.totalorder %s32, 0
    %s35 = sadd.s32 %s34, 1
    %s36 = scalar_select %p33, %s34, %s35
    %p39 = pneg %p33
    %p40 = scmp.eq.s32.totalorder %s12, 1
    %p41 = por %p39, %p40
    %p42 = scmp.ne.s32.totalorder %s34, %s37
    %p43 = scmp.eq.s32.totalorder %s12, 0
    %p44 = por %p42, %p43
    %p45 = scmp.ne.s32.totalorder %s34, %s37
    %p46 = scmp.eq.s32.totalorder %s17, 1
    %p47 = por %p45, %p46
    %p48 = scmp.ne.s32.totalorder %s37, %s38
    %p49 = scmp.eq.s32.totalorder %s17, 0
    %p50 = por %p48, %p49
    %p51 = scmp.ne.s32.totalorder %s37, %s38
    %p52 = scmp.eq.s32.totalorder %s18, 1
    %p53 = por %p51, %p52
    %p55 = scmp.ne.s32.totalorder %s38, %s54
    %p56 = scmp.eq.s32.totalorder %s18, 0
    %p57 = por %p55, %p56
    %s58 = ssub.s32 %s19, %s31
    %p59 = scmp.eq.s32.totalorder %s58, 0
    %s61 = sadd.s32 %s60, 1
    %s62 = scalar_select %p59, %s60, %s61
    %p65 = pneg %p59
    %p66 = scmp.eq.s32.totalorder %s12, 1
    %p67 = por %p65, %p66
    %p68 = scmp.ne.s32.totalorder %s60, %s63
    %p69 = scmp.eq.s32.totalorder %s12, 0
    %p70 = por %p68, %p69
    %p71 = scmp.ne.s32.totalorder %s60, %s63
    %p72 = scmp.eq.s32.totalorder %s17, 1
    %p73 = por %p71, %p72
    %p74 = scmp.ne.s32.totalorder %s63, %s64
    %p75 = scmp.eq.s32.totalorder %s17, 0
    %p76 = por %p74, %p75
    %p77 = scmp.ne.s32.totalorder %s63, %s64
    %p78 = scmp.eq.s32.totalorder %s18, 1
    %p79 = por %p77, %p78
    %p81 = scmp.ne.s32.totalorder %s64, %s80
    %p82 = scmp.eq.s32.totalorder %s18, 0
    %p83 = por %p81, %p82
    %s84 = ssub.s32 %s19, %s31
    %p85 = scmp.eq.s32.totalorder %s84, 0
    %s87 = sadd.s32 %s86, 1
    %s88 = scalar_select %p85, %s86, %s87
    %p91 = pneg %p85
    %p92 = scmp.eq.s32.totalorder %s12, 1
    %p93 = por %p91, %p92
    %p94 = scmp.ne.s32.totalorder %s86, %s89
    %p95 = scmp.eq.s32.totalorder %s12, 0
    %p96 = por %p94, %p95
    %p97 = scmp.ne.s32.totalorder %s86, %s89
    %p98 = scmp.eq.s32.totalorder %s17, 1
    %p99 = por %p97, %p98
    %p100 = scmp.ne.s32.totalorder %s89, %s90
    %p101 = scmp.eq.s32.totalorder %s17, 0
    %p102 = por %p100, %p101
    %p103 = scmp.ne.s32.totalorder %s89, %s90
    %p104 = scmp.eq.s32.totalorder %s18, 1
    %p105 = por %p103, %p104
    %p107 = scmp.ne.s32.totalorder %s90, %s106
    %p108 = scmp.eq.s32.totalorder %s18, 0
    %p109 = por %p107, %p108
    %s110 = ssub.s32 %s20, %s27
    %s111 = ssub.s32 %s19, %s31
    %s112 = sor.u32 %s110, %s111
    %p113 = scmp.eq.s32.totalorder %s112, 0
    %s115 = sadd.s32 %s114, 1
    %s116 = scalar_select %p113, %s114, %s115
    %p119 = pneg %p113
    %p120 = scmp.eq.s32.totalorder %s12, 1
    %p121 = por %p119, %p120
    %p122 = scmp.ne.s32.totalorder %s114, %s117
    %p123 = scmp.eq.s32.totalorder %s12, 0
    %p124 = por %p122, %p123
    %p125 = scmp.ne.s32.totalorder %s114, %s117
    %p126 = scmp.eq.s32.totalorder %s17, 1
    %p127 = por %p125, %p126
    %p128 = scmp.ne.s32.totalorder %s117, %s118
    %p129 = scmp.eq.s32.totalorder %s17, 0
    %p130 = por %p128, %p129
    %p131 = scmp.ne.s32.totalorder %s117, %s118
    %p132 = scmp.eq.s32.totalorder %s18, 1
    %p133 = por %p131, %p132
    %p135 = scmp.ne.s32.totalorder %s118, %s134
    %p136 = scmp.eq.s32.totalorder %s18, 0
    %p137 = por %p135, %p136
    %s138 = ssub.s32 %s20, %s27
    %s139 = ssub.s32 %s19, %s31
    %s140 = sor.u32 %s138, %s139
    %p141 = scmp.eq.s32.totalorder %s140, 0
    %s143 = sadd.s32 %s142, 1
    %s144 = scalar_select %p141, %s142, %s143
    %p147 = pneg %p141
    %p148 = scmp.eq.s32.totalorder %s12, 1
    %p149 = por %p147, %p148
    %p150 = scmp.ne.s32.totalorder %s142, %s145
    %p151 = scmp.eq.s32.totalorder %s12, 0
    %p152 = por %p150, %p151
    %p153 = scmp.ne.s32.totalorder %s142, %s145
    %p154 = scmp.eq.s32.totalorder %s17, 1
    %p155 = por %p153, %p154
    %p156 = scmp.ne.s32.totalorder %s145, %s146
    %p157 = scmp.eq.s32.totalorder %s17, 0
    %p158 = por %p156, %p157
    %p159 = scmp.ne.s32.totalorder %s145, %s146
    %p160 = scmp.eq.s32.totalorder %s18, 1
    %p161 = por %p159, %p160
    %p163 = scmp.ne.s32.totalorder %s146, %s162
    %p164 = scmp.eq.s32.totalorder %s18, 0
    %p165 = por %p163, %p164
    %s166 = ssub.s32 %s20, %s27
    %s167 = ssub.s32 %s19, %s31
    %s168 = sor.u32 %s166, %s167
    %p169 = scmp.eq.s32.totalorder %s168, 0
    %s171 = sadd.s32 %s170, 1
    %s172 = scalar_select %p169, %s170, %s171
    %p175 = pneg %p169
    %p176 = scmp.eq.s32.totalorder %s12, 1
    %p177 = por %p175, %p176
    %p178 = scmp.ne.s32.totalorder %s170, %s173
    %p179 = scmp.eq.s32.totalorder %s12, 0
    %p180 = por %p178, %p179
    %p181 = scmp.ne.s32.totalorder %s170, %s173
    %p182 = scmp.eq.s32.totalorder %s17, 1
    %p183 = por %p181, %p182
    %p184 = scmp.ne.s32.totalorder %s173, %s174
    %p185 = scmp.eq.s32.totalorder %s17, 0
    %p186 = por %p184, %p185
    %p187 = scmp.ne.s32.totalorder %s173, %s174
    %p188 = scmp.eq.s32.totalorder %s18, 1
    %p189 = por %p187, %p188
    %p191 = scmp.ne.s32.totalorder %s174, %s190
    %p192 = scmp.eq.s32.totalorder %s18, 0
    %p193 = por %p191, %p192
    %p194 = scmp.le.s32.totalorder 1, %s12
    %p195 = scmp.lt.s32.totalorder %s12, 3
    %p196 = pnand %p194, %p195
    %p197 = pneg %p196
    // Predicated region
    $region9: #{up_forward.8} parent=5 // pred_check
      _
    $region10: #{up_forward.8} parent=5 // pred_check_branch
      %199 = sbr.rel (%p196) target = $region12
    $region11: #{up_forward.8} parent=5 // pred_region
      %s200 = ssub.s32 %s12, 1
      // Predicated region
      $region13: #{up_forward.8} parent=11 // pred_check
        %p201 = pneg %p76
      $region14: #{up_forward.8} parent=11 // pred_check_branch
        %203 = sbr.rel (%p201) target = $region16
      $region15: #{up_forward.8} parent=11 // pred_region
        %p204 = scmp.lt.s32.totalorder %s21, 0
        %s205 = scalar_select %p204, %s21, 0
        %s206 = smul.addr %s205, 4
        %s207 = scalar_lea.vmem %s1, %s206
      $region16: #{up_forward.8} parent=11 // pred_fallthru
        _
      // Predicated region
      $region17: #{up_forward.8} parent=11 // pred_check
        %p208 = pneg %p102
      $region18: #{up_forward.8} parent=11 // pred_check_branch
        %210 = sbr.rel (%p208) target = $region20
      $region19: #{up_forward.8} parent=11 // pred_region
        %p211 = scmp.lt.s32.totalorder %s21, 0
        %s212 = scalar_select %p211, %s21, 0
        %s213 = scalar_lea.vmem %s2, %s212
      $region20: #{up_forward.8} parent=11 // pred_fallthru
        _
    $region12: #{up_forward.8} parent=5 // pred_fallthru
      _
    %p214 = scmp.lt.s32.totalorder %s12, 2
    // Predicated region
    $region21: #{up_forward.8} parent=5 // pred_check
      %p215 = pneg %p214
    $region22: #{up_forward.8} parent=5 // pred_check_branch
      %217 = sbr.rel (%p215) target = $region24
    $region23: #{up_forward.8} parent=5 // pred_region
      // Predicated region
      $region25: #{up_forward.8} parent=23 // pred_check
        %p218 = pneg %p44
      $region26: #{up_forward.8} parent=23 // pred_check_branch
        %220 = sbr.rel (%p218) target = $region28
      $region27: #{up_forward.8} parent=23 // pred_region
        %p221 = scmp.lt.s32.totalorder %s20, 1
        %s222 = scalar_select %p221, %s20, 1
        %s223 = smul.addr %s222, 54
        %s224 = smul.addr %s223, 4
        %s225 = scalar_lea.vmem %s0, %s224
      $region28: #{up_forward.8} parent=23 // pred_fallthru
        _
    $region24: #{up_forward.8} parent=5 // pred_fallthru
      _
    %p226 = scmp.le.s32.totalorder 1, %s12
    %p227 = scmp.lt.s32.totalorder %s12, 3
    %p228 = pnand %p226, %p227
    %p229 = pneg %p228
    // Predicated region
    $region29: #{up_forward.8} parent=5 // pred_check
      _
    $region30: #{up_forward.8} parent=5 // pred_check_branch
      %231 = sbr.rel (%p228) target = $region32
    $region31: #{up_forward.8} parent=5 // pred_region
      %s232 = ssub.s32 %s12, 1
      %p233 = scmp.lt.s32.totalorder %s22, 1
      %s234 = scalar_select %p233, %s22, 1
      %s235 = smul.addr %s234, 54
      %s236 = smul.addr %s235, 4
      %s237 = scalar_lea.vmem %s0, %s236
      %p238 = pneg %p50
      %p239 = pneg %p47
      %p240 = scmp.lt.s32.totalorder %s21, 0
      %s241 = scalar_select %p240, %s21, 0
      %s242 = smul.addr %s241, 4
      %s243 = scalar_lea.vmem %s1, %s242
      %p244 = pneg %p76
      %p245 = pneg %p73
      %p246 = scmp.lt.s32.totalorder %s21, 0
      %s247 = scalar_select %p246, %s21, 0
      %s248 = scalar_lea.vmem %s2, %s247
      %p249 = pneg %p102
      %p250 = pneg %p99
      %p251 = pneg %p130
      %p252 = pneg %p127
      %p253 = scmp.lt.s32.totalorder %s22, 1
      %s254 = scalar_select %p253, %s22, 1
      %p255 = scmp.lt.s32.totalorder %s21, 0
      %s256 = scalar_select %p255, %s21, 0
      %s257 = smul.addr %s254, 32
      %s258 = sadd.s32 %s256, %s257
      %s259 = smul.addr %s258, 4
      %s260 = scalar_lea.vmem %s3, %s259
      %p261 = pneg %p158
      %p262 = pneg %p155
      %p263 = scmp.lt.s32.totalorder %s22, 1
      %s264 = scalar_select %p263, %s22, 1
      %p265 = scmp.lt.s32.totalorder %s21, 0
      %s266 = scalar_select %p265, %s21, 0
      %s267 = sadd.s32 %s266, %s264
      %s268 = scalar_lea.vmem %s4, %s267
      %p269 = pneg %p186
      %p270 = pneg %p183
      %p271 = scmp.lt.s32.totalorder %s22, 1
      %s272 = scalar_select %p271, %s22, 1
      %p273 = scmp.lt.s32.totalorder %s21, 0
      %s274 = scalar_select %p273, %s21, 0
      %s275 = sadd.s32 %s274, %s272
      %s276 = scalar_lea.vmem %s5, %s275
      %p277 = scmp.lt.s32.totalorder %s22, 1
      %s278 = scalar_select %p277, %s22, 1
      %s279 = smul.addr %s278, 54
      %s280 = smul.addr %s279, 4
      %s281 = scalar_lea.vmem %s0, %s280
      %p282 = scmp.lt.s32.totalorder %s21, 0
      %s283 = scalar_select %p282, %s21, 0
      %s284 = smul.addr %s283, 4
      %s285 = scalar_lea.vmem %s1, %s284
      %p286 = scmp.lt.s32.totalorder %s21, 0
      %s287 = scalar_select %p286, %s21, 0
      %s288 = scalar_lea.vmem %s2, %s287
      %p289 = scmp.lt.s32.totalorder %s22, 1
      %s290 = scalar_select %p289, %s22, 1
      %p291 = scmp.lt.s32.totalorder %s21, 0
      %s292 = scalar_select %p291, %s21, 0
      %s293 = smul.addr %s290, 32
      %s294 = sadd.s32 %s292, %s293
      %s295 = smul.addr %s294, 4
      %s296 = scalar_lea.vmem %s3, %s295
      %p297 = scmp.lt.s32.totalorder %s22, 1
      %s298 = scalar_select %p297, %s22, 1
      %p299 = scmp.lt.s32.totalorder %s21, 0
      %s300 = scalar_select %p299, %s21, 0
      %s301 = sadd.s32 %s300, %s298
      %s302 = scalar_lea.vmem %s4, %s301
      %p303 = scmp.lt.s32.totalorder %s22, 1
      %s304 = scalar_select %p303, %s22, 1
      %p305 = scmp.lt.s32.totalorder %s21, 0
      %s306 = scalar_select %p305, %s21, 0
      %s307 = sadd.s32 %s306, %s304
      %s308 = scalar_lea.vmem %s5, %s307
      %v310 = vld [vmem:[%s281] sm:$0xf]
      %v311 = vld [vmem:[%s281 + $0x4] sm:$0xf]
      %v312 = vld [vmem:[%s281 + $0x8] sm:$0x1]
      %v313 = vld [vmem:[%s281 + $0xc] sm:$0xf]
      %v314 = vld [vmem:[%s281 + $0x10] sm:$0xf]
      %v315 = vld [vmem:[%s281 + $0x14] sm:$0x1]
      %v316 = vld [vmem:[%s281 + $0x18] sm:$0xf]
      %v317 = vld [vmem:[%s281 + $0x1c] sm:$0xf]
      %v318 = vld [vmem:[%s281 + $0x20] sm:$0x1]
      %v319 = vld [vmem:[%s281 + $0x24] sm:$0xf]
      %v320 = vld [vmem:[%s281 + $0x28] sm:$0xf]
      %v321 = vld [vmem:[%s281 + $0x2c] sm:$0x1]
      %v322 = vld [vmem:[%s281 + $0x30] sm:$0xf]
      %v323 = vld [vmem:[%s281 + $0x34] sm:$0xf]
      %v324 = vld [vmem:[%s281 + $0x38] sm:$0x1]
      %v325 = vld [vmem:[%s281 + $0x3c] sm:$0xf]
      %v326 = vld [vmem:[%s281 + $0x40] sm:$0xf]
      %v327 = vld [vmem:[%s281 + $0x44] sm:$0x1]
      %v328 = vld [vmem:[%s281 + $0x48] sm:$0xf]
      %v329 = vld [vmem:[%s281 + $0x4c] sm:$0xf]
      %v330 = vld [vmem:[%s281 + $0x50] sm:$0x1]
      %v331 = vld [vmem:[%s281 + $0x54] sm:$0xf]
      %v332 = vld [vmem:[%s281 + $0x58] sm:$0xf]
      %v333 = vld [vmem:[%s281 + $0x5c] sm:$0x1]
      %v334 = vld [vmem:[%s281 + $0x60] sm:$0xf]
      %v335 = vld [vmem:[%s281 + $0x64] sm:$0xf]
      %v336 = vld [vmem:[%s281 + $0x68] sm:$0x1]
      %v337 = vld [vmem:[%s281 + $0x6c] sm:$0xf]
      %v338 = vld [vmem:[%s281 + $0x70] sm:$0xf]
      %v339 = vld [vmem:[%s281 + $0x74] sm:$0x1]
      %v340 = vld [vmem:[%s281 + $0x78] sm:$0xf]
      %v341 = vld [vmem:[%s281 + $0x7c] sm:$0xf]
      %v342 = vld [vmem:[%s281 + $0x80] sm:$0x1]
      %v343 = vld [vmem:[%s281 + $0x84] sm:$0xf]
      %v344 = vld [vmem:[%s281 + $0x88] sm:$0xf]
      %v345 = vld [vmem:[%s281 + $0x8c] sm:$0x1]
      %v346 = vld [vmem:[%s281 + $0x90] sm:$0xf]
      %v347 = vld [vmem:[%s281 + $0x94] sm:$0xf]
      %v348 = vld [vmem:[%s281 + $0x98] sm:$0x1]
      %v349 = vld [vmem:[%s281 + $0x9c] sm:$0xf]
      %v350 = vld [vmem:[%s281 + $0xa0] sm:$0xf]
      %v351 = vld [vmem:[%s281 + $0xa4] sm:$0x1]
      %v352 = vld [vmem:[%s281 + $0xa8] sm:$0xf]
      %v353 = vld [vmem:[%s281 + $0xac] sm:$0xf]
      %v354 = vld [vmem:[%s281 + $0xb0] sm:$0x1]
      %v355 = vld [vmem:[%s281 + $0xb4] sm:$0xf]
      %v356 = vld [vmem:[%s281 + $0xb8] sm:$0xf]
      %v357 = vld [vmem:[%s281 + $0xbc] sm:$0x1]
      %v358 = vld [vmem:[%s281 + $0xc0] sm:$0xf]
      %v359 = vld [vmem:[%s281 + $0xc4] sm:$0xf]
      %v360 = vld [vmem:[%s281 + $0xc8] sm:$0x1]
      %v361 = vld [vmem:[%s281 + $0xcc] sm:$0xf]
      %v362 = vld [vmem:[%s281 + $0xd0] sm:$0xf]
      %v363 = vld [vmem:[%s281 + $0xd4] sm:$0x1]
      %v364 = vld [vmem:[%s285] sm:$0xf]
      %v365 = vld [vmem:[%s285 + $0x4] sm:$0xf]
      %v366 = vld [vmem:[%s285 + $0x8] sm:$0xf]
      %v367 = vld [vmem:[%s285 + $0xc] sm:$0xf]
      %v368 = vld [vmem:[%s285 + $0x10] sm:$0xf]
      %v369 = vld [vmem:[%s285 + $0x14] sm:$0xf]
      %v370 = vld [vmem:[%s285 + $0x18] sm:$0xf]
      %v371 = vld [vmem:[%s285 + $0x1c] sm:$0xf]
      %v372 = vld [vmem:[%s285 + $0x20] sm:$0xf]
      %v373 = vld [vmem:[%s285 + $0x24] sm:$0xf]
      %v374 = vld [vmem:[%s285 + $0x28] sm:$0xf]
      %v375 = vld [vmem:[%s285 + $0x2c] sm:$0xf]
      %v376 = vld [vmem:[%s285 + $0x30] sm:$0xf]
      %v377 = vld [vmem:[%s285 + $0x34] sm:$0xf]
      %v378 = vld [vmem:[%s285 + $0x38] sm:$0xf]
      %v379 = vld [vmem:[%s285 + $0x3c] sm:$0xf]
      %v380 = vld [vmem:[%s285 + $0x40] sm:$0xf]
      %v381 = vld [vmem:[%s285 + $0x44] sm:$0xf]
      %v382 = vld [vmem:[%s285 + $0x48] sm:$0xf]
      %v383 = vld [vmem:[%s285 + $0x4c] sm:$0xf]
      %v384 = vld [vmem:[%s285 + $0x50] sm:$0xf]
      %v385 = vld [vmem:[%s285 + $0x54] sm:$0xf]
      %v386 = vld [vmem:[%s285 + $0x58] sm:$0xf]
      %v387 = vld [vmem:[%s285 + $0x5c] sm:$0xf]
      %v388 = vld [vmem:[%s285 + $0x60] sm:$0xf]
      %v389 = vld [vmem:[%s285 + $0x64] sm:$0xf]
      %v390 = vld [vmem:[%s285 + $0x68] sm:$0xf]
      %v391 = vld [vmem:[%s285 + $0x6c] sm:$0xf]
      %v392 = vld [vmem:[%s285 + $0x70] sm:$0xf]
      %v393 = vld [vmem:[%s285 + $0x74] sm:$0xf]
      %v394 = vld [vmem:[%s285 + $0x78] sm:$0xf]
      %v395 = vld [vmem:[%s285 + $0x7c] sm:$0xf]
      %v396 = vld [vmem:[%s285 + $0x80] sm:$0xf]
      %v397 = vld [vmem:[%s285 + $0x84] sm:$0xf]
      %v398 = vld [vmem:[%s285 + $0x88] sm:$0xf]
      %v399 = vld [vmem:[%s285 + $0x8c] sm:$0xf]
      %vm400 = vsmask.f32 3328
      %vm401 = vsmask.f32 7440
      %vm402 = vmor %vm400, %vm401
      %v404 = vshrl.u32 %v310, 16
      %v406 = vrot.slane %v404, 4
      %v407 = vshll.u32 %v310, 16
      %v409 = vrot.slane %v407, 5
      %v410 = vor.u32 %v406, %v409
      %v411 = vrot.slane %v410, 4
      %v413 = vshll.u32 %v311, 16
      %v415 = vrot.slane %v413, 5
      %v416 = vsel %vm402, %v411, %v415
      %v417 = vshrl.u32 %v311, 16
      %v419 = vrot.slane %v417, 4
      %v420 = vor.u32 %v419, %v415
      %v421 = vrot.slane %v420, 4
      %v423 = vshll.u32 %v312, 16
      %v425 = vrot.slane %v423, 5
      %v426 = vsel %vm402, %v421, %v425
      %v428 = vshrl.u32 %v313, 16
      %v430 = vrot.slane %v428, 4
      %v431 = vshll.u32 %v313, 16
      %v433 = vrot.slane %v431, 5
      %v434 = vor.u32 %v430, %v433
      %v435 = vrot.slane %v434, 4
      %v437 = vshll.u32 %v314, 16
      %v439 = vrot.slane %v437, 5
      %v440 = vsel %vm402, %v435, %v439
      %v441 = vshrl.u32 %v314, 16
      %v443 = vrot.slane %v441, 4
      %v444 = vor.u32 %v443, %v439
      %v445 = vrot.slane %v444, 4
      %v447 = vshll.u32 %v315, 16
      %v449 = vrot.slane %v447, 5
      %v450 = vsel %vm402, %v445, %v449
      %v452 = vshrl.u32 %v316, 16
      %v454 = vrot.slane %v452, 4
      %v455 = vshll.u32 %v316, 16
      %v457 = vrot.slane %v455, 5
      %v458 = vor.u32 %v454, %v457
      %v459 = vrot.slane %v458, 4
      %v461 = vshll.u32 %v317, 16
      %v463 = vrot.slane %v461, 5
      %v464 = vsel %vm402, %v459, %v463
      %v465 = vshrl.u32 %v317, 16
      %v467 = vrot.slane %v465, 4
      %v468 = vor.u32 %v467, %v463
      %v469 = vrot.slane %v468, 4
      %v471 = vshll.u32 %v318, 16
      %v473 = vrot.slane %v471, 5
      %v474 = vsel %vm402, %v469, %v473
      %v476 = vshrl.u32 %v319, 16
      %v478 = vrot.slane %v476, 4
      %v479 = vshll.u32 %v319, 16
      %v481 = vrot.slane %v479, 5
      %v482 = vor.u32 %v478, %v481
      %v483 = vrot.slane %v482, 4
      %v485 = vshll.u32 %v320, 16
      %v487 = vrot.slane %v485, 5
      %v488 = vsel %vm402, %v483, %v487
      %v489 = vshrl.u32 %v320, 16
      %v491 = vrot.slane %v489, 4
      %v492 = vor.u32 %v491, %v487
      %v493 = vrot.slane %v492, 4
      %v495 = vshll.u32 %v321, 16
      %v497 = vrot.slane %v495, 5
      %v498 = vsel %vm402, %v493, %v497
      %v500 = vshrl.u32 %v322, 16
      %v502 = vrot.slane %v500, 4
      %v503 = vshll.u32 %v322, 16
      %v505 = vrot.slane %v503, 5
      %v506 = vor.u32 %v502, %v505
      %v507 = vrot.slane %v506, 4
      %v509 = vshll.u32 %v323, 16
      %v511 = vrot.slane %v509, 5
      %v512 = vsel %vm402, %v507, %v511
      %v513 = vshrl.u32 %v323, 16
      %v515 = vrot.slane %v513, 4
      %v516 = vor.u32 %v515, %v511
      %v517 = vrot.slane %v516, 4
      %v519 = vshll.u32 %v324, 16
      %v521 = vrot.slane %v519, 5
      %v522 = vsel %vm402, %v517, %v521
      %v524 = vshrl.u32 %v325, 16
      %v526 = vrot.slane %v524, 4
      %v527 = vshll.u32 %v325, 16
      %v529 = vrot.slane %v527, 5
      %v530 = vor.u32 %v526, %v529
      %v531 = vrot.slane %v530, 4
      %v533 = vshll.u32 %v326, 16
      %v535 = vrot.slane %v533, 5
      %v536 = vsel %vm402, %v531, %v535
      %v537 = vshrl.u32 %v326, 16
      %v539 = vrot.slane %v537, 4
      %v540 = vor.u32 %v539, %v535
      %v541 = vrot.slane %v540, 4
      %v543 = vshll.u32 %v327, 16
      %v545 = vrot.slane %v543, 5
      %v546 = vsel %vm402, %v541, %v545
      %v548 = vshrl.u32 %v328, 16
      %v550 = vrot.slane %v548, 4
      %v551 = vshll.u32 %v328, 16
      %v553 = vrot.slane %v551, 5
      %v554 = vor.u32 %v550, %v553
      %v555 = vrot.slane %v554, 4
      %v557 = vshll.u32 %v329, 16
      %v559 = vrot.slane %v557, 5
      %v560 = vsel %vm402, %v555, %v559
      %v561 = vshrl.u32 %v329, 16
      %v563 = vrot.slane %v561, 4
      %v564 = vor.u32 %v563, %v559
      %v565 = vrot.slane %v564, 4
      %v567 = vshll.u32 %v330, 16
      %v569 = vrot.slane %v567, 5
      %v570 = vsel %vm402, %v565, %v569
      %v572 = vshrl.u32 %v331, 16
      %v574 = vrot.slane %v572, 4
      %v575 = vshll.u32 %v331, 16
      %v577 = vrot.slane %v575, 5
      %v578 = vor.u32 %v574, %v577
      %v579 = vrot.slane %v578, 4
      %v581 = vshll.u32 %v332, 16
      %v583 = vrot.slane %v581, 5
      %v584 = vsel %vm402, %v579, %v583
      %v585 = vshrl.u32 %v332, 16
      %v587 = vrot.slane %v585, 4
      %v588 = vor.u32 %v587, %v583
      %v589 = vrot.slane %v588, 4
      %v591 = vshll.u32 %v333, 16
      %v593 = vrot.slane %v591, 5
      %v594 = vsel %vm402, %v589, %v593
      %v596 = vshrl.u32 %v334, 16
      %v598 = vrot.slane %v596, 4
      %v599 = vshll.u32 %v334, 16
      %v601 = vrot.slane %v599, 5
      %v602 = vor.u32 %v598, %v601
      %v603 = vrot.slane %v602, 4
      %v605 = vshll.u32 %v335, 16
      %v607 = vrot.slane %v605, 5
      %v608 = vsel %vm402, %v603, %v607
      %v609 = vshrl.u32 %v335, 16
      %v611 = vrot.slane %v609, 4
      %v612 = vor.u32 %v611, %v607
      %v613 = vrot.slane %v612, 4
      %v615 = vshll.u32 %v336, 16
      %v617 = vrot.slane %v615, 5
      %v618 = vsel %vm402, %v613, %v617
      %v620 = vshrl.u32 %v337, 16
      %v622 = vrot.slane %v620, 4
      %v623 = vshll.u32 %v337, 16
      %v625 = vrot.slane %v623, 5
      %v626 = vor.u32 %v622, %v625
      %v627 = vrot.slane %v626, 4
      %v629 = vshll.u32 %v338, 16
      %v631 = vrot.slane %v629, 5
      %v632 = vsel %vm402, %v627, %v631
      %v633 = vshrl.u32 %v338, 16
      %v635 = vrot.slane %v633, 4
      %v636 = vor.u32 %v635, %v631
      %v637 = vrot.slane %v636, 4
      %v639 = vshll.u32 %v339, 16
      %v641 = vrot.slane %v639, 5
      %v642 = vsel %vm402, %v637, %v641
      %v644 = vshrl.u32 %v340, 16
      %v646 = vrot.slane %v644, 4
      %v647 = vshll.u32 %v340, 16
      %v649 = vrot.slane %v647, 5
      %v650 = vor.u32 %v646, %v649
      %v651 = vrot.slane %v650, 4
      %v653 = vshll.u32 %v341, 16
      %v655 = vrot.slane %v653, 5
      %v656 = vsel %vm402, %v651, %v655
      %v657 = vshrl.u32 %v341, 16
      %v659 = vrot.slane %v657, 4
      %v660 = vor.u32 %v659, %v655
      %v661 = vrot.slane %v660, 4
      %v663 = vshll.u32 %v342, 16
      %v665 = vrot.slane %v663, 5
      %v666 = vsel %vm402, %v661, %v665
      %v668 = vshrl.u32 %v343, 16
      %v670 = vrot.slane %v668, 4
      %v671 = vshll.u32 %v343, 16
      %v673 = vrot.slane %v671, 5
      %v674 = vor.u32 %v670, %v673
      %v675 = vrot.slane %v674, 4
      %v677 = vshll.u32 %v344, 16
      %v679 = vrot.slane %v677, 5
      %v680 = vsel %vm402, %v675, %v679
      %v681 = vshrl.u32 %v344, 16
      %v683 = vrot.slane %v681, 4
      %v684 = vor.u32 %v683, %v679
      %v685 = vrot.slane %v684, 4
      %v687 = vshll.u32 %v345, 16
      %v689 = vrot.slane %v687, 5
      %v690 = vsel %vm402, %v685, %v689
      %v692 = vshrl.u32 %v346, 16
      %v694 = vrot.slane %v692, 4
      %v695 = vshll.u32 %v346, 16
      %v697 = vrot.slane %v695, 5
      %v698 = vor.u32 %v694, %v697
      %v699 = vrot.slane %v698, 4
      %v701 = vshll.u32 %v347, 16
      %v703 = vrot.slane %v701, 5
      %v704 = vsel %vm402, %v699, %v703
      %v705 = vshrl.u32 %v347, 16
      %v707 = vrot.slane %v705, 4
      %v708 = vor.u32 %v707, %v703
      %v709 = vrot.slane %v708, 4
      %v711 = vshll.u32 %v348, 16
      %v713 = vrot.slane %v711, 5
      %v714 = vsel %vm402, %v709, %v713
      %v716 = vshrl.u32 %v349, 16
      %v718 = vrot.slane %v716, 4
      %v719 = vshll.u32 %v349, 16
      %v721 = vrot.slane %v719, 5
      %v722 = vor.u32 %v718, %v721
      %v723 = vrot.slane %v722, 4
      %v725 = vshll.u32 %v350, 16
      %v727 = vrot.slane %v725, 5
      %v728 = vsel %vm402, %v723, %v727
      %v729 = vshrl.u32 %v350, 16
      %v731 = vrot.slane %v729, 4
      %v732 = vor.u32 %v731, %v727
      %v733 = vrot.slane %v732, 4
      %v735 = vshll.u32 %v351, 16
      %v737 = vrot.slane %v735, 5
      %v738 = vsel %vm402, %v733, %v737
      %v740 = vshrl.u32 %v352, 16
      %v742 = vrot.slane %v740, 4
      %v743 = vshll.u32 %v352, 16
      %v745 = vrot.slane %v743, 5
      %v746 = vor.u32 %v742, %v745
      %v747 = vrot.slane %v746, 4
      %v749 = vshll.u32 %v353, 16
      %v751 = vrot.slane %v749, 5
      %v752 = vsel %vm402, %v747, %v751
      %v753 = vshrl.u32 %v353, 16
      %v755 = vrot.slane %v753, 4
      %v756 = vor.u32 %v755, %v751
      %v757 = vrot.slane %v756, 4
      %v759 = vshll.u32 %v354, 16
      %v761 = vrot.slane %v759, 5
      %v762 = vsel %vm402, %v757, %v761
      %v764 = vshrl.u32 %v355, 16
      %v766 = vrot.slane %v764, 4
      %v767 = vshll.u32 %v355, 16
      %v769 = vrot.slane %v767, 5
      %v770 = vor.u32 %v766, %v769
      %v771 = vrot.slane %v770, 4
      %v773 = vshll.u32 %v356, 16
      %v775 = vrot.slane %v773, 5
      %v776 = vsel %vm402, %v771, %v775
      %v777 = vshrl.u32 %v356, 16
      %v779 = vrot.slane %v777, 4
      %v780 = vor.u32 %v779, %v775
      %v781 = vrot.slane %v780, 4
      %v783 = vshll.u32 %v357, 16
      %v785 = vrot.slane %v783, 5
      %v786 = vsel %vm402, %v781, %v785
      %v787 = vunpack.c.l.b16 %v416
      %v788 = vunpack.c.l.b16 %v426
      %v789 = vunpack.c.l.b16 %v440
      %v790 = vunpack.c.l.b16 %v450
      %v791 = vunpack.c.l.b16 %v464
      %v792 = vunpack.c.l.b16 %v474
      %v793 = vunpack.c.l.b16 %v488
      %v794 = vunpack.c.l.b16 %v498
      %v795 = vunpack.c.l.b16 %v512
      %v796 = vunpack.c.l.b16 %v522
      %v797 = vunpack.c.l.b16 %v536
      %v798 = vunpack.c.l.b16 %v546
      %v799 = vunpack.c.l.b16 %v560
      %v800 = vunpack.c.l.b16 %v570
      %v801 = vunpack.c.l.b16 %v584
      %v802 = vunpack.c.l.b16 %v594
      %v803 = vunpack.c.l.b16 %v608
      %v804 = vunpack.c.l.b16 %v618
      %v805 = vunpack.c.l.b16 %v632
      %v806 = vunpack.c.l.b16 %v642
      %v807 = vunpack.c.l.b16 %v656
      %v808 = vunpack.c.l.b16 %v666
      %v809 = vunpack.c.l.b16 %v680
      %v810 = vunpack.c.l.b16 %v690
      %v811 = vunpack.c.l.b16 %v704
      %v812 = vunpack.c.l.b16 %v714
      %v813 = vunpack.c.l.b16 %v728
      %v814 = vunpack.c.l.b16 %v738
      %v815 = vunpack.c.l.b16 %v752
      %v816 = vunpack.c.l.b16 %v762
      %v817 = vunpack.c.l.b16 %v776
      %v818 = vunpack.c.l.b16 %v786
      %v819 = vpack.c.b16 %v788, %v787
      %v820 = vpack.c.b16 %v790, %v789
      %v821 = vpack.c.b16 %v792, %v791
      %v822 = vpack.c.b16 %v794, %v793
      %v823 = vpack.c.b16 %v796, %v795
      %v824 = vpack.c.b16 %v798, %v797
      %v825 = vpack.c.b16 %v800, %v799
      %v826 = vpack.c.b16 %v802, %v801
      %v827 = vpack.c.b16 %v804, %v803
      %v828 = vpack.c.b16 %v806, %v805
      %v829 = vpack.c.b16 %v808, %v807
      %v830 = vpack.c.b16 %v810, %v809
      %v831 = vpack.c.b16 %v812, %v811
      %v832 = vpack.c.b16 %v814, %v813
      %v833 = vpack.c.b16 %v816, %v815
      %v834 = vpack.c.b16 %v818, %v817
      %v839 = vunpack.c.l.b16 %v368
      %v840 = vunpack.c.l.b16 %v369
      %v841 = vunpack.c.l.b16 %v370
      %v842 = vunpack.c.l.b16 %v371
      %v843 = vpack.c.b16 %v840, %v839
      %v844 = vpack.c.b16 %v842, %v841
      %vm847 = vcmask 261120
      %v849 = vsel %vm847, %v819, 0
      %v852 = vsel %vm847, %v820, 0
      %v855 = vsel %vm847, %v821, 0
      %v858 = vsel %vm847, %v822, 0
      %v861 = vsel %vm847, %v823, 0
      %v864 = vsel %vm847, %v824, 0
      %v867 = vsel %vm847, %v825, 0
      %v870 = vsel %vm847, %v826, 0
      %v873 = vsel %vm847, %v827, 0
      %v876 = vsel %vm847, %v828, 0
      %v879 = vsel %vm847, %v829, 0
      %v882 = vsel %vm847, %v830, 0
      %v885 = vsel %vm847, %v831, 0
      %v888 = vsel %vm847, %v832, 0
      %v891 = vsel %vm847, %v833, 0
      %v894 = vsel %vm847, %v834, 0
      %896 = vmatprep.subr.bf16.mxu0 0
      %897 = vmatpush1.bf16.msra.mxu0 0
      %898 = vmatprep.subr.bf16.mxu0 0
      %899 = vmatpush1.bf16.msra.mxu0 0
      %900 = vmatprep.subr.bf16.mxu0 0
      %901 = vmatpush1.bf16.msra.mxu0 0
      %902 = vmatprep.subr.bf16.mxu0 0
      %903 = vmatpush1.bf16.msra.mxu0 0
      %904 = vmatprep.subr.bf16.mxu0 0
      %905 = vmatpush1.bf16.msra.mxu0 0
      %906 = vmatprep.subr.bf16.mxu0 0
      %907 = vmatpush1.bf16.msra.mxu0 0
      %908 = vmatprep.subr.bf16.mxu0 0
      %909 = vmatpush1.bf16.msra.mxu0 %v844
      %910 = vmatprep.subr.bf16.mxu0 0
      %911 = vmatpush1.bf16.msra.mxu0 %v843
      %912 = vmatprep.subr.bf16.mxu0 0
      %913 = vmatpush2.bf16.msra.mxu0 0
      %914 = vmatprep.subr.bf16.mxu0 0
      %915 = vmatpush2.bf16.msra.mxu0 0
      %916 = vmatprep.subr.bf16.mxu0 0
      %917 = vmatpush2.bf16.msra.mxu0 0
      %918 = vmatprep.subr.bf16.mxu0 0
      %919 = vmatpush2.bf16.msra.mxu0 0
      %920 = vmatprep.subr.bf16.mxu0 0
      %921 = vmatpush2.bf16.msra.mxu0 0
      %922 = vmatprep.subr.bf16.mxu0 0
      %923 = vmatpush2.bf16.msra.mxu0 0
      %924 = vmatprep.subr.bf16.mxu0 0
      %925 = vmatpush2.bf16.msra.mxu0 0
      %926 = vmatprep.subr.bf16.mxu0 0
      %927 = vmatpush2.bf16.msra.mxu0 0
      %928 = vmatprep.mubr.bf16.mxu0 0
      %929 = vmatmul.mubr.bf16.gmra.mxu0 %v849
      %v930 = vpop.f32.mrf.mxu0
      %v931 = vadd.f32 0.0, %v930
      %v932 = vpop.f32.mrf.mxu0
      %v933 = vpop.f32.mrf.mxu0
      %v934 = vadd.f32 0.0, %v933
      %v935 = vpop.f32.mrf.mxu0
      %936 = vmatprep.mubr.bf16.mxu0 0
      %937 = vmatmul.mubr.bf16.gmra.mxu0 %v852
      %v938 = vpop.f32.mrf.mxu0
      %v939 = vadd.f32 0.0, %v938
      %v940 = vpop.f32.mrf.mxu0
      %v941 = vpop.f32.mrf.mxu0
      %v942 = vadd.f32 0.0, %v941
      %v943 = vpop.f32.mrf.mxu0
      %944 = vmatprep.mubr.bf16.mxu0 0
      %945 = vmatmul.mubr.bf16.gmra.mxu0 %v855
      %v946 = vpop.f32.mrf.mxu0
      %v947 = vadd.f32 0.0, %v946
      %v948 = vpop.f32.mrf.mxu0
      %v949 = vpop.f32.mrf.mxu0
      %v950 = vadd.f32 0.0, %v949
      %v951 = vpop.f32.mrf.mxu0
      %952 = vmatprep.mubr.bf16.mxu0 0
      %953 = vmatmul.mubr.bf16.gmra.mxu0 %v858
      %v954 = vpop.f32.mrf.mxu0
      %v955 = vadd.f32 0.0, %v954
      %v956 = vpop.f32.mrf.mxu0
      %v957 = vpop.f32.mrf.mxu0
      %v958 = vadd.f32 0.0, %v957
      %v959 = vpop.f32.mrf.mxu0
      %960 = vmatprep.mubr.bf16.mxu0 0
      %961 = vmatmul.mubr.bf16.gmra.mxu0 %v861
      %v962 = vpop.f32.mrf.mxu0
      %v963 = vadd.f32 0.0, %v962
      %v964 = vpop.f32.mrf.mxu0
      %v965 = vpop.f32.mrf.mxu0
      %v966 = vadd.f32 0.0, %v965
      %v967 = vpop.f32.mrf.mxu0
      %968 = vmatprep.mubr.bf16.mxu0 0
      %969 = vmatmul.mubr.bf16.gmra.mxu0 %v864
      %v970 = vpop.f32.mrf.mxu0
      %v971 = vadd.f32 0.0, %v970
      %v972 = vpop.f32.mrf.mxu0
      %v973 = vpop.f32.mrf.mxu0
      %v974 = vadd.f32 0.0, %v973
      %v975 = vpop.f32.mrf.mxu0
      %976 = vmatprep.mubr.bf16.mxu0 0
      %977 = vmatmul.mubr.bf16.gmra.mxu0 %v867
      %v978 = vpop.f32.mrf.mxu0
      %v979 = vadd.f32 0.0, %v978
      %v980 = vpop.f32.mrf.mxu0
      %v981 = vpop.f32.mrf.mxu0
      %v982 = vadd.f32 0.0, %v981
      %v983 = vpop.f32.mrf.mxu0
      %984 = vmatprep.mubr.bf16.mxu0 0
      %985 = vmatmul.mubr.bf16.gmra.mxu0 %v870
      %v986 = vpop.f32.mrf.mxu0
      %v987 = vadd.f32 0.0, %v986
      %v988 = vpop.f32.mrf.mxu0
      %v989 = vpop.f32.mrf.mxu0
      %v990 = vadd.f32 0.0, %v989
      %v991 = vpop.f32.mrf.mxu0
      %992 = vmatprep.mubr.bf16.mxu0 0
      %993 = vmatmul.mubr.bf16.gmra.mxu0 %v873
      %v994 = vpop.f32.mrf.mxu0
      %v995 = vadd.f32 0.0, %v994
      %v996 = vpop.f32.mrf.mxu0
      %v997 = vpop.f32.mrf.mxu0
      %v998 = vadd.f32 0.0, %v997
      %v999 = vpop.f32.mrf.mxu0
      %1000 = vmatprep.mubr.bf16.mxu0 0
      %1001 = vmatmul.mubr.bf16.gmra.mxu0 %v876
      %v1002 = vpop.f32.mrf.mxu0
      %v1003 = vadd.f32 0.0, %v1002
      %v1004 = vpop.f32.mrf.mxu0
      %v1005 = vpop.f32.mrf.mxu0
      %v1006 = vadd.f32 0.0, %v1005
      %v1007 = vpop.f32.mrf.mxu0
      %1008 = vmatprep.mubr.bf16.mxu0 0
      %1009 = vmatmul.mubr.bf16.gmra.mxu0 %v879
      %v1010 = vpop.f32.mrf.mxu0
      %v1011 = vadd.f32 0.0, %v1010
      %v1012 = vpop.f32.mrf.mxu0
      %v1013 = vpop.f32.mrf.mxu0
      %v1014 = vadd.f32 0.0, %v1013
      %v1015 = vpop.f32.mrf.mxu0
      %1016 = vmatprep.mubr.bf16.mxu0 0
      %1017 = vmatmul.mubr.bf16.gmra.mxu0 %v882
      %v1018 = vpop.f32.mrf.mxu0
      %v1019 = vadd.f32 0.0, %v1018
      %v1020 = vpop.f32.mrf.mxu0
      %v1021 = vpop.f32.mrf.mxu0
      %v1022 = vadd.f32 0.0, %v1021
      %v1023 = vpop.f32.mrf.mxu0
      %1024 = vmatprep.mubr.bf16.mxu0 0
      %1025 = vmatmul.mubr.bf16.gmra.mxu0 %v885
      %v1026 = vpop.f32.mrf.mxu0
      %v1027 = vadd.f32 0.0, %v1026
      %v1028 = vpop.f32.mrf.mxu0
      %v1029 = vpop.f32.mrf.mxu0
      %v1030 = vadd.f32 0.0, %v1029
      %v1031 = vpop.f32.mrf.mxu0
      %1032 = vmatprep.mubr.bf16.mxu0 0
      %1033 = vmatmul.mubr.bf16.gmra.mxu0 %v888
      %v1034 = vpop.f32.mrf.mxu0
      %v1035 = vadd.f32 0.0, %v1034
      %v1036 = vpop.f32.mrf.mxu0
      %v1037 = vpop.f32.mrf.mxu0
      %v1038 = vadd.f32 0.0, %v1037
      %v1039 = vpop.f32.mrf.mxu0
      %1040 = vmatprep.mubr.bf16.mxu0 0
      %1041 = vmatmul.mubr.bf16.gmra.mxu0 %v891
      %v1042 = vpop.f32.mrf.mxu0
      %v1043 = vadd.f32 0.0, %v1042
      %v1044 = vpop.f32.mrf.mxu0
      %v1045 = vpop.f32.mrf.mxu0
      %v1046 = vadd.f32 0.0, %v1045
      %v1047 = vpop.f32.mrf.mxu0
      %1048 = vmatprep.mubr.bf16.mxu0 0
      %1049 = vmatmul.mubr.bf16.gmra.mxu0 %v894
      %v1050 = vpop.f32.mrf.mxu0
      %v1051 = vadd.f32 0.0, %v1050
      %v1052 = vpop.f32.mrf.mxu0
      %v1053 = vpop.f32.mrf.mxu0
      %v1054 = vadd.f32 0.0, %v1053
      %v1055 = vpop.f32.mrf.mxu0
      %1056 = vdwg.mxu0
      %v1089 = vunpack.c.l.b16 %v310
      %v1090 = vunpack.c.l.b16 %v311
      %v1091 = vunpack.c.l.b16 %v313
      %v1092 = vunpack.c.l.b16 %v314
      %v1093 = vunpack.c.l.b16 %v316
      %v1094 = vunpack.c.l.b16 %v317
      %v1095 = vunpack.c.l.b16 %v319
      %v1096 = vunpack.c.l.b16 %v320
      %v1097 = vunpack.c.l.b16 %v322
      %v1098 = vunpack.c.l.b16 %v323
      %v1099 = vunpack.c.l.b16 %v325
      %v1100 = vunpack.c.l.b16 %v326
      %v1101 = vunpack.c.l.b16 %v328
      %v1102 = vunpack.c.l.b16 %v329
      %v1103 = vunpack.c.l.b16 %v331
      %v1104 = vunpack.c.l.b16 %v332
      %v1105 = vunpack.c.l.b16 %v334
      %v1106 = vunpack.c.l.b16 %v335
      %v1107 = vunpack.c.l.b16 %v337
      %v1108 = vunpack.c.l.b16 %v338
      %v1109 = vunpack.c.l.b16 %v340
      %v1110 = vunpack.c.l.b16 %v341
      %v1111 = vunpack.c.l.b16 %v343
      %v1112 = vunpack.c.l.b16 %v344
      %v1113 = vunpack.c.l.b16 %v346
      %v1114 = vunpack.c.l.b16 %v347
      %v1115 = vunpack.c.l.b16 %v349
      %v1116 = vunpack.c.l.b16 %v350
      %v1117 = vunpack.c.l.b16 %v352
      %v1118 = vunpack.c.l.b16 %v353
      %v1119 = vunpack.c.l.b16 %v355
      %v1120 = vunpack.c.l.b16 %v356
      %v1121 = vpack.c.b16 %v1090, %v1089
      %v1122 = vpack.c.b16 %v1092, %v1091
      %v1123 = vpack.c.b16 %v1094, %v1093
      %v1124 = vpack.c.b16 %v1096, %v1095
      %v1125 = vpack.c.b16 %v1098, %v1097
      %v1126 = vpack.c.b16 %v1100, %v1099
      %v1127 = vpack.c.b16 %v1102, %v1101
      %v1128 = vpack.c.b16 %v1104, %v1103
      %v1129 = vpack.c.b16 %v1106, %v1105
      %v1130 = vpack.c.b16 %v1108, %v1107
      %v1131 = vpack.c.b16 %v1110, %v1109
      %v1132 = vpack.c.b16 %v1112, %v1111
      %v1133 = vpack.c.b16 %v1114, %v1113
      %v1134 = vpack.c.b16 %v1116, %v1115
      %v1135 = vpack.c.b16 %v1118, %v1117
      %v1136 = vpack.c.b16 %v1120, %v1119
      %v1141 = vunpack.c.l.b16 %v364
      %v1142 = vunpack.c.l.b16 %v365
      %v1143 = vunpack.c.l.b16 %v366
      %v1144 = vunpack.c.l.b16 %v367
      %v1145 = vpack.c.b16 %v1142, %v1141
      %v1146 = vpack.c.b16 %v1144, %v1143
      %v1150 = vsel %vm847, %v1121, 0
      %v1153 = vsel %vm847, %v1122, 0
      %v1156 = vsel %vm847, %v1123, 0
      %v1159 = vsel %vm847, %v1124, 0
      %v1162 = vsel %vm847, %v1125, 0
      %v1165 = vsel %vm847, %v1126, 0
      %v1168 = vsel %vm847, %v1127, 0
      %v1171 = vsel %vm847, %v1128, 0
      %v1174 = vsel %vm847, %v1129, 0
      %v1177 = vsel %vm847, %v1130, 0
      %v1180 = vsel %vm847, %v1131, 0
      %v1183 = vsel %vm847, %v1132, 0
      %v1186 = vsel %vm847, %v1133, 0
      %v1189 = vsel %vm847, %v1134, 0
      %v1192 = vsel %vm847, %v1135, 0
      %v1195 = vsel %vm847, %v1136, 0
      %1197 = vmatprep.subr.bf16.mxu0 0
      %1198 = vmatpush1.bf16.msra.mxu0 0
      %1199 = vmatprep.subr.bf16.mxu0 0
      %1200 = vmatpush1.bf16.msra.mxu0 0
      %1201 = vmatprep.subr.bf16.mxu0 0
      %1202 = vmatpush1.bf16.msra.mxu0 0
      %1203 = vmatprep.subr.bf16.mxu0 0
      %1204 = vmatpush1.bf16.msra.mxu0 0
      %1205 = vmatprep.subr.bf16.mxu0 0
      %1206 = vmatpush1.bf16.msra.mxu0 0
      %1207 = vmatprep.subr.bf16.mxu0 0
      %1208 = vmatpush1.bf16.msra.mxu0 0
      %1209 = vmatprep.subr.bf16.mxu0 0
      %1210 = vmatpush1.bf16.msra.mxu0 %v1146
      %1211 = vmatprep.subr.bf16.mxu0 0
      %1212 = vmatpush1.bf16.msra.mxu0 %v1145
      %1213 = vmatprep.subr.bf16.mxu0 0
      %1214 = vmatpush2.bf16.msra.mxu0 0
      %1215 = vmatprep.subr.bf16.mxu0 0
      %1216 = vmatpush2.bf16.msra.mxu0 0
      %1217 = vmatprep.subr.bf16.mxu0 0
      %1218 = vmatpush2.bf16.msra.mxu0 0
      %1219 = vmatprep.subr.bf16.mxu0 0
      %1220 = vmatpush2.bf16.msra.mxu0 0
      %1221 = vmatprep.subr.bf16.mxu0 0
      %1222 = vmatpush2.bf16.msra.mxu0 0
      %1223 = vmatprep.subr.bf16.mxu0 0
      %1224 = vmatpush2.bf16.msra.mxu0 0
      %1225 = vmatprep.subr.bf16.mxu0 0
      %1226 = vmatpush2.bf16.msra.mxu0 0
      %1227 = vmatprep.subr.bf16.mxu0 0
      %1228 = vmatpush2.bf16.msra.mxu0 0
      %1229 = vmatprep.mubr.bf16.mxu0 0
      %1230 = vmatmul.mubr.bf16.gmra.mxu0 %v1150
      %v1231 = vpop.f32.mrf.mxu0
      %v1232 = vadd.f32 %v931, %v1231
      %v1233 = vpop.f32.mrf.mxu0
      %v1234 = vpop.f32.mrf.mxu0
      %v1235 = vadd.f32 %v934, %v1234
      %v1236 = vpop.f32.mrf.mxu0
      %1237 = vmatprep.mubr.bf16.mxu0 0
      %1238 = vmatmul.mubr.bf16.gmra.mxu0 %v1153
      %v1239 = vpop.f32.mrf.mxu0
      %v1240 = vadd.f32 %v939, %v1239
      %v1241 = vpop.f32.mrf.mxu0
      %v1242 = vpop.f32.mrf.mxu0
      %v1243 = vadd.f32 %v942, %v1242
      %v1244 = vpop.f32.mrf.mxu0
      %1245 = vmatprep.mubr.bf16.mxu0 0
      %1246 = vmatmul.mubr.bf16.gmra.mxu0 %v1156
      %v1247 = vpop.f32.mrf.mxu0
      %v1248 = vadd.f32 %v947, %v1247
      %v1249 = vpop.f32.mrf.mxu0
      %v1250 = vpop.f32.mrf.mxu0
      %v1251 = vadd.f32 %v950, %v1250
      %v1252 = vpop.f32.mrf.mxu0
      %1253 = vmatprep.mubr.bf16.mxu0 0
      %1254 = vmatmul.mubr.bf16.gmra.mxu0 %v1159
      %v1255 = vpop.f32.mrf.mxu0
      %v1256 = vadd.f32 %v955, %v1255
      %v1257 = vpop.f32.mrf.mxu0
      %v1258 = vpop.f32.mrf.mxu0
      %v1259 = vadd.f32 %v958, %v1258
      %v1260 = vpop.f32.mrf.mxu0
      %1261 = vmatprep.mubr.bf16.mxu0 0
      %1262 = vmatmul.mubr.bf16.gmra.mxu0 %v1162
      %v1263 = vpop.f32.mrf.mxu0
      %v1264 = vadd.f32 %v963, %v1263
      %v1265 = vpop.f32.mrf.mxu0
      %v1266 = vpop.f32.mrf.mxu0
      %v1267 = vadd.f32 %v966, %v1266
      %v1268 = vpop.f32.mrf.mxu0
      %1269 = vmatprep.mubr.bf16.mxu0 0
      %1270 = vmatmul.mubr.bf16.gmra.mxu0 %v1165
      %v1271 = vpop.f32.mrf.mxu0
      %v1272 = vadd.f32 %v971, %v1271
      %v1273 = vpop.f32.mrf.mxu0
      %v1274 = vpop.f32.mrf.mxu0
      %v1275 = vadd.f32 %v974, %v1274
      %v1276 = vpop.f32.mrf.mxu0
      %1277 = vmatprep.mubr.bf16.mxu0 0
      %1278 = vmatmul.mubr.bf16.gmra.mxu0 %v1168
      %v1279 = vpop.f32.mrf.mxu0
      %v1280 = vadd.f32 %v979, %v1279
      %v1281 = vpop.f32.mrf.mxu0
      %v1282 = vpop.f32.mrf.mxu0
      %v1283 = vadd.f32 %v982, %v1282
      %v1284 = vpop.f32.mrf.mxu0
      %1285 = vmatprep.mubr.bf16.mxu0 0
      %1286 = vmatmul.mubr.bf16.gmra.mxu0 %v1171
      %v1287 = vpop.f32.mrf.mxu0
      %v1288 = vadd.f32 %v987, %v1287
      %v1289 = vpop.f32.mrf.mxu0
      %v1290 = vpop.f32.mrf.mxu0
      %v1291 = vadd.f32 %v990, %v1290
      %v1292 = vpop.f32.mrf.mxu0
      %1293 = vmatprep.mubr.bf16.mxu0 0
      %1294 = vmatmul.mubr.bf16.gmra.mxu0 %v1174
      %v1295 = vpop.f32.mrf.mxu0
      %v1296 = vadd.f32 %v995, %v1295
      %v1297 = vpop.f32.mrf.mxu0
      %v1298 = vpop.f32.mrf.mxu0
      %v1299 = vadd.f32 %v998, %v1298
      %v1300 = vpop.f32.mrf.mxu0
      %1301 = vmatprep.mubr.bf16.mxu0 0
      %1302 = vmatmul.mubr.bf16.gmra.mxu0 %v1177
      %v1303 = vpop.f32.mrf.mxu0
      %v1304 = vadd.f32 %v1003, %v1303
      %v1305 = vpop.f32.mrf.mxu0
      %v1306 = vpop.f32.mrf.mxu0
      %v1307 = vadd.f32 %v1006, %v1306
      %v1308 = vpop.f32.mrf.mxu0
      %1309 = vmatprep.mubr.bf16.mxu0 0
      %1310 = vmatmul.mubr.bf16.gmra.mxu0 %v1180
      %v1311 = vpop.f32.mrf.mxu0
      %v1312 = vadd.f32 %v1011, %v1311
      %v1313 = vpop.f32.mrf.mxu0
      %v1314 = vpop.f32.mrf.mxu0
      %v1315 = vadd.f32 %v1014, %v1314
      %v1316 = vpop.f32.mrf.mxu0
      %1317 = vmatprep.mubr.bf16.mxu0 0
      %1318 = vmatmul.mubr.bf16.gmra.mxu0 %v1183
      %v1319 = vpop.f32.mrf.mxu0
      %v1320 = vadd.f32 %v1019, %v1319
      %v1321 = vpop.f32.mrf.mxu0
      %v1322 = vpop.f32.mrf.mxu0
      %v1323 = vadd.f32 %v1022, %v1322
      %v1324 = vpop.f32.mrf.mxu0
      %1325 = vmatprep.mubr.bf16.mxu0 0
      %1326 = vmatmul.mubr.bf16.gmra.mxu0 %v1186
      %v1327 = vpop.f32.mrf.mxu0
      %v1328 = vadd.f32 %v1027, %v1327
      %v1329 = vpop.f32.mrf.mxu0
      %v1330 = vpop.f32.mrf.mxu0
      %v1331 = vadd.f32 %v1030, %v1330
      %v1332 = vpop.f32.mrf.mxu0
      %1333 = vmatprep.mubr.bf16.mxu0 0
      %1334 = vmatmul.mubr.bf16.gmra.mxu0 %v1189
      %v1335 = vpop.f32.mrf.mxu0
      %v1336 = vadd.f32 %v1035, %v1335
      %v1337 = vpop.f32.mrf.mxu0
      %v1338 = vpop.f32.mrf.mxu0
      %v1339 = vadd.f32 %v1038, %v1338
      %v1340 = vpop.f32.mrf.mxu0
      %1341 = vmatprep.mubr.bf16.mxu0 0
      %1342 = vmatmul.mubr.bf16.gmra.mxu0 %v1192
      %v1343 = vpop.f32.mrf.mxu0
      %v1344 = vadd.f32 %v1043, %v1343
      %v1345 = vpop.f32.mrf.mxu0
      %v1346 = vpop.f32.mrf.mxu0
      %v1347 = vadd.f32 %v1046, %v1346
      %v1348 = vpop.f32.mrf.mxu0
      %1349 = vmatprep.mubr.bf16.mxu0 0
      %1350 = vmatmul.mubr.bf16.gmra.mxu0 %v1195
      %v1351 = vpop.f32.mrf.mxu0
      %v1352 = vadd.f32 %v1051, %v1351
      %v1353 = vpop.f32.mrf.mxu0
      %v1354 = vpop.f32.mrf.mxu0
      %v1355 = vadd.f32 %v1054, %v1354
      %v1356 = vpop.f32.mrf.mxu0
      %1357 = vdwg.mxu0
      %vm1374 = vcmask 1042432
      %vm1375 = vcmask 1046532
      %vm1376 = vmor %vm1374, %vm1375
      %v1377 = vrot.slane %v310, 5
      %v1378 = vrot.slane %v1377, 4
      %v1379 = vrot.slane %v311, 5
      %v1380 = vsel %vm1376, %v1378, %v1379
      %v1381 = vrot.slane %v1379, 4
      %v1382 = vrot.slane %v312, 5
      %v1383 = vsel %vm1376, %v1381, %v1382
      %v1384 = vrot.slane %v313, 5
      %v1385 = vrot.slane %v1384, 4
      %v1386 = vrot.slane %v314, 5
      %v1387 = vsel %vm1376, %v1385, %v1386
      %v1388 = vrot.slane %v1386, 4
      %v1389 = vrot.slane %v315, 5
      %v1390 = vsel %vm1376, %v1388, %v1389
      %v1391 = vrot.slane %v316, 5
      %v1392 = vrot.slane %v1391, 4
      %v1393 = vrot.slane %v317, 5
      %v1394 = vsel %vm1376, %v1392, %v1393
      %v1395 = vrot.slane %v1393, 4
      %v1396 = vrot.slane %v318, 5
      %v1397 = vsel %vm1376, %v1395, %v1396
      %v1398 = vrot.slane %v319, 5
      %v1399 = vrot.slane %v1398, 4
      %v1400 = vrot.slane %v320, 5
      %v1401 = vsel %vm1376, %v1399, %v1400
      %v1402 = vrot.slane %v1400, 4
      %v1403 = vrot.slane %v321, 5
      %v1404 = vsel %vm1376, %v1402, %v1403
      %v1405 = vrot.slane %v322, 5
      %v1406 = vrot.slane %v1405, 4
      %v1407 = vrot.slane %v323, 5
      %v1408 = vsel %vm1376, %v1406, %v1407
      %v1409 = vrot.slane %v1407, 4
      %v1410 = vrot.slane %v324, 5
      %v1411 = vsel %vm1376, %v1409, %v1410
      %v1412 = vrot.slane %v325, 5
      %v1413 = vrot.slane %v1412, 4
      %v1414 = vrot.slane %v326, 5
      %v1415 = vsel %vm1376, %v1413, %v1414
      %v1416 = vrot.slane %v1414, 4
      %v1417 = vrot.slane %v327, 5
      %v1418 = vsel %vm1376, %v1416, %v1417
      %v1419 = vrot.slane %v328, 5
      %v1420 = vrot.slane %v1419, 4
      %v1421 = vrot.slane %v329, 5
      %v1422 = vsel %vm1376, %v1420, %v1421
      %v1423 = vrot.slane %v1421, 4
      %v1424 = vrot.slane %v330, 5
      %v1425 = vsel %vm1376, %v1423, %v1424
      %v1426 = vrot.slane %v331, 5
      %v1427 = vrot.slane %v1426, 4
      %v1428 = vrot.slane %v332, 5
      %v1429 = vsel %vm1376, %v1427, %v1428
      %v1430 = vrot.slane %v1428, 4
      %v1431 = vrot.slane %v333, 5
      %v1432 = vsel %vm1376, %v1430, %v1431
      %v1433 = vrot.slane %v334, 5
      %v1434 = vrot.slane %v1433, 4
      %v1435 = vrot.slane %v335, 5
      %v1436 = vsel %vm1376, %v1434, %v1435
      %v1437 = vrot.slane %v1435, 4
      %v1438 = vrot.slane %v336, 5
      %v1439 = vsel %vm1376, %v1437, %v1438
      %v1440 = vrot.slane %v337, 5
      %v1441 = vrot.slane %v1440, 4
      %v1442 = vrot.slane %v338, 5
      %v1443 = vsel %vm1376, %v1441, %v1442
      %v1444 = vrot.slane %v1442, 4
      %v1445 = vrot.slane %v339, 5
      %v1446 = vsel %vm1376, %v1444, %v1445
      %v1447 = vrot.slane %v340, 5
      %v1448 = vrot.slane %v1447, 4
      %v1449 = vrot.slane %v341, 5
      %v1450 = vsel %vm1376, %v1448, %v1449
      %v1451 = vrot.slane %v1449, 4
      %v1452 = vrot.slane %v342, 5
      %v1453 = vsel %vm1376, %v1451, %v1452
      %v1454 = vrot.slane %v343, 5
      %v1455 = vrot.slane %v1454, 4
      %v1456 = vrot.slane %v344, 5
      %v1457 = vsel %vm1376, %v1455, %v1456
      %v1458 = vrot.slane %v1456, 4
      %v1459 = vrot.slane %v345, 5
      %v1460 = vsel %vm1376, %v1458, %v1459
      %v1461 = vrot.slane %v346, 5
      %v1462 = vrot.slane %v1461, 4
      %v1463 = vrot.slane %v347, 5
      %v1464 = vsel %vm1376, %v1462, %v1463
      %v1465 = vrot.slane %v1463, 4
      %v1466 = vrot.slane %v348, 5
      %v1467 = vsel %vm1376, %v1465, %v1466
      %v1468 = vrot.slane %v349, 5
      %v1469 = vrot.slane %v1468, 4
      %v1470 = vrot.slane %v350, 5
      %v1471 = vsel %vm1376, %v1469, %v1470
      %v1472 = vrot.slane %v1470, 4
      %v1473 = vrot.slane %v351, 5
      %v1474 = vsel %vm1376, %v1472, %v1473
      %v1475 = vrot.slane %v352, 5
      %v1476 = vrot.slane %v1475, 4
      %v1477 = vrot.slane %v353, 5
      %v1478 = vsel %vm1376, %v1476, %v1477
      %v1479 = vrot.slane %v1477, 4
      %v1480 = vrot.slane %v354, 5
      %v1481 = vsel %vm1376, %v1479, %v1480
      %v1482 = vrot.slane %v355, 5
      %v1483 = vrot.slane %v1482, 4
      %v1484 = vrot.slane %v356, 5
      %v1485 = vsel %vm1376, %v1483, %v1484
      %v1486 = vrot.slane %v1484, 4
      %v1487 = vrot.slane %v357, 5
      %v1488 = vsel %vm1376, %v1486, %v1487
      %v1489 = vunpack.c.l.b16 %v1380
      %v1490 = vunpack.c.l.b16 %v1383
      %v1491 = vunpack.c.l.b16 %v1387
      %v1492 = vunpack.c.l.b16 %v1390
      %v1493 = vunpack.c.l.b16 %v1394
      %v1494 = vunpack.c.l.b16 %v1397
      %v1495 = vunpack.c.l.b16 %v1401
      %v1496 = vunpack.c.l.b16 %v1404
      %v1497 = vunpack.c.l.b16 %v1408
      %v1498 = vunpack.c.l.b16 %v1411
      %v1499 = vunpack.c.l.b16 %v1415
      %v1500 = vunpack.c.l.b16 %v1418
      %v1501 = vunpack.c.l.b16 %v1422
      %v1502 = vunpack.c.l.b16 %v1425
      %v1503 = vunpack.c.l.b16 %v1429
      %v1504 = vunpack.c.l.b16 %v1432
      %v1505 = vunpack.c.l.b16 %v1436
      %v1506 = vunpack.c.l.b16 %v1439
      %v1507 = vunpack.c.l.b16 %v1443
      %v1508 = vunpack.c.l.b16 %v1446
      %v1509 = vunpack.c.l.b16 %v1450
      %v1510 = vunpack.c.l.b16 %v1453
      %v1511 = vunpack.c.l.b16 %v1457
      %v1512 = vunpack.c.l.b16 %v1460
      %v1513 = vunpack.c.l.b16 %v1464
      %v1514 = vunpack.c.l.b16 %v1467
      %v1515 = vunpack.c.l.b16 %v1471
      %v1516 = vunpack.c.l.b16 %v1474
      %v1517 = vunpack.c.l.b16 %v1478
      %v1518 = vunpack.c.l.b16 %v1481
      %v1519 = vunpack.c.l.b16 %v1485
      %v1520 = vunpack.c.l.b16 %v1488
      %v1521 = vpack.c.b16 %v1490, %v1489
      %v1522 = vpack.c.b16 %v1492, %v1491
      %v1523 = vpack.c.b16 %v1494, %v1493
      %v1524 = vpack.c.b16 %v1496, %v1495
      %v1525 = vpack.c.b16 %v1498, %v1497
      %v1526 = vpack.c.b16 %v1500, %v1499
      %v1527 = vpack.c.b16 %v1502, %v1501
      %v1528 = vpack.c.b16 %v1504, %v1503
      %v1529 = vpack.c.b16 %v1506, %v1505
      %v1530 = vpack.c.b16 %v1508, %v1507
      %v1531 = vpack.c.b16 %v1510, %v1509
      %v1532 = vpack.c.b16 %v1512, %v1511
      %v1533 = vpack.c.b16 %v1514, %v1513
      %v1534 = vpack.c.b16 %v1516, %v1515
      %v1535 = vpack.c.b16 %v1518, %v1517
      %v1536 = vpack.c.b16 %v1520, %v1519
      %v1541 = vunpack.c.l.b16 %v372
      %v1542 = vunpack.c.l.b16 %v373
      %v1543 = vunpack.c.l.b16 %v374
      %v1544 = vunpack.c.l.b16 %v375
      %v1545 = vpack.c.b16 %v1542, %v1541
      %v1546 = vpack.c.b16 %v1544, %v1543
      %v1550 = vsel %vm847, %v1521, 0
      %v1553 = vsel %vm847, %v1522, 0
      %v1556 = vsel %vm847, %v1523, 0
      %v1559 = vsel %vm847, %v1524, 0
      %v1562 = vsel %vm847, %v1525, 0
      %v1565 = vsel %vm847, %v1526, 0
      %v1568 = vsel %vm847, %v1527, 0
      %v1571 = vsel %vm847, %v1528, 0
      %v1574 = vsel %vm847, %v1529, 0
      %v1577 = vsel %vm847, %v1530, 0
      %v1580 = vsel %vm847, %v1531, 0
      %v1583 = vsel %vm847, %v1532, 0
      %v1586 = vsel %vm847, %v1533, 0
      %v1589 = vsel %vm847, %v1534, 0
      %v1592 = vsel %vm847, %v1535, 0
      %v1595 = vsel %vm847, %v1536, 0
      %1597 = vmatprep.subr.bf16.mxu0 0
      %1598 = vmatpush1.bf16.msra.mxu0 0
      %1599 = vmatprep.subr.bf16.mxu0 0
      %1600 = vmatpush1.bf16.msra.mxu0 0
      %1601 = vmatprep.subr.bf16.mxu0 0
      %1602 = vmatpush1.bf16.msra.mxu0 0
      %1603 = vmatprep.subr.bf16.mxu0 0
      %1604 = vmatpush1.bf16.msra.mxu0 0
      %1605 = vmatprep.subr.bf16.mxu0 0
      %1606 = vmatpush1.bf16.msra.mxu0 0
      %1607 = vmatprep.subr.bf16.mxu0 0
      %1608 = vmatpush1.bf16.msra.mxu0 0
      %1609 = vmatprep.subr.bf16.mxu0 0
      %1610 = vmatpush1.bf16.msra.mxu0 %v1546
      %1611 = vmatprep.subr.bf16.mxu0 0
      %1612 = vmatpush1.bf16.msra.mxu0 %v1545
      %1613 = vmatprep.subr.bf16.mxu0 0
      %1614 = vmatpush2.bf16.msra.mxu0 0
      %1615 = vmatprep.subr.bf16.mxu0 0
      %1616 = vmatpush2.bf16.msra.mxu0 0
      %1617 = vmatprep.subr.bf16.mxu0 0
      %1618 = vmatpush2.bf16.msra.mxu0 0
      %1619 = vmatprep.subr.bf16.mxu0 0
      %1620 = vmatpush2.bf16.msra.mxu0 0
      %1621 = vmatprep.subr.bf16.mxu0 0
      %1622 = vmatpush2.bf16.msra.mxu0 0
      %1623 = vmatprep.subr.bf16.mxu0 0
      %1624 = vmatpush2.bf16.msra.mxu0 0
      %1625 = vmatprep.subr.bf16.mxu0 0
      %1626 = vmatpush2.bf16.msra.mxu0 0
      %1627 = vmatprep.subr.bf16.mxu0 0
      %1628 = vmatpush2.bf16.msra.mxu0 0
      %1629 = vmatprep.mubr.bf16.mxu0 0
      %1630 = vmatmul.mubr.bf16.gmra.mxu0 %v1550
      %v1631 = vpop.f32.mrf.mxu0
      %v1632 = vadd.f32 0.0, %v1631
      %v1633 = vpop.f32.mrf.mxu0
      %v1634 = vpop.f32.mrf.mxu0
      %v1635 = vadd.f32 0.0, %v1634
      %v1636 = vpop.f32.mrf.mxu0
      %1637 = vmatprep.mubr.bf16.mxu0 0
      %1638 = vmatmul.mubr.bf16.gmra.mxu0 %v1553
      %v1639 = vpop.f32.mrf.mxu0
      %v1640 = vadd.f32 0.0, %v1639
      %v1641 = vpop.f32.mrf.mxu0
      %v1642 = vpop.f32.mrf.mxu0
      %v1643 = vadd.f32 0.0, %v1642
      %v1644 = vpop.f32.mrf.mxu0
      %1645 = vmatprep.mubr.bf16.mxu0 0
      %1646 = vmatmul.mubr.bf16.gmra.mxu0 %v1556
      %v1647 = vpop.f32.mrf.mxu0
      %v1648 = vadd.f32 0.0, %v1647
      %v1649 = vpop.f32.mrf.mxu0
      %v1650 = vpop.f32.mrf.mxu0
      %v1651 = vadd.f32 0.0, %v1650
      %v1652 = vpop.f32.mrf.mxu0
      %1653 = vmatprep.mubr.bf16.mxu0 0
      %1654 = vmatmul.mubr.bf16.gmra.mxu0 %v1559
      %v1655 = vpop.f32.mrf.mxu0
      %v1656 = vadd.f32 0.0, %v1655
      %v1657 = vpop.f32.mrf.mxu0
      %v1658 = vpop.f32.mrf.mxu0
      %v1659 = vadd.f32 0.0, %v1658
      %v1660 = vpop.f32.mrf.mxu0
      %1661 = vmatprep.mubr.bf16.mxu0 0
      %1662 = vmatmul.mubr.bf16.gmra.mxu0 %v1562
      %v1663 = vpop.f32.mrf.mxu0
      %v1664 = vadd.f32 0.0, %v1663
      %v1665 = vpop.f32.mrf.mxu0
      %v1666 = vpop.f32.mrf.mxu0
      %v1667 = vadd.f32 0.0, %v1666
      %v1668 = vpop.f32.mrf.mxu0
      %1669 = vmatprep.mubr.bf16.mxu0 0
      %1670 = vmatmul.mubr.bf16.gmra.mxu0 %v1565
      %v1671 = vpop.f32.mrf.mxu0
      %v1672 = vadd.f32 0.0, %v1671
      %v1673 = vpop.f32.mrf.mxu0
      %v1674 = vpop.f32.mrf.mxu0
      %v1675 = vadd.f32 0.0, %v1674
      %v1676 = vpop.f32.mrf.mxu0
      %1677 = vmatprep.mubr.bf16.mxu0 0
      %1678 = vmatmul.mubr.bf16.gmra.mxu0 %v1568
      %v1679 = vpop.f32.mrf.mxu0
      %v1680 = vadd.f32 0.0, %v1679
      %v1681 = vpop.f32.mrf.mxu0
      %v1682 = vpop.f32.mrf.mxu0
      %v1683 = vadd.f32 0.0, %v1682
      %v1684 = vpop.f32.mrf.mxu0
      %1685 = vmatprep.mubr.bf16.mxu0 0
      %1686 = vmatmul.mubr.bf16.gmra.mxu0 %v1571
      %v1687 = vpop.f32.mrf.mxu0
      %v1688 = vadd.f32 0.0, %v1687
      %v1689 = vpop.f32.mrf.mxu0
      %v1690 = vpop.f32.mrf.mxu0
      %v1691 = vadd.f32 0.0, %v1690
      %v1692 = vpop.f32.mrf.mxu0
      %1693 = vmatprep.mubr.bf16.mxu0 0
      %1694 = vmatmul.mubr.bf16.gmra.mxu0 %v1574
      %v1695 = vpop.f32.mrf.mxu0
      %v1696 = vadd.f32 0.0, %v1695
      %v1697 = vpop.f32.mrf.mxu0
      %v1698 = vpop.f32.mrf.mxu0
      %v1699 = vadd.f32 0.0, %v1698
      %v1700 = vpop.f32.mrf.mxu0
      %1701 = vmatprep.mubr.bf16.mxu0 0
      %1702 = vmatmul.mubr.bf16.gmra.mxu0 %v1577
      %v1703 = vpop.f32.mrf.mxu0
      %v1704 = vadd.f32 0.0, %v1703
      %v1705 = vpop.f32.mrf.mxu0
      %v1706 = vpop.f32.mrf.mxu0
      %v1707 = vadd.f32 0.0, %v1706
      %v1708 = vpop.f32.mrf.mxu0
      %1709 = vmatprep.mubr.bf16.mxu0 0
      %1710 = vmatmul.mubr.bf16.gmra.mxu0 %v1580
      %v1711 = vpop.f32.mrf.mxu0
      %v1712 = vadd.f32 0.0, %v1711
      %v1713 = vpop.f32.mrf.mxu0
      %v1714 = vpop.f32.mrf.mxu0
      %v1715 = vadd.f32 0.0, %v1714
      %v1716 = vpop.f32.mrf.mxu0
      %1717 = vmatprep.mubr.bf16.mxu0 0
      %1718 = vmatmul.mubr.bf16.gmra.mxu0 %v1583
      %v1719 = vpop.f32.mrf.mxu0
      %v1720 = vadd.f32 0.0, %v1719
      %v1721 = vpop.f32.mrf.mxu0
      %v1722 = vpop.f32.mrf.mxu0
      %v1723 = vadd.f32 0.0, %v1722
      %v1724 = vpop.f32.mrf.mxu0
      %1725 = vmatprep.mubr.bf16.mxu0 0
      %1726 = vmatmul.mubr.bf16.gmra.mxu0 %v1586
      %v1727 = vpop.f32.mrf.mxu0
      %v1728 = vadd.f32 0.0, %v1727
      %v1729 = vpop.f32.mrf.mxu0
      %v1730 = vpop.f32.mrf.mxu0
      %v1731 = vadd.f32 0.0, %v1730
      %v1732 = vpop.f32.mrf.mxu0
      %1733 = vmatprep.mubr.bf16.mxu0 0
      %1734 = vmatmul.mubr.bf16.gmra.mxu0 %v1589
      %v1735 = vpop.f32.mrf.mxu0
      %v1736 = vadd.f32 0.0, %v1735
      %v1737 = vpop.f32.mrf.mxu0
      %v1738 = vpop.f32.mrf.mxu0
      %v1739 = vadd.f32 0.0, %v1738
      %v1740 = vpop.f32.mrf.mxu0
      %1741 = vmatprep.mubr.bf16.mxu0 0
      %1742 = vmatmul.mubr.bf16.gmra.mxu0 %v1592
      %v1743 = vpop.f32.mrf.mxu0
      %v1744 = vadd.f32 0.0, %v1743
      %v1745 = vpop.f32.mrf.mxu0
      %v1746 = vpop.f32.mrf.mxu0
      %v1747 = vadd.f32 0.0, %v1746
      %v1748 = vpop.f32.mrf.mxu0
      %1749 = vmatprep.mubr.bf16.mxu0 0
      %1750 = vmatmul.mubr.bf16.gmra.mxu0 %v1595
      %v1751 = vpop.f32.mrf.mxu0
      %v1752 = vadd.f32 0.0, %v1751
      %v1753 = vpop.f32.mrf.mxu0
      %v1754 = vpop.f32.mrf.mxu0
      %v1755 = vadd.f32 0.0, %v1754
      %v1756 = vpop.f32.mrf.mxu0
      %1757 = vdwg.mxu0
      %v1758 = vadd.f32 %v1232, %v1632
      %v1759 = vadd.f32 %v1235, %v1635
      %v1760 = vadd.f32 %v1240, %v1640
      %v1761 = vadd.f32 %v1243, %v1643
      %v1762 = vadd.f32 %v1248, %v1648
      %v1763 = vadd.f32 %v1251, %v1651
      %v1764 = vadd.f32 %v1256, %v1656
      %v1765 = vadd.f32 %v1259, %v1659
      %v1766 = vadd.f32 %v1264, %v1664
      %v1767 = vadd.f32 %v1267, %v1667
      %v1768 = vadd.f32 %v1272, %v1672
      %v1769 = vadd.f32 %v1275, %v1675
      %v1770 = vadd.f32 %v1280, %v1680
      %v1771 = vadd.f32 %v1283, %v1683
      %v1772 = vadd.f32 %v1288, %v1688
      %v1773 = vadd.f32 %v1291, %v1691
      %v1774 = vadd.f32 %v1296, %v1696
      %v1775 = vadd.f32 %v1299, %v1699
      %v1776 = vadd.f32 %v1304, %v1704
      %v1777 = vadd.f32 %v1307, %v1707
      %v1778 = vadd.f32 %v1312, %v1712
      %v1779 = vadd.f32 %v1315, %v1715
      %v1780 = vadd.f32 %v1320, %v1720
      %v1781 = vadd.f32 %v1323, %v1723
      %v1782 = vadd.f32 %v1328, %v1728
      %v1783 = vadd.f32 %v1331, %v1731
      %v1784 = vadd.f32 %v1336, %v1736
      %v1785 = vadd.f32 %v1339, %v1739
      %v1786 = vadd.f32 %v1344, %v1744
      %v1787 = vadd.f32 %v1347, %v1747
      %v1788 = vadd.f32 %v1352, %v1752
      %v1789 = vadd.f32 %v1355, %v1755
      %v1792 = vunpack.c.l.b16 %v358
      %v1793 = vunpack.c.l.b16 %v359
      %v1794 = vpack.c.b16 %v1793, %v1792
      %v1799 = vunpack.c.l.b16 %v376
      %v1800 = vunpack.c.l.b16 %v377
      %v1801 = vunpack.c.l.b16 %v378
      %v1802 = vunpack.c.l.b16 %v379
      %v1803 = vpack.c.b16 %v1800, %v1799
      %v1804 = vpack.c.b16 %v1802, %v1801
      %v1808 = vsel %vm847, %v1794, 0
      %1810 = vmatprep.subr.bf16.mxu0 0
      %1811 = vmatpush1.bf16.msra.mxu0 0
      %1812 = vmatprep.subr.bf16.mxu0 0
      %1813 = vmatpush1.bf16.msra.mxu0 0
      %1814 = vmatprep.subr.bf16.mxu0 0
      %1815 = vmatpush1.bf16.msra.mxu0 0
      %1816 = vmatprep.subr.bf16.mxu0 0
      %1817 = vmatpush1.bf16.msra.mxu0 0
      %1818 = vmatprep.subr.bf16.mxu0 0
      %1819 = vmatpush1.bf16.msra.mxu0 0
      %1820 = vmatprep.subr.bf16.mxu0 0
      %1821 = vmatpush1.bf16.msra.mxu0 0
      %1822 = vmatprep.subr.bf16.mxu0 0
      %1823 = vmatpush1.bf16.msra.mxu0 %v1804
      %1824 = vmatprep.subr.bf16.mxu0 0
      %1825 = vmatpush1.bf16.msra.mxu0 %v1803
      %1826 = vmatprep.subr.bf16.mxu0 0
      %1827 = vmatpush2.bf16.msra.mxu0 0
      %1828 = vmatprep.subr.bf16.mxu0 0
      %1829 = vmatpush2.bf16.msra.mxu0 0
      %1830 = vmatprep.subr.bf16.mxu0 0
      %1831 = vmatpush2.bf16.msra.mxu0 0
      %1832 = vmatprep.subr.bf16.mxu0 0
      %1833 = vmatpush2.bf16.msra.mxu0 0
      %1834 = vmatprep.subr.bf16.mxu0 0
      %1835 = vmatpush2.bf16.msra.mxu0 0
      %1836 = vmatprep.subr.bf16.mxu0 0
      %1837 = vmatpush2.bf16.msra.mxu0 0
      %1838 = vmatprep.subr.bf16.mxu0 0
      %1839 = vmatpush2.bf16.msra.mxu0 0
      %1840 = vmatprep.subr.bf16.mxu0 0
      %1841 = vmatpush2.bf16.msra.mxu0 0
      %1842 = vmatprep.mubr.bf16.mxu0 0
      %1843 = vmatmul.mubr.bf16.gmra.mxu0 %v1153
      %v1844 = vpop.f32.mrf.mxu0
      %v1845 = vadd.f32 0.0, %v1844
      %v1846 = vpop.f32.mrf.mxu0
      %v1847 = vpop.f32.mrf.mxu0
      %v1848 = vadd.f32 0.0, %v1847
      %v1849 = vpop.f32.mrf.mxu0
      %1850 = vmatprep.mubr.bf16.mxu0 0
      %1851 = vmatmul.mubr.bf16.gmra.mxu0 %v1156
      %v1852 = vpop.f32.mrf.mxu0
      %v1853 = vadd.f32 0.0, %v1852
      %v1854 = vpop.f32.mrf.mxu0
      %v1855 = vpop.f32.mrf.mxu0
      %v1856 = vadd.f32 0.0, %v1855
      %v1857 = vpop.f32.mrf.mxu0
      %1858 = vmatprep.mubr.bf16.mxu0 0
      %1859 = vmatmul.mubr.bf16.gmra.mxu0 %v1159
      %v1860 = vpop.f32.mrf.mxu0
      %v1861 = vadd.f32 0.0, %v1860
      %v1862 = vpop.f32.mrf.mxu0
      %v1863 = vpop.f32.mrf.mxu0
      %v1864 = vadd.f32 0.0, %v1863
      %v1865 = vpop.f32.mrf.mxu0
      %1866 = vmatprep.mubr.bf16.mxu0 0
      %1867 = vmatmul.mubr.bf16.gmra.mxu0 %v1162
      %v1868 = vpop.f32.mrf.mxu0
      %v1869 = vadd.f32 0.0, %v1868
      %v1870 = vpop.f32.mrf.mxu0
      %v1871 = vpop.f32.mrf.mxu0
      %v1872 = vadd.f32 0.0, %v1871
      %v1873 = vpop.f32.mrf.mxu0
      %1874 = vmatprep.mubr.bf16.mxu0 0
      %1875 = vmatmul.mubr.bf16.gmra.mxu0 %v1165
      %v1876 = vpop.f32.mrf.mxu0
      %v1877 = vadd.f32 0.0, %v1876
      %v1878 = vpop.f32.mrf.mxu0
      %v1879 = vpop.f32.mrf.mxu0
      %v1880 = vadd.f32 0.0, %v1879
      %v1881 = vpop.f32.mrf.mxu0
      %1882 = vmatprep.mubr.bf16.mxu0 0
      %1883 = vmatmul.mubr.bf16.gmra.mxu0 %v1168
      %v1884 = vpop.f32.mrf.mxu0
      %v1885 = vadd.f32 0.0, %v1884
      %v1886 = vpop.f32.mrf.mxu0
      %v1887 = vpop.f32.mrf.mxu0
      %v1888 = vadd.f32 0.0, %v1887
      %v1889 = vpop.f32.mrf.mxu0
      %1890 = vmatprep.mubr.bf16.mxu0 0
      %1891 = vmatmul.mubr.bf16.gmra.mxu0 %v1171
      %v1892 = vpop.f32.mrf.mxu0
      %v1893 = vadd.f32 0.0, %v1892
      %v1894 = vpop.f32.mrf.mxu0
      %v1895 = vpop.f32.mrf.mxu0
      %v1896 = vadd.f32 0.0, %v1895
      %v1897 = vpop.f32.mrf.mxu0
      %1898 = vmatprep.mubr.bf16.mxu0 0
      %1899 = vmatmul.mubr.bf16.gmra.mxu0 %v1174
      %v1900 = vpop.f32.mrf.mxu0
      %v1901 = vadd.f32 0.0, %v1900
      %v1902 = vpop.f32.mrf.mxu0
      %v1903 = vpop.f32.mrf.mxu0
      %v1904 = vadd.f32 0.0, %v1903
      %v1905 = vpop.f32.mrf.mxu0
      %1906 = vmatprep.mubr.bf16.mxu0 0
      %1907 = vmatmul.mubr.bf16.gmra.mxu0 %v1177
      %v1908 = vpop.f32.mrf.mxu0
      %v1909 = vadd.f32 0.0, %v1908
      %v1910 = vpop.f32.mrf.mxu0
      %v1911 = vpop.f32.mrf.mxu0
      %v1912 = vadd.f32 0.0, %v1911
      %v1913 = vpop.f32.mrf.mxu0
      %1914 = vmatprep.mubr.bf16.mxu0 0
      %1915 = vmatmul.mubr.bf16.gmra.mxu0 %v1180
      %v1916 = vpop.f32.mrf.mxu0
      %v1917 = vadd.f32 0.0, %v1916
      %v1918 = vpop.f32.mrf.mxu0
      %v1919 = vpop.f32.mrf.mxu0
      %v1920 = vadd.f32 0.0, %v1919
      %v1921 = vpop.f32.mrf.mxu0
      %1922 = vmatprep.mubr.bf16.mxu0 0
      %1923 = vmatmul.mubr.bf16.gmra.mxu0 %v1183
      %v1924 = vpop.f32.mrf.mxu0
      %v1925 = vadd.f32 0.0, %v1924
      %v1926 = vpop.f32.mrf.mxu0
      %v1927 = vpop.f32.mrf.mxu0
      %v1928 = vadd.f32 0.0, %v1927
      %v1929 = vpop.f32.mrf.mxu0
      %1930 = vmatprep.mubr.bf16.mxu0 0
      %1931 = vmatmul.mubr.bf16.gmra.mxu0 %v1186
      %v1932 = vpop.f32.mrf.mxu0
      %v1933 = vadd.f32 0.0, %v1932
      %v1934 = vpop.f32.mrf.mxu0
      %v1935 = vpop.f32.mrf.mxu0
      %v1936 = vadd.f32 0.0, %v1935
      %v1937 = vpop.f32.mrf.mxu0
      %1938 = vmatprep.mubr.bf16.mxu0 0
      %1939 = vmatmul.mubr.bf16.gmra.mxu0 %v1189
      %v1940 = vpop.f32.mrf.mxu0
      %v1941 = vadd.f32 0.0, %v1940
      %v1942 = vpop.f32.mrf.mxu0
      %v1943 = vpop.f32.mrf.mxu0
      %v1944 = vadd.f32 0.0, %v1943
      %v1945 = vpop.f32.mrf.mxu0
      %1946 = vmatprep.mubr.bf16.mxu0 0
      %1947 = vmatmul.mubr.bf16.gmra.mxu0 %v1192
      %v1948 = vpop.f32.mrf.mxu0
      %v1949 = vadd.f32 0.0, %v1948
      %v1950 = vpop.f32.mrf.mxu0
      %v1951 = vpop.f32.mrf.mxu0
      %v1952 = vadd.f32 0.0, %v1951
      %v1953 = vpop.f32.mrf.mxu0
      %1954 = vmatprep.mubr.bf16.mxu0 0
      %1955 = vmatmul.mubr.bf16.gmra.mxu0 %v1195
      %v1956 = vpop.f32.mrf.mxu0
      %v1957 = vadd.f32 0.0, %v1956
      %v1958 = vpop.f32.mrf.mxu0
      %v1959 = vpop.f32.mrf.mxu0
      %v1960 = vadd.f32 0.0, %v1959
      %v1961 = vpop.f32.mrf.mxu0
      %1962 = vmatprep.mubr.bf16.mxu0 0
      %1963 = vmatmul.mubr.bf16.gmra.mxu0 %v1808
      %v1964 = vpop.f32.mrf.mxu0
      %v1965 = vadd.f32 0.0, %v1964
      %v1966 = vpop.f32.mrf.mxu0
      %v1967 = vpop.f32.mrf.mxu0
      %v1968 = vadd.f32 0.0, %v1967
      %v1969 = vpop.f32.mrf.mxu0
      %1970 = vdwg.mxu0
      %v1971 = vadd.f32 %v1758, %v1845
      %v1972 = vadd.f32 %v1759, %v1848
      %v1973 = vadd.f32 %v1760, %v1853
      %v1974 = vadd.f32 %v1761, %v1856
      %v1975 = vadd.f32 %v1762, %v1861
      %v1976 = vadd.f32 %v1763, %v1864
      %v1977 = vadd.f32 %v1764, %v1869
      %v1978 = vadd.f32 %v1765, %v1872
      %v1979 = vadd.f32 %v1766, %v1877
      %v1980 = vadd.f32 %v1767, %v1880
      %v1981 = vadd.f32 %v1768, %v1885
      %v1982 = vadd.f32 %v1769, %v1888
      %v1983 = vadd.f32 %v1770, %v1893
      %v1984 = vadd.f32 %v1771, %v1896
      %v1985 = vadd.f32 %v1772, %v1901
      %v1986 = vadd.f32 %v1773, %v1904
      %v1987 = vadd.f32 %v1774, %v1909
      %v1988 = vadd.f32 %v1775, %v1912
      %v1989 = vadd.f32 %v1776, %v1917
      %v1990 = vadd.f32 %v1777, %v1920
      %v1991 = vadd.f32 %v1778, %v1925
      %v1992 = vadd.f32 %v1779, %v1928
      %v1993 = vadd.f32 %v1780, %v1933
      %v1994 = vadd.f32 %v1781, %v1936
      %v1995 = vadd.f32 %v1782, %v1941
      %v1996 = vadd.f32 %v1783, %v1944
      %v1997 = vadd.f32 %v1784, %v1949
      %v1998 = vadd.f32 %v1785, %v1952
      %v1999 = vadd.f32 %v1786, %v1957
      %v2000 = vadd.f32 %v1787, %v1960
      %v2001 = vadd.f32 %v1788, %v1965
      %v2002 = vadd.f32 %v1789, %v1968
      %v2004 = vshrl.u32 %v358, 16
      %v2006 = vrot.slane %v2004, 4
      %v2007 = vshll.u32 %v358, 16
      %v2009 = vrot.slane %v2007, 5
      %v2010 = vor.u32 %v2006, %v2009
      %v2011 = vrot.slane %v2010, 4
      %v2013 = vshll.u32 %v359, 16
      %v2015 = vrot.slane %v2013, 5
      %v2016 = vsel %vm402, %v2011, %v2015
      %v2017 = vshrl.u32 %v359, 16
      %v2019 = vrot.slane %v2017, 4
      %v2020 = vor.u32 %v2019, %v2015
      %v2021 = vrot.slane %v2020, 4
      %v2023 = vshll.u32 %v360, 16
      %v2025 = vrot.slane %v2023, 5
      %v2026 = vsel %vm402, %v2021, %v2025
      %v2027 = vunpack.c.l.b16 %v2016
      %v2028 = vunpack.c.l.b16 %v2026
      %v2029 = vpack.c.b16 %v2028, %v2027
      %v2034 = vunpack.c.l.b16 %v380
      %v2035 = vunpack.c.l.b16 %v381
      %v2036 = vunpack.c.l.b16 %v382
      %v2037 = vunpack.c.l.b16 %v383
      %v2038 = vpack.c.b16 %v2035, %v2034
      %v2039 = vpack.c.b16 %v2037, %v2036
      %v2043 = vsel %vm847, %v2029, 0
      %2045 = vmatprep.subr.bf16.mxu0 0
      %2046 = vmatpush1.bf16.msra.mxu0 0
      %2047 = vmatprep.subr.bf16.mxu0 0
      %2048 = vmatpush1.bf16.msra.mxu0 0
      %2049 = vmatprep.subr.bf16.mxu0 0
      %2050 = vmatpush1.bf16.msra.mxu0 0
      %2051 = vmatprep.subr.bf16.mxu0 0
      %2052 = vmatpush1.bf16.msra.mxu0 0
      %2053 = vmatprep.subr.bf16.mxu0 0
      %2054 = vmatpush1.bf16.msra.mxu0 0
      %2055 = vmatprep.subr.bf16.mxu0 0
      %2056 = vmatpush1.bf16.msra.mxu0 0
      %2057 = vmatprep.subr.bf16.mxu0 0
      %2058 = vmatpush1.bf16.msra.mxu0 %v2039
      %2059 = vmatprep.subr.bf16.mxu0 0
      %2060 = vmatpush1.bf16.msra.mxu0 %v2038
      %2061 = vmatprep.subr.bf16.mxu0 0
      %2062 = vmatpush2.bf16.msra.mxu0 0
      %2063 = vmatprep.subr.bf16.mxu0 0
      %2064 = vmatpush2.bf16.msra.mxu0 0
      %2065 = vmatprep.subr.bf16.mxu0 0
      %2066 = vmatpush2.bf16.msra.mxu0 0
      %2067 = vmatprep.subr.bf16.mxu0 0
      %2068 = vmatpush2.bf16.msra.mxu0 0
      %2069 = vmatprep.subr.bf16.mxu0 0
      %2070 = vmatpush2.bf16.msra.mxu0 0
      %2071 = vmatprep.subr.bf16.mxu0 0
      %2072 = vmatpush2.bf16.msra.mxu0 0
      %2073 = vmatprep.subr.bf16.mxu0 0
      %2074 = vmatpush2.bf16.msra.mxu0 0
      %2075 = vmatprep.subr.bf16.mxu0 0
      %2076 = vmatpush2.bf16.msra.mxu0 0
      %2077 = vmatprep.mubr.bf16.mxu0 0
      %2078 = vmatmul.mubr.bf16.gmra.mxu0 %v852
      %v2079 = vpop.f32.mrf.mxu0
      %v2080 = vadd.f32 0.0, %v2079
      %v2081 = vpop.f32.mrf.mxu0
      %v2082 = vpop.f32.mrf.mxu0
      %v2083 = vadd.f32 0.0, %v2082
      %v2084 = vpop.f32.mrf.mxu0
      %2085 = vmatprep.mubr.bf16.mxu0 0
      %2086 = vmatmul.mubr.bf16.gmra.mxu0 %v855
      %v2087 = vpop.f32.mrf.mxu0
      %v2088 = vadd.f32 0.0, %v2087
      %v2089 = vpop.f32.mrf.mxu0
      %v2090 = vpop.f32.mrf.mxu0
      %v2091 = vadd.f32 0.0, %v2090
      %v2092 = vpop.f32.mrf.mxu0
      %2093 = vmatprep.mubr.bf16.mxu0 0
      %2094 = vmatmul.mubr.bf16.gmra.mxu0 %v858
      %v2095 = vpop.f32.mrf.mxu0
      %v2096 = vadd.f32 0.0, %v2095
      %v2097 = vpop.f32.mrf.mxu0
      %v2098 = vpop.f32.mrf.mxu0
      %v2099 = vadd.f32 0.0, %v2098
      %v2100 = vpop.f32.mrf.mxu0
      %2101 = vmatprep.mubr.bf16.mxu0 0
      %2102 = vmatmul.mubr.bf16.gmra.mxu0 %v861
      %v2103 = vpop.f32.mrf.mxu0
      %v2104 = vadd.f32 0.0, %v2103
      %v2105 = vpop.f32.mrf.mxu0
      %v2106 = vpop.f32.mrf.mxu0
      %v2107 = vadd.f32 0.0, %v2106
      %v2108 = vpop.f32.mrf.mxu0
      %2109 = vmatprep.mubr.bf16.mxu0 0
      %2110 = vmatmul.mubr.bf16.gmra.mxu0 %v864
      %v2111 = vpop.f32.mrf.mxu0
      %v2112 = vadd.f32 0.0, %v2111
      %v2113 = vpop.f32.mrf.mxu0
      %v2114 = vpop.f32.mrf.mxu0
      %v2115 = vadd.f32 0.0, %v2114
      %v2116 = vpop.f32.mrf.mxu0
      %2117 = vmatprep.mubr.bf16.mxu0 0
      %2118 = vmatmul.mubr.bf16.gmra.mxu0 %v867
      %v2119 = vpop.f32.mrf.mxu0
      %v2120 = vadd.f32 0.0, %v2119
      %v2121 = vpop.f32.mrf.mxu0
      %v2122 = vpop.f32.mrf.mxu0
      %v2123 = vadd.f32 0.0, %v2122
      %v2124 = vpop.f32.mrf.mxu0
      %2125 = vmatprep.mubr.bf16.mxu0 0
      %2126 = vmatmul.mubr.bf16.gmra.mxu0 %v870
      %v2127 = vpop.f32.mrf.mxu0
      %v2128 = vadd.f32 0.0, %v2127
      %v2129 = vpop.f32.mrf.mxu0
      %v2130 = vpop.f32.mrf.mxu0
      %v2131 = vadd.f32 0.0, %v2130
      %v2132 = vpop.f32.mrf.mxu0
      %2133 = vmatprep.mubr.bf16.mxu0 0
      %2134 = vmatmul.mubr.bf16.gmra.mxu0 %v873
      %v2135 = vpop.f32.mrf.mxu0
      %v2136 = vadd.f32 0.0, %v2135
      %v2137 = vpop.f32.mrf.mxu0
      %v2138 = vpop.f32.mrf.mxu0
      %v2139 = vadd.f32 0.0, %v2138
      %v2140 = vpop.f32.mrf.mxu0
      %2141 = vmatprep.mubr.bf16.mxu0 0
      %2142 = vmatmul.mubr.bf16.gmra.mxu0 %v876
      %v2143 = vpop.f32.mrf.mxu0
      %v2144 = vadd.f32 0.0, %v2143
      %v2145 = vpop.f32.mrf.mxu0
      %v2146 = vpop.f32.mrf.mxu0
      %v2147 = vadd.f32 0.0, %v2146
      %v2148 = vpop.f32.mrf.mxu0
      %2149 = vmatprep.mubr.bf16.mxu0 0
      %2150 = vmatmul.mubr.bf16.gmra.mxu0 %v879
      %v2151 = vpop.f32.mrf.mxu0
      %v2152 = vadd.f32 0.0, %v2151
      %v2153 = vpop.f32.mrf.mxu0
      %v2154 = vpop.f32.mrf.mxu0
      %v2155 = vadd.f32 0.0, %v2154
      %v2156 = vpop.f32.mrf.mxu0
      %2157 = vmatprep.mubr.bf16.mxu0 0
      %2158 = vmatmul.mubr.bf16.gmra.mxu0 %v882
      %v2159 = vpop.f32.mrf.mxu0
      %v2160 = vadd.f32 0.0, %v2159
      %v2161 = vpop.f32.mrf.mxu0
      %v2162 = vpop.f32.mrf.mxu0
      %v2163 = vadd.f32 0.0, %v2162
      %v2164 = vpop.f32.mrf.mxu0
      %2165 = vmatprep.mubr.bf16.mxu0 0
      %2166 = vmatmul.mubr.bf16.gmra.mxu0 %v885
      %v2167 = vpop.f32.mrf.mxu0
      %v2168 = vadd.f32 0.0, %v2167
      %v2169 = vpop.f32.mrf.mxu0
      %v2170 = vpop.f32.mrf.mxu0
      %v2171 = vadd.f32 0.0, %v2170
      %v2172 = vpop.f32.mrf.mxu0
      %2173 = vmatprep.mubr.bf16.mxu0 0
      %2174 = vmatmul.mubr.bf16.gmra.mxu0 %v888
      %v2175 = vpop.f32.mrf.mxu0
      %v2176 = vadd.f32 0.0, %v2175
      %v2177 = vpop.f32.mrf.mxu0
      %v2178 = vpop.f32.mrf.mxu0
      %v2179 = vadd.f32 0.0, %v2178
      %v2180 = vpop.f32.mrf.mxu0
      %2181 = vmatprep.mubr.bf16.mxu0 0
      %2182 = vmatmul.mubr.bf16.gmra.mxu0 %v891
      %v2183 = vpop.f32.mrf.mxu0
      %v2184 = vadd.f32 0.0, %v2183
      %v2185 = vpop.f32.mrf.mxu0
      %v2186 = vpop.f32.mrf.mxu0
      %v2187 = vadd.f32 0.0, %v2186
      %v2188 = vpop.f32.mrf.mxu0
      %2189 = vmatprep.mubr.bf16.mxu0 0
      %2190 = vmatmul.mubr.bf16.gmra.mxu0 %v894
      %v2191 = vpop.f32.mrf.mxu0
      %v2192 = vadd.f32 0.0, %v2191
      %v2193 = vpop.f32.mrf.mxu0
      %v2194 = vpop.f32.mrf.mxu0
      %v2195 = vadd.f32 0.0, %v2194
      %v2196 = vpop.f32.mrf.mxu0
      %2197 = vmatprep.mubr.bf16.mxu0 0
      %2198 = vmatmul.mubr.bf16.gmra.mxu0 %v2043
      %v2199 = vpop.f32.mrf.mxu0
      %v2200 = vadd.f32 0.0, %v2199
      %v2201 = vpop.f32.mrf.mxu0
      %v2202 = vpop.f32.mrf.mxu0
      %v2203 = vadd.f32 0.0, %v2202
      %v2204 = vpop.f32.mrf.mxu0
      %2205 = vdwg.mxu0
      %v2206 = vadd.f32 %v1971, %v2080
      %v2207 = vadd.f32 %v1972, %v2083
      %v2208 = vadd.f32 %v1973, %v2088
      %v2209 = vadd.f32 %v1974, %v2091
      %v2210 = vadd.f32 %v1975, %v2096
      %v2211 = vadd.f32 %v1976, %v2099
      %v2212 = vadd.f32 %v1977, %v2104
      %v2213 = vadd.f32 %v1978, %v2107
      %v2214 = vadd.f32 %v1979, %v2112
      %v2215 = vadd.f32 %v1980, %v2115
      %v2216 = vadd.f32 %v1981, %v2120
      %v2217 = vadd.f32 %v1982, %v2123
      %v2218 = vadd.f32 %v1983, %v2128
      %v2219 = vadd.f32 %v1984, %v2131
      %v2220 = vadd.f32 %v1985, %v2136
      %v2221 = vadd.f32 %v1986, %v2139
      %v2222 = vadd.f32 %v1987, %v2144
      %v2223 = vadd.f32 %v1988, %v2147
      %v2224 = vadd.f32 %v1989, %v2152
      %v2225 = vadd.f32 %v1990, %v2155
      %v2226 = vadd.f32 %v1991, %v2160
      %v2227 = vadd.f32 %v1992, %v2163
      %v2228 = vadd.f32 %v1993, %v2168
      %v2229 = vadd.f32 %v1994, %v2171
      %v2230 = vadd.f32 %v1995, %v2176
      %v2231 = vadd.f32 %v1996, %v2179
      %v2232 = vadd.f32 %v1997, %v2184
      %v2233 = vadd.f32 %v1998, %v2187
      %v2234 = vadd.f32 %v1999, %v2192
      %v2235 = vadd.f32 %v2000, %v2195
      %v2236 = vadd.f32 %v2001, %v2200
      %v2237 = vadd.f32 %v2002, %v2203
      %v2239 = vrot.slane %v358, 5
      %v2240 = vrot.slane %v2239, 4
      %v2241 = vrot.slane %v359, 5
      %v2242 = vsel %vm1376, %v2240, %v2241
      %v2243 = vrot.slane %v2241, 4
      %v2244 = vrot.slane %v360, 5
      %v2245 = vsel %vm1376, %v2243, %v2244
      %v2246 = vunpack.c.l.b16 %v2242
      %v2247 = vunpack.c.l.b16 %v2245
      %v2248 = vpack.c.b16 %v2247, %v2246
      %v2253 = vunpack.c.l.b16 %v384
      %v2254 = vunpack.c.l.b16 %v385
      %v2255 = vunpack.c.l.b16 %v386
      %v2256 = vunpack.c.l.b16 %v387
      %v2257 = vpack.c.b16 %v2254, %v2253
      %v2258 = vpack.c.b16 %v2256, %v2255
      %v2262 = vsel %vm847, %v2248, 0
      %2264 = vmatprep.subr.bf16.mxu0 0
      %2265 = vmatpush1.bf16.msra.mxu0 0
      %2266 = vmatprep.subr.bf16.mxu0 0
      %2267 = vmatpush1.bf16.msra.mxu0 0
      %2268 = vmatprep.subr.bf16.mxu0 0
      %2269 = vmatpush1.bf16.msra.mxu0 0
      %2270 = vmatprep.subr.bf16.mxu0 0
      %2271 = vmatpush1.bf16.msra.mxu0 0
      %2272 = vmatprep.subr.bf16.mxu0 0
      %2273 = vmatpush1.bf16.msra.mxu0 0
      %2274 = vmatprep.subr.bf16.mxu0 0
      %2275 = vmatpush1.bf16.msra.mxu0 0
      %2276 = vmatprep.subr.bf16.mxu0 0
      %2277 = vmatpush1.bf16.msra.mxu0 %v2258
      %2278 = vmatprep.subr.bf16.mxu0 0
      %2279 = vmatpush1.bf16.msra.mxu0 %v2257
      %2280 = vmatprep.subr.bf16.mxu0 0
      %2281 = vmatpush2.bf16.msra.mxu0 0
      %2282 = vmatprep.subr.bf16.mxu0 0
      %2283 = vmatpush2.bf16.msra.mxu0 0
      %2284 = vmatprep.subr.bf16.mxu0 0
      %2285 = vmatpush2.bf16.msra.mxu0 0
      %2286 = vmatprep.subr.bf16.mxu0 0
      %2287 = vmatpush2.bf16.msra.mxu0 0
      %2288 = vmatprep.subr.bf16.mxu0 0
      %2289 = vmatpush2.bf16.msra.mxu0 0
      %2290 = vmatprep.subr.bf16.mxu0 0
      %2291 = vmatpush2.bf16.msra.mxu0 0
      %2292 = vmatprep.subr.bf16.mxu0 0
      %2293 = vmatpush2.bf16.msra.mxu0 0
      %2294 = vmatprep.subr.bf16.mxu0 0
      %2295 = vmatpush2.bf16.msra.mxu0 0
      %2296 = vmatprep.mubr.bf16.mxu0 0
      %2297 = vmatmul.mubr.bf16.gmra.mxu0 %v1553
      %v2298 = vpop.f32.mrf.mxu0
      %v2299 = vadd.f32 0.0, %v2298
      %v2300 = vpop.f32.mrf.mxu0
      %v2301 = vpop.f32.mrf.mxu0
      %v2302 = vadd.f32 0.0, %v2301
      %v2303 = vpop.f32.mrf.mxu0
      %2304 = vmatprep.mubr.bf16.mxu0 0
      %2305 = vmatmul.mubr.bf16.gmra.mxu0 %v1556
      %v2306 = vpop.f32.mrf.mxu0
      %v2307 = vadd.f32 0.0, %v2306
      %v2308 = vpop.f32.mrf.mxu0
      %v2309 = vpop.f32.mrf.mxu0
      %v2310 = vadd.f32 0.0, %v2309
      %v2311 = vpop.f32.mrf.mxu0
      %2312 = vmatprep.mubr.bf16.mxu0 0
      %2313 = vmatmul.mubr.bf16.gmra.mxu0 %v1559
      %v2314 = vpop.f32.mrf.mxu0
      %v2315 = vadd.f32 0.0, %v2314
      %v2316 = vpop.f32.mrf.mxu0
      %v2317 = vpop.f32.mrf.mxu0
      %v2318 = vadd.f32 0.0, %v2317
      %v2319 = vpop.f32.mrf.mxu0
      %2320 = vmatprep.mubr.bf16.mxu0 0
      %2321 = vmatmul.mubr.bf16.gmra.mxu0 %v1562
      %v2322 = vpop.f32.mrf.mxu0
      %v2323 = vadd.f32 0.0, %v2322
      %v2324 = vpop.f32.mrf.mxu0
      %v2325 = vpop.f32.mrf.mxu0
      %v2326 = vadd.f32 0.0, %v2325
      %v2327 = vpop.f32.mrf.mxu0
      %2328 = vmatprep.mubr.bf16.mxu0 0
      %2329 = vmatmul.mubr.bf16.gmra.mxu0 %v1565
      %v2330 = vpop.f32.mrf.mxu0
      %v2331 = vadd.f32 0.0, %v2330
      %v2332 = vpop.f32.mrf.mxu0
      %v2333 = vpop.f32.mrf.mxu0
      %v2334 = vadd.f32 0.0, %v2333
      %v2335 = vpop.f32.mrf.mxu0
      %2336 = vmatprep.mubr.bf16.mxu0 0
      %2337 = vmatmul.mubr.bf16.gmra.mxu0 %v1568
      %v2338 = vpop.f32.mrf.mxu0
      %v2339 = vadd.f32 0.0, %v2338
      %v2340 = vpop.f32.mrf.mxu0
      %v2341 = vpop.f32.mrf.mxu0
      %v2342 = vadd.f32 0.0, %v2341
      %v2343 = vpop.f32.mrf.mxu0
      %2344 = vmatprep.mubr.bf16.mxu0 0
      %2345 = vmatmul.mubr.bf16.gmra.mxu0 %v1571
      %v2346 = vpop.f32.mrf.mxu0
      %v2347 = vadd.f32 0.0, %v2346
      %v2348 = vpop.f32.mrf.mxu0
      %v2349 = vpop.f32.mrf.mxu0
      %v2350 = vadd.f32 0.0, %v2349
      %v2351 = vpop.f32.mrf.mxu0
      %2352 = vmatprep.mubr.bf16.mxu0 0
      %2353 = vmatmul.mubr.bf16.gmra.mxu0 %v1574
      %v2354 = vpop.f32.mrf.mxu0
      %v2355 = vadd.f32 0.0, %v2354
      %v2356 = vpop.f32.mrf.mxu0
      %v2357 = vpop.f32.mrf.mxu0
      %v2358 = vadd.f32 0.0, %v2357
      %v2359 = vpop.f32.mrf.mxu0
      %2360 = vmatprep.mubr.bf16.mxu0 0
      %2361 = vmatmul.mubr.bf16.gmra.mxu0 %v1577
      %v2362 = vpop.f32.mrf.mxu0
      %v2363 = vadd.f32 0.0, %v2362
      %v2364 = vpop.f32.mrf.mxu0
      %v2365 = vpop.f32.mrf.mxu0
      %v2366 = vadd.f32 0.0, %v2365
      %v2367 = vpop.f32.mrf.mxu0
      %2368 = vmatprep.mubr.bf16.mxu0 0
      %2369 = vmatmul.mubr.bf16.gmra.mxu0 %v1580
      %v2370 = vpop.f32.mrf.mxu0
      %v2371 = vadd.f32 0.0, %v2370
      %v2372 = vpop.f32.mrf.mxu0
      %v2373 = vpop.f32.mrf.mxu0
      %v2374 = vadd.f32 0.0, %v2373
      %v2375 = vpop.f32.mrf.mxu0
      %2376 = vmatprep.mubr.bf16.mxu0 0
      %2377 = vmatmul.mubr.bf16.gmra.mxu0 %v1583
      %v2378 = vpop.f32.mrf.mxu0
      %v2379 = vadd.f32 0.0, %v2378
      %v2380 = vpop.f32.mrf.mxu0
      %v2381 = vpop.f32.mrf.mxu0
      %v2382 = vadd.f32 0.0, %v2381
      %v2383 = vpop.f32.mrf.mxu0
      %2384 = vmatprep.mubr.bf16.mxu0 0
      %2385 = vmatmul.mubr.bf16.gmra.mxu0 %v1586
      %v2386 = vpop.f32.mrf.mxu0
      %v2387 = vadd.f32 0.0, %v2386
      %v2388 = vpop.f32.mrf.mxu0
      %v2389 = vpop.f32.mrf.mxu0
      %v2390 = vadd.f32 0.0, %v2389
      %v2391 = vpop.f32.mrf.mxu0
      %2392 = vmatprep.mubr.bf16.mxu0 0
      %2393 = vmatmul.mubr.bf16.gmra.mxu0 %v1589
      %v2394 = vpop.f32.mrf.mxu0
      %v2395 = vadd.f32 0.0, %v2394
      %v2396 = vpop.f32.mrf.mxu0
      %v2397 = vpop.f32.mrf.mxu0
      %v2398 = vadd.f32 0.0, %v2397
      %v2399 = vpop.f32.mrf.mxu0
      %2400 = vmatprep.mubr.bf16.mxu0 0
      %2401 = vmatmul.mubr.bf16.gmra.mxu0 %v1592
      %v2402 = vpop.f32.mrf.mxu0
      %v2403 = vadd.f32 0.0, %v2402
      %v2404 = vpop.f32.mrf.mxu0
      %v2405 = vpop.f32.mrf.mxu0
      %v2406 = vadd.f32 0.0, %v2405
      %v2407 = vpop.f32.mrf.mxu0
      %2408 = vmatprep.mubr.bf16.mxu0 0
      %2409 = vmatmul.mubr.bf16.gmra.mxu0 %v1595
      %v2410 = vpop.f32.mrf.mxu0
      %v2411 = vadd.f32 0.0, %v2410
      %v2412 = vpop.f32.mrf.mxu0
      %v2413 = vpop.f32.mrf.mxu0
      %v2414 = vadd.f32 0.0, %v2413
      %v2415 = vpop.f32.mrf.mxu0
      %2416 = vmatprep.mubr.bf16.mxu0 0
      %2417 = vmatmul.mubr.bf16.gmra.mxu0 %v2262
      %v2418 = vpop.f32.mrf.mxu0
      %v2419 = vadd.f32 0.0, %v2418
      %v2420 = vpop.f32.mrf.mxu0
      %v2421 = vpop.f32.mrf.mxu0
      %v2422 = vadd.f32 0.0, %v2421
      %v2423 = vpop.f32.mrf.mxu0
      %2424 = vdwg.mxu0
      %v2425 = vadd.f32 %v2206, %v2299
      %v2426 = vadd.f32 %v2207, %v2302
      %v2427 = vadd.f32 %v2208, %v2307
      %v2428 = vadd.f32 %v2209, %v2310
      %v2429 = vadd.f32 %v2210, %v2315
      %v2430 = vadd.f32 %v2211, %v2318
      %v2431 = vadd.f32 %v2212, %v2323
      %v2432 = vadd.f32 %v2213, %v2326
      %v2433 = vadd.f32 %v2214, %v2331
      %v2434 = vadd.f32 %v2215, %v2334
      %v2435 = vadd.f32 %v2216, %v2339
      %v2436 = vadd.f32 %v2217, %v2342
      %v2437 = vadd.f32 %v2218, %v2347
      %v2438 = vadd.f32 %v2219, %v2350
      %v2439 = vadd.f32 %v2220, %v2355
      %v2440 = vadd.f32 %v2221, %v2358
      %v2441 = vadd.f32 %v2222, %v2363
      %v2442 = vadd.f32 %v2223, %v2366
      %v2443 = vadd.f32 %v2224, %v2371
      %v2444 = vadd.f32 %v2225, %v2374
      %v2445 = vadd.f32 %v2226, %v2379
      %v2446 = vadd.f32 %v2227, %v2382
      %v2447 = vadd.f32 %v2228, %v2387
      %v2448 = vadd.f32 %v2229, %v2390
      %v2449 = vadd.f32 %v2230, %v2395
      %v2450 = vadd.f32 %v2231, %v2398
      %v2451 = vadd.f32 %v2232, %v2403
      %v2452 = vadd.f32 %v2233, %v2406
      %v2453 = vadd.f32 %v2234, %v2411
      %v2454 = vadd.f32 %v2235, %v2414
      %v2455 = vadd.f32 %v2236, %v2419
      %v2456 = vadd.f32 %v2237, %v2422
      %v2459 = vunpack.c.l.b16 %v361
      %v2460 = vunpack.c.l.b16 %v362
      %v2461 = vpack.c.b16 %v2460, %v2459
      %v2466 = vunpack.c.l.b16 %v388
      %v2467 = vunpack.c.l.b16 %v389
      %v2468 = vunpack.c.l.b16 %v390
      %v2469 = vunpack.c.l.b16 %v391
      %v2470 = vpack.c.b16 %v2467, %v2466
      %v2471 = vpack.c.b16 %v2469, %v2468
      %v2475 = vsel %vm847, %v2461, 0
      %2477 = vmatprep.subr.bf16.mxu0 0
      %2478 = vmatpush1.bf16.msra.mxu0 0
      %2479 = vmatprep.subr.bf16.mxu0 0
      %2480 = vmatpush1.bf16.msra.mxu0 0
      %2481 = vmatprep.subr.bf16.mxu0 0
      %2482 = vmatpush1.bf16.msra.mxu0 0
      %2483 = vmatprep.subr.bf16.mxu0 0
      %2484 = vmatpush1.bf16.msra.mxu0 0
      %2485 = vmatprep.subr.bf16.mxu0 0
      %2486 = vmatpush1.bf16.msra.mxu0 0
      %2487 = vmatprep.subr.bf16.mxu0 0
      %2488 = vmatpush1.bf16.msra.mxu0 0
      %2489 = vmatprep.subr.bf16.mxu0 0
      %2490 = vmatpush1.bf16.msra.mxu0 %v2471
      %2491 = vmatprep.subr.bf16.mxu0 0
      %2492 = vmatpush1.bf16.msra.mxu0 %v2470
      %2493 = vmatprep.subr.bf16.mxu0 0
      %2494 = vmatpush2.bf16.msra.mxu0 0
      %2495 = vmatprep.subr.bf16.mxu0 0
      %2496 = vmatpush2.bf16.msra.mxu0 0
      %2497 = vmatprep.subr.bf16.mxu0 0
      %2498 = vmatpush2.bf16.msra.mxu0 0
      %2499 = vmatprep.subr.bf16.mxu0 0
      %2500 = vmatpush2.bf16.msra.mxu0 0
      %2501 = vmatprep.subr.bf16.mxu0 0
      %2502 = vmatpush2.bf16.msra.mxu0 0
      %2503 = vmatprep.subr.bf16.mxu0 0
      %2504 = vmatpush2.bf16.msra.mxu0 0
      %2505 = vmatprep.subr.bf16.mxu0 0
      %2506 = vmatpush2.bf16.msra.mxu0 0
      %2507 = vmatprep.subr.bf16.mxu0 0
      %2508 = vmatpush2.bf16.msra.mxu0 0
      %2509 = vmatprep.mubr.bf16.mxu0 0
      %2510 = vmatmul.mubr.bf16.gmra.mxu0 %v1156
      %v2511 = vpop.f32.mrf.mxu0
      %v2512 = vadd.f32 0.0, %v2511
      %v2513 = vpop.f32.mrf.mxu0
      %v2514 = vpop.f32.mrf.mxu0
      %v2515 = vadd.f32 0.0, %v2514
      %v2516 = vpop.f32.mrf.mxu0
      %2517 = vmatprep.mubr.bf16.mxu0 0
      %2518 = vmatmul.mubr.bf16.gmra.mxu0 %v1159
      %v2519 = vpop.f32.mrf.mxu0
      %v2520 = vadd.f32 0.0, %v2519
      %v2521 = vpop.f32.mrf.mxu0
      %v2522 = vpop.f32.mrf.mxu0
      %v2523 = vadd.f32 0.0, %v2522
      %v2524 = vpop.f32.mrf.mxu0
      %2525 = vmatprep.mubr.bf16.mxu0 0
      %2526 = vmatmul.mubr.bf16.gmra.mxu0 %v1162
      %v2527 = vpop.f32.mrf.mxu0
      %v2528 = vadd.f32 0.0, %v2527
      %v2529 = vpop.f32.mrf.mxu0
      %v2530 = vpop.f32.mrf.mxu0
      %v2531 = vadd.f32 0.0, %v2530
      %v2532 = vpop.f32.mrf.mxu0
      %2533 = vmatprep.mubr.bf16.mxu0 0
      %2534 = vmatmul.mubr.bf16.gmra.mxu0 %v1165
      %v2535 = vpop.f32.mrf.mxu0
      %v2536 = vadd.f32 0.0, %v2535
      %v2537 = vpop.f32.mrf.mxu0
      %v2538 = vpop.f32.mrf.mxu0
      %v2539 = vadd.f32 0.0, %v2538
      %v2540 = vpop.f32.mrf.mxu0
      %2541 = vmatprep.mubr.bf16.mxu0 0
      %2542 = vmatmul.mubr.bf16.gmra.mxu0 %v1168
      %v2543 = vpop.f32.mrf.mxu0
      %v2544 = vadd.f32 0.0, %v2543
      %v2545 = vpop.f32.mrf.mxu0
      %v2546 = vpop.f32.mrf.mxu0
      %v2547 = vadd.f32 0.0, %v2546
      %v2548 = vpop.f32.mrf.mxu0
      %2549 = vmatprep.mubr.bf16.mxu0 0
      %2550 = vmatmul.mubr.bf16.gmra.mxu0 %v1171
      %v2551 = vpop.f32.mrf.mxu0
      %v2552 = vadd.f32 0.0, %v2551
      %v2553 = vpop.f32.mrf.mxu0
      %v2554 = vpop.f32.mrf.mxu0
      %v2555 = vadd.f32 0.0, %v2554
      %v2556 = vpop.f32.mrf.mxu0
      %2557 = vmatprep.mubr.bf16.mxu0 0
      %2558 = vmatmul.mubr.bf16.gmra.mxu0 %v1174
      %v2559 = vpop.f32.mrf.mxu0
      %v2560 = vadd.f32 0.0, %v2559
      %v2561 = vpop.f32.mrf.mxu0
      %v2562 = vpop.f32.mrf.mxu0
      %v2563 = vadd.f32 0.0, %v2562
      %v2564 = vpop.f32.mrf.mxu0
      %2565 = vmatprep.mubr.bf16.mxu0 0
      %2566 = vmatmul.mubr.bf16.gmra.mxu0 %v1177
      %v2567 = vpop.f32.mrf.mxu0
      %v2568 = vadd.f32 0.0, %v2567
      %v2569 = vpop.f32.mrf.mxu0
      %v2570 = vpop.f32.mrf.mxu0
      %v2571 = vadd.f32 0.0, %v2570
      %v2572 = vpop.f32.mrf.mxu0
      %2573 = vmatprep.mubr.bf16.mxu0 0
      %2574 = vmatmul.mubr.bf16.gmra.mxu0 %v1180
      %v2575 = vpop.f32.mrf.mxu0
      %v2576 = vadd.f32 0.0, %v2575
      %v2577 = vpop.f32.mrf.mxu0
      %v2578 = vpop.f32.mrf.mxu0
      %v2579 = vadd.f32 0.0, %v2578
      %v2580 = vpop.f32.mrf.mxu0
      %2581 = vmatprep.mubr.bf16.mxu0 0
      %2582 = vmatmul.mubr.bf16.gmra.mxu0 %v1183
      %v2583 = vpop.f32.mrf.mxu0
      %v2584 = vadd.f32 0.0, %v2583
      %v2585 = vpop.f32.mrf.mxu0
      %v2586 = vpop.f32.mrf.mxu0
      %v2587 = vadd.f32 0.0, %v2586
      %v2588 = vpop.f32.mrf.mxu0
      %2589 = vmatprep.mubr.bf16.mxu0 0
      %2590 = vmatmul.mubr.bf16.gmra.mxu0 %v1186
      %v2591 = vpop.f32.mrf.mxu0
      %v2592 = vadd.f32 0.0, %v2591
      %v2593 = vpop.f32.mrf.mxu0
      %v2594 = vpop.f32.mrf.mxu0
      %v2595 = vadd.f32 0.0, %v2594
      %v2596 = vpop.f32.mrf.mxu0
      %2597 = vmatprep.mubr.bf16.mxu0 0
      %2598 = vmatmul.mubr.bf16.gmra.mxu0 %v1189
      %v2599 = vpop.f32.mrf.mxu0
      %v2600 = vadd.f32 0.0, %v2599
      %v2601 = vpop.f32.mrf.mxu0
      %v2602 = vpop.f32.mrf.mxu0
      %v2603 = vadd.f32 0.0, %v2602
      %v2604 = vpop.f32.mrf.mxu0
      %2605 = vmatprep.mubr.bf16.mxu0 0
      %2606 = vmatmul.mubr.bf16.gmra.mxu0 %v1192
      %v2607 = vpop.f32.mrf.mxu0
      %v2608 = vadd.f32 0.0, %v2607
      %v2609 = vpop.f32.mrf.mxu0
      %v2610 = vpop.f32.mrf.mxu0
      %v2611 = vadd.f32 0.0, %v2610
      %v2612 = vpop.f32.mrf.mxu0
      %2613 = vmatprep.mubr.bf16.mxu0 0
      %2614 = vmatmul.mubr.bf16.gmra.mxu0 %v1195
      %v2615 = vpop.f32.mrf.mxu0
      %v2616 = vadd.f32 0.0, %v2615
      %v2617 = vpop.f32.mrf.mxu0
      %v2618 = vpop.f32.mrf.mxu0
      %v2619 = vadd.f32 0.0, %v2618
      %v2620 = vpop.f32.mrf.mxu0
      %2621 = vmatprep.mubr.bf16.mxu0 0
      %2622 = vmatmul.mubr.bf16.gmra.mxu0 %v1808
      %v2623 = vpop.f32.mrf.mxu0
      %v2624 = vadd.f32 0.0, %v2623
      %v2625 = vpop.f32.mrf.mxu0
      %v2626 = vpop.f32.mrf.mxu0
      %v2627 = vadd.f32 0.0, %v2626
      %v2628 = vpop.f32.mrf.mxu0
      %2629 = vmatprep.mubr.bf16.mxu0 0
      %2630 = vmatmul.mubr.bf16.gmra.mxu0 %v2475
      %v2631 = vpop.f32.mrf.mxu0
      %v2632 = vadd.f32 0.0, %v2631
      %v2633 = vpop.f32.mrf.mxu0
      %v2634 = vpop.f32.mrf.mxu0
      %v2635 = vadd.f32 0.0, %v2634
      %v2636 = vpop.f32.mrf.mxu0
      %2637 = vdwg.mxu0
      %v2638 = vadd.f32 %v2425, %v2512
      %v2639 = vadd.f32 %v2426, %v2515
      %v2640 = vadd.f32 %v2427, %v2520
      %v2641 = vadd.f32 %v2428, %v2523
      %v2642 = vadd.f32 %v2429, %v2528
      %v2643 = vadd.f32 %v2430, %v2531
      %v2644 = vadd.f32 %v2431, %v2536
      %v2645 = vadd.f32 %v2432, %v2539
      %v2646 = vadd.f32 %v2433, %v2544
      %v2647 = vadd.f32 %v2434, %v2547
      %v2648 = vadd.f32 %v2435, %v2552
      %v2649 = vadd.f32 %v2436, %v2555
      %v2650 = vadd.f32 %v2437, %v2560
      %v2651 = vadd.f32 %v2438, %v2563
      %v2652 = vadd.f32 %v2439, %v2568
      %v2653 = vadd.f32 %v2440, %v2571
      %v2654 = vadd.f32 %v2441, %v2576
      %v2655 = vadd.f32 %v2442, %v2579
      %v2656 = vadd.f32 %v2443, %v2584
      %v2657 = vadd.f32 %v2444, %v2587
      %v2658 = vadd.f32 %v2445, %v2592
      %v2659 = vadd.f32 %v2446, %v2595
      %v2660 = vadd.f32 %v2447, %v2600
      %v2661 = vadd.f32 %v2448, %v2603
      %v2662 = vadd.f32 %v2449, %v2608
      %v2663 = vadd.f32 %v2450, %v2611
      %v2664 = vadd.f32 %v2451, %v2616
      %v2665 = vadd.f32 %v2452, %v2619
      %v2666 = vadd.f32 %v2453, %v2624
      %v2667 = vadd.f32 %v2454, %v2627
      %v2668 = vadd.f32 %v2455, %v2632
      %v2669 = vadd.f32 %v2456, %v2635
      %v2671 = vshrl.u32 %v361, 16
      %v2673 = vrot.slane %v2671, 4
      %v2674 = vshll.u32 %v361, 16
      %v2676 = vrot.slane %v2674, 5
      %v2677 = vor.u32 %v2673, %v2676
      %v2678 = vrot.slane %v2677, 4
      %v2680 = vshll.u32 %v362, 16
      %v2682 = vrot.slane %v2680, 5
      %v2683 = vsel %vm402, %v2678, %v2682
      %v2684 = vshrl.u32 %v362, 16
      %v2686 = vrot.slane %v2684, 4
      %v2687 = vor.u32 %v2686, %v2682
      %v2688 = vrot.slane %v2687, 4
      %v2690 = vshll.u32 %v363, 16
      %v2692 = vrot.slane %v2690, 5
      %v2693 = vsel %vm402, %v2688, %v2692
      %v2694 = vunpack.c.l.b16 %v2683
      %v2695 = vunpack.c.l.b16 %v2693
      %v2696 = vpack.c.b16 %v2695, %v2694
      %v2701 = vunpack.c.l.b16 %v392
      %v2702 = vunpack.c.l.b16 %v393
      %v2703 = vunpack.c.l.b16 %v394
      %v2704 = vunpack.c.l.b16 %v395
      %v2705 = vpack.c.b16 %v2702, %v2701
      %v2706 = vpack.c.b16 %v2704, %v2703
      %v2710 = vsel %vm847, %v2696, 0
      %2712 = vmatprep.subr.bf16.mxu0 0
      %2713 = vmatpush1.bf16.msra.mxu0 0
      %2714 = vmatprep.subr.bf16.mxu0 0
      %2715 = vmatpush1.bf16.msra.mxu0 0
      %2716 = vmatprep.subr.bf16.mxu0 0
      %2717 = vmatpush1.bf16.msra.mxu0 0
      %2718 = vmatprep.subr.bf16.mxu0 0
      %2719 = vmatpush1.bf16.msra.mxu0 0
      %2720 = vmatprep.subr.bf16.mxu0 0
      %2721 = vmatpush1.bf16.msra.mxu0 0
      %2722 = vmatprep.subr.bf16.mxu0 0
      %2723 = vmatpush1.bf16.msra.mxu0 0
      %2724 = vmatprep.subr.bf16.mxu0 0
      %2725 = vmatpush1.bf16.msra.mxu0 %v2706
      %2726 = vmatprep.subr.bf16.mxu0 0
      %2727 = vmatpush1.bf16.msra.mxu0 %v2705
      %2728 = vmatprep.subr.bf16.mxu0 0
      %2729 = vmatpush2.bf16.msra.mxu0 0
      %2730 = vmatprep.subr.bf16.mxu0 0
      %2731 = vmatpush2.bf16.msra.mxu0 0
      %2732 = vmatprep.subr.bf16.mxu0 0
      %2733 = vmatpush2.bf16.msra.mxu0 0
      %2734 = vmatprep.subr.bf16.mxu0 0
      %2735 = vmatpush2.bf16.msra.mxu0 0
      %2736 = vmatprep.subr.bf16.mxu0 0
      %2737 = vmatpush2.bf16.msra.mxu0 0
      %2738 = vmatprep.subr.bf16.mxu0 0
      %2739 = vmatpush2.bf16.msra.mxu0 0
      %2740 = vmatprep.subr.bf16.mxu0 0
      %2741 = vmatpush2.bf16.msra.mxu0 0
      %2742 = vmatprep.subr.bf16.mxu0 0
      %2743 = vmatpush2.bf16.msra.mxu0 0
      %2744 = vmatprep.mubr.bf16.mxu0 0
      %2745 = vmatmul.mubr.bf16.gmra.mxu0 %v855
      %v2746 = vpop.f32.mrf.mxu0
      %v2747 = vadd.f32 0.0, %v2746
      %v2748 = vpop.f32.mrf.mxu0
      %v2749 = vpop.f32.mrf.mxu0
      %v2750 = vadd.f32 0.0, %v2749
      %v2751 = vpop.f32.mrf.mxu0
      %2752 = vmatprep.mubr.bf16.mxu0 0
      %2753 = vmatmul.mubr.bf16.gmra.mxu0 %v858
      %v2754 = vpop.f32.mrf.mxu0
      %v2755 = vadd.f32 0.0, %v2754
      %v2756 = vpop.f32.mrf.mxu0
      %v2757 = vpop.f32.mrf.mxu0
      %v2758 = vadd.f32 0.0, %v2757
      %v2759 = vpop.f32.mrf.mxu0
      %2760 = vmatprep.mubr.bf16.mxu0 0
      %2761 = vmatmul.mubr.bf16.gmra.mxu0 %v861
      %v2762 = vpop.f32.mrf.mxu0
      %v2763 = vadd.f32 0.0, %v2762
      %v2764 = vpop.f32.mrf.mxu0
      %v2765 = vpop.f32.mrf.mxu0
      %v2766 = vadd.f32 0.0, %v2765
      %v2767 = vpop.f32.mrf.mxu0
      %2768 = vmatprep.mubr.bf16.mxu0 0
      %2769 = vmatmul.mubr.bf16.gmra.mxu0 %v864
      %v2770 = vpop.f32.mrf.mxu0
      %v2771 = vadd.f32 0.0, %v2770
      %v2772 = vpop.f32.mrf.mxu0
      %v2773 = vpop.f32.mrf.mxu0
      %v2774 = vadd.f32 0.0, %v2773
      %v2775 = vpop.f32.mrf.mxu0
      %2776 = vmatprep.mubr.bf16.mxu0 0
      %2777 = vmatmul.mubr.bf16.gmra.mxu0 %v867
      %v2778 = vpop.f32.mrf.mxu0
      %v2779 = vadd.f32 0.0, %v2778
      %v2780 = vpop.f32.mrf.mxu0
      %v2781 = vpop.f32.mrf.mxu0
      %v2782 = vadd.f32 0.0, %v2781
      %v2783 = vpop.f32.mrf.mxu0
      %2784 = vmatprep.mubr.bf16.mxu0 0
      %2785 = vmatmul.mubr.bf16.gmra.mxu0 %v870
      %v2786 = vpop.f32.mrf.mxu0
      %v2787 = vadd.f32 0.0, %v2786
      %v2788 = vpop.f32.mrf.mxu0
      %v2789 = vpop.f32.mrf.mxu0
      %v2790 = vadd.f32 0.0, %v2789
      %v2791 = vpop.f32.mrf.mxu0
      %2792 = vmatprep.mubr.bf16.mxu0 0
      %2793 = vmatmul.mubr.bf16.gmra.mxu0 %v873
      %v2794 = vpop.f32.mrf.mxu0
      %v2795 = vadd.f32 0.0, %v2794
      %v2796 = vpop.f32.mrf.mxu0
      %v2797 = vpop.f32.mrf.mxu0
      %v2798 = vadd.f32 0.0, %v2797
      %v2799 = vpop.f32.mrf.mxu0
      %2800 = vmatprep.mubr.bf16.mxu0 0
      %2801 = vmatmul.mubr.bf16.gmra.mxu0 %v876
      %v2802 = vpop.f32.mrf.mxu0
      %v2803 = vadd.f32 0.0, %v2802
      %v2804 = vpop.f32.mrf.mxu0
      %v2805 = vpop.f32.mrf.mxu0
      %v2806 = vadd.f32 0.0, %v2805
      %v2807 = vpop.f32.mrf.mxu0
      %2808 = vmatprep.mubr.bf16.mxu0 0
      %2809 = vmatmul.mubr.bf16.gmra.mxu0 %v879
      %v2810 = vpop.f32.mrf.mxu0
      %v2811 = vadd.f32 0.0, %v2810
      %v2812 = vpop.f32.mrf.mxu0
      %v2813 = vpop.f32.mrf.mxu0
      %v2814 = vadd.f32 0.0, %v2813
      %v2815 = vpop.f32.mrf.mxu0
      %2816 = vmatprep.mubr.bf16.mxu0 0
      %2817 = vmatmul.mubr.bf16.gmra.mxu0 %v882
      %v2818 = vpop.f32.mrf.mxu0
      %v2819 = vadd.f32 0.0, %v2818
      %v2820 = vpop.f32.mrf.mxu0
      %v2821 = vpop.f32.mrf.mxu0
      %v2822 = vadd.f32 0.0, %v2821
      %v2823 = vpop.f32.mrf.mxu0
      %2824 = vmatprep.mubr.bf16.mxu0 0
      %2825 = vmatmul.mubr.bf16.gmra.mxu0 %v885
      %v2826 = vpop.f32.mrf.mxu0
      %v2827 = vadd.f32 0.0, %v2826
      %v2828 = vpop.f32.mrf.mxu0
      %v2829 = vpop.f32.mrf.mxu0
      %v2830 = vadd.f32 0.0, %v2829
      %v2831 = vpop.f32.mrf.mxu0
      %2832 = vmatprep.mubr.bf16.mxu0 0
      %2833 = vmatmul.mubr.bf16.gmra.mxu0 %v888
      %v2834 = vpop.f32.mrf.mxu0
      %v2835 = vadd.f32 0.0, %v2834
      %v2836 = vpop.f32.mrf.mxu0
      %v2837 = vpop.f32.mrf.mxu0
      %v2838 = vadd.f32 0.0, %v2837
      %v2839 = vpop.f32.mrf.mxu0
      %2840 = vmatprep.mubr.bf16.mxu0 0
      %2841 = vmatmul.mubr.bf16.gmra.mxu0 %v891
      %v2842 = vpop.f32.mrf.mxu0
      %v2843 = vadd.f32 0.0, %v2842
      %v2844 = vpop.f32.mrf.mxu0
      %v2845 = vpop.f32.mrf.mxu0
      %v2846 = vadd.f32 0.0, %v2845
      %v2847 = vpop.f32.mrf.mxu0
      %2848 = vmatprep.mubr.bf16.mxu0 0
      %2849 = vmatmul.mubr.bf16.gmra.mxu0 %v894
      %v2850 = vpop.f32.mrf.mxu0
      %v2851 = vadd.f32 0.0, %v2850
      %v2852 = vpop.f32.mrf.mxu0
      %v2853 = vpop.f32.mrf.mxu0
      %v2854 = vadd.f32 0.0, %v2853
      %v2855 = vpop.f32.mrf.mxu0
      %2856 = vmatprep.mubr.bf16.mxu0 0
      %2857 = vmatmul.mubr.bf16.gmra.mxu0 %v2043
      %v2858 = vpop.f32.mrf.mxu0
      %v2859 = vadd.f32 0.0, %v2858
      %v2860 = vpop.f32.mrf.mxu0
      %v2861 = vpop.f32.mrf.mxu0
      %v2862 = vadd.f32 0.0, %v2861
      %v2863 = vpop.f32.mrf.mxu0
      %2864 = vmatprep.mubr.bf16.mxu0 0
      %2865 = vmatmul.mubr.bf16.gmra.mxu0 %v2710
      %v2866 = vpop.f32.mrf.mxu0
      %v2867 = vadd.f32 0.0, %v2866
      %v2868 = vpop.f32.mrf.mxu0
      %v2869 = vpop.f32.mrf.mxu0
      %v2870 = vadd.f32 0.0, %v2869
      %v2871 = vpop.f32.mrf.mxu0
      %2872 = vdwg.mxu0
      %v2873 = vadd.f32 %v2638, %v2747
      %v2874 = vadd.f32 %v2639, %v2750
      %v2875 = vadd.f32 %v2640, %v2755
      %v2876 = vadd.f32 %v2641, %v2758
      %v2877 = vadd.f32 %v2642, %v2763
      %v2878 = vadd.f32 %v2643, %v2766
      %v2879 = vadd.f32 %v2644, %v2771
      %v2880 = vadd.f32 %v2645, %v2774
      %v2881 = vadd.f32 %v2646, %v2779
      %v2882 = vadd.f32 %v2647, %v2782
      %v2883 = vadd.f32 %v2648, %v2787
      %v2884 = vadd.f32 %v2649, %v2790
      %v2885 = vadd.f32 %v2650, %v2795
      %v2886 = vadd.f32 %v2651, %v2798
      %v2887 = vadd.f32 %v2652, %v2803
      %v2888 = vadd.f32 %v2653, %v2806
      %v2889 = vadd.f32 %v2654, %v2811
      %v2890 = vadd.f32 %v2655, %v2814
      %v2891 = vadd.f32 %v2656, %v2819
      %v2892 = vadd.f32 %v2657, %v2822
      %v2893 = vadd.f32 %v2658, %v2827
      %v2894 = vadd.f32 %v2659, %v2830
      %v2895 = vadd.f32 %v2660, %v2835
      %v2896 = vadd.f32 %v2661, %v2838
      %v2897 = vadd.f32 %v2662, %v2843
      %v2898 = vadd.f32 %v2663, %v2846
      %v2899 = vadd.f32 %v2664, %v2851
      %v2900 = vadd.f32 %v2665, %v2854
      %v2901 = vadd.f32 %v2666, %v2859
      %v2902 = vadd.f32 %v2667, %v2862
      %v2903 = vadd.f32 %v2668, %v2867
      %v2904 = vadd.f32 %v2669, %v2870
      %v2906 = vrot.slane %v361, 5
      %v2907 = vrot.slane %v2906, 4
      %v2908 = vrot.slane %v362, 5
      %v2909 = vsel %vm1376, %v2907, %v2908
      %v2910 = vrot.slane %v2908, 4
      %v2911 = vrot.slane %v363, 5
      %v2912 = vsel %vm1376, %v2910, %v2911
      %v2913 = vunpack.c.l.b16 %v2909
      %v2914 = vunpack.c.l.b16 %v2912
      %v2915 = vpack.c.b16 %v2914, %v2913
      %v2920 = vunpack.c.l.b16 %v396
      %v2921 = vunpack.c.l.b16 %v397
      %v2922 = vunpack.c.l.b16 %v398
      %v2923 = vunpack.c.l.b16 %v399
      %v2924 = vpack.c.b16 %v2921, %v2920
      %v2925 = vpack.c.b16 %v2923, %v2922
      %v2929 = vsel %vm847, %v2915, 0
      %2931 = vmatprep.subr.bf16.mxu0 0
      %2932 = vmatpush1.bf16.msra.mxu0 0
      %2933 = vmatprep.subr.bf16.mxu0 0
      %2934 = vmatpush1.bf16.msra.mxu0 0
      %2935 = vmatprep.subr.bf16.mxu0 0
      %2936 = vmatpush1.bf16.msra.mxu0 0
      %2937 = vmatprep.subr.bf16.mxu0 0
      %2938 = vmatpush1.bf16.msra.mxu0 0
      %2939 = vmatprep.subr.bf16.mxu0 0
      %2940 = vmatpush1.bf16.msra.mxu0 0
      %2941 = vmatprep.subr.bf16.mxu0 0
      %2942 = vmatpush1.bf16.msra.mxu0 0
      %2943 = vmatprep.subr.bf16.mxu0 0
      %2944 = vmatpush1.bf16.msra.mxu0 %v2925
      %2945 = vmatprep.subr.bf16.mxu0 0
      %2946 = vmatpush1.bf16.msra.mxu0 %v2924
      %2947 = vmatprep.subr.bf16.mxu0 0
      %2948 = vmatpush2.bf16.msra.mxu0 0
      %2949 = vmatprep.subr.bf16.mxu0 0
      %2950 = vmatpush2.bf16.msra.mxu0 0
      %2951 = vmatprep.subr.bf16.mxu0 0
      %2952 = vmatpush2.bf16.msra.mxu0 0
      %2953 = vmatprep.subr.bf16.mxu0 0
      %2954 = vmatpush2.bf16.msra.mxu0 0
      %2955 = vmatprep.subr.bf16.mxu0 0
      %2956 = vmatpush2.bf16.msra.mxu0 0
      %2957 = vmatprep.subr.bf16.mxu0 0
      %2958 = vmatpush2.bf16.msra.mxu0 0
      %2959 = vmatprep.subr.bf16.mxu0 0
      %2960 = vmatpush2.bf16.msra.mxu0 0
      %2961 = vmatprep.subr.bf16.mxu0 0
      %2962 = vmatpush2.bf16.msra.mxu0 0
      %2963 = vmatprep.mubr.bf16.mxu0 0
      %2964 = vmatmul.mubr.bf16.gmra.mxu0 %v1556
      %v2965 = vpop.f32.mrf.mxu0
      %v2966 = vadd.f32 0.0, %v2965
      %v2967 = vpop.f32.mrf.mxu0
      %v2968 = vpop.f32.mrf.mxu0
      %v2969 = vadd.f32 0.0, %v2968
      %v2970 = vpop.f32.mrf.mxu0
      %2971 = vmatprep.mubr.bf16.mxu0 0
      %2972 = vmatmul.mubr.bf16.gmra.mxu0 %v1559
      %v2973 = vpop.f32.mrf.mxu0
      %v2974 = vadd.f32 0.0, %v2973
      %v2975 = vpop.f32.mrf.mxu0
      %v2976 = vpop.f32.mrf.mxu0
      %v2977 = vadd.f32 0.0, %v2976
      %v2978 = vpop.f32.mrf.mxu0
      %2979 = vmatprep.mubr.bf16.mxu0 0
      %2980 = vmatmul.mubr.bf16.gmra.mxu0 %v1562
      %v2981 = vpop.f32.mrf.mxu0
      %v2982 = vadd.f32 0.0, %v2981
      %v2983 = vpop.f32.mrf.mxu0
      %v2984 = vpop.f32.mrf.mxu0
      %v2985 = vadd.f32 0.0, %v2984
      %v2986 = vpop.f32.mrf.mxu0
      %2987 = vmatprep.mubr.bf16.mxu0 0
      %2988 = vmatmul.mubr.bf16.gmra.mxu0 %v1565
      %v2989 = vpop.f32.mrf.mxu0
      %v2990 = vadd.f32 0.0, %v2989
      %v2991 = vpop.f32.mrf.mxu0
      %v2992 = vpop.f32.mrf.mxu0
      %v2993 = vadd.f32 0.0, %v2992
      %v2994 = vpop.f32.mrf.mxu0
      %2995 = vmatprep.mubr.bf16.mxu0 0
      %2996 = vmatmul.mubr.bf16.gmra.mxu0 %v1568
      %v2997 = vpop.f32.mrf.mxu0
      %v2998 = vadd.f32 0.0, %v2997
      %v2999 = vpop.f32.mrf.mxu0
      %v3000 = vpop.f32.mrf.mxu0
      %v3001 = vadd.f32 0.0, %v3000
      %v3002 = vpop.f32.mrf.mxu0
      %3003 = vmatprep.mubr.bf16.mxu0 0
      %3004 = vmatmul.mubr.bf16.gmra.mxu0 %v1571
      %v3005 = vpop.f32.mrf.mxu0
      %v3006 = vadd.f32 0.0, %v3005
      %v3007 = vpop.f32.mrf.mxu0
      %v3008 = vpop.f32.mrf.mxu0
      %v3009 = vadd.f32 0.0, %v3008
      %v3010 = vpop.f32.mrf.mxu0
      %3011 = vmatprep.mubr.bf16.mxu0 0
      %3012 = vmatmul.mubr.bf16.gmra.mxu0 %v1574
      %v3013 = vpop.f32.mrf.mxu0
      %v3014 = vadd.f32 0.0, %v3013
      %v3015 = vpop.f32.mrf.mxu0
      %v3016 = vpop.f32.mrf.mxu0
      %v3017 = vadd.f32 0.0, %v3016
      %v3018 = vpop.f32.mrf.mxu0
      %3019 = vmatprep.mubr.bf16.mxu0 0
      %3020 = vmatmul.mubr.bf16.gmra.mxu0 %v1577
      %v3021 = vpop.f32.mrf.mxu0
      %v3022 = vadd.f32 0.0, %v3021
      %v3023 = vpop.f32.mrf.mxu0
      %v3024 = vpop.f32.mrf.mxu0
      %v3025 = vadd.f32 0.0, %v3024
      %v3026 = vpop.f32.mrf.mxu0
      %3027 = vmatprep.mubr.bf16.mxu0 0
      %3028 = vmatmul.mubr.bf16.gmra.mxu0 %v1580
      %v3029 = vpop.f32.mrf.mxu0
      %v3030 = vadd.f32 0.0, %v3029
      %v3031 = vpop.f32.mrf.mxu0
      %v3032 = vpop.f32.mrf.mxu0
      %v3033 = vadd.f32 0.0, %v3032
      %v3034 = vpop.f32.mrf.mxu0
      %3035 = vmatprep.mubr.bf16.mxu0 0
      %3036 = vmatmul.mubr.bf16.gmra.mxu0 %v1583
      %v3037 = vpop.f32.mrf.mxu0
      %v3038 = vadd.f32 0.0, %v3037
      %v3039 = vpop.f32.mrf.mxu0
      %v3040 = vpop.f32.mrf.mxu0
      %v3041 = vadd.f32 0.0, %v3040
      %v3042 = vpop.f32.mrf.mxu0
      %3043 = vmatprep.mubr.bf16.mxu0 0
      %3044 = vmatmul.mubr.bf16.gmra.mxu0 %v1586
      %v3045 = vpop.f32.mrf.mxu0
      %v3046 = vadd.f32 0.0, %v3045
      %v3047 = vpop.f32.mrf.mxu0
      %v3048 = vpop.f32.mrf.mxu0
      %v3049 = vadd.f32 0.0, %v3048
      %v3050 = vpop.f32.mrf.mxu0
      %3051 = vmatprep.mubr.bf16.mxu0 0
      %3052 = vmatmul.mubr.bf16.gmra.mxu0 %v1589
      %v3053 = vpop.f32.mrf.mxu0
      %v3054 = vadd.f32 0.0, %v3053
      %v3055 = vpop.f32.mrf.mxu0
      %v3056 = vpop.f32.mrf.mxu0
      %v3057 = vadd.f32 0.0, %v3056
      %v3058 = vpop.f32.mrf.mxu0
      %3059 = vmatprep.mubr.bf16.mxu0 0
      %3060 = vmatmul.mubr.bf16.gmra.mxu0 %v1592
      %v3061 = vpop.f32.mrf.mxu0
      %v3062 = vadd.f32 0.0, %v3061
      %v3063 = vpop.f32.mrf.mxu0
      %v3064 = vpop.f32.mrf.mxu0
      %v3065 = vadd.f32 0.0, %v3064
      %v3066 = vpop.f32.mrf.mxu0
      %3067 = vmatprep.mubr.bf16.mxu0 0
      %3068 = vmatmul.mubr.bf16.gmra.mxu0 %v1595
      %v3069 = vpop.f32.mrf.mxu0
      %v3070 = vadd.f32 0.0, %v3069
      %v3071 = vpop.f32.mrf.mxu0
      %v3072 = vpop.f32.mrf.mxu0
      %v3073 = vadd.f32 0.0, %v3072
      %v3074 = vpop.f32.mrf.mxu0
      %3075 = vmatprep.mubr.bf16.mxu0 0
      %3076 = vmatmul.mubr.bf16.gmra.mxu0 %v2262
      %v3077 = vpop.f32.mrf.mxu0
      %v3078 = vadd.f32 0.0, %v3077
      %v3079 = vpop.f32.mrf.mxu0
      %v3080 = vpop.f32.mrf.mxu0
      %v3081 = vadd.f32 0.0, %v3080
      %v3082 = vpop.f32.mrf.mxu0
      %3083 = vmatprep.mubr.bf16.mxu0 0
      %3084 = vmatmul.mubr.bf16.gmra.mxu0 %v2929
      %v3085 = vpop.f32.mrf.mxu0
      %v3086 = vadd.f32 0.0, %v3085
      %v3087 = vpop.f32.mrf.mxu0
      %v3088 = vpop.f32.mrf.mxu0
      %v3089 = vadd.f32 0.0, %v3088
      %v3090 = vpop.f32.mrf.mxu0
      %3091 = vdwg.mxu0
      %v3092 = vadd.f32 %v2873, %v2966
      %v3093 = vadd.f32 %v2874, %v2969
      %v3094 = vadd.f32 %v2875, %v2974
      %v3095 = vadd.f32 %v2876, %v2977
      %v3096 = vadd.f32 %v2877, %v2982
      %v3097 = vadd.f32 %v2878, %v2985
      %v3098 = vadd.f32 %v2879, %v2990
      %v3099 = vadd.f32 %v2880, %v2993
      %v3100 = vadd.f32 %v2881, %v2998
      %v3101 = vadd.f32 %v2882, %v3001
      %v3102 = vadd.f32 %v2883, %v3006
      %v3103 = vadd.f32 %v2884, %v3009
      %v3104 = vadd.f32 %v2885, %v3014
      %v3105 = vadd.f32 %v2886, %v3017
      %v3106 = vadd.f32 %v2887, %v3022
      %v3107 = vadd.f32 %v2888, %v3025
      %v3108 = vadd.f32 %v2889, %v3030
      %v3109 = vadd.f32 %v2890, %v3033
      %v3110 = vadd.f32 %v2891, %v3038
      %v3111 = vadd.f32 %v2892, %v3041
      %v3112 = vadd.f32 %v2893, %v3046
      %v3113 = vadd.f32 %v2894, %v3049
      %v3114 = vadd.f32 %v2895, %v3054
      %v3115 = vadd.f32 %v2896, %v3057
      %v3116 = vadd.f32 %v2897, %v3062
      %v3117 = vadd.f32 %v2898, %v3065
      %v3118 = vadd.f32 %v2899, %v3070
      %v3119 = vadd.f32 %v2900, %v3073
      %v3120 = vadd.f32 %v2901, %v3078
      %v3121 = vadd.f32 %v2902, %v3081
      %v3122 = vadd.f32 %v2903, %v3086
      %v3123 = vadd.f32 %v2904, %v3089
      %v3124 = vld [vmem:[%s288] sm:$0x1]
      %v3126 = vlaneseq
      %v3127 = vshrl.u32 %v3126, 7
      %v3128 = vsub.s32 0, %v3127
      %v3129 = vrot.slane %v3124, %v3128
      %v3131 = vadd.f32 %v3092, %v3129
      %v3132 = vadd.f32 %v3093, %v3129
      %v3133 = vadd.f32 %v3094, %v3129
      %v3134 = vadd.f32 %v3095, %v3129
      %v3135 = vadd.f32 %v3096, %v3129
      %v3136 = vadd.f32 %v3097, %v3129
      %v3137 = vadd.f32 %v3098, %v3129
      %v3138 = vadd.f32 %v3099, %v3129
      %v3139 = vadd.f32 %v3100, %v3129
      %v3140 = vadd.f32 %v3101, %v3129
      %v3141 = vadd.f32 %v3102, %v3129
      %v3142 = vadd.f32 %v3103, %v3129
      %v3143 = vadd.f32 %v3104, %v3129
      %v3144 = vadd.f32 %v3105, %v3129
      %v3145 = vadd.f32 %v3106, %v3129
      %v3146 = vadd.f32 %v3107, %v3129
      %v3147 = vadd.f32 %v3108, %v3129
      %v3148 = vadd.f32 %v3109, %v3129
      %v3149 = vadd.f32 %v3110, %v3129
      %v3150 = vadd.f32 %v3111, %v3129
      %v3151 = vadd.f32 %v3112, %v3129
      %v3152 = vadd.f32 %v3113, %v3129
      %v3153 = vadd.f32 %v3114, %v3129
      %v3154 = vadd.f32 %v3115, %v3129
      %v3155 = vadd.f32 %v3116, %v3129
      %v3156 = vadd.f32 %v3117, %v3129
      %v3157 = vadd.f32 %v3118, %v3129
      %v3158 = vadd.f32 %v3119, %v3129
      %v3159 = vadd.f32 %v3120, %v3129
      %v3160 = vadd.f32 %v3121, %v3129
      %v3161 = vadd.f32 %v3122, %v3129
      %v3162 = vadd.f32 %v3123, %v3129
      %v3163 = vpack.c.bf16 %v3132, %v3131
      %v3164 = vpack.c.bf16 %v3134, %v3133
      %v3165 = vpack.c.bf16 %v3136, %v3135
      %v3166 = vpack.c.bf16 %v3138, %v3137
      %v3167 = vpack.c.bf16 %v3140, %v3139
      %v3168 = vpack.c.bf16 %v3142, %v3141
      %v3169 = vpack.c.bf16 %v3144, %v3143
      %v3170 = vpack.c.bf16 %v3146, %v3145
      %v3171 = vpack.c.bf16 %v3148, %v3147
      %v3172 = vpack.c.bf16 %v3150, %v3149
      %v3173 = vpack.c.bf16 %v3152, %v3151
      %v3174 = vpack.c.bf16 %v3154, %v3153
      %v3175 = vpack.c.bf16 %v3156, %v3155
      %v3176 = vpack.c.bf16 %v3158, %v3157
      %v3177 = vpack.c.bf16 %v3160, %v3159
      %v3178 = vpack.c.bf16 %v3162, %v3161
      %v3195 = vunpack.c.l.b16 %v3163
      %v3196 = vunpack.c.h.b16 %v3163
      %v3197 = vunpack.c.l.b16 %v3164
      %v3198 = vunpack.c.h.b16 %v3164
      %v3199 = vunpack.c.l.b16 %v3165
      %v3200 = vunpack.c.h.b16 %v3165
      %v3201 = vunpack.c.l.b16 %v3166
      %v3202 = vunpack.c.h.b16 %v3166
      %v3203 = vunpack.c.l.b16 %v3167
      %v3204 = vunpack.c.h.b16 %v3167
      %v3205 = vunpack.c.l.b16 %v3168
      %v3206 = vunpack.c.h.b16 %v3168
      %v3207 = vunpack.c.l.b16 %v3169
      %v3208 = vunpack.c.h.b16 %v3169
      %v3209 = vunpack.c.l.b16 %v3170
      %v3210 = vunpack.c.h.b16 %v3170
      %v3211 = vunpack.c.l.b16 %v3171
      %v3212 = vunpack.c.h.b16 %v3171
      %v3213 = vunpack.c.l.b16 %v3172
      %v3214 = vunpack.c.h.b16 %v3172
      %v3215 = vunpack.c.l.b16 %v3173
      %v3216 = vunpack.c.h.b16 %v3173
      %v3217 = vunpack.c.l.b16 %v3174
      %v3218 = vunpack.c.h.b16 %v3174
      %v3219 = vunpack.c.l.b16 %v3175
      %v3220 = vunpack.c.h.b16 %v3175
      %v3221 = vunpack.c.l.b16 %v3176
      %v3222 = vunpack.c.h.b16 %v3176
      %v3223 = vunpack.c.l.b16 %v3177
      %v3224 = vunpack.c.h.b16 %v3177
      %v3225 = vunpack.c.l.b16 %v3178
      %v3226 = vunpack.c.h.b16 %v3178
      %v3227 = vpack.c.b16 %v3195, %v3195
      %v3228 = vpack.c.b16 %v3196, %v3196
      %v3229 = vpack.c.b16 %v3197, %v3197
      %v3230 = vpack.c.b16 %v3198, %v3198
      %v3231 = vpack.c.b16 %v3199, %v3199
      %v3232 = vpack.c.b16 %v3200, %v3200
      %v3233 = vpack.c.b16 %v3201, %v3201
      %v3234 = vpack.c.b16 %v3202, %v3202
      %v3235 = vpack.c.b16 %v3203, %v3203
      %v3236 = vpack.c.b16 %v3204, %v3204
      %v3237 = vpack.c.b16 %v3205, %v3205
      %v3238 = vpack.c.b16 %v3206, %v3206
      %v3239 = vpack.c.b16 %v3207, %v3207
      %v3240 = vpack.c.b16 %v3208, %v3208
      %v3241 = vpack.c.b16 %v3209, %v3209
      %v3242 = vpack.c.b16 %v3210, %v3210
      %v3243 = vpack.c.b16 %v3211, %v3211
      %v3244 = vpack.c.b16 %v3212, %v3212
      %v3245 = vpack.c.b16 %v3213, %v3213
      %v3246 = vpack.c.b16 %v3214, %v3214
      %v3247 = vpack.c.b16 %v3215, %v3215
      %v3248 = vpack.c.b16 %v3216, %v3216
      %v3249 = vpack.c.b16 %v3217, %v3217
      %v3250 = vpack.c.b16 %v3218, %v3218
      %v3251 = vpack.c.b16 %v3219, %v3219
      %v3252 = vpack.c.b16 %v3220, %v3220
      %v3253 = vpack.c.b16 %v3221, %v3221
      %v3254 = vpack.c.b16 %v3222, %v3222
      %v3255 = vpack.c.b16 %v3223, %v3223
      %v3256 = vpack.c.b16 %v3224, %v3224
      %v3257 = vpack.c.b16 %v3225, %v3225
      %v3258 = vpack.c.b16 %v3226, %v3226
      %vm3291 = vcmask 257024
      %3292 = vst.msk [vmem:[%s296] sm:$0xf] %vm3291, %v3227
      %3293 = vst.msk [vmem:[%s296 + $0x4] sm:$0xf] %vm3291, %v3228
      %3294 = vst.msk [vmem:[%s296 + $0x8] sm:$0xf] %vm3291, %v3229
      %3295 = vst.msk [vmem:[%s296 + $0xc] sm:$0xf] %vm3291, %v3230
      %3296 = vst.msk [vmem:[%s296 + $0x10] sm:$0xf] %vm3291, %v3231
      %3297 = vst.msk [vmem:[%s296 + $0x14] sm:$0xf] %vm3291, %v3232
      %3298 = vst.msk [vmem:[%s296 + $0x18] sm:$0xf] %vm3291, %v3233
      %3299 = vst.msk [vmem:[%s296 + $0x1c] sm:$0xf] %vm3291, %v3234
      %3300 = vst.msk [vmem:[%s296 + $0x20] sm:$0xf] %vm3291, %v3235
      %3301 = vst.msk [vmem:[%s296 + $0x24] sm:$0xf] %vm3291, %v3236
      %3302 = vst.msk [vmem:[%s296 + $0x28] sm:$0xf] %vm3291, %v3237
      %3303 = vst.msk [vmem:[%s296 + $0x2c] sm:$0xf] %vm3291, %v3238
      %3304 = vst.msk [vmem:[%s296 + $0x30] sm:$0xf] %vm3291, %v3239
      %3305 = vst.msk [vmem:[%s296 + $0x34] sm:$0xf] %vm3291, %v3240
      %3306 = vst.msk [vmem:[%s296 + $0x38] sm:$0xf] %vm3291, %v3241
      %3307 = vst.msk [vmem:[%s296 + $0x3c] sm:$0xf] %vm3291, %v3242
      %3308 = vst.msk [vmem:[%s296 + $0x40] sm:$0xf] %vm3291, %v3243
      %3309 = vst.msk [vmem:[%s296 + $0x44] sm:$0xf] %vm3291, %v3244
      %3310 = vst.msk [vmem:[%s296 + $0x48] sm:$0xf] %vm3291, %v3245
      %3311 = vst.msk [vmem:[%s296 + $0x4c] sm:$0xf] %vm3291, %v3246
      %3312 = vst.msk [vmem:[%s296 + $0x50] sm:$0xf] %vm3291, %v3247
      %3313 = vst.msk [vmem:[%s296 + $0x54] sm:$0xf] %vm3291, %v3248
      %3314 = vst.msk [vmem:[%s296 + $0x58] sm:$0xf] %vm3291, %v3249
      %3315 = vst.msk [vmem:[%s296 + $0x5c] sm:$0xf] %vm3291, %v3250
      %3316 = vst.msk [vmem:[%s296 + $0x60] sm:$0xf] %vm3291, %v3251
      %3317 = vst.msk [vmem:[%s296 + $0x64] sm:$0xf] %vm3291, %v3252
      %3318 = vst.msk [vmem:[%s296 + $0x68] sm:$0xf] %vm3291, %v3253
      %3319 = vst.msk [vmem:[%s296 + $0x6c] sm:$0xf] %vm3291, %v3254
      %3320 = vst.msk [vmem:[%s296 + $0x70] sm:$0xf] %vm3291, %v3255
      %3321 = vst.msk [vmem:[%s296 + $0x74] sm:$0xf] %vm3291, %v3256
      %3322 = vst.msk [vmem:[%s296 + $0x78] sm:$0xf] %vm3291, %v3257
      %3323 = vst.msk [vmem:[%s296 + $0x7c] sm:$0xf] %vm3291, %v3258
      %v3324 = vsel %vm847, %v3131, 0.0
      %v3325 = vsel %vm847, %v3132, 0.0
      %v3326 = vadd.f32 %v3324, %v3325
      %v3327 = vsel %vm847, %v3133, 0.0
      %v3328 = vadd.f32 %v3326, %v3327
      %v3329 = vsel %vm847, %v3134, 0.0
      %v3330 = vadd.f32 %v3328, %v3329
      %v3331 = vsel %vm847, %v3135, 0.0
      %v3332 = vadd.f32 %v3330, %v3331
      %v3333 = vsel %vm847, %v3136, 0.0
      %v3334 = vadd.f32 %v3332, %v3333
      %v3335 = vsel %vm847, %v3137, 0.0
      %v3336 = vadd.f32 %v3334, %v3335
      %v3337 = vsel %vm847, %v3138, 0.0
      %v3338 = vadd.f32 %v3336, %v3337
      %v3339 = vsel %vm847, %v3139, 0.0
      %v3340 = vadd.f32 %v3338, %v3339
      %v3341 = vsel %vm847, %v3140, 0.0
      %v3342 = vadd.f32 %v3340, %v3341
      %v3343 = vsel %vm847, %v3141, 0.0
      %v3344 = vadd.f32 %v3342, %v3343
      %v3345 = vsel %vm847, %v3142, 0.0
      %v3346 = vadd.f32 %v3344, %v3345
      %v3347 = vsel %vm847, %v3143, 0.0
      %v3348 = vadd.f32 %v3346, %v3347
      %v3349 = vsel %vm847, %v3144, 0.0
      %v3350 = vadd.f32 %v3348, %v3349
      %v3351 = vsel %vm847, %v3145, 0.0
      %v3352 = vadd.f32 %v3350, %v3351
      %v3353 = vsel %vm847, %v3146, 0.0
      %v3354 = vadd.f32 %v3352, %v3353
      %v3355 = vsel %vm847, %v3147, 0.0
      %v3356 = vadd.f32 %v3354, %v3355
      %v3357 = vsel %vm847, %v3148, 0.0
      %v3358 = vadd.f32 %v3356, %v3357
      %v3359 = vsel %vm847, %v3149, 0.0
      %v3360 = vadd.f32 %v3358, %v3359
      %v3361 = vsel %vm847, %v3150, 0.0
      %v3362 = vadd.f32 %v3360, %v3361
      %v3363 = vsel %vm847, %v3151, 0.0
      %v3364 = vadd.f32 %v3362, %v3363
      %v3365 = vsel %vm847, %v3152, 0.0
      %v3366 = vadd.f32 %v3364, %v3365
      %v3367 = vsel %vm847, %v3153, 0.0
      %v3368 = vadd.f32 %v3366, %v3367
      %v3369 = vsel %vm847, %v3154, 0.0
      %v3370 = vadd.f32 %v3368, %v3369
      %v3371 = vsel %vm847, %v3155, 0.0
      %v3372 = vadd.f32 %v3370, %v3371
      %v3373 = vsel %vm847, %v3156, 0.0
      %v3374 = vadd.f32 %v3372, %v3373
      %v3375 = vsel %vm847, %v3157, 0.0
      %v3376 = vadd.f32 %v3374, %v3375
      %v3377 = vsel %vm847, %v3158, 0.0
      %v3378 = vadd.f32 %v3376, %v3377
      %v3379 = vsel %vm847, %v3159, 0.0
      %v3380 = vadd.f32 %v3378, %v3379
      %v3381 = vsel %vm847, %v3160, 0.0
      %v3382 = vadd.f32 %v3380, %v3381
      %v3383 = vsel %vm847, %v3161, 0.0
      %v3384 = vadd.f32 %v3382, %v3383
      %v3385 = vsel %vm847, %v3162, 0.0
      %v3386 = vadd.f32 %v3384, %v3385
      %v3387 = vrot.slane %v3386, 4
      %v3388 = vadd.f32 %v3386, %v3387
      %v3389 = vrot.slane %v3388, 2
      %v3390 = vadd.f32 %v3388, %v3389
      %v3391 = vrot.slane %v3390, 1
      %v3392 = vadd.f32 %v3390, %v3391
      %vm3393 = vcmask 253952
      %3394 = vst.msk [vmem:[%s302] sm:$0x1] %vm3393, %v3392
      %v3395 = vmul.f32 %v3131, %v3131
      %v3396 = vmul.f32 %v3132, %v3132
      %v3397 = vmul.f32 %v3133, %v3133
      %v3398 = vmul.f32 %v3134, %v3134
      %v3399 = vmul.f32 %v3135, %v3135
      %v3400 = vmul.f32 %v3136, %v3136
      %v3401 = vmul.f32 %v3137, %v3137
      %v3402 = vmul.f32 %v3138, %v3138
      %v3403 = vmul.f32 %v3139, %v3139
      %v3404 = vmul.f32 %v3140, %v3140
      %v3405 = vmul.f32 %v3141, %v3141
      %v3406 = vmul.f32 %v3142, %v3142
      %v3407 = vmul.f32 %v3143, %v3143
      %v3408 = vmul.f32 %v3144, %v3144
      %v3409 = vmul.f32 %v3145, %v3145
      %v3410 = vmul.f32 %v3146, %v3146
      %v3411 = vmul.f32 %v3147, %v3147
      %v3412 = vmul.f32 %v3148, %v3148
      %v3413 = vmul.f32 %v3149, %v3149
      %v3414 = vmul.f32 %v3150, %v3150
      %v3415 = vmul.f32 %v3151, %v3151
      %v3416 = vmul.f32 %v3152, %v3152
      %v3417 = vmul.f32 %v3153, %v3153
      %v3418 = vmul.f32 %v3154, %v3154
      %v3419 = vmul.f32 %v3155, %v3155
      %v3420 = vmul.f32 %v3156, %v3156
      %v3421 = vmul.f32 %v3157, %v3157
      %v3422 = vmul.f32 %v3158, %v3158
      %v3423 = vmul.f32 %v3159, %v3159
      %v3424 = vmul.f32 %v3160, %v3160
      %v3425 = vmul.f32 %v3161, %v3161
      %v3426 = vmul.f32 %v3162, %v3162
      %v3427 = vsel %vm847, %v3395, 0.0
      %v3428 = vsel %vm847, %v3396, 0.0
      %v3429 = vadd.f32 %v3427, %v3428
      %v3430 = vsel %vm847, %v3397, 0.0
      %v3431 = vadd.f32 %v3429, %v3430
      %v3432 = vsel %vm847, %v3398, 0.0
      %v3433 = vadd.f32 %v3431, %v3432
      %v3434 = vsel %vm847, %v3399, 0.0
      %v3435 = vadd.f32 %v3433, %v3434
      %v3436 = vsel %vm847, %v3400, 0.0
      %v3437 = vadd.f32 %v3435, %v3436
      %v3438 = vsel %vm847, %v3401, 0.0
      %v3439 = vadd.f32 %v3437, %v3438
      %v3440 = vsel %vm847, %v3402, 0.0
      %v3441 = vadd.f32 %v3439, %v3440
      %v3442 = vsel %vm847, %v3403, 0.0
      %v3443 = vadd.f32 %v3441, %v3442
      %v3444 = vsel %vm847, %v3404, 0.0
      %v3445 = vadd.f32 %v3443, %v3444
      %v3446 = vsel %vm847, %v3405, 0.0
      %v3447 = vadd.f32 %v3445, %v3446
      %v3448 = vsel %vm847, %v3406, 0.0
      %v3449 = vadd.f32 %v3447, %v3448
      %v3450 = vsel %vm847, %v3407, 0.0
      %v3451 = vadd.f32 %v3449, %v3450
      %v3452 = vsel %vm847, %v3408, 0.0
      %v3453 = vadd.f32 %v3451, %v3452
      %v3454 = vsel %vm847, %v3409, 0.0
      %v3455 = vadd.f32 %v3453, %v3454
      %v3456 = vsel %vm847, %v3410, 0.0
      %v3457 = vadd.f32 %v3455, %v3456
      %v3458 = vsel %vm847, %v3411, 0.0
      %v3459 = vadd.f32 %v3457, %v3458
      %v3460 = vsel %vm847, %v3412, 0.0
      %v3461 = vadd.f32 %v3459, %v3460
      %v3462 = vsel %vm847, %v3413, 0.0
      %v3463 = vadd.f32 %v3461, %v3462
      %v3464 = vsel %vm847, %v3414, 0.0
      %v3465 = vadd.f32 %v3463, %v3464
      %v3466 = vsel %vm847, %v3415, 0.0
      %v3467 = vadd.f32 %v3465, %v3466
      %v3468 = vsel %vm847, %v3416, 0.0
      %v3469 = vadd.f32 %v3467, %v3468
      %v3470 = vsel %vm847, %v3417, 0.0
      %v3471 = vadd.f32 %v3469, %v3470
      %v3472 = vsel %vm847, %v3418, 0.0
      %v3473 = vadd.f32 %v3471, %v3472
      %v3474 = vsel %vm847, %v3419, 0.0
      %v3475 = vadd.f32 %v3473, %v3474
      %v3476 = vsel %vm847, %v3420, 0.0
      %v3477 = vadd.f32 %v3475, %v3476
      %v3478 = vsel %vm847, %v3421, 0.0
      %v3479 = vadd.f32 %v3477, %v3478
      %v3480 = vsel %vm847, %v3422, 0.0
      %v3481 = vadd.f32 %v3479, %v3480
      %v3482 = vsel %vm847, %v3423, 0.0
      %v3483 = vadd.f32 %v3481, %v3482
      %v3484 = vsel %vm847, %v3424, 0.0
      %v3485 = vadd.f32 %v3483, %v3484
      %v3486 = vsel %vm847, %v3425, 0.0
      %v3487 = vadd.f32 %v3485, %v3486
      %v3488 = vsel %vm847, %v3426, 0.0
      %v3489 = vadd.f32 %v3487, %v3488
      %v3490 = vrot.slane %v3489, 4
      %v3491 = vadd.f32 %v3489, %v3490
      %v3492 = vrot.slane %v3491, 2
      %v3493 = vadd.f32 %v3491, %v3492
      %v3494 = vrot.slane %v3493, 1
      %v3495 = vadd.f32 %v3493, %v3494
      %3496 = vst.msk [vmem:[%s308] sm:$0x1] %vm3393, %v3495
      %p3497 = scmp.lt.s32.totalorder %s22, 1
      %s3498 = scalar_select %p3497, %s22, 1
      %p3499 = scmp.lt.s32.totalorder %s21, 0
      %s3500 = scalar_select %p3499, %s21, 0
      %s3501 = smul.addr %s3498, 32
      %s3502 = sadd.s32 %s3500, %s3501
      %s3503 = smul.addr %s3502, 4
      %s3504 = scalar_lea.vmem %s3, %s3503
      %p3505 = scmp.lt.s32.totalorder %s22, 1
      %s3506 = scalar_select %p3505, %s22, 1
      %p3507 = scmp.lt.s32.totalorder %s21, 0
      %s3508 = scalar_select %p3507, %s21, 0
      %s3509 = sadd.s32 %s3508, %s3506
      %s3510 = scalar_lea.vmem %s4, %s3509
      %p3511 = scmp.lt.s32.totalorder %s22, 1
      %s3512 = scalar_select %p3511, %s22, 1
      %p3513 = scmp.lt.s32.totalorder %s21, 0
      %s3514 = scalar_select %p3513, %s21, 0
      %s3515 = sadd.s32 %s3514, %s3512
      %s3516 = scalar_lea.vmem %s5, %s3515
      // Predicated region
      $region33: #{up_forward.8} parent=31 // pred_check
        %p3517 = pneg %p127
      $region34: #{up_forward.8} parent=31 // pred_check_branch
        %3519 = sbr.rel (%p3517) target = $region36
      $region35: #{up_forward.8} parent=31 // pred_region
        _
      $region36: #{up_forward.8} parent=31 // pred_fallthru
        _
      // Predicated region
      $region37: #{up_forward.8} parent=31 // pred_check
        %p3520 = pneg %p155
      $region38: #{up_forward.8} parent=31 // pred_check_branch
        %3522 = sbr.rel (%p3520) target = $region40
      $region39: #{up_forward.8} parent=31 // pred_region
        _
      $region40: #{up_forward.8} parent=31 // pred_fallthru
        _
      // Predicated region
      $region41: #{up_forward.8} parent=31 // pred_check
        %p3523 = pneg %p183
      $region42: #{up_forward.8} parent=31 // pred_check_branch
        %3525 = sbr.rel (%p3523) target = $region44
      $region43: #{up_forward.8} parent=31 // pred_region
        _
      $region44: #{up_forward.8} parent=31 // pred_fallthru
        _
    $region32: #{up_forward.8} parent=5 // pred_fallthru
      _
    %p3526 = scmp.le.s32.totalorder 2, %s12
    // Predicated region
    $region45: #{up_forward.8} parent=5 // pred_check
      %p3527 = pneg %p3526
    $region46: #{up_forward.8} parent=5 // pred_check_branch
      %3529 = sbr.rel (%p3527) target = $region48
    $region47: #{up_forward.8} parent=5 // pred_region
      %s3530 = ssub.s32 %s12, 2
      // Predicated region
      $region49: #{up_forward.8} parent=47 // pred_check
        %p3531 = pneg %p133
      $region50: #{up_forward.8} parent=47 // pred_check_branch
        %3533 = sbr.rel (%p3531) target = $region52
      $region51: #{up_forward.8} parent=47 // pred_region
        %p3534 = scmp.lt.s32.totalorder %s24, 1
        %s3535 = scalar_select %p3534, %s24, 1
        %p3536 = scmp.lt.s32.totalorder %s23, 0
        %s3537 = scalar_select %p3536, %s23, 0
        %s3538 = smul.addr %s3535, 32
        %s3539 = sadd.s32 %s3537, %s3538
        %s3540 = smul.addr %s3539, 4
        %s3541 = scalar_lea.vmem %s3, %s3540
      $region52: #{up_forward.8} parent=47 // pred_fallthru
        _
      // Predicated region
      $region53: #{up_forward.8} parent=47 // pred_check
        %p3542 = pneg %p161
      $region54: #{up_forward.8} parent=47 // pred_check_branch
        %3544 = sbr.rel (%p3542) target = $region56
      $region55: #{up_forward.8} parent=47 // pred_region
        %p3545 = scmp.lt.s32.totalorder %s24, 1
        %s3546 = scalar_select %p3545, %s24, 1
        %p3547 = scmp.lt.s32.totalorder %s23, 0
        %s3548 = scalar_select %p3547, %s23, 0
        %s3549 = sadd.s32 %s3548, %s3546
        %s3550 = scalar_lea.vmem %s4, %s3549
      $region56: #{up_forward.8} parent=47 // pred_fallthru
        _
      // Predicated region
      $region57: #{up_forward.8} parent=47 // pred_check
        %p3551 = pneg %p189
      $region58: #{up_forward.8} parent=47 // pred_check_branch
        %3553 = sbr.rel (%p3551) target = $region60
      $region59: #{up_forward.8} parent=47 // pred_region
        %p3554 = scmp.lt.s32.totalorder %s24, 1
        %s3555 = scalar_select %p3554, %s24, 1
        %p3556 = scmp.lt.s32.totalorder %s23, 0
        %s3557 = scalar_select %p3556, %s23, 0
        %s3558 = sadd.s32 %s3557, %s3555
        %s3559 = scalar_lea.vmem %s5, %s3558
      $region60: #{up_forward.8} parent=47 // pred_fallthru
        _
    $region48: #{up_forward.8} parent=5 // pred_fallthru
      _
  $region6: #{up_forward.8} parent=0 // loop_footer
    %s16 = sadd.s32 1, %s12
  $region7: #{up_forward.8} parent=0 // loop_footer_branch
    %11 = sbr.rel target = $region3
  $region8: #{up_forward.8} parent=0 // loop_exit
    _

</llo_original>
